<compile_context>
chip_gen: v7x
topology: tpu7x:2x2x1
jax: 0.10.0
libtpu: 0.0.40
codegen_flags: <defaults>
</compile_context>

<pallas_src>
import functools

import jax
import jax.numpy as jnp
from jax.experimental import pallas as pl
from jax.experimental.pallas import tpu as pltpu  # noqa: F401  (TPU backend)

LRELU_SLOPE = 0.2
BN_EPS = 1e-5


def _lrelu(x):
    return jnp.where(x >= 0, x, LRELU_SLOPE * x)


# --------------------------------------------------------------------------
# The single fused kernel
# --------------------------------------------------------------------------
def _generator_actor_kernel(*refs, L, H):
    """Ref order (inputs):
         xt0,
         lt1, tt1,                                  # conv1 (no BN)
         [lt, tt, a, at, gamma, beta] x 3,          # conv2..conv4 (+BN)
         qt, v, lin1_b,                             # flatten + lin1 (folded)
         [wih_T, whh_T, b] x L,                     # LSTM layers
         h0, c0, lin2_wT, lin2_b
       then outputs: x_out, m_out, h_out, c_out.
    """
    pos = 0

    def nxt():
        nonlocal pos
        r = refs[pos]
        pos += 1
        return r

    xt_ref = nxt()
    conv_layers = [(nxt(), nxt(), None, None, None, None)]        # conv1
    for _ in range(3):                                            # conv2..conv4
        conv_layers.append((nxt(), nxt(), nxt(), nxt(), nxt(), nxt()))
    qt_ref, v_ref, lin1_b_ref = nxt(), nxt(), nxt()
    lstm_refs = [(nxt(), nxt(), nxt()) for _ in range(L)]
    h_ref, c_ref, lin2_w_ref, lin2_b_ref = nxt(), nxt(), nxt(), nxt()
    x_out_ref, m_out_ref, h_out_ref, c_out_ref = refs[pos:pos + 4]

    def conv_taps(x_bf, lt_ref, tt_ref):
        # out^T = sum_dj  Tt_dj @ x^T @ Lt_dj   -- plain MXU matmuls only.
        acc = None
        for dj in range(lt_ref.shape[0]):
            y = jnp.dot(tt_ref[dj], x_bf, preferred_element_type=jnp.float32)
            z = jnp.dot(y.astype(jnp.bfloat16), lt_ref[dj],
                        preferred_element_type=jnp.float32)
            acc = z if acc is None else acc + z
        return acc                                  # (N*OW, OC*OH) f32

    def bn_lrelu(y, a_ref, at_ref, g_ref, b_ref):
        # Training-mode BatchNorm per channel oc (lanes are (oc, oh); rows are
        # (n, ow)).  One-pass stats (sum, sum of squares); channel grouping and
        # the broadcast back are tiny constant matmuls.
        oc = a_ref.shape[0]
        rows, lanes = y.shape
        cnt = float(rows * (lanes // oc))
        s1 = jnp.sum(y, axis=0, keepdims=True)                      # (1, OC*OH)
        s2 = jnp.sum(y * y, axis=0, keepdims=True)
        ch1 = jnp.dot(s1, at_ref[...], preferred_element_type=jnp.float32)  # (1, OC)
        ch2 = jnp.dot(s2, at_ref[...], preferred_element_type=jnp.float32)
        mean = ch1 / cnt
        var = ch2 / cnt - mean * mean                               # biased var
        scale = g_ref[...] * jax.lax.rsqrt(var + BN_EPS)            # (1, OC)
        shift = b_ref[...] - mean * scale
        scale_l = jnp.dot(scale, a_ref[...], preferred_element_type=jnp.float32)
        shift_l = jnp.dot(shift, a_ref[...], preferred_element_type=jnp.float32)
        return _lrelu(y * scale_l + shift_l)

    # ---- conv stack: everything stays in VMEM, transposed layout -----------
    x = xt_ref[...]                                                 # bf16
    for lt_ref, tt_ref, a_ref, at_ref, g_ref, b_ref in conv_layers:
        y = conv_taps(x, lt_ref, tt_ref)
        if a_ref is None:
            y = _lrelu(y)                                           # conv1
        else:
            y = bn_lrelu(y, a_ref, at_ref, g_ref, b_ref)            # conv2..4
        x = y.astype(jnp.bfloat16)
    # x: (N*OW4, OC4*OH4) bf16 -- conv4 output after BN + leaky-relu.

    # ---- flatten + lin1 (folded via per-ow weight slices) -------------------
    acc = None
    for ow in range(qt_ref.shape[0]):
        sel = jnp.dot(qt_ref[ow], x, preferred_element_type=jnp.float32)  # (B, OC*OH)
        t = jnp.dot(sel.astype(jnp.bfloat16), v_ref[ow],
                    preferred_element_type=jnp.float32)                   # (B, nz)
        acc = t if acc is None else acc + t
    x_lin = acc + lin1_b_ref[...]
    x_out_ref[...] = x_lin

    # ---- L-layer LSTM, seq_len == 1 (gates pre-permuted to i|f|o|g) --------
    layer_in = x_lin
    for l in range(L):
        wih_ref, whh_ref, bl_ref = lstm_refs[l]
        h_prev = h_ref[l]
        c_prev = c_ref[l]
        gates = (jnp.dot(layer_in.astype(jnp.bfloat16), wih_ref[...],
                         preferred_element_type=jnp.float32)
                 + jnp.dot(h_prev.astype(jnp.bfloat16), whh_ref[...],
                           preferred_element_type=jnp.float32)
                 + bl_ref[...])                                      # (B, 4H)
        sig = jax.nn.sigmoid(gates[:, :3 * H])                       # i | f | o
        i_g = sig[:, 0:H]
        f_g = sig[:, H:2 * H]
        o_g = sig[:, 2 * H:3 * H]
        g_g = jnp.tanh(gates[:, 3 * H:])
        c_new = f_g * c_prev + i_g * g_g
        h_new = o_g * jnp.tanh(c_new)
        h_out_ref[l] = h_new
        c_out_ref[l] = c_new
        layer_in = h_new

    # ---- leaky-relu + lin2 ---------------------------------------------------
    m = _lrelu(layer_in)
    m_out_ref[...] = jnp.dot(m.astype(jnp.bfloat16), lin2_w_ref[...],
                             preferred_element_type=jnp.float32) + lin2_b_ref[...]


# --------------------------------------------------------------------------
# One-time host-side preparation of the constant gather / weight matrices
# --------------------------------------------------------------------------
def _conv_gather_mats(w, hw, batch):
    """Per-tap matrices for a 4x4 / stride-2 / pad-1 conv on an hw x hw input.

    lt[dj] : (C*H, OC*OH)  conv weights fused with the stride-2 row gather
    tt[dj] : (N*OW, N*W)   0/1 stride-2 column gather (block-diag over batch)
    so that out^T = sum_dj tt[dj] @ x^T @ lt[dj]  equals conv2d(x, w, 2, 1)
    in (rows=(n, ow), lanes=(oc, oh)) layout.
    """
    OC, C, KH, KW = w.shape
    Hs = Ws = hw
    OH, OW = Hs // 2, Ws // 2
    hh = jnp.arange(Hs)
    oh = jnp.arange(OH)
    di = hh[:, None] - 2 * oh[None, :] + 1                     # (H, OH)
    valid = ((di >= 0) & (di < KH)).astype(w.dtype)
    dic = jnp.clip(di, 0, KH - 1)
    ww_ = jnp.arange(Ws)
    ow_ = jnp.arange(OW)
    eye_n = jnp.eye(batch, dtype=jnp.float32)
    lt_list, tt_list = [], []
    for dj in range(KW):
        wdj = w[:, :, :, dj]                                   # (OC, C, KH)
        lt = wdj[:, :, dic] * valid[None, None, :, :]          # (OC, C, H, OH)
        lt = jnp.transpose(lt, (1, 2, 0, 3)).reshape(C * Hs, OC * OH)
        lt_list.append(lt)
        sel = (ww_[None, :] == (2 * ow_[:, None] + dj - 1)).astype(jnp.float32)
        tt_list.append(jnp.kron(eye_n, sel))                   # (N*OW, N*W)
    return (jnp.stack(lt_list).astype(jnp.bfloat16),
            jnp.stack(tt_list).astype(jnp.bfloat16))


def init_params(key, p):
    nc, ngf, nz = p["nc"], p["ngf"], p["nz"]
    H, L = p["LSTM_hidden"], p["LSTM_layers"]
    keys = iter(jax.random.split(key, 64))

    def nrm(shape, s=0.05):
        return (s * jax.random.normal(next(keys), shape)).astype(jnp.float32)

    params = {
        "conv1_w": nrm((ngf, nc, 4, 4)),
        "conv2_w": nrm((ngf * 2, ngf, 4, 4)),
        "conv3_w": nrm((ngf * 4, ngf * 2, 4, 4)),
        "conv4_w": nrm((ngf * 8, ngf * 4, 4, 4)),
        "bn2_g": jnp.ones((ngf * 2,), jnp.float32), "bn2_b": jnp.zeros((ngf * 2,), jnp.float32),
        "bn3_g": jnp.ones((ngf * 4,), jnp.float32), "bn3_b": jnp.zeros((ngf * 4,), jnp.float32),
        "bn4_g": jnp.ones((ngf * 8,), jnp.float32), "bn4_b": jnp.zeros((ngf * 8,), jnp.float32),
        "lin1_w": nrm((nz, ngf * 8 * 4 * 4)), "lin1_b": nrm((nz,)),
        "lin2_w": nrm((nz, H)), "lin2_b": nrm((nz,)),
        "lstm": [],
    }
    for layer in range(L):
        in_dim = nz if layer == 0 else H
        params["lstm"].append({
            "w_ih": nrm((4 * H, in_dim)),
            "w_hh": nrm((4 * H, H)),
            "b_ih": nrm((4 * H,)),
            "b_hh": nrm((4 * H,)),
        })
    return params


def prepare_params(params, hp, batch, input_hw=64):
    nz = hp["nz"]
    H, L = hp["LSTM_hidden"], hp["LSTM_layers"]

    conv_ws = [params["conv1_w"], params["conv2_w"],
               params["conv3_w"], params["conv4_w"]]
    lt, tt = [], []
    hw = input_hw
    for w in conv_ws:
        l_m, t_m = _conv_gather_mats(w, hw, batch)
        lt.append(l_m)
        tt.append(t_m)
        hw //= 2
    final_hw = hw                                    # conv4 output spatial (= 4)

    bn = []
    for i, name in enumerate(("2", "3", "4")):
        oc = conv_ws[i + 1].shape[0]
        oh = input_hw // (2 ** (i + 2))
        a = jnp.kron(jnp.eye(oc, dtype=jnp.float32), jnp.ones((1, oh), jnp.float32))
        bn.append({
            "a": a, "at": a.T,
            "gamma": params["bn" + name + "_g"].reshape(1, -1).astype(jnp.float32),
            "beta": params["bn" + name + "_b"].reshape(1, -1).astype(jnp.float32),
        })

    # flatten + lin1 folded: per-ow slices of lin1_w against the transposed
    # (rows=(n, ow), lanes=(oc, oh)) conv4 output.
    oc4 = conv_ws[3].shape[0]
    oh4 = ow4 = final_hw
    w1 = params["lin1_w"].reshape(nz, oc4, oh4, ow4)
    eye_n = jnp.eye(batch, dtype=jnp.float32)
    qt_list, v_list = [], []
    for ow in range(ow4):
        onehot = (jnp.arange(ow4)[None, :] == ow).astype(jnp.float32)   # (1, OW4)
        qt_list.append(jnp.kron(eye_n, onehot))                         # (N, N*OW4)
        v_list.append(jnp.transpose(w1[:, :, :, ow], (1, 2, 0)).reshape(oc4 * oh4, nz))
    qt = jnp.stack(qt_list).astype(jnp.bfloat16)
    v = jnp.stack(v_list).astype(jnp.bfloat16)

    # LSTM: permute PyTorch gate order i|f|g|o -> i|f|o|g, fuse biases, bf16.
    perm = jnp.concatenate([jnp.arange(0, H), jnp.arange(H, 2 * H),
                            jnp.arange(3 * H, 4 * H), jnp.arange(2 * H, 3 * H)])
    lstm = []
    for lp in params["lstm"]:
        lstm.append({
            "wih_T": lp["w_ih"][perm].T.astype(jnp.bfloat16),
            "whh_T": lp["w_hh"][perm].T.astype(jnp.bfloat16),
            "b": (lp["b_ih"] + lp["b_hh"])[perm].reshape(1, -1).astype(jnp.float32),
        })

    return {
        "lt": lt, "tt": tt, "bn": bn, "qt": qt, "v": v,
        "lin1_b": params["lin1_b"].reshape(1, -1).astype(jnp.float32),
        "lstm": lstm,
        "lin2_wT": params["lin2_w"].T.astype(jnp.bfloat16),
        "lin2_b": params["lin2_b"].reshape(1, -1).astype(jnp.float32),
    }


# --------------------------------------------------------------------------
# Forward pass: one transpose of the input, one pallas_call, done.
# --------------------------------------------------------------------------
def generator_actor_forward(prep, hp, x_nchw, h, c):
    N, C, Hs, Ws = x_nchw.shape
    nz, H, L = hp["nz"], hp["LSTM_hidden"], hp["LSTM_layers"]

    # Conv activations live in "transposed" layout: rows = (n, w), lanes = (c, h).
    xt0 = jnp.transpose(x_nchw, (0, 3, 1, 2)).reshape(N * Ws, C * Hs).astype(jnp.bfloat16)

    args = [xt0, prep["lt"][0], prep["tt"][0]]
    for i in range(3):
        bnp = prep["bn"][i]
        args += [prep["lt"][i + 1], prep["tt"][i + 1],
                 bnp["a"], bnp["at"], bnp["gamma"], bnp["beta"]]
    args += [prep["qt"], prep["v"], prep["lin1_b"]]
    for lp in prep["lstm"]:
        args += [lp["wih_T"], lp["whh_T"], lp["b"]]
    args += [h, c, prep["lin2_wT"], prep["lin2_b"]]

    x_lin, m, h_out, c_out = pl.pallas_call(
        functools.partial(_generator_actor_kernel, L=L, H=H),
        out_shape=(
            jax.ShapeDtypeStruct((N, nz), jnp.float32),
            jax.ShapeDtypeStruct((N, nz), jnp.float32),
            jax.ShapeDtypeStruct((L, N, H), jnp.float32),
            jax.ShapeDtypeStruct((L, N, H), jnp.float32),
        ),
    )(*args)

    return x_lin.reshape(N, 1, nz), m, h_out, c_out


# --------------------------------------------------------------------------
if __name__ == "__main__":
    hp = {"nc": 3, "ngf": 8, "nz": 16, "LSTM_hidden": 32, "LSTM_layers": 2}
    key = jax.random.PRNGKey(0)
    k_p, k_x, k_h, k_c = jax.random.split(key, 4)

    params = init_params(k_p, hp)

    B = 2
    # input spatial must be 64: four stride-2 convs -> 4x4, matching lin1's
    # expected ngf*8*4*4 input features.
    prep = prepare_params(params, hp, batch=B, input_hw=64)

    x = jax.random.normal(k_x, (B, hp["nc"], 64, 64), jnp.float32)
    h0 = jax.random.normal(k_h, (hp["LSTM_layers"], B, hp["LSTM_hidden"]), jnp.float32)
    c0 = jax.random.normal(k_c, (hp["LSTM_layers"], B, hp["LSTM_hidden"]), jnp.float32)

    fwd = jax.jit(functools.partial(generator_actor_forward, prep, hp))
    x_out, m_out, h_out, c_out = fwd(x, h0, c0)
    jax.block_until_ready((x_out, m_out, h_out, c_out))

    assert x_out.shape == (B, 1, hp["nz"])
    assert m_out.shape == (B, hp["nz"])
    assert h_out.shape == (hp["LSTM_layers"], B, hp["LSTM_hidden"])
    assert c_out.shape == (hp["LSTM_layers"], B, hp["LSTM_hidden"])
    print("KERNEL_OK")
</pallas_src>

<mosaic_0001>
module attributes {stable_mosaic.version = 11 : i64} {
  func.func @_generator_actor_kernel(%arg0: memref<128x192xbf16, #tpu.memory_space<vmem>>, %arg1: memref<4x192x256xbf16, #tpu.memory_space<vmem>>, %arg2: memref<4x64x128xbf16, #tpu.memory_space<vmem>>, %arg3: memref<4x256x256xbf16, #tpu.memory_space<vmem>>, %arg4: memref<4x32x64xbf16, #tpu.memory_space<vmem>>, %arg5: memref<16x256xf32, #tpu.memory_space<vmem>>, %arg6: memref<256x16xf32, #tpu.memory_space<vmem>>, %arg7: memref<1x16xf32, #tpu.memory_space<vmem>>, %arg8: memref<1x16xf32, #tpu.memory_space<vmem>>, %arg9: memref<4x256x256xbf16, #tpu.memory_space<vmem>>, %arg10: memref<4x16x32xbf16, #tpu.memory_space<vmem>>, %arg11: memref<32x256xf32, #tpu.memory_space<vmem>>, %arg12: memref<256x32xf32, #tpu.memory_space<vmem>>, %arg13: memref<1x32xf32, #tpu.memory_space<vmem>>, %arg14: memref<1x32xf32, #tpu.memory_space<vmem>>, %arg15: memref<4x256x256xbf16, #tpu.memory_space<vmem>>, %arg16: memref<4x8x16xbf16, #tpu.memory_space<vmem>>, %arg17: memref<64x256xf32, #tpu.memory_space<vmem>>, %arg18: memref<256x64xf32, #tpu.memory_space<vmem>>, %arg19: memref<1x64xf32, #tpu.memory_space<vmem>>, %arg20: memref<1x64xf32, #tpu.memory_space<vmem>>, %arg21: memref<4x2x8xbf16, #tpu.memory_space<vmem>>, %arg22: memref<4x256x16xbf16, #tpu.memory_space<vmem>>, %arg23: memref<1x16xf32, #tpu.memory_space<vmem>>, %arg24: memref<16x128xbf16, #tpu.memory_space<vmem>>, %arg25: memref<32x128xbf16, #tpu.memory_space<vmem>>, %arg26: memref<1x128xf32, #tpu.memory_space<vmem>>, %arg27: memref<32x128xbf16, #tpu.memory_space<vmem>>, %arg28: memref<32x128xbf16, #tpu.memory_space<vmem>>, %arg29: memref<1x128xf32, #tpu.memory_space<vmem>>, %arg30: memref<2x2x32xf32, #tpu.memory_space<vmem>>, %arg31: memref<2x2x32xf32, #tpu.memory_space<vmem>>, %arg32: memref<32x16xbf16, #tpu.memory_space<vmem>>, %arg33: memref<1x16xf32, #tpu.memory_space<vmem>>, %arg34: memref<2x16xf32, #tpu.memory_space<vmem>>, %arg35: memref<2x16xf32, #tpu.memory_space<vmem>>, %arg36: memref<2x2x32xf32, #tpu.memory_space<vmem>>, %arg37: memref<2x2x32xf32, #tpu.memory_space<vmem>>) attributes {dimension_semantics = [], scalar_prefetch = 0 : i64, scratch_operands = 0 : i64, tpu.core_type = #tpu.core_type<tc>} {
    %c0 = arith.constant 0 : index
    %c0_0 = arith.constant 0 : index
    %0 = vector.load %arg0[%c0, %c0_0] : memref<128x192xbf16, #tpu.memory_space<vmem>>, vector<128x192xbf16>
    %c0_1 = arith.constant 0 : index
    %c0_2 = arith.constant 0 : index
    %c0_3 = arith.constant 0 : index
    %1 = vector.load %arg2[%c0_1, %c0_2, %c0_3] : memref<4x64x128xbf16, #tpu.memory_space<vmem>>, vector<1x64x128xbf16>
    %2 = vector.shape_cast %1 : vector<1x64x128xbf16> to vector<64x128xbf16>
    %cst = arith.constant dense<0.000000e+00> : vector<64x192xf32>
    %3 = tpu.matmul %2, %0, %cst {dimension_numbers = #tpu.dot_dimension_numbers<[1], [0], [0], [1], [0, 0, 1, 1], [], []>} : vector<64x128xbf16>, vector<128x192xbf16>, vector<64x192xf32> -> vector<64x192xf32>
    %4 = arith.truncf %3 : vector<64x192xf32> to vector<64x192xbf16>
    %c0_4 = arith.constant 0 : index
    %c0_5 = arith.constant 0 : index
    %c0_6 = arith.constant 0 : index
    %5 = vector.load %arg1[%c0_4, %c0_5, %c0_6] : memref<4x192x256xbf16, #tpu.memory_space<vmem>>, vector<1x192x256xbf16>
    %6 = vector.shape_cast %5 : vector<1x192x256xbf16> to vector<192x256xbf16>
    %cst_7 = arith.constant dense<0.000000e+00> : vector<64x256xf32>
    %7 = tpu.matmul %4, %6, %cst_7 {dimension_numbers = #tpu.dot_dimension_numbers<[1], [0], [0], [1], [0, 0, 1, 1], [], []>} : vector<64x192xbf16>, vector<192x256xbf16>, vector<64x256xf32> -> vector<64x256xf32>
    %c1 = arith.constant 1 : index
    %c0_8 = arith.constant 0 : index
    %c0_9 = arith.constant 0 : index
    %8 = vector.load %arg2[%c1, %c0_8, %c0_9] : memref<4x64x128xbf16, #tpu.memory_space<vmem>>, vector<1x64x128xbf16>
    %9 = vector.shape_cast %8 : vector<1x64x128xbf16> to vector<64x128xbf16>
    %cst_10 = arith.constant dense<0.000000e+00> : vector<64x192xf32>
    %10 = tpu.matmul %9, %0, %cst_10 {dimension_numbers = #tpu.dot_dimension_numbers<[1], [0], [0], [1], [0, 0, 1, 1], [], []>} : vector<64x128xbf16>, vector<128x192xbf16>, vector<64x192xf32> -> vector<64x192xf32>
    %11 = arith.truncf %10 : vector<64x192xf32> to vector<64x192xbf16>
    %c1_11 = arith.constant 1 : index
    %c0_12 = arith.constant 0 : index
    %c0_13 = arith.constant 0 : index
    %12 = vector.load %arg1[%c1_11, %c0_12, %c0_13] : memref<4x192x256xbf16, #tpu.memory_space<vmem>>, vector<1x192x256xbf16>
    %13 = vector.shape_cast %12 : vector<1x192x256xbf16> to vector<192x256xbf16>
    %cst_14 = arith.constant dense<0.000000e+00> : vector<64x256xf32>
    %14 = tpu.matmul %11, %13, %cst_14 {dimension_numbers = #tpu.dot_dimension_numbers<[1], [0], [0], [1], [0, 0, 1, 1], [], []>} : vector<64x192xbf16>, vector<192x256xbf16>, vector<64x256xf32> -> vector<64x256xf32>
    %15 = arith.addf %7, %14 : vector<64x256xf32>
    %c2 = arith.constant 2 : index
    %c0_15 = arith.constant 0 : index
    %c0_16 = arith.constant 0 : index
    %16 = vector.load %arg2[%c2, %c0_15, %c0_16] : memref<4x64x128xbf16, #tpu.memory_space<vmem>>, vector<1x64x128xbf16>
    %17 = vector.shape_cast %16 : vector<1x64x128xbf16> to vector<64x128xbf16>
    %cst_17 = arith.constant dense<0.000000e+00> : vector<64x192xf32>
    %18 = tpu.matmul %17, %0, %cst_17 {dimension_numbers = #tpu.dot_dimension_numbers<[1], [0], [0], [1], [0, 0, 1, 1], [], []>} : vector<64x128xbf16>, vector<128x192xbf16>, vector<64x192xf32> -> vector<64x192xf32>
    %19 = arith.truncf %18 : vector<64x192xf32> to vector<64x192xbf16>
    %c2_18 = arith.constant 2 : index
    %c0_19 = arith.constant 0 : index
    %c0_20 = arith.constant 0 : index
    %20 = vector.load %arg1[%c2_18, %c0_19, %c0_20] : memref<4x192x256xbf16, #tpu.memory_space<vmem>>, vector<1x192x256xbf16>
    %21 = vector.shape_cast %20 : vector<1x192x256xbf16> to vector<192x256xbf16>
    %cst_21 = arith.constant dense<0.000000e+00> : vector<64x256xf32>
    %22 = tpu.matmul %19, %21, %cst_21 {dimension_numbers = #tpu.dot_dimension_numbers<[1], [0], [0], [1], [0, 0, 1, 1], [], []>} : vector<64x192xbf16>, vector<192x256xbf16>, vector<64x256xf32> -> vector<64x256xf32>
    %23 = arith.addf %15, %22 : vector<64x256xf32>
    %c3 = arith.constant 3 : index
    %c0_22 = arith.constant 0 : index
    %c0_23 = arith.constant 0 : index
    %24 = vector.load %arg2[%c3, %c0_22, %c0_23] : memref<4x64x128xbf16, #tpu.memory_space<vmem>>, vector<1x64x128xbf16>
    %25 = vector.shape_cast %24 : vector<1x64x128xbf16> to vector<64x128xbf16>
    %cst_24 = arith.constant dense<0.000000e+00> : vector<64x192xf32>
    %26 = tpu.matmul %25, %0, %cst_24 {dimension_numbers = #tpu.dot_dimension_numbers<[1], [0], [0], [1], [0, 0, 1, 1], [], []>} : vector<64x128xbf16>, vector<128x192xbf16>, vector<64x192xf32> -> vector<64x192xf32>
    %27 = arith.truncf %26 : vector<64x192xf32> to vector<64x192xbf16>
    %c3_25 = arith.constant 3 : index
    %c0_26 = arith.constant 0 : index
    %c0_27 = arith.constant 0 : index
    %28 = vector.load %arg1[%c3_25, %c0_26, %c0_27] : memref<4x192x256xbf16, #tpu.memory_space<vmem>>, vector<1x192x256xbf16>
    %29 = vector.shape_cast %28 : vector<1x192x256xbf16> to vector<192x256xbf16>
    %cst_28 = arith.constant dense<0.000000e+00> : vector<64x256xf32>
    %30 = tpu.matmul %27, %29, %cst_28 {dimension_numbers = #tpu.dot_dimension_numbers<[1], [0], [0], [1], [0, 0, 1, 1], [], []>} : vector<64x192xbf16>, vector<192x256xbf16>, vector<64x256xf32> -> vector<64x256xf32>
    %31 = arith.addf %23, %30 : vector<64x256xf32>
    %cst_29 = arith.constant 0.000000e+00 : f32
    %32 = vector.broadcast %cst_29 : f32 to vector<64x256xf32>
    %33 = arith.cmpf oge, %31, %32 : vector<64x256xf32>
    %cst_30 = arith.constant 2.000000e-01 : f32
    %34 = vector.broadcast %cst_30 : f32 to vector<64x256xf32>
    %35 = arith.mulf %34, %31 : vector<64x256xf32>
    %36 = arith.select %33, %31, %35 : vector<64x256xi1>, vector<64x256xf32>
    %37 = arith.truncf %36 : vector<64x256xf32> to vector<64x256xbf16>
    %c0_31 = arith.constant 0 : index
    %c0_32 = arith.constant 0 : index
    %c0_33 = arith.constant 0 : index
    %38 = vector.load %arg4[%c0_31, %c0_32, %c0_33] : memref<4x32x64xbf16, #tpu.memory_space<vmem>>, vector<1x32x64xbf16>
    %39 = vector.shape_cast %38 : vector<1x32x64xbf16> to vector<32x64xbf16>
    %cst_34 = arith.constant dense<0.000000e+00> : vector<32x256xf32>
    %40 = tpu.matmul %39, %37, %cst_34 {dimension_numbers = #tpu.dot_dimension_numbers<[1], [0], [0], [1], [0, 0, 1, 1], [], []>} : vector<32x64xbf16>, vector<64x256xbf16>, vector<32x256xf32> -> vector<32x256xf32>
    %41 = arith.truncf %40 : vector<32x256xf32> to vector<32x256xbf16>
    %c0_35 = arith.constant 0 : index
    %c0_36 = arith.constant 0 : index
    %c0_37 = arith.constant 0 : index
    %42 = vector.load %arg3[%c0_35, %c0_36, %c0_37] : memref<4x256x256xbf16, #tpu.memory_space<vmem>>, vector<1x256x256xbf16>
    %43 = vector.shape_cast %42 : vector<1x256x256xbf16> to vector<256x256xbf16>
    %cst_38 = arith.constant dense<0.000000e+00> : vector<32x256xf32>
    %44 = tpu.matmul %41, %43, %cst_38 {dimension_numbers = #tpu.dot_dimension_numbers<[1], [0], [0], [1], [0, 0, 1, 1], [], []>} : vector<32x256xbf16>, vector<256x256xbf16>, vector<32x256xf32> -> vector<32x256xf32>
    %c1_39 = arith.constant 1 : index
    %c0_40 = arith.constant 0 : index
    %c0_41 = arith.constant 0 : index
    %45 = vector.load %arg4[%c1_39, %c0_40, %c0_41] : memref<4x32x64xbf16, #tpu.memory_space<vmem>>, vector<1x32x64xbf16>
    %46 = vector.shape_cast %45 : vector<1x32x64xbf16> to vector<32x64xbf16>
    %cst_42 = arith.constant dense<0.000000e+00> : vector<32x256xf32>
    %47 = tpu.matmul %46, %37, %cst_42 {dimension_numbers = #tpu.dot_dimension_numbers<[1], [0], [0], [1], [0, 0, 1, 1], [], []>} : vector<32x64xbf16>, vector<64x256xbf16>, vector<32x256xf32> -> vector<32x256xf32>
    %48 = arith.truncf %47 : vector<32x256xf32> to vector<32x256xbf16>
    %c1_43 = arith.constant 1 : index
    %c0_44 = arith.constant 0 : index
    %c0_45 = arith.constant 0 : index
    %49 = vector.load %arg3[%c1_43, %c0_44, %c0_45] : memref<4x256x256xbf16, #tpu.memory_space<vmem>>, vector<1x256x256xbf16>
    %50 = vector.shape_cast %49 : vector<1x256x256xbf16> to vector<256x256xbf16>
    %cst_46 = arith.constant dense<0.000000e+00> : vector<32x256xf32>
    %51 = tpu.matmul %48, %50, %cst_46 {dimension_numbers = #tpu.dot_dimension_numbers<[1], [0], [0], [1], [0, 0, 1, 1], [], []>} : vector<32x256xbf16>, vector<256x256xbf16>, vector<32x256xf32> -> vector<32x256xf32>
    %52 = arith.addf %44, %51 : vector<32x256xf32>
    %c2_47 = arith.constant 2 : index
    %c0_48 = arith.constant 0 : index
    %c0_49 = arith.constant 0 : index
    %53 = vector.load %arg4[%c2_47, %c0_48, %c0_49] : memref<4x32x64xbf16, #tpu.memory_space<vmem>>, vector<1x32x64xbf16>
    %54 = vector.shape_cast %53 : vector<1x32x64xbf16> to vector<32x64xbf16>
    %cst_50 = arith.constant dense<0.000000e+00> : vector<32x256xf32>
    %55 = tpu.matmul %54, %37, %cst_50 {dimension_numbers = #tpu.dot_dimension_numbers<[1], [0], [0], [1], [0, 0, 1, 1], [], []>} : vector<32x64xbf16>, vector<64x256xbf16>, vector<32x256xf32> -> vector<32x256xf32>
    %56 = arith.truncf %55 : vector<32x256xf32> to vector<32x256xbf16>
    %c2_51 = arith.constant 2 : index
    %c0_52 = arith.constant 0 : index
    %c0_53 = arith.constant 0 : index
    %57 = vector.load %arg3[%c2_51, %c0_52, %c0_53] : memref<4x256x256xbf16, #tpu.memory_space<vmem>>, vector<1x256x256xbf16>
    %58 = vector.shape_cast %57 : vector<1x256x256xbf16> to vector<256x256xbf16>
    %cst_54 = arith.constant dense<0.000000e+00> : vector<32x256xf32>
    %59 = tpu.matmul %56, %58, %cst_54 {dimension_numbers = #tpu.dot_dimension_numbers<[1], [0], [0], [1], [0, 0, 1, 1], [], []>} : vector<32x256xbf16>, vector<256x256xbf16>, vector<32x256xf32> -> vector<32x256xf32>
    %60 = arith.addf %52, %59 : vector<32x256xf32>
    %c3_55 = arith.constant 3 : index
    %c0_56 = arith.constant 0 : index
    %c0_57 = arith.constant 0 : index
    %61 = vector.load %arg4[%c3_55, %c0_56, %c0_57] : memref<4x32x64xbf16, #tpu.memory_space<vmem>>, vector<1x32x64xbf16>
    %62 = vector.shape_cast %61 : vector<1x32x64xbf16> to vector<32x64xbf16>
    %cst_58 = arith.constant dense<0.000000e+00> : vector<32x256xf32>
    %63 = tpu.matmul %62, %37, %cst_58 {dimension_numbers = #tpu.dot_dimension_numbers<[1], [0], [0], [1], [0, 0, 1, 1], [], []>} : vector<32x64xbf16>, vector<64x256xbf16>, vector<32x256xf32> -> vector<32x256xf32>
    %64 = arith.truncf %63 : vector<32x256xf32> to vector<32x256xbf16>
    %c3_59 = arith.constant 3 : index
    %c0_60 = arith.constant 0 : index
    %c0_61 = arith.constant 0 : index
    %65 = vector.load %arg3[%c3_59, %c0_60, %c0_61] : memref<4x256x256xbf16, #tpu.memory_space<vmem>>, vector<1x256x256xbf16>
    %66 = vector.shape_cast %65 : vector<1x256x256xbf16> to vector<256x256xbf16>
    %cst_62 = arith.constant dense<0.000000e+00> : vector<32x256xf32>
    %67 = tpu.matmul %64, %66, %cst_62 {dimension_numbers = #tpu.dot_dimension_numbers<[1], [0], [0], [1], [0, 0, 1, 1], [], []>} : vector<32x256xbf16>, vector<256x256xbf16>, vector<32x256xf32> -> vector<32x256xf32>
    %68 = arith.addf %60, %67 : vector<32x256xf32>
    %cst_63 = arith.constant dense<0.000000e+00> : vector<256xf32>
    %69 = vector.multi_reduction <add>, %68, %cst_63 [0] : vector<32x256xf32> to vector<256xf32>
    %70 = vector.shape_cast %69 : vector<256xf32> to vector<1x256xf32>
    %71 = arith.mulf %68, %68 : vector<32x256xf32>
    %cst_64 = arith.constant dense<0.000000e+00> : vector<256xf32>
    %72 = vector.multi_reduction <add>, %71, %cst_64 [0] : vector<32x256xf32> to vector<256xf32>
    %73 = vector.shape_cast %72 : vector<256xf32> to vector<1x256xf32>
    %c0_65 = arith.constant 0 : index
    %c0_66 = arith.constant 0 : index
    %74 = vector.load %arg6[%c0_65, %c0_66] : memref<256x16xf32, #tpu.memory_space<vmem>>, vector<256x16xf32>
    %cst_67 = arith.constant dense<0.000000e+00> : vector<1x16xf32>
    %75 = tpu.matmul %70, %74, %cst_67 {dimension_numbers = #tpu.dot_dimension_numbers<[1], [0], [0], [1], [0, 0, 1, 1], [], []>} : vector<1x256xf32>, vector<256x16xf32>, vector<1x16xf32> -> vector<1x16xf32>
    %c0_68 = arith.constant 0 : index
    %c0_69 = arith.constant 0 : index
    %76 = vector.load %arg6[%c0_68, %c0_69] : memref<256x16xf32, #tpu.memory_space<vmem>>, vector<256x16xf32>
    %cst_70 = arith.constant dense<0.000000e+00> : vector<1x16xf32>
    %77 = tpu.matmul %73, %76, %cst_70 {dimension_numbers = #tpu.dot_dimension_numbers<[1], [0], [0], [1], [0, 0, 1, 1], [], []>} : vector<1x256xf32>, vector<256x16xf32>, vector<1x16xf32> -> vector<1x16xf32>
    %cst_71 = arith.constant 5.120000e+02 : f32
    %78 = vector.broadcast %cst_71 : f32 to vector<1x16xf32>
    %79 = arith.divf %75, %78 : vector<1x16xf32>
    %cst_72 = arith.constant 5.120000e+02 : f32
    %80 = vector.broadcast %cst_72 : f32 to vector<1x16xf32>
    %81 = arith.divf %77, %80 : vector<1x16xf32>
    %82 = arith.mulf %79, %79 : vector<1x16xf32>
    %83 = arith.subf %81, %82 : vector<1x16xf32>
    %c0_73 = arith.constant 0 : index
    %c0_74 = arith.constant 0 : index
    %84 = vector.load %arg7[%c0_73, %c0_74] : memref<1x16xf32, #tpu.memory_space<vmem>>, vector<1x16xf32>
    %cst_75 = arith.constant 9.99999974E-6 : f32
    %85 = vector.broadcast %cst_75 : f32 to vector<1x16xf32>
    %86 = arith.addf %83, %85 : vector<1x16xf32>
    %87 = math.rsqrt %86 : vector<1x16xf32>
    %88 = arith.mulf %84, %87 : vector<1x16xf32>
    %c0_76 = arith.constant 0 : index
    %c0_77 = arith.constant 0 : index
    %89 = vector.load %arg8[%c0_76, %c0_77] : memref<1x16xf32, #tpu.memory_space<vmem>>, vector<1x16xf32>
    %90 = arith.mulf %79, %88 : vector<1x16xf32>
    %91 = arith.subf %89, %90 : vector<1x16xf32>
    %c0_78 = arith.constant 0 : index
    %c0_79 = arith.constant 0 : index
    %92 = vector.load %arg5[%c0_78, %c0_79] : memref<16x256xf32, #tpu.memory_space<vmem>>, vector<16x256xf32>
    %cst_80 = arith.constant dense<0.000000e+00> : vector<1x256xf32>
    %93 = tpu.matmul %88, %92, %cst_80 {dimension_numbers = #tpu.dot_dimension_numbers<[1], [0], [0], [1], [0, 0, 1, 1], [], []>} : vector<1x16xf32>, vector<16x256xf32>, vector<1x256xf32> -> vector<1x256xf32>
    %c0_81 = arith.constant 0 : index
    %c0_82 = arith.constant 0 : index
    %94 = vector.load %arg5[%c0_81, %c0_82] : memref<16x256xf32, #tpu.memory_space<vmem>>, vector<16x256xf32>
    %cst_83 = arith.constant dense<0.000000e+00> : vector<1x256xf32>
    %95 = tpu.matmul %91, %94, %cst_83 {dimension_numbers = #tpu.dot_dimension_numbers<[1], [0], [0], [1], [0, 0, 1, 1], [], []>} : vector<1x16xf32>, vector<16x256xf32>, vector<1x256xf32> -> vector<1x256xf32>
    %96 = vector.broadcast %93 : vector<1x256xf32> to vector<32x256xf32>
    %97 = arith.mulf %68, %96 : vector<32x256xf32>
    %98 = vector.broadcast %95 : vector<1x256xf32> to vector<32x256xf32>
    %99 = arith.addf %97, %98 : vector<32x256xf32>
    %cst_84 = arith.constant 0.000000e+00 : f32
    %100 = vector.broadcast %cst_84 : f32 to vector<32x256xf32>
    %101 = arith.cmpf oge, %99, %100 : vector<32x256xf32>
    %cst_85 = arith.constant 2.000000e-01 : f32
    %102 = vector.broadcast %cst_85 : f32 to vector<32x256xf32>
    %103 = arith.mulf %102, %99 : vector<32x256xf32>
    %104 = arith.select %101, %99, %103 : vector<32x256xi1>, vector<32x256xf32>
    %105 = arith.truncf %104 : vector<32x256xf32> to vector<32x256xbf16>
    %c0_86 = arith.constant 0 : index
    %c0_87 = arith.constant 0 : index
    %c0_88 = arith.constant 0 : index
    %106 = vector.load %arg10[%c0_86, %c0_87, %c0_88] : memref<4x16x32xbf16, #tpu.memory_space<vmem>>, vector<1x16x32xbf16>
    %107 = vector.shape_cast %106 : vector<1x16x32xbf16> to vector<16x32xbf16>
    %cst_89 = arith.constant dense<0.000000e+00> : vector<16x256xf32>
    %108 = tpu.matmul %107, %105, %cst_89 {dimension_numbers = #tpu.dot_dimension_numbers<[1], [0], [0], [1], [0, 0, 1, 1], [], []>} : vector<16x32xbf16>, vector<32x256xbf16>, vector<16x256xf32> -> vector<16x256xf32>
    %109 = arith.truncf %108 : vector<16x256xf32> to vector<16x256xbf16>
    %c0_90 = arith.constant 0 : index
    %c0_91 = arith.constant 0 : index
    %c0_92 = arith.constant 0 : index
    %110 = vector.load %arg9[%c0_90, %c0_91, %c0_92] : memref<4x256x256xbf16, #tpu.memory_space<vmem>>, vector<1x256x256xbf16>
    %111 = vector.shape_cast %110 : vector<1x256x256xbf16> to vector<256x256xbf16>
    %cst_93 = arith.constant dense<0.000000e+00> : vector<16x256xf32>
    %112 = tpu.matmul %109, %111, %cst_93 {dimension_numbers = #tpu.dot_dimension_numbers<[1], [0], [0], [1], [0, 0, 1, 1], [], []>} : vector<16x256xbf16>, vector<256x256xbf16>, vector<16x256xf32> -> vector<16x256xf32>
    %c1_94 = arith.constant 1 : index
    %c0_95 = arith.constant 0 : index
    %c0_96 = arith.constant 0 : index
    %113 = vector.load %arg10[%c1_94, %c0_95, %c0_96] : memref<4x16x32xbf16, #tpu.memory_space<vmem>>, vector<1x16x32xbf16>
    %114 = vector.shape_cast %113 : vector<1x16x32xbf16> to vector<16x32xbf16>
    %cst_97 = arith.constant dense<0.000000e+00> : vector<16x256xf32>
    %115 = tpu.matmul %114, %105, %cst_97 {dimension_numbers = #tpu.dot_dimension_numbers<[1], [0], [0], [1], [0, 0, 1, 1], [], []>} : vector<16x32xbf16>, vector<32x256xbf16>, vector<16x256xf32> -> vector<16x256xf32>
    %116 = arith.truncf %115 : vector<16x256xf32> to vector<16x256xbf16>
    %c1_98 = arith.constant 1 : index
    %c0_99 = arith.constant 0 : index
    %c0_100 = arith.constant 0 : index
    %117 = vector.load %arg9[%c1_98, %c0_99, %c0_100] : memref<4x256x256xbf16, #tpu.memory_space<vmem>>, vector<1x256x256xbf16>
    %118 = vector.shape_cast %117 : vector<1x256x256xbf16> to vector<256x256xbf16>
    %cst_101 = arith.constant dense<0.000000e+00> : vector<16x256xf32>
    %119 = tpu.matmul %116, %118, %cst_101 {dimension_numbers = #tpu.dot_dimension_numbers<[1], [0], [0], [1], [0, 0, 1, 1], [], []>} : vector<16x256xbf16>, vector<256x256xbf16>, vector<16x256xf32> -> vector<16x256xf32>
    %120 = arith.addf %112, %119 : vector<16x256xf32>
    %c2_102 = arith.constant 2 : index
    %c0_103 = arith.constant 0 : index
    %c0_104 = arith.constant 0 : index
    %121 = vector.load %arg10[%c2_102, %c0_103, %c0_104] : memref<4x16x32xbf16, #tpu.memory_space<vmem>>, vector<1x16x32xbf16>
    %122 = vector.shape_cast %121 : vector<1x16x32xbf16> to vector<16x32xbf16>
    %cst_105 = arith.constant dense<0.000000e+00> : vector<16x256xf32>
    %123 = tpu.matmul %122, %105, %cst_105 {dimension_numbers = #tpu.dot_dimension_numbers<[1], [0], [0], [1], [0, 0, 1, 1], [], []>} : vector<16x32xbf16>, vector<32x256xbf16>, vector<16x256xf32> -> vector<16x256xf32>
    %124 = arith.truncf %123 : vector<16x256xf32> to vector<16x256xbf16>
    %c2_106 = arith.constant 2 : index
    %c0_107 = arith.constant 0 : index
    %c0_108 = arith.constant 0 : index
    %125 = vector.load %arg9[%c2_106, %c0_107, %c0_108] : memref<4x256x256xbf16, #tpu.memory_space<vmem>>, vector<1x256x256xbf16>
    %126 = vector.shape_cast %125 : vector<1x256x256xbf16> to vector<256x256xbf16>
    %cst_109 = arith.constant dense<0.000000e+00> : vector<16x256xf32>
    %127 = tpu.matmul %124, %126, %cst_109 {dimension_numbers = #tpu.dot_dimension_numbers<[1], [0], [0], [1], [0, 0, 1, 1], [], []>} : vector<16x256xbf16>, vector<256x256xbf16>, vector<16x256xf32> -> vector<16x256xf32>
    %128 = arith.addf %120, %127 : vector<16x256xf32>
    %c3_110 = arith.constant 3 : index
    %c0_111 = arith.constant 0 : index
    %c0_112 = arith.constant 0 : index
    %129 = vector.load %arg10[%c3_110, %c0_111, %c0_112] : memref<4x16x32xbf16, #tpu.memory_space<vmem>>, vector<1x16x32xbf16>
    %130 = vector.shape_cast %129 : vector<1x16x32xbf16> to vector<16x32xbf16>
    %cst_113 = arith.constant dense<0.000000e+00> : vector<16x256xf32>
    %131 = tpu.matmul %130, %105, %cst_113 {dimension_numbers = #tpu.dot_dimension_numbers<[1], [0], [0], [1], [0, 0, 1, 1], [], []>} : vector<16x32xbf16>, vector<32x256xbf16>, vector<16x256xf32> -> vector<16x256xf32>
    %132 = arith.truncf %131 : vector<16x256xf32> to vector<16x256xbf16>
    %c3_114 = arith.constant 3 : index
    %c0_115 = arith.constant 0 : index
    %c0_116 = arith.constant 0 : index
    %133 = vector.load %arg9[%c3_114, %c0_115, %c0_116] : memref<4x256x256xbf16, #tpu.memory_space<vmem>>, vector<1x256x256xbf16>
    %134 = vector.shape_cast %133 : vector<1x256x256xbf16> to vector<256x256xbf16>
    %cst_117 = arith.constant dense<0.000000e+00> : vector<16x256xf32>
    %135 = tpu.matmul %132, %134, %cst_117 {dimension_numbers = #tpu.dot_dimension_numbers<[1], [0], [0], [1], [0, 0, 1, 1], [], []>} : vector<16x256xbf16>, vector<256x256xbf16>, vector<16x256xf32> -> vector<16x256xf32>
    %136 = arith.addf %128, %135 : vector<16x256xf32>
    %cst_118 = arith.constant dense<0.000000e+00> : vector<256xf32>
    %137 = vector.multi_reduction <add>, %136, %cst_118 [0] : vector<16x256xf32> to vector<256xf32>
    %138 = vector.shape_cast %137 : vector<256xf32> to vector<1x256xf32>
    %139 = arith.mulf %136, %136 : vector<16x256xf32>
    %cst_119 = arith.constant dense<0.000000e+00> : vector<256xf32>
    %140 = vector.multi_reduction <add>, %139, %cst_119 [0] : vector<16x256xf32> to vector<256xf32>
    %141 = vector.shape_cast %140 : vector<256xf32> to vector<1x256xf32>
    %c0_120 = arith.constant 0 : index
    %c0_121 = arith.constant 0 : index
    %142 = vector.load %arg12[%c0_120, %c0_121] : memref<256x32xf32, #tpu.memory_space<vmem>>, vector<256x32xf32>
    %cst_122 = arith.constant dense<0.000000e+00> : vector<1x32xf32>
    %143 = tpu.matmul %138, %142, %cst_122 {dimension_numbers = #tpu.dot_dimension_numbers<[1], [0], [0], [1], [0, 0, 1, 1], [], []>} : vector<1x256xf32>, vector<256x32xf32>, vector<1x32xf32> -> vector<1x32xf32>
    %c0_123 = arith.constant 0 : index
    %c0_124 = arith.constant 0 : index
    %144 = vector.load %arg12[%c0_123, %c0_124] : memref<256x32xf32, #tpu.memory_space<vmem>>, vector<256x32xf32>
    %cst_125 = arith.constant dense<0.000000e+00> : vector<1x32xf32>
    %145 = tpu.matmul %141, %144, %cst_125 {dimension_numbers = #tpu.dot_dimension_numbers<[1], [0], [0], [1], [0, 0, 1, 1], [], []>} : vector<1x256xf32>, vector<256x32xf32>, vector<1x32xf32> -> vector<1x32xf32>
    %cst_126 = arith.constant 1.280000e+02 : f32
    %146 = vector.broadcast %cst_126 : f32 to vector<1x32xf32>
    %147 = arith.divf %143, %146 : vector<1x32xf32>
    %cst_127 = arith.constant 1.280000e+02 : f32
    %148 = vector.broadcast %cst_127 : f32 to vector<1x32xf32>
    %149 = arith.divf %145, %148 : vector<1x32xf32>
    %150 = arith.mulf %147, %147 : vector<1x32xf32>
    %151 = arith.subf %149, %150 : vector<1x32xf32>
    %c0_128 = arith.constant 0 : index
    %c0_129 = arith.constant 0 : index
    %152 = vector.load %arg13[%c0_128, %c0_129] : memref<1x32xf32, #tpu.memory_space<vmem>>, vector<1x32xf32>
    %cst_130 = arith.constant 9.99999974E-6 : f32
    %153 = vector.broadcast %cst_130 : f32 to vector<1x32xf32>
    %154 = arith.addf %151, %153 : vector<1x32xf32>
    %155 = math.rsqrt %154 : vector<1x32xf32>
    %156 = arith.mulf %152, %155 : vector<1x32xf32>
    %c0_131 = arith.constant 0 : index
    %c0_132 = arith.constant 0 : index
    %157 = vector.load %arg14[%c0_131, %c0_132] : memref<1x32xf32, #tpu.memory_space<vmem>>, vector<1x32xf32>
    %158 = arith.mulf %147, %156 : vector<1x32xf32>
    %159 = arith.subf %157, %158 : vector<1x32xf32>
    %c0_133 = arith.constant 0 : index
    %c0_134 = arith.constant 0 : index
    %160 = vector.load %arg11[%c0_133, %c0_134] : memref<32x256xf32, #tpu.memory_space<vmem>>, vector<32x256xf32>
    %cst_135 = arith.constant dense<0.000000e+00> : vector<1x256xf32>
    %161 = tpu.matmul %156, %160, %cst_135 {dimension_numbers = #tpu.dot_dimension_numbers<[1], [0], [0], [1], [0, 0, 1, 1], [], []>} : vector<1x32xf32>, vector<32x256xf32>, vector<1x256xf32> -> vector<1x256xf32>
    %c0_136 = arith.constant 0 : index
    %c0_137 = arith.constant 0 : index
    %162 = vector.load %arg11[%c0_136, %c0_137] : memref<32x256xf32, #tpu.memory_space<vmem>>, vector<32x256xf32>
    %cst_138 = arith.constant dense<0.000000e+00> : vector<1x256xf32>
    %163 = tpu.matmul %159, %162, %cst_138 {dimension_numbers = #tpu.dot_dimension_numbers<[1], [0], [0], [1], [0, 0, 1, 1], [], []>} : vector<1x32xf32>, vector<32x256xf32>, vector<1x256xf32> -> vector<1x256xf32>
    %164 = vector.broadcast %161 : vector<1x256xf32> to vector<16x256xf32>
    %165 = arith.mulf %136, %164 : vector<16x256xf32>
    %166 = vector.broadcast %163 : vector<1x256xf32> to vector<16x256xf32>
    %167 = arith.addf %165, %166 : vector<16x256xf32>
    %cst_139 = arith.constant 0.000000e+00 : f32
    %168 = vector.broadcast %cst_139 : f32 to vector<16x256xf32>
    %169 = arith.cmpf oge, %167, %168 : vector<16x256xf32>
    %cst_140 = arith.constant 2.000000e-01 : f32
    %170 = vector.broadcast %cst_140 : f32 to vector<16x256xf32>
    %171 = arith.mulf %170, %167 : vector<16x256xf32>
    %172 = arith.select %169, %167, %171 : vector<16x256xi1>, vector<16x256xf32>
    %173 = arith.truncf %172 : vector<16x256xf32> to vector<16x256xbf16>
    %c0_141 = arith.constant 0 : index
    %c0_142 = arith.constant 0 : index
    %c0_143 = arith.constant 0 : index
    %174 = vector.load %arg16[%c0_141, %c0_142, %c0_143] : memref<4x8x16xbf16, #tpu.memory_space<vmem>>, vector<1x8x16xbf16>
    %175 = vector.shape_cast %174 : vector<1x8x16xbf16> to vector<8x16xbf16>
    %cst_144 = arith.constant dense<0.000000e+00> : vector<8x256xf32>
    %176 = tpu.matmul %175, %173, %cst_144 {dimension_numbers = #tpu.dot_dimension_numbers<[1], [0], [0], [1], [0, 0, 1, 1], [], []>} : vector<8x16xbf16>, vector<16x256xbf16>, vector<8x256xf32> -> vector<8x256xf32>
    %177 = arith.truncf %176 : vector<8x256xf32> to vector<8x256xbf16>
    %c0_145 = arith.constant 0 : index
    %c0_146 = arith.constant 0 : index
    %c0_147 = arith.constant 0 : index
    %178 = vector.load %arg15[%c0_145, %c0_146, %c0_147] : memref<4x256x256xbf16, #tpu.memory_space<vmem>>, vector<1x256x256xbf16>
    %179 = vector.shape_cast %178 : vector<1x256x256xbf16> to vector<256x256xbf16>
    %cst_148 = arith.constant dense<0.000000e+00> : vector<8x256xf32>
    %180 = tpu.matmul %177, %179, %cst_148 {dimension_numbers = #tpu.dot_dimension_numbers<[1], [0], [0], [1], [0, 0, 1, 1], [], []>} : vector<8x256xbf16>, vector<256x256xbf16>, vector<8x256xf32> -> vector<8x256xf32>
    %c1_149 = arith.constant 1 : index
    %c0_150 = arith.constant 0 : index
    %c0_151 = arith.constant 0 : index
    %181 = vector.load %arg16[%c1_149, %c0_150, %c0_151] : memref<4x8x16xbf16, #tpu.memory_space<vmem>>, vector<1x8x16xbf16>
    %182 = vector.shape_cast %181 : vector<1x8x16xbf16> to vector<8x16xbf16>
    %cst_152 = arith.constant dense<0.000000e+00> : vector<8x256xf32>
    %183 = tpu.matmul %182, %173, %cst_152 {dimension_numbers = #tpu.dot_dimension_numbers<[1], [0], [0], [1], [0, 0, 1, 1], [], []>} : vector<8x16xbf16>, vector<16x256xbf16>, vector<8x256xf32> -> vector<8x256xf32>
    %184 = arith.truncf %183 : vector<8x256xf32> to vector<8x256xbf16>
    %c1_153 = arith.constant 1 : index
    %c0_154 = arith.constant 0 : index
    %c0_155 = arith.constant 0 : index
    %185 = vector.load %arg15[%c1_153, %c0_154, %c0_155] : memref<4x256x256xbf16, #tpu.memory_space<vmem>>, vector<1x256x256xbf16>
    %186 = vector.shape_cast %185 : vector<1x256x256xbf16> to vector<256x256xbf16>
    %cst_156 = arith.constant dense<0.000000e+00> : vector<8x256xf32>
    %187 = tpu.matmul %184, %186, %cst_156 {dimension_numbers = #tpu.dot_dimension_numbers<[1], [0], [0], [1], [0, 0, 1, 1], [], []>} : vector<8x256xbf16>, vector<256x256xbf16>, vector<8x256xf32> -> vector<8x256xf32>
    %188 = arith.addf %180, %187 : vector<8x256xf32>
    %c2_157 = arith.constant 2 : index
    %c0_158 = arith.constant 0 : index
    %c0_159 = arith.constant 0 : index
    %189 = vector.load %arg16[%c2_157, %c0_158, %c0_159] : memref<4x8x16xbf16, #tpu.memory_space<vmem>>, vector<1x8x16xbf16>
    %190 = vector.shape_cast %189 : vector<1x8x16xbf16> to vector<8x16xbf16>
    %cst_160 = arith.constant dense<0.000000e+00> : vector<8x256xf32>
    %191 = tpu.matmul %190, %173, %cst_160 {dimension_numbers = #tpu.dot_dimension_numbers<[1], [0], [0], [1], [0, 0, 1, 1], [], []>} : vector<8x16xbf16>, vector<16x256xbf16>, vector<8x256xf32> -> vector<8x256xf32>
    %192 = arith.truncf %191 : vector<8x256xf32> to vector<8x256xbf16>
    %c2_161 = arith.constant 2 : index
    %c0_162 = arith.constant 0 : index
    %c0_163 = arith.constant 0 : index
    %193 = vector.load %arg15[%c2_161, %c0_162, %c0_163] : memref<4x256x256xbf16, #tpu.memory_space<vmem>>, vector<1x256x256xbf16>
    %194 = vector.shape_cast %193 : vector<1x256x256xbf16> to vector<256x256xbf16>
    %cst_164 = arith.constant dense<0.000000e+00> : vector<8x256xf32>
    %195 = tpu.matmul %192, %194, %cst_164 {dimension_numbers = #tpu.dot_dimension_numbers<[1], [0], [0], [1], [0, 0, 1, 1], [], []>} : vector<8x256xbf16>, vector<256x256xbf16>, vector<8x256xf32> -> vector<8x256xf32>
    %196 = arith.addf %188, %195 : vector<8x256xf32>
    %c3_165 = arith.constant 3 : index
    %c0_166 = arith.constant 0 : index
    %c0_167 = arith.constant 0 : index
    %197 = vector.load %arg16[%c3_165, %c0_166, %c0_167] : memref<4x8x16xbf16, #tpu.memory_space<vmem>>, vector<1x8x16xbf16>
    %198 = vector.shape_cast %197 : vector<1x8x16xbf16> to vector<8x16xbf16>
    %cst_168 = arith.constant dense<0.000000e+00> : vector<8x256xf32>
    %199 = tpu.matmul %198, %173, %cst_168 {dimension_numbers = #tpu.dot_dimension_numbers<[1], [0], [0], [1], [0, 0, 1, 1], [], []>} : vector<8x16xbf16>, vector<16x256xbf16>, vector<8x256xf32> -> vector<8x256xf32>
    %200 = arith.truncf %199 : vector<8x256xf32> to vector<8x256xbf16>
    %c3_169 = arith.constant 3 : index
    %c0_170 = arith.constant 0 : index
    %c0_171 = arith.constant 0 : index
    %201 = vector.load %arg15[%c3_169, %c0_170, %c0_171] : memref<4x256x256xbf16, #tpu.memory_space<vmem>>, vector<1x256x256xbf16>
    %202 = vector.shape_cast %201 : vector<1x256x256xbf16> to vector<256x256xbf16>
    %cst_172 = arith.constant dense<0.000000e+00> : vector<8x256xf32>
    %203 = tpu.matmul %200, %202, %cst_172 {dimension_numbers = #tpu.dot_dimension_numbers<[1], [0], [0], [1], [0, 0, 1, 1], [], []>} : vector<8x256xbf16>, vector<256x256xbf16>, vector<8x256xf32> -> vector<8x256xf32>
    %204 = arith.addf %196, %203 : vector<8x256xf32>
    %cst_173 = arith.constant dense<0.000000e+00> : vector<256xf32>
    %205 = vector.multi_reduction <add>, %204, %cst_173 [0] : vector<8x256xf32> to vector<256xf32>
    %206 = vector.shape_cast %205 : vector<256xf32> to vector<1x256xf32>
    %207 = arith.mulf %204, %204 : vector<8x256xf32>
    %cst_174 = arith.constant dense<0.000000e+00> : vector<256xf32>
    %208 = vector.multi_reduction <add>, %207, %cst_174 [0] : vector<8x256xf32> to vector<256xf32>
    %209 = vector.shape_cast %208 : vector<256xf32> to vector<1x256xf32>
    %c0_175 = arith.constant 0 : index
    %c0_176 = arith.constant 0 : index
    %210 = vector.load %arg18[%c0_175, %c0_176] : memref<256x64xf32, #tpu.memory_space<vmem>>, vector<256x64xf32>
    %cst_177 = arith.constant dense<0.000000e+00> : vector<1x64xf32>
    %211 = tpu.matmul %206, %210, %cst_177 {dimension_numbers = #tpu.dot_dimension_numbers<[1], [0], [0], [1], [0, 0, 1, 1], [], []>} : vector<1x256xf32>, vector<256x64xf32>, vector<1x64xf32> -> vector<1x64xf32>
    %c0_178 = arith.constant 0 : index
    %c0_179 = arith.constant 0 : index
    %212 = vector.load %arg18[%c0_178, %c0_179] : memref<256x64xf32, #tpu.memory_space<vmem>>, vector<256x64xf32>
    %cst_180 = arith.constant dense<0.000000e+00> : vector<1x64xf32>
    %213 = tpu.matmul %209, %212, %cst_180 {dimension_numbers = #tpu.dot_dimension_numbers<[1], [0], [0], [1], [0, 0, 1, 1], [], []>} : vector<1x256xf32>, vector<256x64xf32>, vector<1x64xf32> -> vector<1x64xf32>
    %cst_181 = arith.constant 3.200000e+01 : f32
    %214 = vector.broadcast %cst_181 : f32 to vector<1x64xf32>
    %215 = arith.divf %211, %214 : vector<1x64xf32>
    %cst_182 = arith.constant 3.200000e+01 : f32
    %216 = vector.broadcast %cst_182 : f32 to vector<1x64xf32>
    %217 = arith.divf %213, %216 : vector<1x64xf32>
    %218 = arith.mulf %215, %215 : vector<1x64xf32>
    %219 = arith.subf %217, %218 : vector<1x64xf32>
    %c0_183 = arith.constant 0 : index
    %c0_184 = arith.constant 0 : index
    %220 = vector.load %arg19[%c0_183, %c0_184] : memref<1x64xf32, #tpu.memory_space<vmem>>, vector<1x64xf32>
    %cst_185 = arith.constant 9.99999974E-6 : f32
    %221 = vector.broadcast %cst_185 : f32 to vector<1x64xf32>
    %222 = arith.addf %219, %221 : vector<1x64xf32>
    %223 = math.rsqrt %222 : vector<1x64xf32>
    %224 = arith.mulf %220, %223 : vector<1x64xf32>
    %c0_186 = arith.constant 0 : index
    %c0_187 = arith.constant 0 : index
    %225 = vector.load %arg20[%c0_186, %c0_187] : memref<1x64xf32, #tpu.memory_space<vmem>>, vector<1x64xf32>
    %226 = arith.mulf %215, %224 : vector<1x64xf32>
    %227 = arith.subf %225, %226 : vector<1x64xf32>
    %c0_188 = arith.constant 0 : index
    %c0_189 = arith.constant 0 : index
    %228 = vector.load %arg17[%c0_188, %c0_189] : memref<64x256xf32, #tpu.memory_space<vmem>>, vector<64x256xf32>
    %cst_190 = arith.constant dense<0.000000e+00> : vector<1x256xf32>
    %229 = tpu.matmul %224, %228, %cst_190 {dimension_numbers = #tpu.dot_dimension_numbers<[1], [0], [0], [1], [0, 0, 1, 1], [], []>} : vector<1x64xf32>, vector<64x256xf32>, vector<1x256xf32> -> vector<1x256xf32>
    %c0_191 = arith.constant 0 : index
    %c0_192 = arith.constant 0 : index
    %230 = vector.load %arg17[%c0_191, %c0_192] : memref<64x256xf32, #tpu.memory_space<vmem>>, vector<64x256xf32>
    %cst_193 = arith.constant dense<0.000000e+00> : vector<1x256xf32>
    %231 = tpu.matmul %227, %230, %cst_193 {dimension_numbers = #tpu.dot_dimension_numbers<[1], [0], [0], [1], [0, 0, 1, 1], [], []>} : vector<1x64xf32>, vector<64x256xf32>, vector<1x256xf32> -> vector<1x256xf32>
    %232 = vector.broadcast %229 : vector<1x256xf32> to vector<8x256xf32>
    %233 = arith.mulf %204, %232 : vector<8x256xf32>
    %234 = vector.broadcast %231 : vector<1x256xf32> to vector<8x256xf32>
    %235 = arith.addf %233, %234 : vector<8x256xf32>
    %cst_194 = arith.constant 0.000000e+00 : f32
    %236 = vector.broadcast %cst_194 : f32 to vector<8x256xf32>
    %237 = arith.cmpf oge, %235, %236 : vector<8x256xf32>
    %cst_195 = arith.constant 2.000000e-01 : f32
    %238 = vector.broadcast %cst_195 : f32 to vector<8x256xf32>
    %239 = arith.mulf %238, %235 : vector<8x256xf32>
    %240 = arith.select %237, %235, %239 : vector<8x256xi1>, vector<8x256xf32>
    %241 = arith.truncf %240 : vector<8x256xf32> to vector<8x256xbf16>
    %c0_196 = arith.constant 0 : index
    %c0_197 = arith.constant 0 : index
    %c0_198 = arith.constant 0 : index
    %242 = vector.load %arg21[%c0_196, %c0_197, %c0_198] : memref<4x2x8xbf16, #tpu.memory_space<vmem>>, vector<1x2x8xbf16>
    %243 = vector.shape_cast %242 : vector<1x2x8xbf16> to vector<2x8xbf16>
    %cst_199 = arith.constant dense<0.000000e+00> : vector<2x256xf32>
    %244 = tpu.matmul %243, %241, %cst_199 {dimension_numbers = #tpu.dot_dimension_numbers<[1], [0], [0], [1], [0, 0, 1, 1], [], []>} : vector<2x8xbf16>, vector<8x256xbf16>, vector<2x256xf32> -> vector<2x256xf32>
    %245 = arith.truncf %244 : vector<2x256xf32> to vector<2x256xbf16>
    %c0_200 = arith.constant 0 : index
    %c0_201 = arith.constant 0 : index
    %c0_202 = arith.constant 0 : index
    %246 = vector.load %arg22[%c0_200, %c0_201, %c0_202] : memref<4x256x16xbf16, #tpu.memory_space<vmem>>, vector<1x256x16xbf16>
    %247 = vector.shape_cast %246 : vector<1x256x16xbf16> to vector<256x16xbf16>
    %cst_203 = arith.constant dense<0.000000e+00> : vector<2x16xf32>
    %248 = tpu.matmul %245, %247, %cst_203 {dimension_numbers = #tpu.dot_dimension_numbers<[1], [0], [0], [1], [0, 0, 1, 1], [], []>} : vector<2x256xbf16>, vector<256x16xbf16>, vector<2x16xf32> -> vector<2x16xf32>
    %c1_204 = arith.constant 1 : index
    %c0_205 = arith.constant 0 : index
    %c0_206 = arith.constant 0 : index
    %249 = vector.load %arg21[%c1_204, %c0_205, %c0_206] : memref<4x2x8xbf16, #tpu.memory_space<vmem>>, vector<1x2x8xbf16>
    %250 = vector.shape_cast %249 : vector<1x2x8xbf16> to vector<2x8xbf16>
    %cst_207 = arith.constant dense<0.000000e+00> : vector<2x256xf32>
    %251 = tpu.matmul %250, %241, %cst_207 {dimension_numbers = #tpu.dot_dimension_numbers<[1], [0], [0], [1], [0, 0, 1, 1], [], []>} : vector<2x8xbf16>, vector<8x256xbf16>, vector<2x256xf32> -> vector<2x256xf32>
    %252 = arith.truncf %251 : vector<2x256xf32> to vector<2x256xbf16>
    %c1_208 = arith.constant 1 : index
    %c0_209 = arith.constant 0 : index
    %c0_210 = arith.constant 0 : index
    %253 = vector.load %arg22[%c1_208, %c0_209, %c0_210] : memref<4x256x16xbf16, #tpu.memory_space<vmem>>, vector<1x256x16xbf16>
    %254 = vector.shape_cast %253 : vector<1x256x16xbf16> to vector<256x16xbf16>
    %cst_211 = arith.constant dense<0.000000e+00> : vector<2x16xf32>
    %255 = tpu.matmul %252, %254, %cst_211 {dimension_numbers = #tpu.dot_dimension_numbers<[1], [0], [0], [1], [0, 0, 1, 1], [], []>} : vector<2x256xbf16>, vector<256x16xbf16>, vector<2x16xf32> -> vector<2x16xf32>
    %256 = arith.addf %248, %255 : vector<2x16xf32>
    %c2_212 = arith.constant 2 : index
    %c0_213 = arith.constant 0 : index
    %c0_214 = arith.constant 0 : index
    %257 = vector.load %arg21[%c2_212, %c0_213, %c0_214] : memref<4x2x8xbf16, #tpu.memory_space<vmem>>, vector<1x2x8xbf16>
    %258 = vector.shape_cast %257 : vector<1x2x8xbf16> to vector<2x8xbf16>
    %cst_215 = arith.constant dense<0.000000e+00> : vector<2x256xf32>
    %259 = tpu.matmul %258, %241, %cst_215 {dimension_numbers = #tpu.dot_dimension_numbers<[1], [0], [0], [1], [0, 0, 1, 1], [], []>} : vector<2x8xbf16>, vector<8x256xbf16>, vector<2x256xf32> -> vector<2x256xf32>
    %260 = arith.truncf %259 : vector<2x256xf32> to vector<2x256xbf16>
    %c2_216 = arith.constant 2 : index
    %c0_217 = arith.constant 0 : index
    %c0_218 = arith.constant 0 : index
    %261 = vector.load %arg22[%c2_216, %c0_217, %c0_218] : memref<4x256x16xbf16, #tpu.memory_space<vmem>>, vector<1x256x16xbf16>
    %262 = vector.shape_cast %261 : vector<1x256x16xbf16> to vector<256x16xbf16>
    %cst_219 = arith.constant dense<0.000000e+00> : vector<2x16xf32>
    %263 = tpu.matmul %260, %262, %cst_219 {dimension_numbers = #tpu.dot_dimension_numbers<[1], [0], [0], [1], [0, 0, 1, 1], [], []>} : vector<2x256xbf16>, vector<256x16xbf16>, vector<2x16xf32> -> vector<2x16xf32>
    %264 = arith.addf %256, %263 : vector<2x16xf32>
    %c3_220 = arith.constant 3 : index
    %c0_221 = arith.constant 0 : index
    %c0_222 = arith.constant 0 : index
    %265 = vector.load %arg21[%c3_220, %c0_221, %c0_222] : memref<4x2x8xbf16, #tpu.memory_space<vmem>>, vector<1x2x8xbf16>
    %266 = vector.shape_cast %265 : vector<1x2x8xbf16> to vector<2x8xbf16>
    %cst_223 = arith.constant dense<0.000000e+00> : vector<2x256xf32>
    %267 = tpu.matmul %266, %241, %cst_223 {dimension_numbers = #tpu.dot_dimension_numbers<[1], [0], [0], [1], [0, 0, 1, 1], [], []>} : vector<2x8xbf16>, vector<8x256xbf16>, vector<2x256xf32> -> vector<2x256xf32>
    %268 = arith.truncf %267 : vector<2x256xf32> to vector<2x256xbf16>
    %c3_224 = arith.constant 3 : index
    %c0_225 = arith.constant 0 : index
    %c0_226 = arith.constant 0 : index
    %269 = vector.load %arg22[%c3_224, %c0_225, %c0_226] : memref<4x256x16xbf16, #tpu.memory_space<vmem>>, vector<1x256x16xbf16>
    %270 = vector.shape_cast %269 : vector<1x256x16xbf16> to vector<256x16xbf16>
    %cst_227 = arith.constant dense<0.000000e+00> : vector<2x16xf32>
    %271 = tpu.matmul %268, %270, %cst_227 {dimension_numbers = #tpu.dot_dimension_numbers<[1], [0], [0], [1], [0, 0, 1, 1], [], []>} : vector<2x256xbf16>, vector<256x16xbf16>, vector<2x16xf32> -> vector<2x16xf32>
    %272 = arith.addf %264, %271 : vector<2x16xf32>
    %c0_228 = arith.constant 0 : index
    %c0_229 = arith.constant 0 : index
    %273 = vector.load %arg23[%c0_228, %c0_229] : memref<1x16xf32, #tpu.memory_space<vmem>>, vector<1x16xf32>
    %274 = vector.broadcast %273 : vector<1x16xf32> to vector<2x16xf32>
    %275 = arith.addf %272, %274 : vector<2x16xf32>
    %c0_230 = arith.constant 0 : index
    %c0_231 = arith.constant 0 : index
    %276 = vector.load %arg34[%c0_230, %c0_231] : memref<2x16xf32, #tpu.memory_space<vmem>>, vector<2x16xf32>
    tpu.vector_store %arg34[%c0_230, %c0_231], %275 {strides = array<i32>} : memref<2x16xf32, #tpu.memory_space<vmem>>, vector<2x16xf32>,
    %c0_232 = arith.constant 0 : index
    %c0_233 = arith.constant 0 : index
    %c0_234 = arith.constant 0 : index
    %277 = vector.load %arg30[%c0_232, %c0_233, %c0_234] : memref<2x2x32xf32, #tpu.memory_space<vmem>>, vector<1x2x32xf32>
    %278 = vector.shape_cast %277 : vector<1x2x32xf32> to vector<2x32xf32>
    %c0_235 = arith.constant 0 : index
    %c0_236 = arith.constant 0 : index
    %c0_237 = arith.constant 0 : index
    %279 = vector.load %arg31[%c0_235, %c0_236, %c0_237] : memref<2x2x32xf32, #tpu.memory_space<vmem>>, vector<1x2x32xf32>
    %280 = vector.shape_cast %279 : vector<1x2x32xf32> to vector<2x32xf32>
    %281 = arith.truncf %275 : vector<2x16xf32> to vector<2x16xbf16>
    %c0_238 = arith.constant 0 : index
    %c0_239 = arith.constant 0 : index
    %282 = vector.load %arg24[%c0_238, %c0_239] : memref<16x128xbf16, #tpu.memory_space<vmem>>, vector<16x128xbf16>
    %cst_240 = arith.constant dense<0.000000e+00> : vector<2x128xf32>
    %283 = tpu.matmul %281, %282, %cst_240 {dimension_numbers = #tpu.dot_dimension_numbers<[1], [0], [0], [1], [0, 0, 1, 1], [], []>} : vector<2x16xbf16>, vector<16x128xbf16>, vector<2x128xf32> -> vector<2x128xf32>
    %284 = arith.truncf %278 : vector<2x32xf32> to vector<2x32xbf16>
    %c0_241 = arith.constant 0 : index
    %c0_242 = arith.constant 0 : index
    %285 = vector.load %arg25[%c0_241, %c0_242] : memref<32x128xbf16, #tpu.memory_space<vmem>>, vector<32x128xbf16>
    %cst_243 = arith.constant dense<0.000000e+00> : vector<2x128xf32>
    %286 = tpu.matmul %284, %285, %cst_243 {dimension_numbers = #tpu.dot_dimension_numbers<[1], [0], [0], [1], [0, 0, 1, 1], [], []>} : vector<2x32xbf16>, vector<32x128xbf16>, vector<2x128xf32> -> vector<2x128xf32>
    %287 = arith.addf %283, %286 : vector<2x128xf32>
    %c0_244 = arith.constant 0 : index
    %c0_245 = arith.constant 0 : index
    %288 = vector.load %arg26[%c0_244, %c0_245] : memref<1x128xf32, #tpu.memory_space<vmem>>, vector<1x128xf32>
    %289 = vector.broadcast %288 : vector<1x128xf32> to vector<2x128xf32>
    %290 = arith.addf %287, %289 : vector<2x128xf32>
    %291 = vector.extract_strided_slice %290 {offsets = [0, 0], sizes = [2, 96], strides = [1, 1]} : vector<2x128xf32> to vector<2x96xf32>
    %292 = arith.negf %291 : vector<2x96xf32>
    %293 = math.exp %292 : vector<2x96xf32>
    %cst_246 = arith.constant 1.000000e+00 : f32
    %294 = vector.broadcast %cst_246 : f32 to vector<2x96xf32>
    %295 = arith.addf %294, %293 : vector<2x96xf32>
    %296 = arith.divf %294, %295 : vector<2x96xf32>
    %297 = vector.extract_strided_slice %296 {offsets = [0, 0], sizes = [2, 32], strides = [1, 1]} : vector<2x96xf32> to vector<2x32xf32>
    %298 = vector.extract_strided_slice %296 {offsets = [0, 32], sizes = [2, 32], strides = [1, 1]} : vector<2x96xf32> to vector<2x32xf32>
    %299 = vector.extract_strided_slice %296 {offsets = [0, 64], sizes = [2, 32], strides = [1, 1]} : vector<2x96xf32> to vector<2x32xf32>
    %300 = vector.extract_strided_slice %290 {offsets = [0, 96], sizes = [2, 32], strides = [1, 1]} : vector<2x128xf32> to vector<2x32xf32>
    %301 = math.tanh %300 : vector<2x32xf32>
    %302 = arith.mulf %298, %280 : vector<2x32xf32>
    %303 = arith.mulf %297, %301 : vector<2x32xf32>
    %304 = arith.addf %302, %303 : vector<2x32xf32>
    %305 = math.tanh %304 : vector<2x32xf32>
    %306 = arith.mulf %299, %305 : vector<2x32xf32>
    %c0_247 = arith.constant 0 : index
    %c0_248 = arith.constant 0 : index
    %c0_249 = arith.constant 0 : index
    %307 = vector.load %arg36[%c0_247, %c0_248, %c0_249] : memref<2x2x32xf32, #tpu.memory_space<vmem>>, vector<1x2x32xf32>
    %308 = vector.shape_cast %307 : vector<1x2x32xf32> to vector<2x32xf32>
    %309 = vector.shape_cast %306 : vector<2x32xf32> to vector<1x2x32xf32>
    tpu.vector_store %arg36[%c0_247, %c0_248, %c0_249], %309 {strides = array<i32>} : memref<2x2x32xf32, #tpu.memory_space<vmem>>, vector<1x2x32xf32>,
    %c0_250 = arith.constant 0 : index
    %c0_251 = arith.constant 0 : index
    %c0_252 = arith.constant 0 : index
    %310 = vector.load %arg37[%c0_250, %c0_251, %c0_252] : memref<2x2x32xf32, #tpu.memory_space<vmem>>, vector<1x2x32xf32>
    %311 = vector.shape_cast %310 : vector<1x2x32xf32> to vector<2x32xf32>
    %312 = vector.shape_cast %304 : vector<2x32xf32> to vector<1x2x32xf32>
    tpu.vector_store %arg37[%c0_250, %c0_251, %c0_252], %312 {strides = array<i32>} : memref<2x2x32xf32, #tpu.memory_space<vmem>>, vector<1x2x32xf32>,
    %c1_253 = arith.constant 1 : index
    %c0_254 = arith.constant 0 : index
    %c0_255 = arith.constant 0 : index
    %313 = vector.load %arg30[%c1_253, %c0_254, %c0_255] : memref<2x2x32xf32, #tpu.memory_space<vmem>>, vector<1x2x32xf32>
    %314 = vector.shape_cast %313 : vector<1x2x32xf32> to vector<2x32xf32>
    %c1_256 = arith.constant 1 : index
    %c0_257 = arith.constant 0 : index
    %c0_258 = arith.constant 0 : index
    %315 = vector.load %arg31[%c1_256, %c0_257, %c0_258] : memref<2x2x32xf32, #tpu.memory_space<vmem>>, vector<1x2x32xf32>
    %316 = vector.shape_cast %315 : vector<1x2x32xf32> to vector<2x32xf32>
    %317 = arith.truncf %306 : vector<2x32xf32> to vector<2x32xbf16>
    %c0_259 = arith.constant 0 : index
    %c0_260 = arith.constant 0 : index
    %318 = vector.load %arg27[%c0_259, %c0_260] : memref<32x128xbf16, #tpu.memory_space<vmem>>, vector<32x128xbf16>
    %cst_261 = arith.constant dense<0.000000e+00> : vector<2x128xf32>
    %319 = tpu.matmul %317, %318, %cst_261 {dimension_numbers = #tpu.dot_dimension_numbers<[1], [0], [0], [1], [0, 0, 1, 1], [], []>} : vector<2x32xbf16>, vector<32x128xbf16>, vector<2x128xf32> -> vector<2x128xf32>
    %320 = arith.truncf %314 : vector<2x32xf32> to vector<2x32xbf16>
    %c0_262 = arith.constant 0 : index
    %c0_263 = arith.constant 0 : index
    %321 = vector.load %arg28[%c0_262, %c0_263] : memref<32x128xbf16, #tpu.memory_space<vmem>>, vector<32x128xbf16>
    %cst_264 = arith.constant dense<0.000000e+00> : vector<2x128xf32>
    %322 = tpu.matmul %320, %321, %cst_264 {dimension_numbers = #tpu.dot_dimension_numbers<[1], [0], [0], [1], [0, 0, 1, 1], [], []>} : vector<2x32xbf16>, vector<32x128xbf16>, vector<2x128xf32> -> vector<2x128xf32>
    %323 = arith.addf %319, %322 : vector<2x128xf32>
    %c0_265 = arith.constant 0 : index
    %c0_266 = arith.constant 0 : index
    %324 = vector.load %arg29[%c0_265, %c0_266] : memref<1x128xf32, #tpu.memory_space<vmem>>, vector<1x128xf32>
    %325 = vector.broadcast %324 : vector<1x128xf32> to vector<2x128xf32>
    %326 = arith.addf %323, %325 : vector<2x128xf32>
    %327 = vector.extract_strided_slice %326 {offsets = [0, 0], sizes = [2, 96], strides = [1, 1]} : vector<2x128xf32> to vector<2x96xf32>
    %328 = arith.negf %327 : vector<2x96xf32>
    %329 = math.exp %328 : vector<2x96xf32>
    %cst_267 = arith.constant 1.000000e+00 : f32
    %330 = vector.broadcast %cst_267 : f32 to vector<2x96xf32>
    %331 = arith.addf %330, %329 : vector<2x96xf32>
    %332 = arith.divf %330, %331 : vector<2x96xf32>
    %333 = vector.extract_strided_slice %332 {offsets = [0, 0], sizes = [2, 32], strides = [1, 1]} : vector<2x96xf32> to vector<2x32xf32>
    %334 = vector.extract_strided_slice %332 {offsets = [0, 32], sizes = [2, 32], strides = [1, 1]} : vector<2x96xf32> to vector<2x32xf32>
    %335 = vector.extract_strided_slice %332 {offsets = [0, 64], sizes = [2, 32], strides = [1, 1]} : vector<2x96xf32> to vector<2x32xf32>
    %336 = vector.extract_strided_slice %326 {offsets = [0, 96], sizes = [2, 32], strides = [1, 1]} : vector<2x128xf32> to vector<2x32xf32>
    %337 = math.tanh %336 : vector<2x32xf32>
    %338 = arith.mulf %334, %316 : vector<2x32xf32>
    %339 = arith.mulf %333, %337 : vector<2x32xf32>
    %340 = arith.addf %338, %339 : vector<2x32xf32>
    %341 = math.tanh %340 : vector<2x32xf32>
    %342 = arith.mulf %335, %341 : vector<2x32xf32>
    %c1_268 = arith.constant 1 : index
    %c0_269 = arith.constant 0 : index
    %c0_270 = arith.constant 0 : index
    %343 = vector.load %arg36[%c1_268, %c0_269, %c0_270] : memref<2x2x32xf32, #tpu.memory_space<vmem>>, vector<1x2x32xf32>
    %344 = vector.shape_cast %343 : vector<1x2x32xf32> to vector<2x32xf32>
    %345 = vector.shape_cast %342 : vector<2x32xf32> to vector<1x2x32xf32>
    tpu.vector_store %arg36[%c1_268, %c0_269, %c0_270], %345 {strides = array<i32>} : memref<2x2x32xf32, #tpu.memory_space<vmem>>, vector<1x2x32xf32>,
    %c1_271 = arith.constant 1 : index
    %c0_272 = arith.constant 0 : index
    %c0_273 = arith.constant 0 : index
    %346 = vector.load %arg37[%c1_271, %c0_272, %c0_273] : memref<2x2x32xf32, #tpu.memory_space<vmem>>, vector<1x2x32xf32>
    %347 = vector.shape_cast %346 : vector<1x2x32xf32> to vector<2x32xf32>
    %348 = vector.shape_cast %340 : vector<2x32xf32> to vector<1x2x32xf32>
    tpu.vector_store %arg37[%c1_271, %c0_272, %c0_273], %348 {strides = array<i32>} : memref<2x2x32xf32, #tpu.memory_space<vmem>>, vector<1x2x32xf32>,
    %cst_274 = arith.constant 0.000000e+00 : f32
    %349 = vector.broadcast %cst_274 : f32 to vector<2x32xf32>
    %350 = arith.cmpf oge, %342, %349 : vector<2x32xf32>
    %cst_275 = arith.constant 2.000000e-01 : f32
    %351 = vector.broadcast %cst_275 : f32 to vector<2x32xf32>
    %352 = arith.mulf %351, %342 : vector<2x32xf32>
    %353 = arith.select %350, %342, %352 : vector<2x32xi1>, vector<2x32xf32>
    %354 = arith.truncf %353 : vector<2x32xf32> to vector<2x32xbf16>
    %c0_276 = arith.constant 0 : index
    %c0_277 = arith.constant 0 : index
    %355 = vector.load %arg32[%c0_276, %c0_277] : memref<32x16xbf16, #tpu.memory_space<vmem>>, vector<32x16xbf16>
    %cst_278 = arith.constant dense<0.000000e+00> : vector<2x16xf32>
    %356 = tpu.matmul %354, %355, %cst_278 {dimension_numbers = #tpu.dot_dimension_numbers<[1], [0], [0], [1], [0, 0, 1, 1], [], []>} : vector<2x32xbf16>, vector<32x16xbf16>, vector<2x16xf32> -> vector<2x16xf32>
    %c0_279 = arith.constant 0 : index
    %c0_280 = arith.constant 0 : index
    %357 = vector.load %arg33[%c0_279, %c0_280] : memref<1x16xf32, #tpu.memory_space<vmem>>, vector<1x16xf32>
    %358 = vector.broadcast %357 : vector<1x16xf32> to vector<2x16xf32>
    %359 = arith.addf %356, %358 : vector<2x16xf32>
    %c0_281 = arith.constant 0 : index
    %c0_282 = arith.constant 0 : index
    %360 = vector.load %arg35[%c0_281, %c0_282] : memref<2x16xf32, #tpu.memory_space<vmem>>, vector<2x16xf32>
    tpu.vector_store %arg35[%c0_281, %c0_282], %359 {strides = array<i32>} : memref<2x16xf32, #tpu.memory_space<vmem>>, vector<2x16xf32>,
    return
  }
}

</mosaic_0001>

<llo_original>
// kernel: generator_actor_forward.1
$region0: #{generator_actor_forward.1}
  #allocation0 [shape = 'u32[]', space=smem, size = 0x4, offset = 0x4, fixed_abs, tag = 'smem constant byte address 0x4 - core index']
  #allocation1 [shape = 'u32[144,128]{1,0:T(1,128)}', space=vmem, size = 0x12000, scoped, tag = 'internal scratch']
  %s0 = inlined_call_operand.smem [shape: u32[38], index: -1, kind: input, shape index: {}]
  %s1 = sld [smem:[%s0]]
  %s2 = scalar_lea.smem %s0, 1
  %s3 = sld [smem:[%s2]]
  %s4 = scalar_lea.smem %s0, 2
  %s5 = sld [smem:[%s4]]
  %s6 = scalar_lea.smem %s0, 3
  %s7 = sld [smem:[%s6]]
  %s8 = scalar_lea.smem %s0, 4
  %s9 = sld [smem:[%s8]]
  %s10 = scalar_lea.smem %s0, 5
  %s11 = sld [smem:[%s10]]
  %s12 = scalar_lea.smem %s0, 6
  %s13 = sld [smem:[%s12]]
  %s14 = scalar_lea.smem %s0, 7
  %s15 = sld [smem:[%s14]]
  %s16 = scalar_lea.smem %s0, 8
  %s17 = sld [smem:[%s16]]
  %s18 = scalar_lea.smem %s0, 9
  %s19 = sld [smem:[%s18]]
  %s20 = scalar_lea.smem %s0, 10
  %s21 = sld [smem:[%s20]]
  %s22 = scalar_lea.smem %s0, 11
  %s23 = sld [smem:[%s22]]
  %s24 = scalar_lea.smem %s0, 12
  %s25 = sld [smem:[%s24]]
  %s26 = scalar_lea.smem %s0, 13
  %s27 = sld [smem:[%s26]]
  %s28 = scalar_lea.smem %s0, 14
  %s29 = sld [smem:[%s28]]
  %s30 = scalar_lea.smem %s0, 15
  %s31 = sld [smem:[%s30]]
  %s32 = scalar_lea.smem %s0, 16
  %s33 = sld [smem:[%s32]]
  %s34 = scalar_lea.smem %s0, 17
  %s35 = sld [smem:[%s34]]
  %s36 = scalar_lea.smem %s0, 18
  %s37 = sld [smem:[%s36]]
  %s38 = scalar_lea.smem %s0, 19
  %s39 = sld [smem:[%s38]]
  %s40 = scalar_lea.smem %s0, 20
  %s41 = sld [smem:[%s40]]
  %s42 = scalar_lea.smem %s0, 21
  %s43 = sld [smem:[%s42]]
  %s44 = scalar_lea.smem %s0, 22
  %s45 = sld [smem:[%s44]]
  %s46 = scalar_lea.smem %s0, 23
  %s47 = sld [smem:[%s46]]
  %s48 = scalar_lea.smem %s0, 24
  %s49 = sld [smem:[%s48]]
  %s50 = scalar_lea.smem %s0, 25
  %s51 = sld [smem:[%s50]]
  %s52 = scalar_lea.smem %s0, 26
  %s53 = sld [smem:[%s52]]
  %s54 = scalar_lea.smem %s0, 27
  %s55 = sld [smem:[%s54]]
  %s56 = scalar_lea.smem %s0, 28
  %s57 = sld [smem:[%s56]]
  %s58 = scalar_lea.smem %s0, 29
  %s59 = sld [smem:[%s58]]
  %s60 = scalar_lea.smem %s0, 30
  %s61 = sld [smem:[%s60]]
  %s62 = scalar_lea.smem %s0, 31
  %s63 = sld [smem:[%s62]]
  %s64 = scalar_lea.smem %s0, 32
  %s65 = sld [smem:[%s64]]
  %s66 = scalar_lea.smem %s0, 33
  %s67 = sld [smem:[%s66]]
  %s68 = scalar_lea.smem %s0, 34
  %s69 = sld [smem:[%s68]]
  %s70 = scalar_lea.smem %s0, 35
  %s71 = sld [smem:[%s70]]
  %s72 = scalar_lea.smem %s0, 36
  %s73 = sld [smem:[%s72]]
  %s74 = scalar_lea.smem %s0, 37
  %s75 = sld [smem:[%s74]]
  %76 = xla_tuple %s69, %s71, %s73, %s75
  %s77 = sld [smem:[#allocation0]]
  $region170: #{generator_actor_forward.1} parent=0
    _
  %s79 = ssub.s32 1, %s77
  %s80 = scalar_select 0, %s79, %s77
  $region1: #{generator_actor_forward.1} parent=0
    #allocation2 [shape = 'u8[1024]{0}', space=vmem, size = 0x400, scoped, tag = 'output window, operand 0, single buffered']
    #allocation3 [shape = 's32[1]{0}', space=sflag, size = 0x4, scoped, tag = 'scoped memory for generator_actor_forward.1']
    #allocation4 [shape = 'u8[1024]{0}', space=vmem, size = 0x400, scoped, tag = 'output window, operand 1, single buffered']
    #allocation5 [shape = 's32[1]{0}', space=sflag, size = 0x4, scoped, tag = 'scoped memory for generator_actor_forward.1']
    #allocation6 [shape = 'u8[2048]{0}', space=vmem, size = 0x800, scoped, tag = 'output window, operand 2, single buffered']
    #allocation7 [shape = 'u8[2048]{0}', space=vmem, size = 0x800, scoped, tag = 'output window, operand 3, single buffered']
    #allocation8 [shape = 's32[1]{0}', space=sflag, size = 0x4, scoped, tag = 'scoped memory for generator_actor_forward.1']
    %81 = vsyncpa [#allocation3], 0
    %82 = vsyncpa [#allocation5], 0
    %83 = vsyncpa [#allocation8], 0
    // Predicated region
    $region2: #{generator_actor_forward.1} parent=1 // pred_check
      _
    $region3: #{generator_actor_forward.1} parent=1 // pred_check_branch
      %85 = sbr.rel (0) target = $region5
    $region4: #{generator_actor_forward.1} parent=1 // pred_region
      _
    $region5: #{generator_actor_forward.1} parent=1 // pred_fallthru
      _
    // Predicated region
    $region6: #{generator_actor_forward.1} parent=1 // pred_check
      _
    $region7: #{generator_actor_forward.1} parent=1 // pred_check_branch
      %87 = sbr.rel (0) target = $region9
    $region8: #{generator_actor_forward.1} parent=1 // pred_region
      _
    $region9: #{generator_actor_forward.1} parent=1 // pred_fallthru
      _
    // Predicated region
    $region10: #{generator_actor_forward.1} parent=1 // pred_check
      _
    $region11: #{generator_actor_forward.1} parent=1 // pred_check_branch
      %89 = sbr.rel (0) target = $region13
    $region12: #{generator_actor_forward.1} parent=1 // pred_region
      _
    $region13: #{generator_actor_forward.1} parent=1 // pred_fallthru
      _
    // Predicated region
    $region14: #{generator_actor_forward.1} parent=1 // pred_check
      _
    $region15: #{generator_actor_forward.1} parent=1 // pred_check_branch
      %91 = sbr.rel (0) target = $region17
    $region16: #{generator_actor_forward.1} parent=1 // pred_region
      _
    $region17: #{generator_actor_forward.1} parent=1 // pred_fallthru
      _
    // Predicated region
    $region18: #{generator_actor_forward.1} parent=1 // pred_check
      _
    $region19: #{generator_actor_forward.1} parent=1 // pred_check_branch
      %93 = sbr.rel (0) target = $region21
    $region20: #{generator_actor_forward.1} parent=1 // pred_region
      _
    $region21: #{generator_actor_forward.1} parent=1 // pred_fallthru
      _
    // Predicated region
    $region22: #{generator_actor_forward.1} parent=1 // pred_check
      _
    $region23: #{generator_actor_forward.1} parent=1 // pred_check_branch
      %95 = sbr.rel (0) target = $region25
    $region24: #{generator_actor_forward.1} parent=1 // pred_region
      _
    $region25: #{generator_actor_forward.1} parent=1 // pred_fallthru
      _
    // Predicated region
    $region26: #{generator_actor_forward.1} parent=1 // pred_check
      _
    $region27: #{generator_actor_forward.1} parent=1 // pred_check_branch
      %97 = sbr.rel (0) target = $region29
    $region28: #{generator_actor_forward.1} parent=1 // pred_region
      _
    $region29: #{generator_actor_forward.1} parent=1 // pred_fallthru
      _
    // Predicated region
    $region30: #{generator_actor_forward.1} parent=1 // pred_check
      _
    $region31: #{generator_actor_forward.1} parent=1 // pred_check_branch
      %99 = sbr.rel (0) target = $region33
    $region32: #{generator_actor_forward.1} parent=1 // pred_region
      _
    $region33: #{generator_actor_forward.1} parent=1 // pred_fallthru
      _
    // Predicated region
    $region34: #{generator_actor_forward.1} parent=1 // pred_check
      _
    $region35: #{generator_actor_forward.1} parent=1 // pred_check_branch
      %101 = sbr.rel (0) target = $region37
    $region36: #{generator_actor_forward.1} parent=1 // pred_region
      _
    $region37: #{generator_actor_forward.1} parent=1 // pred_fallthru
      _
    // Predicated region
    $region38: #{generator_actor_forward.1} parent=1 // pred_check
      _
    $region39: #{generator_actor_forward.1} parent=1 // pred_check_branch
      %103 = sbr.rel (0) target = $region41
    $region40: #{generator_actor_forward.1} parent=1 // pred_region
      _
    $region41: #{generator_actor_forward.1} parent=1 // pred_fallthru
      _
    // Predicated region
    $region42: #{generator_actor_forward.1} parent=1 // pred_check
      _
    $region43: #{generator_actor_forward.1} parent=1 // pred_check_branch
      %105 = sbr.rel (0) target = $region45
    $region44: #{generator_actor_forward.1} parent=1 // pred_region
      _
    $region45: #{generator_actor_forward.1} parent=1 // pred_fallthru
      _
    // Predicated region
    $region46: #{generator_actor_forward.1} parent=1 // pred_check
      _
    $region47: #{generator_actor_forward.1} parent=1 // pred_check_branch
      %107 = sbr.rel (0) target = $region49
    $region48: #{generator_actor_forward.1} parent=1 // pred_region
      _
    $region49: #{generator_actor_forward.1} parent=1 // pred_fallthru
      _
    // Predicated region
    $region50: #{generator_actor_forward.1} parent=1 // pred_check
      _
    $region51: #{generator_actor_forward.1} parent=1 // pred_check_branch
      %109 = sbr.rel (0) target = $region53
    $region52: #{generator_actor_forward.1} parent=1 // pred_region
      _
    $region53: #{generator_actor_forward.1} parent=1 // pred_fallthru
      _
    // Predicated region
    $region54: #{generator_actor_forward.1} parent=1 // pred_check
      _
    $region55: #{generator_actor_forward.1} parent=1 // pred_check_branch
      %111 = sbr.rel (0) target = $region57
    $region56: #{generator_actor_forward.1} parent=1 // pred_region
      _
    $region57: #{generator_actor_forward.1} parent=1 // pred_fallthru
      _
    // Predicated region
    $region58: #{generator_actor_forward.1} parent=1 // pred_check
      _
    $region59: #{generator_actor_forward.1} parent=1 // pred_check_branch
      %113 = sbr.rel (0) target = $region61
    $region60: #{generator_actor_forward.1} parent=1 // pred_region
      _
    $region61: #{generator_actor_forward.1} parent=1 // pred_fallthru
      _
    // Predicated region
    $region62: #{generator_actor_forward.1} parent=1 // pred_check
      _
    $region63: #{generator_actor_forward.1} parent=1 // pred_check_branch
      %115 = sbr.rel (0) target = $region65
    $region64: #{generator_actor_forward.1} parent=1 // pred_region
      _
    $region65: #{generator_actor_forward.1} parent=1 // pred_fallthru
      _
    // Predicated region
    $region66: #{generator_actor_forward.1} parent=1 // pred_check
      _
    $region67: #{generator_actor_forward.1} parent=1 // pred_check_branch
      %117 = sbr.rel (0) target = $region69
    $region68: #{generator_actor_forward.1} parent=1 // pred_region
      _
    $region69: #{generator_actor_forward.1} parent=1 // pred_fallthru
      _
    // Predicated region
    $region70: #{generator_actor_forward.1} parent=1 // pred_check
      _
    $region71: #{generator_actor_forward.1} parent=1 // pred_check_branch
      %119 = sbr.rel (0) target = $region73
    $region72: #{generator_actor_forward.1} parent=1 // pred_region
      _
    $region73: #{generator_actor_forward.1} parent=1 // pred_fallthru
      _
    // Predicated region
    $region74: #{generator_actor_forward.1} parent=1 // pred_check
      _
    $region75: #{generator_actor_forward.1} parent=1 // pred_check_branch
      %121 = sbr.rel (0) target = $region77
    $region76: #{generator_actor_forward.1} parent=1 // pred_region
      _
    $region77: #{generator_actor_forward.1} parent=1 // pred_fallthru
      _
    // Predicated region
    $region78: #{generator_actor_forward.1} parent=1 // pred_check
      _
    $region79: #{generator_actor_forward.1} parent=1 // pred_check_branch
      %123 = sbr.rel (0) target = $region81
    $region80: #{generator_actor_forward.1} parent=1 // pred_region
      _
    $region81: #{generator_actor_forward.1} parent=1 // pred_fallthru
      _
    // Predicated region
    $region82: #{generator_actor_forward.1} parent=1 // pred_check
      _
    $region83: #{generator_actor_forward.1} parent=1 // pred_check_branch
      %125 = sbr.rel (0) target = $region85
    $region84: #{generator_actor_forward.1} parent=1 // pred_region
      _
    $region85: #{generator_actor_forward.1} parent=1 // pred_fallthru
      _
    // Predicated region
    $region86: #{generator_actor_forward.1} parent=1 // pred_check
      _
    $region87: #{generator_actor_forward.1} parent=1 // pred_check_branch
      %127 = sbr.rel (0) target = $region89
    $region88: #{generator_actor_forward.1} parent=1 // pred_region
      _
    $region89: #{generator_actor_forward.1} parent=1 // pred_fallthru
      _
    // Predicated region
    $region90: #{generator_actor_forward.1} parent=1 // pred_check
      _
    $region91: #{generator_actor_forward.1} parent=1 // pred_check_branch
      %129 = sbr.rel (0) target = $region93
    $region92: #{generator_actor_forward.1} parent=1 // pred_region
      _
    $region93: #{generator_actor_forward.1} parent=1 // pred_fallthru
      _
    // Predicated region
    $region94: #{generator_actor_forward.1} parent=1 // pred_check
      _
    $region95: #{generator_actor_forward.1} parent=1 // pred_check_branch
      %131 = sbr.rel (0) target = $region97
    $region96: #{generator_actor_forward.1} parent=1 // pred_region
      _
    $region97: #{generator_actor_forward.1} parent=1 // pred_fallthru
      _
    // Predicated region
    $region98: #{generator_actor_forward.1} parent=1 // pred_check
      _
    $region99: #{generator_actor_forward.1} parent=1 // pred_check_branch
      %133 = sbr.rel (0) target = $region101
    $region100: #{generator_actor_forward.1} parent=1 // pred_region
      _
    $region101: #{generator_actor_forward.1} parent=1 // pred_fallthru
      _
    // Predicated region
    $region102: #{generator_actor_forward.1} parent=1 // pred_check
      _
    $region103: #{generator_actor_forward.1} parent=1 // pred_check_branch
      %135 = sbr.rel (0) target = $region105
    $region104: #{generator_actor_forward.1} parent=1 // pred_region
      _
    $region105: #{generator_actor_forward.1} parent=1 // pred_fallthru
      _
    // Predicated region
    $region106: #{generator_actor_forward.1} parent=1 // pred_check
      _
    $region107: #{generator_actor_forward.1} parent=1 // pred_check_branch
      %137 = sbr.rel (0) target = $region109
    $region108: #{generator_actor_forward.1} parent=1 // pred_region
      _
    $region109: #{generator_actor_forward.1} parent=1 // pred_fallthru
      _
    // Predicated region
    $region110: #{generator_actor_forward.1} parent=1 // pred_check
      _
    $region111: #{generator_actor_forward.1} parent=1 // pred_check_branch
      %139 = sbr.rel (0) target = $region113
    $region112: #{generator_actor_forward.1} parent=1 // pred_region
      _
    $region113: #{generator_actor_forward.1} parent=1 // pred_fallthru
      _
    // Predicated region
    $region114: #{generator_actor_forward.1} parent=1 // pred_check
      _
    $region115: #{generator_actor_forward.1} parent=1 // pred_check_branch
      %141 = sbr.rel (0) target = $region117
    $region116: #{generator_actor_forward.1} parent=1 // pred_region
      _
    $region117: #{generator_actor_forward.1} parent=1 // pred_fallthru
      _
    // Predicated region
    $region118: #{generator_actor_forward.1} parent=1 // pred_check
      _
    $region119: #{generator_actor_forward.1} parent=1 // pred_check_branch
      %143 = sbr.rel (0) target = $region121
    $region120: #{generator_actor_forward.1} parent=1 // pred_region
      _
    $region121: #{generator_actor_forward.1} parent=1 // pred_fallthru
      _
    // Predicated region
    $region122: #{generator_actor_forward.1} parent=1 // pred_check
      _
    $region123: #{generator_actor_forward.1} parent=1 // pred_check_branch
      %145 = sbr.rel (0) target = $region125
    $region124: #{generator_actor_forward.1} parent=1 // pred_region
      _
    $region125: #{generator_actor_forward.1} parent=1 // pred_fallthru
      _
    // Predicated region
    $region126: #{generator_actor_forward.1} parent=1 // pred_check
      _
    $region127: #{generator_actor_forward.1} parent=1 // pred_check_branch
      %147 = sbr.rel (0) target = $region129
    $region128: #{generator_actor_forward.1} parent=1 // pred_region
      _
    $region129: #{generator_actor_forward.1} parent=1 // pred_fallthru
      _
    // Predicated region
    $region130: #{generator_actor_forward.1} parent=1 // pred_check
      _
    $region131: #{generator_actor_forward.1} parent=1 // pred_check_branch
      %149 = sbr.rel (0) target = $region133
    $region132: #{generator_actor_forward.1} parent=1 // pred_region
      _
    $region133: #{generator_actor_forward.1} parent=1 // pred_fallthru
      _
    // Predicated region
    $region134: #{generator_actor_forward.1} parent=1 // pred_check
      _
    $region135: #{generator_actor_forward.1} parent=1 // pred_check_branch
      %151 = sbr.rel (0) target = $region137
    $region136: #{generator_actor_forward.1} parent=1 // pred_region
      _
    $region137: #{generator_actor_forward.1} parent=1 // pred_fallthru
      _
    %v153 = vld [vmem:[%s1] sm:$0xff]
    %v154 = vld [vmem:[%s1 + $0x8] sm:$0xff]
    %v155 = vld [vmem:[%s1 + $0x10] sm:$0xff]
    %v156 = vld [vmem:[%s1 + $0x18] sm:$0xff]
    %v157 = vld [vmem:[%s1 + $0x20] sm:$0xff]
    %v158 = vld [vmem:[%s1 + $0x28] sm:$0xff]
    %v159 = vld [vmem:[%s1 + $0x30] sm:$0xff]
    %v160 = vld [vmem:[%s1 + $0x38] sm:$0xff]
    %v161 = vld [vmem:[%s1 + $0x40] sm:$0xff]
    %v162 = vld [vmem:[%s1 + $0x48] sm:$0xff]
    %v163 = vld [vmem:[%s1 + $0x50] sm:$0xff]
    %v164 = vld [vmem:[%s1 + $0x58] sm:$0xff]
    %v165 = vld [vmem:[%s1 + $0x60] sm:$0xff]
    %v166 = vld [vmem:[%s1 + $0x68] sm:$0xff]
    %v167 = vld [vmem:[%s1 + $0x70] sm:$0xff]
    %v168 = vld [vmem:[%s1 + $0x78] sm:$0xff]
    %v169 = vld [vmem:[%s5] sm:$0xf]
    %v170 = vld [vmem:[%s5 + $0x4] sm:$0xf]
    %v171 = vld [vmem:[%s5 + $0x8] sm:$0xf]
    %v172 = vld [vmem:[%s5 + $0xc] sm:$0xf]
    %v173 = vld [vmem:[%s5 + $0x10] sm:$0xf]
    %v174 = vld [vmem:[%s5 + $0x14] sm:$0xf]
    %v175 = vld [vmem:[%s5 + $0x18] sm:$0xf]
    %v176 = vld [vmem:[%s5 + $0x1c] sm:$0xf]
    %v185 = vunpack.c.l.b16 %v169
    %v186 = vunpack.c.l.b16 %v170
    %v187 = vunpack.c.l.b16 %v171
    %v188 = vunpack.c.l.b16 %v172
    %v189 = vunpack.c.l.b16 %v173
    %v190 = vunpack.c.l.b16 %v174
    %v191 = vunpack.c.l.b16 %v175
    %v192 = vunpack.c.l.b16 %v176
    %v193 = vpack.c.b16 %v186, %v185
    %v194 = vpack.c.b16 %v188, %v187
    %v195 = vpack.c.b16 %v190, %v189
    %v196 = vpack.c.b16 %v192, %v191
    %v217 = vunpack.c.l.b16 %v153
    %v218 = vunpack.c.h.b16 %v153
    %v219 = vunpack.c.l.b16 %v154
    %v220 = vunpack.c.h.b16 %v154
    %v221 = vunpack.c.l.b16 %v155
    %v222 = vunpack.c.h.b16 %v155
    %v223 = vunpack.c.l.b16 %v156
    %v224 = vunpack.c.h.b16 %v156
    %v225 = vunpack.c.l.b16 %v157
    %v226 = vunpack.c.h.b16 %v157
    %v227 = vunpack.c.l.b16 %v158
    %v228 = vunpack.c.h.b16 %v158
    %v229 = vunpack.c.l.b16 %v159
    %v230 = vunpack.c.h.b16 %v159
    %v231 = vunpack.c.l.b16 %v160
    %v232 = vunpack.c.h.b16 %v160
    %v233 = vunpack.c.l.b16 %v161
    %v234 = vunpack.c.h.b16 %v161
    %v235 = vunpack.c.l.b16 %v162
    %v236 = vunpack.c.h.b16 %v162
    %v237 = vunpack.c.l.b16 %v163
    %v238 = vunpack.c.h.b16 %v163
    %v239 = vunpack.c.l.b16 %v164
    %v240 = vunpack.c.h.b16 %v164
    %v241 = vunpack.c.l.b16 %v165
    %v242 = vunpack.c.h.b16 %v165
    %v243 = vunpack.c.l.b16 %v166
    %v244 = vunpack.c.h.b16 %v166
    %v245 = vunpack.c.l.b16 %v167
    %v246 = vunpack.c.h.b16 %v167
    %v247 = vunpack.c.l.b16 %v168
    %v248 = vunpack.c.h.b16 %v168
    %v249 = vpack.c.b16 %v219, %v217
    %v250 = vpack.c.b16 %v220, %v218
    %v251 = vpack.c.b16 %v223, %v221
    %v252 = vpack.c.b16 %v224, %v222
    %v253 = vpack.c.b16 %v227, %v225
    %v254 = vpack.c.b16 %v228, %v226
    %v255 = vpack.c.b16 %v231, %v229
    %v256 = vpack.c.b16 %v232, %v230
    %v257 = vpack.c.b16 %v235, %v233
    %v258 = vpack.c.b16 %v236, %v234
    %v259 = vpack.c.b16 %v239, %v237
    %v260 = vpack.c.b16 %v240, %v238
    %v261 = vpack.c.b16 %v243, %v241
    %v262 = vpack.c.b16 %v244, %v242
    %v263 = vpack.c.b16 %v247, %v245
    %v264 = vpack.c.b16 %v248, %v246
    %281 = vmatprep.subr.bf16.mxu0 %v250
    %282 = vmatpush1.bf16.msra.mxu0 %v249
    %283 = vmatprep.subr.bf16.mxu0 %v252
    %284 = vmatpush1.bf16.msra.mxu0 %v251
    %285 = vmatprep.subr.bf16.mxu0 %v254
    %286 = vmatpush1.bf16.msra.mxu0 %v253
    %287 = vmatprep.subr.bf16.mxu0 %v256
    %288 = vmatpush1.bf16.msra.mxu0 %v255
    %289 = vmatprep.subr.bf16.mxu0 %v258
    %290 = vmatpush1.bf16.msra.mxu0 %v257
    %291 = vmatprep.subr.bf16.mxu0 %v260
    %292 = vmatpush1.bf16.msra.mxu0 %v259
    %293 = vmatprep.subr.bf16.mxu0 %v262
    %294 = vmatpush1.bf16.msra.mxu0 %v261
    %295 = vmatprep.subr.bf16.mxu0 %v264
    %296 = vmatpush1.bf16.msra.mxu0 %v263
    %297 = vmatprep.subr.bf16.mxu0 0
    %298 = vmatpush1.bf16.msra.mxu0 0
    %299 = vmatprep.subr.bf16.mxu0 0
    %300 = vmatpush1.bf16.msra.mxu0 0
    %301 = vmatprep.subr.bf16.mxu0 0
    %302 = vmatpush1.bf16.msra.mxu0 0
    %303 = vmatprep.subr.bf16.mxu0 0
    %304 = vmatpush1.bf16.msra.mxu0 0
    %305 = vmatprep.subr.bf16.mxu0 0
    %306 = vmatpush1.bf16.msra.mxu0 0
    %307 = vmatprep.subr.bf16.mxu0 0
    %308 = vmatpush1.bf16.msra.mxu0 0
    %309 = vmatprep.subr.bf16.mxu0 0
    %310 = vmatpush1.bf16.msra.mxu0 0
    %311 = vmatprep.subr.bf16.mxu0 0
    %312 = vmatpush1.bf16.msra.mxu0 0
    %313 = vmatprep.mubr.bf16.mxu0 0
    %314 = vmatmul.mubr.bf16.gmra.mrb[0].mxu0 %v193
    %v315 = vpop.f32.mrb[0].mxu0
    %v316 = vadd.f32 0.0, %v315
    %v317 = vpop.f32.mrb[0].mxu0
    %v318 = vadd.f32 0.0, %v317
    %v319 = vpop.f32.mrb[0].mxu0
    %v320 = vadd.f32 0.0, %v319
    %v321 = vpop.f32.mrb[0].mxu0
    %v322 = vadd.f32 0.0, %v321
    %323 = vmatprep.mubr.bf16.mxu0 0
    %324 = vmatmul.mubr.bf16.gmra.mrb[0].mxu0 %v194
    %v325 = vpop.f32.mrb[0].mxu0
    %v326 = vadd.f32 0.0, %v325
    %v327 = vpop.f32.mrb[0].mxu0
    %v328 = vadd.f32 0.0, %v327
    %v329 = vpop.f32.mrb[0].mxu0
    %v330 = vadd.f32 0.0, %v329
    %v331 = vpop.f32.mrb[0].mxu0
    %v332 = vadd.f32 0.0, %v331
    %333 = vmatprep.mubr.bf16.mxu0 0
    %334 = vmatmul.mubr.bf16.gmra.mrb[0].mxu0 %v195
    %v335 = vpop.f32.mrb[0].mxu0
    %v336 = vadd.f32 0.0, %v335
    %v337 = vpop.f32.mrb[0].mxu0
    %v338 = vadd.f32 0.0, %v337
    %v339 = vpop.f32.mrb[0].mxu0
    %v340 = vadd.f32 0.0, %v339
    %v341 = vpop.f32.mrb[0].mxu0
    %v342 = vadd.f32 0.0, %v341
    %343 = vmatprep.mubr.bf16.mxu0 0
    %344 = vmatmul.mubr.bf16.gmra.mrb[0].mxu0 %v196
    %v345 = vpop.f32.mrb[0].mxu0
    %v346 = vadd.f32 0.0, %v345
    %v347 = vpop.f32.mrb[0].mxu0
    %v348 = vadd.f32 0.0, %v347
    %v349 = vpop.f32.mrb[0].mxu0
    %v350 = vadd.f32 0.0, %v349
    %v351 = vpop.f32.mrb[0].mxu0
    %v352 = vadd.f32 0.0, %v351
    %353 = vdwg.mxu0
    %v354 = vpack.c.bf16 %v320, %v316
    %v355 = vpack.c.bf16 %v322, %v318
    %v356 = vpack.c.bf16 %v330, %v326
    %v357 = vpack.c.bf16 %v332, %v328
    %v358 = vpack.c.bf16 %v340, %v336
    %v359 = vpack.c.bf16 %v342, %v338
    %v360 = vpack.c.bf16 %v350, %v346
    %v361 = vpack.c.bf16 %v352, %v348
    %v362 = vld [vmem:[%s3] sm:$0xff]
    %v363 = vld [vmem:[%s3 + $0x8] sm:$0xff]
    %v364 = vld [vmem:[%s3 + $0x10] sm:$0xff]
    %v365 = vld [vmem:[%s3 + $0x18] sm:$0xff]
    %v366 = vld [vmem:[%s3 + $0x20] sm:$0xff]
    %v367 = vld [vmem:[%s3 + $0x28] sm:$0xff]
    %v368 = vld [vmem:[%s3 + $0x30] sm:$0xff]
    %v369 = vld [vmem:[%s3 + $0x38] sm:$0xff]
    %v370 = vld [vmem:[%s3 + $0x40] sm:$0xff]
    %v371 = vld [vmem:[%s3 + $0x48] sm:$0xff]
    %v372 = vld [vmem:[%s3 + $0x50] sm:$0xff]
    %v373 = vld [vmem:[%s3 + $0x58] sm:$0xff]
    %v374 = vld [vmem:[%s3 + $0x60] sm:$0xff]
    %v375 = vld [vmem:[%s3 + $0x68] sm:$0xff]
    %v376 = vld [vmem:[%s3 + $0x70] sm:$0xff]
    %v377 = vld [vmem:[%s3 + $0x78] sm:$0xff]
    %v378 = vld [vmem:[%s3 + $0x80] sm:$0xff]
    %v379 = vld [vmem:[%s3 + $0x88] sm:$0xff]
    %v380 = vld [vmem:[%s3 + $0x90] sm:$0xff]
    %v381 = vld [vmem:[%s3 + $0x98] sm:$0xff]
    %v382 = vld [vmem:[%s3 + $0xa0] sm:$0xff]
    %v383 = vld [vmem:[%s3 + $0xa8] sm:$0xff]
    %v384 = vld [vmem:[%s3 + $0xb0] sm:$0xff]
    %v385 = vld [vmem:[%s3 + $0xb8] sm:$0xff]
    %s386 = scalar_lea.vmem %s5, 32
    %v387 = vld [vmem:[%s386] sm:$0xf]
    %v388 = vld [vmem:[%s386 + $0x4] sm:$0xf]
    %v389 = vld [vmem:[%s386 + $0x8] sm:$0xf]
    %v390 = vld [vmem:[%s386 + $0xc] sm:$0xf]
    %v391 = vld [vmem:[%s386 + $0x10] sm:$0xf]
    %v392 = vld [vmem:[%s386 + $0x14] sm:$0xf]
    %v393 = vld [vmem:[%s386 + $0x18] sm:$0xf]
    %v394 = vld [vmem:[%s386 + $0x1c] sm:$0xf]
    %v403 = vunpack.c.l.b16 %v387
    %v404 = vunpack.c.l.b16 %v388
    %v405 = vunpack.c.l.b16 %v389
    %v406 = vunpack.c.l.b16 %v390
    %v407 = vunpack.c.l.b16 %v391
    %v408 = vunpack.c.l.b16 %v392
    %v409 = vunpack.c.l.b16 %v393
    %v410 = vunpack.c.l.b16 %v394
    %v411 = vpack.c.b16 %v404, %v403
    %v412 = vpack.c.b16 %v406, %v405
    %v413 = vpack.c.b16 %v408, %v407
    %v414 = vpack.c.b16 %v410, %v409
    %419 = vmatprep.subr.bf16.mxu0 %v250
    %420 = vmatpush1.bf16.msra.mxu0 %v249
    %421 = vmatprep.subr.bf16.mxu0 %v252
    %422 = vmatpush1.bf16.msra.mxu0 %v251
    %423 = vmatprep.subr.bf16.mxu0 %v254
    %424 = vmatpush1.bf16.msra.mxu0 %v253
    %425 = vmatprep.subr.bf16.mxu0 %v256
    %426 = vmatpush1.bf16.msra.mxu0 %v255
    %427 = vmatprep.subr.bf16.mxu0 %v258
    %428 = vmatpush1.bf16.msra.mxu0 %v257
    %429 = vmatprep.subr.bf16.mxu0 %v260
    %430 = vmatpush1.bf16.msra.mxu0 %v259
    %431 = vmatprep.subr.bf16.mxu0 %v262
    %432 = vmatpush1.bf16.msra.mxu0 %v261
    %433 = vmatprep.subr.bf16.mxu0 %v264
    %434 = vmatpush1.bf16.msra.mxu0 %v263
    %435 = vmatprep.subr.bf16.mxu0 0
    %436 = vmatpush1.bf16.msra.mxu0 0
    %437 = vmatprep.subr.bf16.mxu0 0
    %438 = vmatpush1.bf16.msra.mxu0 0
    %439 = vmatprep.subr.bf16.mxu0 0
    %440 = vmatpush1.bf16.msra.mxu0 0
    %441 = vmatprep.subr.bf16.mxu0 0
    %442 = vmatpush1.bf16.msra.mxu0 0
    %443 = vmatprep.subr.bf16.mxu0 0
    %444 = vmatpush1.bf16.msra.mxu0 0
    %445 = vmatprep.subr.bf16.mxu0 0
    %446 = vmatpush1.bf16.msra.mxu0 0
    %447 = vmatprep.subr.bf16.mxu0 0
    %448 = vmatpush1.bf16.msra.mxu0 0
    %449 = vmatprep.subr.bf16.mxu0 0
    %450 = vmatpush1.bf16.msra.mxu0 0
    %451 = vmatprep.mubr.bf16.mxu0 0
    %452 = vmatmul.mubr.bf16.gmra.mrb[0].mxu0 %v411
    %v453 = vpop.f32.mrb[0].mxu0
    %v454 = vadd.f32 0.0, %v453
    %v455 = vpop.f32.mrb[0].mxu0
    %v456 = vadd.f32 0.0, %v455
    %v457 = vpop.f32.mrb[0].mxu0
    %v458 = vadd.f32 0.0, %v457
    %v459 = vpop.f32.mrb[0].mxu0
    %v460 = vadd.f32 0.0, %v459
    %461 = vmatprep.mubr.bf16.mxu0 0
    %462 = vmatmul.mubr.bf16.gmra.mrb[0].mxu0 %v412
    %v463 = vpop.f32.mrb[0].mxu0
    %v464 = vadd.f32 0.0, %v463
    %v465 = vpop.f32.mrb[0].mxu0
    %v466 = vadd.f32 0.0, %v465
    %v467 = vpop.f32.mrb[0].mxu0
    %v468 = vadd.f32 0.0, %v467
    %v469 = vpop.f32.mrb[0].mxu0
    %v470 = vadd.f32 0.0, %v469
    %471 = vmatprep.mubr.bf16.mxu0 0
    %472 = vmatmul.mubr.bf16.gmra.mrb[0].mxu0 %v413
    %v473 = vpop.f32.mrb[0].mxu0
    %v474 = vadd.f32 0.0, %v473
    %v475 = vpop.f32.mrb[0].mxu0
    %v476 = vadd.f32 0.0, %v475
    %v477 = vpop.f32.mrb[0].mxu0
    %v478 = vadd.f32 0.0, %v477
    %v479 = vpop.f32.mrb[0].mxu0
    %v480 = vadd.f32 0.0, %v479
    %481 = vmatprep.mubr.bf16.mxu0 0
    %482 = vmatmul.mubr.bf16.gmra.mrb[0].mxu0 %v414
    %v483 = vpop.f32.mrb[0].mxu0
    %v484 = vadd.f32 0.0, %v483
    %v485 = vpop.f32.mrb[0].mxu0
    %v486 = vadd.f32 0.0, %v485
    %v487 = vpop.f32.mrb[0].mxu0
    %v488 = vadd.f32 0.0, %v487
    %v489 = vpop.f32.mrb[0].mxu0
    %v490 = vadd.f32 0.0, %v489
    %491 = vdwg.mxu0
    %v492 = vpack.c.bf16 %v458, %v454
    %v493 = vpack.c.bf16 %v460, %v456
    %v494 = vpack.c.bf16 %v468, %v464
    %v495 = vpack.c.bf16 %v470, %v466
    %v496 = vpack.c.bf16 %v478, %v474
    %v497 = vpack.c.bf16 %v480, %v476
    %v498 = vpack.c.bf16 %v488, %v484
    %v499 = vpack.c.bf16 %v490, %v486
    %s500 = scalar_lea.vmem %s3, 192
    %v501 = vld [vmem:[%s500] sm:$0xff]
    %v502 = vld [vmem:[%s500 + $0x8] sm:$0xff]
    %v503 = vld [vmem:[%s500 + $0x10] sm:$0xff]
    %v504 = vld [vmem:[%s500 + $0x18] sm:$0xff]
    %v505 = vld [vmem:[%s500 + $0x20] sm:$0xff]
    %v506 = vld [vmem:[%s500 + $0x28] sm:$0xff]
    %v507 = vld [vmem:[%s500 + $0x30] sm:$0xff]
    %v508 = vld [vmem:[%s500 + $0x38] sm:$0xff]
    %v509 = vld [vmem:[%s500 + $0x40] sm:$0xff]
    %v510 = vld [vmem:[%s500 + $0x48] sm:$0xff]
    %v511 = vld [vmem:[%s500 + $0x50] sm:$0xff]
    %v512 = vld [vmem:[%s500 + $0x58] sm:$0xff]
    %v513 = vld [vmem:[%s500 + $0x60] sm:$0xff]
    %v514 = vld [vmem:[%s500 + $0x68] sm:$0xff]
    %v515 = vld [vmem:[%s500 + $0x70] sm:$0xff]
    %v516 = vld [vmem:[%s500 + $0x78] sm:$0xff]
    %v517 = vld [vmem:[%s500 + $0x80] sm:$0xff]
    %v518 = vld [vmem:[%s500 + $0x88] sm:$0xff]
    %v519 = vld [vmem:[%s500 + $0x90] sm:$0xff]
    %v520 = vld [vmem:[%s500 + $0x98] sm:$0xff]
    %v521 = vld [vmem:[%s500 + $0xa0] sm:$0xff]
    %v522 = vld [vmem:[%s500 + $0xa8] sm:$0xff]
    %v523 = vld [vmem:[%s500 + $0xb0] sm:$0xff]
    %v524 = vld [vmem:[%s500 + $0xb8] sm:$0xff]
    %v549 = vunpack.c.l.b16 %v501
    %v550 = vunpack.c.h.b16 %v501
    %v551 = vunpack.c.l.b16 %v502
    %v552 = vunpack.c.h.b16 %v502
    %v553 = vunpack.c.l.b16 %v503
    %v554 = vunpack.c.h.b16 %v503
    %v555 = vunpack.c.l.b16 %v504
    %v556 = vunpack.c.h.b16 %v504
    %v557 = vunpack.c.l.b16 %v505
    %v558 = vunpack.c.h.b16 %v505
    %v559 = vunpack.c.l.b16 %v506
    %v560 = vunpack.c.h.b16 %v506
    %v561 = vunpack.c.l.b16 %v507
    %v562 = vunpack.c.h.b16 %v507
    %v563 = vunpack.c.l.b16 %v508
    %v564 = vunpack.c.h.b16 %v508
    %v565 = vunpack.c.l.b16 %v509
    %v566 = vunpack.c.h.b16 %v509
    %v567 = vunpack.c.l.b16 %v510
    %v568 = vunpack.c.h.b16 %v510
    %v569 = vunpack.c.l.b16 %v511
    %v570 = vunpack.c.h.b16 %v511
    %v571 = vunpack.c.l.b16 %v512
    %v572 = vunpack.c.h.b16 %v512
    %v573 = vunpack.c.l.b16 %v513
    %v574 = vunpack.c.h.b16 %v513
    %v575 = vunpack.c.l.b16 %v514
    %v576 = vunpack.c.h.b16 %v514
    %v577 = vunpack.c.l.b16 %v515
    %v578 = vunpack.c.h.b16 %v515
    %v579 = vunpack.c.l.b16 %v516
    %v580 = vunpack.c.h.b16 %v516
    %v581 = vunpack.c.l.b16 %v517
    %v582 = vunpack.c.h.b16 %v517
    %v583 = vunpack.c.l.b16 %v518
    %v584 = vunpack.c.h.b16 %v518
    %v585 = vunpack.c.l.b16 %v519
    %v586 = vunpack.c.h.b16 %v519
    %v587 = vunpack.c.l.b16 %v520
    %v588 = vunpack.c.h.b16 %v520
    %v589 = vunpack.c.l.b16 %v521
    %v590 = vunpack.c.h.b16 %v521
    %v591 = vunpack.c.l.b16 %v522
    %v592 = vunpack.c.h.b16 %v522
    %v593 = vunpack.c.l.b16 %v523
    %v594 = vunpack.c.h.b16 %v523
    %v595 = vunpack.c.l.b16 %v524
    %v596 = vunpack.c.h.b16 %v524
    %v597 = vpack.c.b16 %v551, %v549
    %v598 = vpack.c.b16 %v552, %v550
    %v599 = vpack.c.b16 %v555, %v553
    %v600 = vpack.c.b16 %v556, %v554
    %v601 = vpack.c.b16 %v559, %v557
    %v602 = vpack.c.b16 %v560, %v558
    %v603 = vpack.c.b16 %v563, %v561
    %v604 = vpack.c.b16 %v564, %v562
    %v605 = vpack.c.b16 %v567, %v565
    %v606 = vpack.c.b16 %v568, %v566
    %v607 = vpack.c.b16 %v571, %v569
    %v608 = vpack.c.b16 %v572, %v570
    %v609 = vpack.c.b16 %v575, %v573
    %v610 = vpack.c.b16 %v576, %v574
    %v611 = vpack.c.b16 %v579, %v577
    %v612 = vpack.c.b16 %v580, %v578
    %v613 = vpack.c.b16 %v583, %v581
    %v614 = vpack.c.b16 %v584, %v582
    %v615 = vpack.c.b16 %v587, %v585
    %v616 = vpack.c.b16 %v588, %v586
    %v617 = vpack.c.b16 %v591, %v589
    %v618 = vpack.c.b16 %v592, %v590
    %v619 = vpack.c.b16 %v595, %v593
    %v620 = vpack.c.b16 %v596, %v594
    %vm645 = vcmask 523264
    %v647 = vsel %vm645, %v493, 0
    %v650 = vsel %vm645, %v495, 0
    %v653 = vsel %vm645, %v497, 0
    %v656 = vsel %vm645, %v499, 0
    %658 = vmatprep.subr.bf16.mxu0 %v598
    %659 = vmatpush1.bf16.msra.mxu0 %v597
    %660 = vmatprep.subr.bf16.mxu0 %v600
    %661 = vmatpush1.bf16.msra.mxu0 %v599
    %662 = vmatprep.subr.bf16.mxu0 %v602
    %663 = vmatpush1.bf16.msra.mxu0 %v601
    %664 = vmatprep.subr.bf16.mxu0 %v604
    %665 = vmatpush1.bf16.msra.mxu0 %v603
    %666 = vmatprep.subr.bf16.mxu0 %v606
    %667 = vmatpush1.bf16.msra.mxu0 %v605
    %668 = vmatprep.subr.bf16.mxu0 %v608
    %669 = vmatpush1.bf16.msra.mxu0 %v607
    %670 = vmatprep.subr.bf16.mxu0 %v610
    %671 = vmatpush1.bf16.msra.mxu0 %v609
    %672 = vmatprep.subr.bf16.mxu0 %v612
    %673 = vmatpush1.bf16.msra.mxu0 %v611
    %674 = vmatprep.subr.bf16.mxu0 %v614
    %675 = vmatpush1.bf16.msra.mxu0 %v613
    %676 = vmatprep.subr.bf16.mxu0 %v616
    %677 = vmatpush1.bf16.msra.mxu0 %v615
    %678 = vmatprep.subr.bf16.mxu0 %v618
    %679 = vmatpush1.bf16.msra.mxu0 %v617
    %680 = vmatprep.subr.bf16.mxu0 %v620
    %681 = vmatpush1.bf16.msra.mxu0 %v619
    %682 = vmatprep.subr.bf16.mxu0 0
    %683 = vmatpush1.bf16.msra.mxu0 0
    %684 = vmatprep.subr.bf16.mxu0 0
    %685 = vmatpush1.bf16.msra.mxu0 0
    %686 = vmatprep.subr.bf16.mxu0 0
    %687 = vmatpush1.bf16.msra.mxu0 0
    %688 = vmatprep.subr.bf16.mxu0 0
    %689 = vmatpush1.bf16.msra.mxu0 0
    %690 = vmatprep.mubr.bf16.mxu0 %v647
    %691 = vmatmul.mubr.bf16.gmra.mrb[0].mxu0 %v492
    %v692 = vpop.f32.mrb[0].mxu0
    %v693 = vadd.f32 0.0, %v692
    %v694 = vpop.f32.mrb[0].mxu0
    %v695 = vadd.f32 0.0, %v694
    %v696 = vpop.f32.mrb[0].mxu0
    %v697 = vadd.f32 0.0, %v696
    %v698 = vpop.f32.mrb[0].mxu0
    %v699 = vadd.f32 0.0, %v698
    %700 = vmatprep.mubr.bf16.mxu0 %v650
    %701 = vmatmul.mubr.bf16.gmra.mrb[0].mxu0 %v494
    %v702 = vpop.f32.mrb[0].mxu0
    %v703 = vadd.f32 0.0, %v702
    %v704 = vpop.f32.mrb[0].mxu0
    %v705 = vadd.f32 0.0, %v704
    %v706 = vpop.f32.mrb[0].mxu0
    %v707 = vadd.f32 0.0, %v706
    %v708 = vpop.f32.mrb[0].mxu0
    %v709 = vadd.f32 0.0, %v708
    %710 = vmatprep.mubr.bf16.mxu0 %v653
    %711 = vmatmul.mubr.bf16.gmra.mrb[0].mxu0 %v496
    %v712 = vpop.f32.mrb[0].mxu0
    %v713 = vadd.f32 0.0, %v712
    %v714 = vpop.f32.mrb[0].mxu0
    %v715 = vadd.f32 0.0, %v714
    %v716 = vpop.f32.mrb[0].mxu0
    %v717 = vadd.f32 0.0, %v716
    %v718 = vpop.f32.mrb[0].mxu0
    %v719 = vadd.f32 0.0, %v718
    %720 = vmatprep.mubr.bf16.mxu0 %v656
    %721 = vmatmul.mubr.bf16.gmra.mrb[0].mxu0 %v498
    %v722 = vpop.f32.mrb[0].mxu0
    %v723 = vadd.f32 0.0, %v722
    %v724 = vpop.f32.mrb[0].mxu0
    %v725 = vadd.f32 0.0, %v724
    %v726 = vpop.f32.mrb[0].mxu0
    %v727 = vadd.f32 0.0, %v726
    %v728 = vpop.f32.mrb[0].mxu0
    %v729 = vadd.f32 0.0, %v728
    %730 = vdwg.mxu0
    %v755 = vunpack.c.l.b16 %v362
    %v756 = vunpack.c.h.b16 %v362
    %v757 = vunpack.c.l.b16 %v363
    %v758 = vunpack.c.h.b16 %v363
    %v759 = vunpack.c.l.b16 %v364
    %v760 = vunpack.c.h.b16 %v364
    %v761 = vunpack.c.l.b16 %v365
    %v762 = vunpack.c.h.b16 %v365
    %v763 = vunpack.c.l.b16 %v366
    %v764 = vunpack.c.h.b16 %v366
    %v765 = vunpack.c.l.b16 %v367
    %v766 = vunpack.c.h.b16 %v367
    %v767 = vunpack.c.l.b16 %v368
    %v768 = vunpack.c.h.b16 %v368
    %v769 = vunpack.c.l.b16 %v369
    %v770 = vunpack.c.h.b16 %v369
    %v771 = vunpack.c.l.b16 %v370
    %v772 = vunpack.c.h.b16 %v370
    %v773 = vunpack.c.l.b16 %v371
    %v774 = vunpack.c.h.b16 %v371
    %v775 = vunpack.c.l.b16 %v372
    %v776 = vunpack.c.h.b16 %v372
    %v777 = vunpack.c.l.b16 %v373
    %v778 = vunpack.c.h.b16 %v373
    %v779 = vunpack.c.l.b16 %v374
    %v780 = vunpack.c.h.b16 %v374
    %v781 = vunpack.c.l.b16 %v375
    %v782 = vunpack.c.h.b16 %v375
    %v783 = vunpack.c.l.b16 %v376
    %v784 = vunpack.c.h.b16 %v376
    %v785 = vunpack.c.l.b16 %v377
    %v786 = vunpack.c.h.b16 %v377
    %v787 = vunpack.c.l.b16 %v378
    %v788 = vunpack.c.h.b16 %v378
    %v789 = vunpack.c.l.b16 %v379
    %v790 = vunpack.c.h.b16 %v379
    %v791 = vunpack.c.l.b16 %v380
    %v792 = vunpack.c.h.b16 %v380
    %v793 = vunpack.c.l.b16 %v381
    %v794 = vunpack.c.h.b16 %v381
    %v795 = vunpack.c.l.b16 %v382
    %v796 = vunpack.c.h.b16 %v382
    %v797 = vunpack.c.l.b16 %v383
    %v798 = vunpack.c.h.b16 %v383
    %v799 = vunpack.c.l.b16 %v384
    %v800 = vunpack.c.h.b16 %v384
    %v801 = vunpack.c.l.b16 %v385
    %v802 = vunpack.c.h.b16 %v385
    %v803 = vpack.c.b16 %v757, %v755
    %v804 = vpack.c.b16 %v758, %v756
    %v805 = vpack.c.b16 %v761, %v759
    %v806 = vpack.c.b16 %v762, %v760
    %v807 = vpack.c.b16 %v765, %v763
    %v808 = vpack.c.b16 %v766, %v764
    %v809 = vpack.c.b16 %v769, %v767
    %v810 = vpack.c.b16 %v770, %v768
    %v811 = vpack.c.b16 %v773, %v771
    %v812 = vpack.c.b16 %v774, %v772
    %v813 = vpack.c.b16 %v777, %v775
    %v814 = vpack.c.b16 %v778, %v776
    %v815 = vpack.c.b16 %v781, %v779
    %v816 = vpack.c.b16 %v782, %v780
    %v817 = vpack.c.b16 %v785, %v783
    %v818 = vpack.c.b16 %v786, %v784
    %v819 = vpack.c.b16 %v789, %v787
    %v820 = vpack.c.b16 %v790, %v788
    %v821 = vpack.c.b16 %v793, %v791
    %v822 = vpack.c.b16 %v794, %v792
    %v823 = vpack.c.b16 %v797, %v795
    %v824 = vpack.c.b16 %v798, %v796
    %v825 = vpack.c.b16 %v801, %v799
    %v826 = vpack.c.b16 %v802, %v800
    %v852 = vsel %vm645, %v355, 0
    %v855 = vsel %vm645, %v357, 0
    %v858 = vsel %vm645, %v359, 0
    %v861 = vsel %vm645, %v361, 0
    %863 = vmatprep.subr.bf16.mxu0 %v804
    %864 = vmatpush1.bf16.msra.mxu0 %v803
    %865 = vmatprep.subr.bf16.mxu0 %v806
    %866 = vmatpush1.bf16.msra.mxu0 %v805
    %867 = vmatprep.subr.bf16.mxu0 %v808
    %868 = vmatpush1.bf16.msra.mxu0 %v807
    %869 = vmatprep.subr.bf16.mxu0 %v810
    %870 = vmatpush1.bf16.msra.mxu0 %v809
    %871 = vmatprep.subr.bf16.mxu0 %v812
    %872 = vmatpush1.bf16.msra.mxu0 %v811
    %873 = vmatprep.subr.bf16.mxu0 %v814
    %874 = vmatpush1.bf16.msra.mxu0 %v813
    %875 = vmatprep.subr.bf16.mxu0 %v816
    %876 = vmatpush1.bf16.msra.mxu0 %v815
    %877 = vmatprep.subr.bf16.mxu0 %v818
    %878 = vmatpush1.bf16.msra.mxu0 %v817
    %879 = vmatprep.subr.bf16.mxu0 %v820
    %880 = vmatpush1.bf16.msra.mxu0 %v819
    %881 = vmatprep.subr.bf16.mxu0 %v822
    %882 = vmatpush1.bf16.msra.mxu0 %v821
    %883 = vmatprep.subr.bf16.mxu0 %v824
    %884 = vmatpush1.bf16.msra.mxu0 %v823
    %885 = vmatprep.subr.bf16.mxu0 %v826
    %886 = vmatpush1.bf16.msra.mxu0 %v825
    %887 = vmatprep.subr.bf16.mxu0 0
    %888 = vmatpush1.bf16.msra.mxu0 0
    %889 = vmatprep.subr.bf16.mxu0 0
    %890 = vmatpush1.bf16.msra.mxu0 0
    %891 = vmatprep.subr.bf16.mxu0 0
    %892 = vmatpush1.bf16.msra.mxu0 0
    %893 = vmatprep.subr.bf16.mxu0 0
    %894 = vmatpush1.bf16.msra.mxu0 0
    %895 = vmatprep.mubr.bf16.mxu0 %v852
    %896 = vmatmul.mubr.bf16.gmra.mrb[0].mxu0 %v354
    %v897 = vpop.f32.mrb[0].mxu0
    %v898 = vadd.f32 %v693, %v897
    %v899 = vpop.f32.mrb[0].mxu0
    %v900 = vadd.f32 %v695, %v899
    %v901 = vpop.f32.mrb[0].mxu0
    %v902 = vadd.f32 %v697, %v901
    %v903 = vpop.f32.mrb[0].mxu0
    %v904 = vadd.f32 %v699, %v903
    %905 = vmatprep.mubr.bf16.mxu0 %v855
    %906 = vmatmul.mubr.bf16.gmra.mrb[0].mxu0 %v356
    %v907 = vpop.f32.mrb[0].mxu0
    %v908 = vadd.f32 %v703, %v907
    %v909 = vpop.f32.mrb[0].mxu0
    %v910 = vadd.f32 %v705, %v909
    %v911 = vpop.f32.mrb[0].mxu0
    %v912 = vadd.f32 %v707, %v911
    %v913 = vpop.f32.mrb[0].mxu0
    %v914 = vadd.f32 %v709, %v913
    %915 = vmatprep.mubr.bf16.mxu0 %v858
    %916 = vmatmul.mubr.bf16.gmra.mrb[0].mxu0 %v358
    %v917 = vpop.f32.mrb[0].mxu0
    %v918 = vadd.f32 %v713, %v917
    %v919 = vpop.f32.mrb[0].mxu0
    %v920 = vadd.f32 %v715, %v919
    %v921 = vpop.f32.mrb[0].mxu0
    %v922 = vadd.f32 %v717, %v921
    %v923 = vpop.f32.mrb[0].mxu0
    %v924 = vadd.f32 %v719, %v923
    %925 = vmatprep.mubr.bf16.mxu0 %v861
    %926 = vmatmul.mubr.bf16.gmra.mrb[0].mxu0 %v360
    %v927 = vpop.f32.mrb[0].mxu0
    %v928 = vadd.f32 %v723, %v927
    %v929 = vpop.f32.mrb[0].mxu0
    %v930 = vadd.f32 %v725, %v929
    %v931 = vpop.f32.mrb[0].mxu0
    %v932 = vadd.f32 %v727, %v931
    %v933 = vpop.f32.mrb[0].mxu0
    %v934 = vadd.f32 %v729, %v933
    %935 = vdwg.mxu0
    %s936 = scalar_lea.vmem %s5, 64
    %v937 = vld [vmem:[%s936] sm:$0xf]
    %v938 = vld [vmem:[%s936 + $0x4] sm:$0xf]
    %v939 = vld [vmem:[%s936 + $0x8] sm:$0xf]
    %v940 = vld [vmem:[%s936 + $0xc] sm:$0xf]
    %v941 = vld [vmem:[%s936 + $0x10] sm:$0xf]
    %v942 = vld [vmem:[%s936 + $0x14] sm:$0xf]
    %v943 = vld [vmem:[%s936 + $0x18] sm:$0xf]
    %v944 = vld [vmem:[%s936 + $0x1c] sm:$0xf]
    %v953 = vunpack.c.l.b16 %v937
    %v954 = vunpack.c.l.b16 %v938
    %v955 = vunpack.c.l.b16 %v939
    %v956 = vunpack.c.l.b16 %v940
    %v957 = vunpack.c.l.b16 %v941
    %v958 = vunpack.c.l.b16 %v942
    %v959 = vunpack.c.l.b16 %v943
    %v960 = vunpack.c.l.b16 %v944
    %v961 = vpack.c.b16 %v954, %v953
    %v962 = vpack.c.b16 %v956, %v955
    %v963 = vpack.c.b16 %v958, %v957
    %v964 = vpack.c.b16 %v960, %v959
    %969 = vmatprep.subr.bf16.mxu0 %v250
    %970 = vmatpush1.bf16.msra.mxu0 %v249
    %971 = vmatprep.subr.bf16.mxu0 %v252
    %972 = vmatpush1.bf16.msra.mxu0 %v251
    %973 = vmatprep.subr.bf16.mxu0 %v254
    %974 = vmatpush1.bf16.msra.mxu0 %v253
    %975 = vmatprep.subr.bf16.mxu0 %v256
    %976 = vmatpush1.bf16.msra.mxu0 %v255
    %977 = vmatprep.subr.bf16.mxu0 %v258
    %978 = vmatpush1.bf16.msra.mxu0 %v257
    %979 = vmatprep.subr.bf16.mxu0 %v260
    %980 = vmatpush1.bf16.msra.mxu0 %v259
    %981 = vmatprep.subr.bf16.mxu0 %v262
    %982 = vmatpush1.bf16.msra.mxu0 %v261
    %983 = vmatprep.subr.bf16.mxu0 %v264
    %984 = vmatpush1.bf16.msra.mxu0 %v263
    %985 = vmatprep.subr.bf16.mxu0 0
    %986 = vmatpush1.bf16.msra.mxu0 0
    %987 = vmatprep.subr.bf16.mxu0 0
    %988 = vmatpush1.bf16.msra.mxu0 0
    %989 = vmatprep.subr.bf16.mxu0 0
    %990 = vmatpush1.bf16.msra.mxu0 0
    %991 = vmatprep.subr.bf16.mxu0 0
    %992 = vmatpush1.bf16.msra.mxu0 0
    %993 = vmatprep.subr.bf16.mxu0 0
    %994 = vmatpush1.bf16.msra.mxu0 0
    %995 = vmatprep.subr.bf16.mxu0 0
    %996 = vmatpush1.bf16.msra.mxu0 0
    %997 = vmatprep.subr.bf16.mxu0 0
    %998 = vmatpush1.bf16.msra.mxu0 0
    %999 = vmatprep.subr.bf16.mxu0 0
    %1000 = vmatpush1.bf16.msra.mxu0 0
    %1001 = vmatprep.mubr.bf16.mxu0 0
    %1002 = vmatmul.mubr.bf16.gmra.mrb[0].mxu0 %v961
    %v1003 = vpop.f32.mrb[0].mxu0
    %v1004 = vadd.f32 0.0, %v1003
    %v1005 = vpop.f32.mrb[0].mxu0
    %v1006 = vadd.f32 0.0, %v1005
    %v1007 = vpop.f32.mrb[0].mxu0
    %v1008 = vadd.f32 0.0, %v1007
    %v1009 = vpop.f32.mrb[0].mxu0
    %v1010 = vadd.f32 0.0, %v1009
    %1011 = vmatprep.mubr.bf16.mxu0 0
    %1012 = vmatmul.mubr.bf16.gmra.mrb[0].mxu0 %v962
    %v1013 = vpop.f32.mrb[0].mxu0
    %v1014 = vadd.f32 0.0, %v1013
    %v1015 = vpop.f32.mrb[0].mxu0
    %v1016 = vadd.f32 0.0, %v1015
    %v1017 = vpop.f32.mrb[0].mxu0
    %v1018 = vadd.f32 0.0, %v1017
    %v1019 = vpop.f32.mrb[0].mxu0
    %v1020 = vadd.f32 0.0, %v1019
    %1021 = vmatprep.mubr.bf16.mxu0 0
    %1022 = vmatmul.mubr.bf16.gmra.mrb[0].mxu0 %v963
    %v1023 = vpop.f32.mrb[0].mxu0
    %v1024 = vadd.f32 0.0, %v1023
    %v1025 = vpop.f32.mrb[0].mxu0
    %v1026 = vadd.f32 0.0, %v1025
    %v1027 = vpop.f32.mrb[0].mxu0
    %v1028 = vadd.f32 0.0, %v1027
    %v1029 = vpop.f32.mrb[0].mxu0
    %v1030 = vadd.f32 0.0, %v1029
    %1031 = vmatprep.mubr.bf16.mxu0 0
    %1032 = vmatmul.mubr.bf16.gmra.mrb[0].mxu0 %v964
    %v1033 = vpop.f32.mrb[0].mxu0
    %v1034 = vadd.f32 0.0, %v1033
    %v1035 = vpop.f32.mrb[0].mxu0
    %v1036 = vadd.f32 0.0, %v1035
    %v1037 = vpop.f32.mrb[0].mxu0
    %v1038 = vadd.f32 0.0, %v1037
    %v1039 = vpop.f32.mrb[0].mxu0
    %v1040 = vadd.f32 0.0, %v1039
    %1041 = vdwg.mxu0
    %v1042 = vpack.c.bf16 %v1008, %v1004
    %v1043 = vpack.c.bf16 %v1010, %v1006
    %v1044 = vpack.c.bf16 %v1018, %v1014
    %v1045 = vpack.c.bf16 %v1020, %v1016
    %v1046 = vpack.c.bf16 %v1028, %v1024
    %v1047 = vpack.c.bf16 %v1030, %v1026
    %v1048 = vpack.c.bf16 %v1038, %v1034
    %v1049 = vpack.c.bf16 %v1040, %v1036
    %s1050 = scalar_lea.vmem %s3, 384
    %v1051 = vld [vmem:[%s1050] sm:$0xff]
    %v1052 = vld [vmem:[%s1050 + $0x8] sm:$0xff]
    %v1053 = vld [vmem:[%s1050 + $0x10] sm:$0xff]
    %v1054 = vld [vmem:[%s1050 + $0x18] sm:$0xff]
    %v1055 = vld [vmem:[%s1050 + $0x20] sm:$0xff]
    %v1056 = vld [vmem:[%s1050 + $0x28] sm:$0xff]
    %v1057 = vld [vmem:[%s1050 + $0x30] sm:$0xff]
    %v1058 = vld [vmem:[%s1050 + $0x38] sm:$0xff]
    %v1059 = vld [vmem:[%s1050 + $0x40] sm:$0xff]
    %v1060 = vld [vmem:[%s1050 + $0x48] sm:$0xff]
    %v1061 = vld [vmem:[%s1050 + $0x50] sm:$0xff]
    %v1062 = vld [vmem:[%s1050 + $0x58] sm:$0xff]
    %v1063 = vld [vmem:[%s1050 + $0x60] sm:$0xff]
    %v1064 = vld [vmem:[%s1050 + $0x68] sm:$0xff]
    %v1065 = vld [vmem:[%s1050 + $0x70] sm:$0xff]
    %v1066 = vld [vmem:[%s1050 + $0x78] sm:$0xff]
    %v1067 = vld [vmem:[%s1050 + $0x80] sm:$0xff]
    %v1068 = vld [vmem:[%s1050 + $0x88] sm:$0xff]
    %v1069 = vld [vmem:[%s1050 + $0x90] sm:$0xff]
    %v1070 = vld [vmem:[%s1050 + $0x98] sm:$0xff]
    %v1071 = vld [vmem:[%s1050 + $0xa0] sm:$0xff]
    %v1072 = vld [vmem:[%s1050 + $0xa8] sm:$0xff]
    %v1073 = vld [vmem:[%s1050 + $0xb0] sm:$0xff]
    %v1074 = vld [vmem:[%s1050 + $0xb8] sm:$0xff]
    %v1099 = vunpack.c.l.b16 %v1051
    %v1100 = vunpack.c.h.b16 %v1051
    %v1101 = vunpack.c.l.b16 %v1052
    %v1102 = vunpack.c.h.b16 %v1052
    %v1103 = vunpack.c.l.b16 %v1053
    %v1104 = vunpack.c.h.b16 %v1053
    %v1105 = vunpack.c.l.b16 %v1054
    %v1106 = vunpack.c.h.b16 %v1054
    %v1107 = vunpack.c.l.b16 %v1055
    %v1108 = vunpack.c.h.b16 %v1055
    %v1109 = vunpack.c.l.b16 %v1056
    %v1110 = vunpack.c.h.b16 %v1056
    %v1111 = vunpack.c.l.b16 %v1057
    %v1112 = vunpack.c.h.b16 %v1057
    %v1113 = vunpack.c.l.b16 %v1058
    %v1114 = vunpack.c.h.b16 %v1058
    %v1115 = vunpack.c.l.b16 %v1059
    %v1116 = vunpack.c.h.b16 %v1059
    %v1117 = vunpack.c.l.b16 %v1060
    %v1118 = vunpack.c.h.b16 %v1060
    %v1119 = vunpack.c.l.b16 %v1061
    %v1120 = vunpack.c.h.b16 %v1061
    %v1121 = vunpack.c.l.b16 %v1062
    %v1122 = vunpack.c.h.b16 %v1062
    %v1123 = vunpack.c.l.b16 %v1063
    %v1124 = vunpack.c.h.b16 %v1063
    %v1125 = vunpack.c.l.b16 %v1064
    %v1126 = vunpack.c.h.b16 %v1064
    %v1127 = vunpack.c.l.b16 %v1065
    %v1128 = vunpack.c.h.b16 %v1065
    %v1129 = vunpack.c.l.b16 %v1066
    %v1130 = vunpack.c.h.b16 %v1066
    %v1131 = vunpack.c.l.b16 %v1067
    %v1132 = vunpack.c.h.b16 %v1067
    %v1133 = vunpack.c.l.b16 %v1068
    %v1134 = vunpack.c.h.b16 %v1068
    %v1135 = vunpack.c.l.b16 %v1069
    %v1136 = vunpack.c.h.b16 %v1069
    %v1137 = vunpack.c.l.b16 %v1070
    %v1138 = vunpack.c.h.b16 %v1070
    %v1139 = vunpack.c.l.b16 %v1071
    %v1140 = vunpack.c.h.b16 %v1071
    %v1141 = vunpack.c.l.b16 %v1072
    %v1142 = vunpack.c.h.b16 %v1072
    %v1143 = vunpack.c.l.b16 %v1073
    %v1144 = vunpack.c.h.b16 %v1073
    %v1145 = vunpack.c.l.b16 %v1074
    %v1146 = vunpack.c.h.b16 %v1074
    %v1147 = vpack.c.b16 %v1101, %v1099
    %v1148 = vpack.c.b16 %v1102, %v1100
    %v1149 = vpack.c.b16 %v1105, %v1103
    %v1150 = vpack.c.b16 %v1106, %v1104
    %v1151 = vpack.c.b16 %v1109, %v1107
    %v1152 = vpack.c.b16 %v1110, %v1108
    %v1153 = vpack.c.b16 %v1113, %v1111
    %v1154 = vpack.c.b16 %v1114, %v1112
    %v1155 = vpack.c.b16 %v1117, %v1115
    %v1156 = vpack.c.b16 %v1118, %v1116
    %v1157 = vpack.c.b16 %v1121, %v1119
    %v1158 = vpack.c.b16 %v1122, %v1120
    %v1159 = vpack.c.b16 %v1125, %v1123
    %v1160 = vpack.c.b16 %v1126, %v1124
    %v1161 = vpack.c.b16 %v1129, %v1127
    %v1162 = vpack.c.b16 %v1130, %v1128
    %v1163 = vpack.c.b16 %v1133, %v1131
    %v1164 = vpack.c.b16 %v1134, %v1132
    %v1165 = vpack.c.b16 %v1137, %v1135
    %v1166 = vpack.c.b16 %v1138, %v1136
    %v1167 = vpack.c.b16 %v1141, %v1139
    %v1168 = vpack.c.b16 %v1142, %v1140
    %v1169 = vpack.c.b16 %v1145, %v1143
    %v1170 = vpack.c.b16 %v1146, %v1144
    %v1196 = vsel %vm645, %v1043, 0
    %v1199 = vsel %vm645, %v1045, 0
    %v1202 = vsel %vm645, %v1047, 0
    %v1205 = vsel %vm645, %v1049, 0
    %1207 = vmatprep.subr.bf16.mxu0 %v1148
    %1208 = vmatpush1.bf16.msra.mxu0 %v1147
    %1209 = vmatprep.subr.bf16.mxu0 %v1150
    %1210 = vmatpush1.bf16.msra.mxu0 %v1149
    %1211 = vmatprep.subr.bf16.mxu0 %v1152
    %1212 = vmatpush1.bf16.msra.mxu0 %v1151
    %1213 = vmatprep.subr.bf16.mxu0 %v1154
    %1214 = vmatpush1.bf16.msra.mxu0 %v1153
    %1215 = vmatprep.subr.bf16.mxu0 %v1156
    %1216 = vmatpush1.bf16.msra.mxu0 %v1155
    %1217 = vmatprep.subr.bf16.mxu0 %v1158
    %1218 = vmatpush1.bf16.msra.mxu0 %v1157
    %1219 = vmatprep.subr.bf16.mxu0 %v1160
    %1220 = vmatpush1.bf16.msra.mxu0 %v1159
    %1221 = vmatprep.subr.bf16.mxu0 %v1162
    %1222 = vmatpush1.bf16.msra.mxu0 %v1161
    %1223 = vmatprep.subr.bf16.mxu0 %v1164
    %1224 = vmatpush1.bf16.msra.mxu0 %v1163
    %1225 = vmatprep.subr.bf16.mxu0 %v1166
    %1226 = vmatpush1.bf16.msra.mxu0 %v1165
    %1227 = vmatprep.subr.bf16.mxu0 %v1168
    %1228 = vmatpush1.bf16.msra.mxu0 %v1167
    %1229 = vmatprep.subr.bf16.mxu0 %v1170
    %1230 = vmatpush1.bf16.msra.mxu0 %v1169
    %1231 = vmatprep.subr.bf16.mxu0 0
    %1232 = vmatpush1.bf16.msra.mxu0 0
    %1233 = vmatprep.subr.bf16.mxu0 0
    %1234 = vmatpush1.bf16.msra.mxu0 0
    %1235 = vmatprep.subr.bf16.mxu0 0
    %1236 = vmatpush1.bf16.msra.mxu0 0
    %1237 = vmatprep.subr.bf16.mxu0 0
    %1238 = vmatpush1.bf16.msra.mxu0 0
    %1239 = vmatprep.mubr.bf16.mxu0 %v1196
    %1240 = vmatmul.mubr.bf16.gmra.mrb[0].mxu0 %v1042
    %v1241 = vpop.f32.mrb[0].mxu0
    %v1242 = vadd.f32 0.0, %v1241
    %v1243 = vpop.f32.mrb[0].mxu0
    %v1244 = vadd.f32 0.0, %v1243
    %v1245 = vpop.f32.mrb[0].mxu0
    %v1246 = vadd.f32 0.0, %v1245
    %v1247 = vpop.f32.mrb[0].mxu0
    %v1248 = vadd.f32 0.0, %v1247
    %1249 = vmatprep.mubr.bf16.mxu0 %v1199
    %1250 = vmatmul.mubr.bf16.gmra.mrb[0].mxu0 %v1044
    %v1251 = vpop.f32.mrb[0].mxu0
    %v1252 = vadd.f32 0.0, %v1251
    %v1253 = vpop.f32.mrb[0].mxu0
    %v1254 = vadd.f32 0.0, %v1253
    %v1255 = vpop.f32.mrb[0].mxu0
    %v1256 = vadd.f32 0.0, %v1255
    %v1257 = vpop.f32.mrb[0].mxu0
    %v1258 = vadd.f32 0.0, %v1257
    %1259 = vmatprep.mubr.bf16.mxu0 %v1202
    %1260 = vmatmul.mubr.bf16.gmra.mrb[0].mxu0 %v1046
    %v1261 = vpop.f32.mrb[0].mxu0
    %v1262 = vadd.f32 0.0, %v1261
    %v1263 = vpop.f32.mrb[0].mxu0
    %v1264 = vadd.f32 0.0, %v1263
    %v1265 = vpop.f32.mrb[0].mxu0
    %v1266 = vadd.f32 0.0, %v1265
    %v1267 = vpop.f32.mrb[0].mxu0
    %v1268 = vadd.f32 0.0, %v1267
    %1269 = vmatprep.mubr.bf16.mxu0 %v1205
    %1270 = vmatmul.mubr.bf16.gmra.mrb[0].mxu0 %v1048
    %v1271 = vpop.f32.mrb[0].mxu0
    %v1272 = vadd.f32 0.0, %v1271
    %v1273 = vpop.f32.mrb[0].mxu0
    %v1274 = vadd.f32 0.0, %v1273
    %v1275 = vpop.f32.mrb[0].mxu0
    %v1276 = vadd.f32 0.0, %v1275
    %v1277 = vpop.f32.mrb[0].mxu0
    %v1278 = vadd.f32 0.0, %v1277
    %1279 = vdwg.mxu0
    %v1280 = vadd.f32 %v898, %v1242
    %v1281 = vadd.f32 %v900, %v1244
    %v1282 = vadd.f32 %v902, %v1246
    %v1283 = vadd.f32 %v904, %v1248
    %v1284 = vadd.f32 %v908, %v1252
    %v1285 = vadd.f32 %v910, %v1254
    %v1286 = vadd.f32 %v912, %v1256
    %v1287 = vadd.f32 %v914, %v1258
    %v1288 = vadd.f32 %v918, %v1262
    %v1289 = vadd.f32 %v920, %v1264
    %v1290 = vadd.f32 %v922, %v1266
    %v1291 = vadd.f32 %v924, %v1268
    %v1292 = vadd.f32 %v928, %v1272
    %v1293 = vadd.f32 %v930, %v1274
    %v1294 = vadd.f32 %v932, %v1276
    %v1295 = vadd.f32 %v934, %v1278
    %s1296 = scalar_lea.vmem %s5, 96
    %v1297 = vld [vmem:[%s1296] sm:$0xf]
    %v1298 = vld [vmem:[%s1296 + $0x4] sm:$0xf]
    %v1299 = vld [vmem:[%s1296 + $0x8] sm:$0xf]
    %v1300 = vld [vmem:[%s1296 + $0xc] sm:$0xf]
    %v1301 = vld [vmem:[%s1296 + $0x10] sm:$0xf]
    %v1302 = vld [vmem:[%s1296 + $0x14] sm:$0xf]
    %v1303 = vld [vmem:[%s1296 + $0x18] sm:$0xf]
    %v1304 = vld [vmem:[%s1296 + $0x1c] sm:$0xf]
    %v1313 = vunpack.c.l.b16 %v1297
    %v1314 = vunpack.c.l.b16 %v1298
    %v1315 = vunpack.c.l.b16 %v1299
    %v1316 = vunpack.c.l.b16 %v1300
    %v1317 = vunpack.c.l.b16 %v1301
    %v1318 = vunpack.c.l.b16 %v1302
    %v1319 = vunpack.c.l.b16 %v1303
    %v1320 = vunpack.c.l.b16 %v1304
    %v1321 = vpack.c.b16 %v1314, %v1313
    %v1322 = vpack.c.b16 %v1316, %v1315
    %v1323 = vpack.c.b16 %v1318, %v1317
    %v1324 = vpack.c.b16 %v1320, %v1319
    %1329 = vmatprep.subr.bf16.mxu0 %v250
    %1330 = vmatpush1.bf16.msra.mxu0 %v249
    %1331 = vmatprep.subr.bf16.mxu0 %v252
    %1332 = vmatpush1.bf16.msra.mxu0 %v251
    %1333 = vmatprep.subr.bf16.mxu0 %v254
    %1334 = vmatpush1.bf16.msra.mxu0 %v253
    %1335 = vmatprep.subr.bf16.mxu0 %v256
    %1336 = vmatpush1.bf16.msra.mxu0 %v255
    %1337 = vmatprep.subr.bf16.mxu0 %v258
    %1338 = vmatpush1.bf16.msra.mxu0 %v257
    %1339 = vmatprep.subr.bf16.mxu0 %v260
    %1340 = vmatpush1.bf16.msra.mxu0 %v259
    %1341 = vmatprep.subr.bf16.mxu0 %v262
    %1342 = vmatpush1.bf16.msra.mxu0 %v261
    %1343 = vmatprep.subr.bf16.mxu0 %v264
    %1344 = vmatpush1.bf16.msra.mxu0 %v263
    %1345 = vmatprep.subr.bf16.mxu0 0
    %1346 = vmatpush1.bf16.msra.mxu0 0
    %1347 = vmatprep.subr.bf16.mxu0 0
    %1348 = vmatpush1.bf16.msra.mxu0 0
    %1349 = vmatprep.subr.bf16.mxu0 0
    %1350 = vmatpush1.bf16.msra.mxu0 0
    %1351 = vmatprep.subr.bf16.mxu0 0
    %1352 = vmatpush1.bf16.msra.mxu0 0
    %1353 = vmatprep.subr.bf16.mxu0 0
    %1354 = vmatpush1.bf16.msra.mxu0 0
    %1355 = vmatprep.subr.bf16.mxu0 0
    %1356 = vmatpush1.bf16.msra.mxu0 0
    %1357 = vmatprep.subr.bf16.mxu0 0
    %1358 = vmatpush1.bf16.msra.mxu0 0
    %1359 = vmatprep.subr.bf16.mxu0 0
    %1360 = vmatpush1.bf16.msra.mxu0 0
    %1361 = vmatprep.mubr.bf16.mxu0 0
    %1362 = vmatmul.mubr.bf16.gmra.mrb[0].mxu0 %v1321
    %v1363 = vpop.f32.mrb[0].mxu0
    %v1364 = vadd.f32 0.0, %v1363
    %v1365 = vpop.f32.mrb[0].mxu0
    %v1366 = vadd.f32 0.0, %v1365
    %v1367 = vpop.f32.mrb[0].mxu0
    %v1368 = vadd.f32 0.0, %v1367
    %v1369 = vpop.f32.mrb[0].mxu0
    %v1370 = vadd.f32 0.0, %v1369
    %1371 = vmatprep.mubr.bf16.mxu0 0
    %1372 = vmatmul.mubr.bf16.gmra.mrb[0].mxu0 %v1322
    %v1373 = vpop.f32.mrb[0].mxu0
    %v1374 = vadd.f32 0.0, %v1373
    %v1375 = vpop.f32.mrb[0].mxu0
    %v1376 = vadd.f32 0.0, %v1375
    %v1377 = vpop.f32.mrb[0].mxu0
    %v1378 = vadd.f32 0.0, %v1377
    %v1379 = vpop.f32.mrb[0].mxu0
    %v1380 = vadd.f32 0.0, %v1379
    %1381 = vmatprep.mubr.bf16.mxu0 0
    %1382 = vmatmul.mubr.bf16.gmra.mrb[0].mxu0 %v1323
    %v1383 = vpop.f32.mrb[0].mxu0
    %v1384 = vadd.f32 0.0, %v1383
    %v1385 = vpop.f32.mrb[0].mxu0
    %v1386 = vadd.f32 0.0, %v1385
    %v1387 = vpop.f32.mrb[0].mxu0
    %v1388 = vadd.f32 0.0, %v1387
    %v1389 = vpop.f32.mrb[0].mxu0
    %v1390 = vadd.f32 0.0, %v1389
    %1391 = vmatprep.mubr.bf16.mxu0 0
    %1392 = vmatmul.mubr.bf16.gmra.mrb[0].mxu0 %v1324
    %v1393 = vpop.f32.mrb[0].mxu0
    %v1394 = vadd.f32 0.0, %v1393
    %v1395 = vpop.f32.mrb[0].mxu0
    %v1396 = vadd.f32 0.0, %v1395
    %v1397 = vpop.f32.mrb[0].mxu0
    %v1398 = vadd.f32 0.0, %v1397
    %v1399 = vpop.f32.mrb[0].mxu0
    %v1400 = vadd.f32 0.0, %v1399
    %1401 = vdwg.mxu0
    %v1402 = vpack.c.bf16 %v1368, %v1364
    %v1403 = vpack.c.bf16 %v1370, %v1366
    %v1404 = vpack.c.bf16 %v1378, %v1374
    %v1405 = vpack.c.bf16 %v1380, %v1376
    %v1406 = vpack.c.bf16 %v1388, %v1384
    %v1407 = vpack.c.bf16 %v1390, %v1386
    %v1408 = vpack.c.bf16 %v1398, %v1394
    %v1409 = vpack.c.bf16 %v1400, %v1396
    %s1410 = scalar_lea.vmem %s3, 576
    %v1411 = vld [vmem:[%s1410] sm:$0xff]
    %v1412 = vld [vmem:[%s1410 + $0x8] sm:$0xff]
    %v1413 = vld [vmem:[%s1410 + $0x10] sm:$0xff]
    %v1414 = vld [vmem:[%s1410 + $0x18] sm:$0xff]
    %v1415 = vld [vmem:[%s1410 + $0x20] sm:$0xff]
    %v1416 = vld [vmem:[%s1410 + $0x28] sm:$0xff]
    %v1417 = vld [vmem:[%s1410 + $0x30] sm:$0xff]
    %v1418 = vld [vmem:[%s1410 + $0x38] sm:$0xff]
    %v1419 = vld [vmem:[%s1410 + $0x40] sm:$0xff]
    %v1420 = vld [vmem:[%s1410 + $0x48] sm:$0xff]
    %v1421 = vld [vmem:[%s1410 + $0x50] sm:$0xff]
    %v1422 = vld [vmem:[%s1410 + $0x58] sm:$0xff]
    %v1423 = vld [vmem:[%s1410 + $0x60] sm:$0xff]
    %v1424 = vld [vmem:[%s1410 + $0x68] sm:$0xff]
    %v1425 = vld [vmem:[%s1410 + $0x70] sm:$0xff]
    %v1426 = vld [vmem:[%s1410 + $0x78] sm:$0xff]
    %v1427 = vld [vmem:[%s1410 + $0x80] sm:$0xff]
    %v1428 = vld [vmem:[%s1410 + $0x88] sm:$0xff]
    %v1429 = vld [vmem:[%s1410 + $0x90] sm:$0xff]
    %v1430 = vld [vmem:[%s1410 + $0x98] sm:$0xff]
    %v1431 = vld [vmem:[%s1410 + $0xa0] sm:$0xff]
    %v1432 = vld [vmem:[%s1410 + $0xa8] sm:$0xff]
    %v1433 = vld [vmem:[%s1410 + $0xb0] sm:$0xff]
    %v1434 = vld [vmem:[%s1410 + $0xb8] sm:$0xff]
    %v1459 = vunpack.c.l.b16 %v1411
    %v1460 = vunpack.c.h.b16 %v1411
    %v1461 = vunpack.c.l.b16 %v1412
    %v1462 = vunpack.c.h.b16 %v1412
    %v1463 = vunpack.c.l.b16 %v1413
    %v1464 = vunpack.c.h.b16 %v1413
    %v1465 = vunpack.c.l.b16 %v1414
    %v1466 = vunpack.c.h.b16 %v1414
    %v1467 = vunpack.c.l.b16 %v1415
    %v1468 = vunpack.c.h.b16 %v1415
    %v1469 = vunpack.c.l.b16 %v1416
    %v1470 = vunpack.c.h.b16 %v1416
    %v1471 = vunpack.c.l.b16 %v1417
    %v1472 = vunpack.c.h.b16 %v1417
    %v1473 = vunpack.c.l.b16 %v1418
    %v1474 = vunpack.c.h.b16 %v1418
    %v1475 = vunpack.c.l.b16 %v1419
    %v1476 = vunpack.c.h.b16 %v1419
    %v1477 = vunpack.c.l.b16 %v1420
    %v1478 = vunpack.c.h.b16 %v1420
    %v1479 = vunpack.c.l.b16 %v1421
    %v1480 = vunpack.c.h.b16 %v1421
    %v1481 = vunpack.c.l.b16 %v1422
    %v1482 = vunpack.c.h.b16 %v1422
    %v1483 = vunpack.c.l.b16 %v1423
    %v1484 = vunpack.c.h.b16 %v1423
    %v1485 = vunpack.c.l.b16 %v1424
    %v1486 = vunpack.c.h.b16 %v1424
    %v1487 = vunpack.c.l.b16 %v1425
    %v1488 = vunpack.c.h.b16 %v1425
    %v1489 = vunpack.c.l.b16 %v1426
    %v1490 = vunpack.c.h.b16 %v1426
    %v1491 = vunpack.c.l.b16 %v1427
    %v1492 = vunpack.c.h.b16 %v1427
    %v1493 = vunpack.c.l.b16 %v1428
    %v1494 = vunpack.c.h.b16 %v1428
    %v1495 = vunpack.c.l.b16 %v1429
    %v1496 = vunpack.c.h.b16 %v1429
    %v1497 = vunpack.c.l.b16 %v1430
    %v1498 = vunpack.c.h.b16 %v1430
    %v1499 = vunpack.c.l.b16 %v1431
    %v1500 = vunpack.c.h.b16 %v1431
    %v1501 = vunpack.c.l.b16 %v1432
    %v1502 = vunpack.c.h.b16 %v1432
    %v1503 = vunpack.c.l.b16 %v1433
    %v1504 = vunpack.c.h.b16 %v1433
    %v1505 = vunpack.c.l.b16 %v1434
    %v1506 = vunpack.c.h.b16 %v1434
    %v1507 = vpack.c.b16 %v1461, %v1459
    %v1508 = vpack.c.b16 %v1462, %v1460
    %v1509 = vpack.c.b16 %v1465, %v1463
    %v1510 = vpack.c.b16 %v1466, %v1464
    %v1511 = vpack.c.b16 %v1469, %v1467
    %v1512 = vpack.c.b16 %v1470, %v1468
    %v1513 = vpack.c.b16 %v1473, %v1471
    %v1514 = vpack.c.b16 %v1474, %v1472
    %v1515 = vpack.c.b16 %v1477, %v1475
    %v1516 = vpack.c.b16 %v1478, %v1476
    %v1517 = vpack.c.b16 %v1481, %v1479
    %v1518 = vpack.c.b16 %v1482, %v1480
    %v1519 = vpack.c.b16 %v1485, %v1483
    %v1520 = vpack.c.b16 %v1486, %v1484
    %v1521 = vpack.c.b16 %v1489, %v1487
    %v1522 = vpack.c.b16 %v1490, %v1488
    %v1523 = vpack.c.b16 %v1493, %v1491
    %v1524 = vpack.c.b16 %v1494, %v1492
    %v1525 = vpack.c.b16 %v1497, %v1495
    %v1526 = vpack.c.b16 %v1498, %v1496
    %v1527 = vpack.c.b16 %v1501, %v1499
    %v1528 = vpack.c.b16 %v1502, %v1500
    %v1529 = vpack.c.b16 %v1505, %v1503
    %v1530 = vpack.c.b16 %v1506, %v1504
    %v1556 = vsel %vm645, %v1403, 0
    %v1559 = vsel %vm645, %v1405, 0
    %v1562 = vsel %vm645, %v1407, 0
    %v1565 = vsel %vm645, %v1409, 0
    %1567 = vmatprep.subr.bf16.mxu0 %v1508
    %1568 = vmatpush1.bf16.msra.mxu0 %v1507
    %1569 = vmatprep.subr.bf16.mxu0 %v1510
    %1570 = vmatpush1.bf16.msra.mxu0 %v1509
    %1571 = vmatprep.subr.bf16.mxu0 %v1512
    %1572 = vmatpush1.bf16.msra.mxu0 %v1511
    %1573 = vmatprep.subr.bf16.mxu0 %v1514
    %1574 = vmatpush1.bf16.msra.mxu0 %v1513
    %1575 = vmatprep.subr.bf16.mxu0 %v1516
    %1576 = vmatpush1.bf16.msra.mxu0 %v1515
    %1577 = vmatprep.subr.bf16.mxu0 %v1518
    %1578 = vmatpush1.bf16.msra.mxu0 %v1517
    %1579 = vmatprep.subr.bf16.mxu0 %v1520
    %1580 = vmatpush1.bf16.msra.mxu0 %v1519
    %1581 = vmatprep.subr.bf16.mxu0 %v1522
    %1582 = vmatpush1.bf16.msra.mxu0 %v1521
    %1583 = vmatprep.subr.bf16.mxu0 %v1524
    %1584 = vmatpush1.bf16.msra.mxu0 %v1523
    %1585 = vmatprep.subr.bf16.mxu0 %v1526
    %1586 = vmatpush1.bf16.msra.mxu0 %v1525
    %1587 = vmatprep.subr.bf16.mxu0 %v1528
    %1588 = vmatpush1.bf16.msra.mxu0 %v1527
    %1589 = vmatprep.subr.bf16.mxu0 %v1530
    %1590 = vmatpush1.bf16.msra.mxu0 %v1529
    %1591 = vmatprep.subr.bf16.mxu0 0
    %1592 = vmatpush1.bf16.msra.mxu0 0
    %1593 = vmatprep.subr.bf16.mxu0 0
    %1594 = vmatpush1.bf16.msra.mxu0 0
    %1595 = vmatprep.subr.bf16.mxu0 0
    %1596 = vmatpush1.bf16.msra.mxu0 0
    %1597 = vmatprep.subr.bf16.mxu0 0
    %1598 = vmatpush1.bf16.msra.mxu0 0
    %1599 = vmatprep.mubr.bf16.mxu0 %v1556
    %1600 = vmatmul.mubr.bf16.gmra.mrb[0].mxu0 %v1402
    %v1601 = vpop.f32.mrb[0].mxu0
    %v1602 = vadd.f32 0.0, %v1601
    %v1603 = vpop.f32.mrb[0].mxu0
    %v1604 = vadd.f32 0.0, %v1603
    %v1605 = vpop.f32.mrb[0].mxu0
    %v1606 = vadd.f32 0.0, %v1605
    %v1607 = vpop.f32.mrb[0].mxu0
    %v1608 = vadd.f32 0.0, %v1607
    %1609 = vmatprep.mubr.bf16.mxu0 %v1559
    %1610 = vmatmul.mubr.bf16.gmra.mrb[0].mxu0 %v1404
    %v1611 = vpop.f32.mrb[0].mxu0
    %v1612 = vadd.f32 0.0, %v1611
    %v1613 = vpop.f32.mrb[0].mxu0
    %v1614 = vadd.f32 0.0, %v1613
    %v1615 = vpop.f32.mrb[0].mxu0
    %v1616 = vadd.f32 0.0, %v1615
    %v1617 = vpop.f32.mrb[0].mxu0
    %v1618 = vadd.f32 0.0, %v1617
    %1619 = vmatprep.mubr.bf16.mxu0 %v1562
    %1620 = vmatmul.mubr.bf16.gmra.mrb[0].mxu0 %v1406
    %v1621 = vpop.f32.mrb[0].mxu0
    %v1622 = vadd.f32 0.0, %v1621
    %v1623 = vpop.f32.mrb[0].mxu0
    %v1624 = vadd.f32 0.0, %v1623
    %v1625 = vpop.f32.mrb[0].mxu0
    %v1626 = vadd.f32 0.0, %v1625
    %v1627 = vpop.f32.mrb[0].mxu0
    %v1628 = vadd.f32 0.0, %v1627
    %1629 = vmatprep.mubr.bf16.mxu0 %v1565
    %1630 = vmatmul.mubr.bf16.gmra.mrb[0].mxu0 %v1408
    %v1631 = vpop.f32.mrb[0].mxu0
    %v1632 = vadd.f32 0.0, %v1631
    %v1633 = vpop.f32.mrb[0].mxu0
    %v1634 = vadd.f32 0.0, %v1633
    %v1635 = vpop.f32.mrb[0].mxu0
    %v1636 = vadd.f32 0.0, %v1635
    %v1637 = vpop.f32.mrb[0].mxu0
    %v1638 = vadd.f32 0.0, %v1637
    %1639 = vdwg.mxu0
    %v1640 = vadd.f32 %v1280, %v1602
    %v1641 = vadd.f32 %v1281, %v1604
    %v1642 = vadd.f32 %v1282, %v1606
    %v1643 = vadd.f32 %v1283, %v1608
    %v1644 = vadd.f32 %v1284, %v1612
    %v1645 = vadd.f32 %v1285, %v1614
    %v1646 = vadd.f32 %v1286, %v1616
    %v1647 = vadd.f32 %v1287, %v1618
    %v1648 = vadd.f32 %v1288, %v1622
    %v1649 = vadd.f32 %v1289, %v1624
    %v1650 = vadd.f32 %v1290, %v1626
    %v1651 = vadd.f32 %v1291, %v1628
    %v1652 = vadd.f32 %v1292, %v1632
    %v1653 = vadd.f32 %v1293, %v1634
    %v1654 = vadd.f32 %v1294, %v1636
    %v1655 = vadd.f32 %v1295, %v1638
    %vm1656 = vcmp.ge.f32.partialorder %v1640, 0.0
    %vm1657 = vcmp.ge.f32.partialorder %v1641, 0.0
    %vm1658 = vcmp.ge.f32.partialorder %v1642, 0.0
    %vm1659 = vcmp.ge.f32.partialorder %v1643, 0.0
    %vm1660 = vcmp.ge.f32.partialorder %v1644, 0.0
    %vm1661 = vcmp.ge.f32.partialorder %v1645, 0.0
    %vm1662 = vcmp.ge.f32.partialorder %v1646, 0.0
    %vm1663 = vcmp.ge.f32.partialorder %v1647, 0.0
    %vm1664 = vcmp.ge.f32.partialorder %v1648, 0.0
    %vm1665 = vcmp.ge.f32.partialorder %v1649, 0.0
    %vm1666 = vcmp.ge.f32.partialorder %v1650, 0.0
    %vm1667 = vcmp.ge.f32.partialorder %v1651, 0.0
    %vm1668 = vcmp.ge.f32.partialorder %v1652, 0.0
    %vm1669 = vcmp.ge.f32.partialorder %v1653, 0.0
    %vm1670 = vcmp.ge.f32.partialorder %v1654, 0.0
    %vm1671 = vcmp.ge.f32.partialorder %v1655, 0.0
    %v1672 = vmul.f32 %v1640, 0.2
    %v1673 = vmul.f32 %v1641, 0.2
    %v1674 = vmul.f32 %v1642, 0.2
    %v1675 = vmul.f32 %v1643, 0.2
    %v1676 = vmul.f32 %v1644, 0.2
    %v1677 = vmul.f32 %v1645, 0.2
    %v1678 = vmul.f32 %v1646, 0.2
    %v1679 = vmul.f32 %v1647, 0.2
    %v1680 = vmul.f32 %v1648, 0.2
    %v1681 = vmul.f32 %v1649, 0.2
    %v1682 = vmul.f32 %v1650, 0.2
    %v1683 = vmul.f32 %v1651, 0.2
    %v1684 = vmul.f32 %v1652, 0.2
    %v1685 = vmul.f32 %v1653, 0.2
    %v1686 = vmul.f32 %v1654, 0.2
    %v1687 = vmul.f32 %v1655, 0.2
    %v1688 = vsel %vm1656, %v1640, %v1672
    %v1689 = vsel %vm1657, %v1641, %v1673
    %v1690 = vsel %vm1658, %v1642, %v1674
    %v1691 = vsel %vm1659, %v1643, %v1675
    %v1692 = vsel %vm1660, %v1644, %v1676
    %v1693 = vsel %vm1661, %v1645, %v1677
    %v1694 = vsel %vm1662, %v1646, %v1678
    %v1695 = vsel %vm1663, %v1647, %v1679
    %v1696 = vsel %vm1664, %v1648, %v1680
    %v1697 = vsel %vm1665, %v1649, %v1681
    %v1698 = vsel %vm1666, %v1650, %v1682
    %v1699 = vsel %vm1667, %v1651, %v1683
    %v1700 = vsel %vm1668, %v1652, %v1684
    %v1701 = vsel %vm1669, %v1653, %v1685
    %v1702 = vsel %vm1670, %v1654, %v1686
    %v1703 = vsel %vm1671, %v1655, %v1687
    %v1704 = vpack.c.bf16 %v1690, %v1688
    %v1705 = vpack.c.bf16 %v1691, %v1689
    %v1706 = vpack.c.bf16 %v1694, %v1692
    %v1707 = vpack.c.bf16 %v1695, %v1693
    %v1708 = vpack.c.bf16 %v1698, %v1696
    %v1709 = vpack.c.bf16 %v1699, %v1697
    %v1710 = vpack.c.bf16 %v1702, %v1700
    %v1711 = vpack.c.bf16 %v1703, %v1701
    %v1712 = vld [vmem:[%s9] sm:$0xf]
    %v1713 = vld [vmem:[%s9 + $0x4] sm:$0xf]
    %v1714 = vld [vmem:[%s9 + $0x8] sm:$0xf]
    %v1715 = vld [vmem:[%s9 + $0xc] sm:$0xf]
    %v1720 = vunpack.c.l.b16 %v1712
    %v1721 = vunpack.c.l.b16 %v1713
    %v1722 = vunpack.c.l.b16 %v1714
    %v1723 = vunpack.c.l.b16 %v1715
    %v1724 = vpack.c.b16 %v1721, %v1720
    %v1725 = vpack.c.b16 %v1723, %v1722
    %v1727 = vsel %vm645, %v1724, 0
    %v1730 = vsel %vm645, %v1725, 0
    %1732 = vmatprep.subr.bf16.mxu0 %v1705
    %1733 = vmatpush1.bf16.msra.mxu0 %v1704
    %1734 = vmatprep.subr.bf16.mxu0 %v1707
    %1735 = vmatpush1.bf16.msra.mxu0 %v1706
    %1736 = vmatprep.subr.bf16.mxu0 %v1709
    %1737 = vmatpush1.bf16.msra.mxu0 %v1708
    %1738 = vmatprep.subr.bf16.mxu0 %v1711
    %1739 = vmatpush1.bf16.msra.mxu0 %v1710
    %1740 = vmatprep.subr.bf16.mxu0 0
    %1741 = vmatpush1.bf16.msra.mxu0 0
    %1742 = vmatprep.subr.bf16.mxu0 0
    %1743 = vmatpush1.bf16.msra.mxu0 0
    %1744 = vmatprep.subr.bf16.mxu0 0
    %1745 = vmatpush1.bf16.msra.mxu0 0
    %1746 = vmatprep.subr.bf16.mxu0 0
    %1747 = vmatpush1.bf16.msra.mxu0 0
    %1748 = vmatprep.subr.bf16.mxu0 0
    %1749 = vmatpush1.bf16.msra.mxu0 0
    %1750 = vmatprep.subr.bf16.mxu0 0
    %1751 = vmatpush1.bf16.msra.mxu0 0
    %1752 = vmatprep.subr.bf16.mxu0 0
    %1753 = vmatpush1.bf16.msra.mxu0 0
    %1754 = vmatprep.subr.bf16.mxu0 0
    %1755 = vmatpush1.bf16.msra.mxu0 0
    %1756 = vmatprep.subr.bf16.mxu0 0
    %1757 = vmatpush1.bf16.msra.mxu0 0
    %1758 = vmatprep.subr.bf16.mxu0 0
    %1759 = vmatpush1.bf16.msra.mxu0 0
    %1760 = vmatprep.subr.bf16.mxu0 0
    %1761 = vmatpush1.bf16.msra.mxu0 0
    %1762 = vmatprep.subr.bf16.mxu0 0
    %1763 = vmatpush1.bf16.msra.mxu0 0
    %1764 = vmatprep.mubr.bf16.mxu0 0
    %1765 = vmatmul.mubr.bf16.gmra.mrb[0].mxu0 %v1727
    %v1766 = vpop.f32.mrb[0].mxu0
    %v1767 = vadd.f32 0.0, %v1766
    %v1768 = vpop.f32.mrb[0].mxu0
    %v1769 = vadd.f32 0.0, %v1768
    %v1770 = vpop.f32.mrb[0].mxu0
    %v1771 = vadd.f32 0.0, %v1770
    %v1772 = vpop.f32.mrb[0].mxu0
    %v1773 = vadd.f32 0.0, %v1772
    %1774 = vmatprep.mubr.bf16.mxu0 0
    %1775 = vmatmul.mubr.bf16.gmra.mrb[0].mxu0 %v1730
    %v1776 = vpop.f32.mrb[0].mxu0
    %v1777 = vadd.f32 0.0, %v1776
    %v1778 = vpop.f32.mrb[0].mxu0
    %v1779 = vadd.f32 0.0, %v1778
    %v1780 = vpop.f32.mrb[0].mxu0
    %v1781 = vadd.f32 0.0, %v1780
    %v1782 = vpop.f32.mrb[0].mxu0
    %v1783 = vadd.f32 0.0, %v1782
    %1784 = vdwg.mxu0
    %v1785 = vpack.c.bf16 %v1771, %v1767
    %v1786 = vpack.c.bf16 %v1773, %v1769
    %v1787 = vpack.c.bf16 %v1781, %v1777
    %v1788 = vpack.c.bf16 %v1783, %v1779
    %v1789 = vld [vmem:[%s7] sm:$0xff]
    %v1790 = vld [vmem:[%s7 + $0x8] sm:$0xff]
    %v1791 = vld [vmem:[%s7 + $0x10] sm:$0xff]
    %v1792 = vld [vmem:[%s7 + $0x18] sm:$0xff]
    %v1793 = vld [vmem:[%s7 + $0x20] sm:$0xff]
    %v1794 = vld [vmem:[%s7 + $0x28] sm:$0xff]
    %v1795 = vld [vmem:[%s7 + $0x30] sm:$0xff]
    %v1796 = vld [vmem:[%s7 + $0x38] sm:$0xff]
    %v1797 = vld [vmem:[%s7 + $0x40] sm:$0xff]
    %v1798 = vld [vmem:[%s7 + $0x48] sm:$0xff]
    %v1799 = vld [vmem:[%s7 + $0x50] sm:$0xff]
    %v1800 = vld [vmem:[%s7 + $0x58] sm:$0xff]
    %v1801 = vld [vmem:[%s7 + $0x60] sm:$0xff]
    %v1802 = vld [vmem:[%s7 + $0x68] sm:$0xff]
    %v1803 = vld [vmem:[%s7 + $0x70] sm:$0xff]
    %v1804 = vld [vmem:[%s7 + $0x78] sm:$0xff]
    %v1805 = vld [vmem:[%s7 + $0x80] sm:$0xff]
    %v1806 = vld [vmem:[%s7 + $0x88] sm:$0xff]
    %v1807 = vld [vmem:[%s7 + $0x90] sm:$0xff]
    %v1808 = vld [vmem:[%s7 + $0x98] sm:$0xff]
    %v1809 = vld [vmem:[%s7 + $0xa0] sm:$0xff]
    %v1810 = vld [vmem:[%s7 + $0xa8] sm:$0xff]
    %v1811 = vld [vmem:[%s7 + $0xb0] sm:$0xff]
    %v1812 = vld [vmem:[%s7 + $0xb8] sm:$0xff]
    %v1813 = vld [vmem:[%s7 + $0xc0] sm:$0xff]
    %v1814 = vld [vmem:[%s7 + $0xc8] sm:$0xff]
    %v1815 = vld [vmem:[%s7 + $0xd0] sm:$0xff]
    %v1816 = vld [vmem:[%s7 + $0xd8] sm:$0xff]
    %v1817 = vld [vmem:[%s7 + $0xe0] sm:$0xff]
    %v1818 = vld [vmem:[%s7 + $0xe8] sm:$0xff]
    %v1819 = vld [vmem:[%s7 + $0xf0] sm:$0xff]
    %v1820 = vld [vmem:[%s7 + $0xf8] sm:$0xff]
    %s1821 = scalar_lea.vmem %s9, 16
    %v1822 = vld [vmem:[%s1821] sm:$0xf]
    %v1823 = vld [vmem:[%s1821 + $0x4] sm:$0xf]
    %v1824 = vld [vmem:[%s1821 + $0x8] sm:$0xf]
    %v1825 = vld [vmem:[%s1821 + $0xc] sm:$0xf]
    %v1830 = vunpack.c.l.b16 %v1822
    %v1831 = vunpack.c.l.b16 %v1823
    %v1832 = vunpack.c.l.b16 %v1824
    %v1833 = vunpack.c.l.b16 %v1825
    %v1834 = vpack.c.b16 %v1831, %v1830
    %v1835 = vpack.c.b16 %v1833, %v1832
    %v1837 = vsel %vm645, %v1834, 0
    %v1840 = vsel %vm645, %v1835, 0
    %1842 = vmatprep.subr.bf16.mxu0 %v1705
    %1843 = vmatpush1.bf16.msra.mxu0 %v1704
    %1844 = vmatprep.subr.bf16.mxu0 %v1707
    %1845 = vmatpush1.bf16.msra.mxu0 %v1706
    %1846 = vmatprep.subr.bf16.mxu0 %v1709
    %1847 = vmatpush1.bf16.msra.mxu0 %v1708
    %1848 = vmatprep.subr.bf16.mxu0 %v1711
    %1849 = vmatpush1.bf16.msra.mxu0 %v1710
    %1850 = vmatprep.subr.bf16.mxu0 0
    %1851 = vmatpush1.bf16.msra.mxu0 0
    %1852 = vmatprep.subr.bf16.mxu0 0
    %1853 = vmatpush1.bf16.msra.mxu0 0
    %1854 = vmatprep.subr.bf16.mxu0 0
    %1855 = vmatpush1.bf16.msra.mxu0 0
    %1856 = vmatprep.subr.bf16.mxu0 0
    %1857 = vmatpush1.bf16.msra.mxu0 0
    %1858 = vmatprep.subr.bf16.mxu0 0
    %1859 = vmatpush1.bf16.msra.mxu0 0
    %1860 = vmatprep.subr.bf16.mxu0 0
    %1861 = vmatpush1.bf16.msra.mxu0 0
    %1862 = vmatprep.subr.bf16.mxu0 0
    %1863 = vmatpush1.bf16.msra.mxu0 0
    %1864 = vmatprep.subr.bf16.mxu0 0
    %1865 = vmatpush1.bf16.msra.mxu0 0
    %1866 = vmatprep.subr.bf16.mxu0 0
    %1867 = vmatpush1.bf16.msra.mxu0 0
    %1868 = vmatprep.subr.bf16.mxu0 0
    %1869 = vmatpush1.bf16.msra.mxu0 0
    %1870 = vmatprep.subr.bf16.mxu0 0
    %1871 = vmatpush1.bf16.msra.mxu0 0
    %1872 = vmatprep.subr.bf16.mxu0 0
    %1873 = vmatpush1.bf16.msra.mxu0 0
    %1874 = vmatprep.mubr.bf16.mxu0 0
    %1875 = vmatmul.mubr.bf16.gmra.mrb[0].mxu0 %v1837
    %v1876 = vpop.f32.mrb[0].mxu0
    %v1877 = vadd.f32 0.0, %v1876
    %v1878 = vpop.f32.mrb[0].mxu0
    %v1879 = vadd.f32 0.0, %v1878
    %v1880 = vpop.f32.mrb[0].mxu0
    %v1881 = vadd.f32 0.0, %v1880
    %v1882 = vpop.f32.mrb[0].mxu0
    %v1883 = vadd.f32 0.0, %v1882
    %1884 = vmatprep.mubr.bf16.mxu0 0
    %1885 = vmatmul.mubr.bf16.gmra.mrb[0].mxu0 %v1840
    %v1886 = vpop.f32.mrb[0].mxu0
    %v1887 = vadd.f32 0.0, %v1886
    %v1888 = vpop.f32.mrb[0].mxu0
    %v1889 = vadd.f32 0.0, %v1888
    %v1890 = vpop.f32.mrb[0].mxu0
    %v1891 = vadd.f32 0.0, %v1890
    %v1892 = vpop.f32.mrb[0].mxu0
    %v1893 = vadd.f32 0.0, %v1892
    %1894 = vdwg.mxu0
    %v1895 = vpack.c.bf16 %v1881, %v1877
    %v1896 = vpack.c.bf16 %v1883, %v1879
    %v1897 = vpack.c.bf16 %v1891, %v1887
    %v1898 = vpack.c.bf16 %v1893, %v1889
    %s1899 = scalar_lea.vmem %s7, 256
    %v1900 = vld [vmem:[%s1899] sm:$0xff]
    %v1901 = vld [vmem:[%s1899 + $0x8] sm:$0xff]
    %v1902 = vld [vmem:[%s1899 + $0x10] sm:$0xff]
    %v1903 = vld [vmem:[%s1899 + $0x18] sm:$0xff]
    %v1904 = vld [vmem:[%s1899 + $0x20] sm:$0xff]
    %v1905 = vld [vmem:[%s1899 + $0x28] sm:$0xff]
    %v1906 = vld [vmem:[%s1899 + $0x30] sm:$0xff]
    %v1907 = vld [vmem:[%s1899 + $0x38] sm:$0xff]
    %v1908 = vld [vmem:[%s1899 + $0x40] sm:$0xff]
    %v1909 = vld [vmem:[%s1899 + $0x48] sm:$0xff]
    %v1910 = vld [vmem:[%s1899 + $0x50] sm:$0xff]
    %v1911 = vld [vmem:[%s1899 + $0x58] sm:$0xff]
    %v1912 = vld [vmem:[%s1899 + $0x60] sm:$0xff]
    %v1913 = vld [vmem:[%s1899 + $0x68] sm:$0xff]
    %v1914 = vld [vmem:[%s1899 + $0x70] sm:$0xff]
    %v1915 = vld [vmem:[%s1899 + $0x78] sm:$0xff]
    %v1916 = vld [vmem:[%s1899 + $0x80] sm:$0xff]
    %v1917 = vld [vmem:[%s1899 + $0x88] sm:$0xff]
    %v1918 = vld [vmem:[%s1899 + $0x90] sm:$0xff]
    %v1919 = vld [vmem:[%s1899 + $0x98] sm:$0xff]
    %v1920 = vld [vmem:[%s1899 + $0xa0] sm:$0xff]
    %v1921 = vld [vmem:[%s1899 + $0xa8] sm:$0xff]
    %v1922 = vld [vmem:[%s1899 + $0xb0] sm:$0xff]
    %v1923 = vld [vmem:[%s1899 + $0xb8] sm:$0xff]
    %v1924 = vld [vmem:[%s1899 + $0xc0] sm:$0xff]
    %v1925 = vld [vmem:[%s1899 + $0xc8] sm:$0xff]
    %v1926 = vld [vmem:[%s1899 + $0xd0] sm:$0xff]
    %v1927 = vld [vmem:[%s1899 + $0xd8] sm:$0xff]
    %v1928 = vld [vmem:[%s1899 + $0xe0] sm:$0xff]
    %v1929 = vld [vmem:[%s1899 + $0xe8] sm:$0xff]
    %v1930 = vld [vmem:[%s1899 + $0xf0] sm:$0xff]
    %v1931 = vld [vmem:[%s1899 + $0xf8] sm:$0xff]
    %v1964 = vunpack.c.l.b16 %v1900
    %v1965 = vunpack.c.h.b16 %v1900
    %v1966 = vunpack.c.l.b16 %v1901
    %v1967 = vunpack.c.h.b16 %v1901
    %v1968 = vunpack.c.l.b16 %v1902
    %v1969 = vunpack.c.h.b16 %v1902
    %v1970 = vunpack.c.l.b16 %v1903
    %v1971 = vunpack.c.h.b16 %v1903
    %v1972 = vunpack.c.l.b16 %v1904
    %v1973 = vunpack.c.h.b16 %v1904
    %v1974 = vunpack.c.l.b16 %v1905
    %v1975 = vunpack.c.h.b16 %v1905
    %v1976 = vunpack.c.l.b16 %v1906
    %v1977 = vunpack.c.h.b16 %v1906
    %v1978 = vunpack.c.l.b16 %v1907
    %v1979 = vunpack.c.h.b16 %v1907
    %v1980 = vunpack.c.l.b16 %v1908
    %v1981 = vunpack.c.h.b16 %v1908
    %v1982 = vunpack.c.l.b16 %v1909
    %v1983 = vunpack.c.h.b16 %v1909
    %v1984 = vunpack.c.l.b16 %v1910
    %v1985 = vunpack.c.h.b16 %v1910
    %v1986 = vunpack.c.l.b16 %v1911
    %v1987 = vunpack.c.h.b16 %v1911
    %v1988 = vunpack.c.l.b16 %v1912
    %v1989 = vunpack.c.h.b16 %v1912
    %v1990 = vunpack.c.l.b16 %v1913
    %v1991 = vunpack.c.h.b16 %v1913
    %v1992 = vunpack.c.l.b16 %v1914
    %v1993 = vunpack.c.h.b16 %v1914
    %v1994 = vunpack.c.l.b16 %v1915
    %v1995 = vunpack.c.h.b16 %v1915
    %v1996 = vunpack.c.l.b16 %v1916
    %v1997 = vunpack.c.h.b16 %v1916
    %v1998 = vunpack.c.l.b16 %v1917
    %v1999 = vunpack.c.h.b16 %v1917
    %v2000 = vunpack.c.l.b16 %v1918
    %v2001 = vunpack.c.h.b16 %v1918
    %v2002 = vunpack.c.l.b16 %v1919
    %v2003 = vunpack.c.h.b16 %v1919
    %v2004 = vunpack.c.l.b16 %v1920
    %v2005 = vunpack.c.h.b16 %v1920
    %v2006 = vunpack.c.l.b16 %v1921
    %v2007 = vunpack.c.h.b16 %v1921
    %v2008 = vunpack.c.l.b16 %v1922
    %v2009 = vunpack.c.h.b16 %v1922
    %v2010 = vunpack.c.l.b16 %v1923
    %v2011 = vunpack.c.h.b16 %v1923
    %v2012 = vunpack.c.l.b16 %v1924
    %v2013 = vunpack.c.h.b16 %v1924
    %v2014 = vunpack.c.l.b16 %v1925
    %v2015 = vunpack.c.h.b16 %v1925
    %v2016 = vunpack.c.l.b16 %v1926
    %v2017 = vunpack.c.h.b16 %v1926
    %v2018 = vunpack.c.l.b16 %v1927
    %v2019 = vunpack.c.h.b16 %v1927
    %v2020 = vunpack.c.l.b16 %v1928
    %v2021 = vunpack.c.h.b16 %v1928
    %v2022 = vunpack.c.l.b16 %v1929
    %v2023 = vunpack.c.h.b16 %v1929
    %v2024 = vunpack.c.l.b16 %v1930
    %v2025 = vunpack.c.h.b16 %v1930
    %v2026 = vunpack.c.l.b16 %v1931
    %v2027 = vunpack.c.h.b16 %v1931
    %v2028 = vpack.c.b16 %v1966, %v1964
    %v2029 = vpack.c.b16 %v1967, %v1965
    %v2030 = vpack.c.b16 %v1970, %v1968
    %v2031 = vpack.c.b16 %v1971, %v1969
    %v2032 = vpack.c.b16 %v1974, %v1972
    %v2033 = vpack.c.b16 %v1975, %v1973
    %v2034 = vpack.c.b16 %v1978, %v1976
    %v2035 = vpack.c.b16 %v1979, %v1977
    %v2036 = vpack.c.b16 %v1982, %v1980
    %v2037 = vpack.c.b16 %v1983, %v1981
    %v2038 = vpack.c.b16 %v1986, %v1984
    %v2039 = vpack.c.b16 %v1987, %v1985
    %v2040 = vpack.c.b16 %v1990, %v1988
    %v2041 = vpack.c.b16 %v1991, %v1989
    %v2042 = vpack.c.b16 %v1994, %v1992
    %v2043 = vpack.c.b16 %v1995, %v1993
    %v2044 = vpack.c.b16 %v1998, %v1996
    %v2045 = vpack.c.b16 %v1999, %v1997
    %v2046 = vpack.c.b16 %v2002, %v2000
    %v2047 = vpack.c.b16 %v2003, %v2001
    %v2048 = vpack.c.b16 %v2006, %v2004
    %v2049 = vpack.c.b16 %v2007, %v2005
    %v2050 = vpack.c.b16 %v2010, %v2008
    %v2051 = vpack.c.b16 %v2011, %v2009
    %v2052 = vpack.c.b16 %v2014, %v2012
    %v2053 = vpack.c.b16 %v2015, %v2013
    %v2054 = vpack.c.b16 %v2018, %v2016
    %v2055 = vpack.c.b16 %v2019, %v2017
    %v2056 = vpack.c.b16 %v2022, %v2020
    %v2057 = vpack.c.b16 %v2023, %v2021
    %v2058 = vpack.c.b16 %v2026, %v2024
    %v2059 = vpack.c.b16 %v2027, %v2025
    %2092 = vmatprep.subr.bf16.mxu0 %v2029
    %2093 = vmatpush1.bf16.msra.mxu0 %v2028
    %2094 = vmatprep.subr.bf16.mxu0 %v2031
    %2095 = vmatpush1.bf16.msra.mxu0 %v2030
    %2096 = vmatprep.subr.bf16.mxu0 %v2033
    %2097 = vmatpush1.bf16.msra.mxu0 %v2032
    %2098 = vmatprep.subr.bf16.mxu0 %v2035
    %2099 = vmatpush1.bf16.msra.mxu0 %v2034
    %2100 = vmatprep.subr.bf16.mxu0 %v2037
    %2101 = vmatpush1.bf16.msra.mxu0 %v2036
    %2102 = vmatprep.subr.bf16.mxu0 %v2039
    %2103 = vmatpush1.bf16.msra.mxu0 %v2038
    %2104 = vmatprep.subr.bf16.mxu0 %v2041
    %2105 = vmatpush1.bf16.msra.mxu0 %v2040
    %2106 = vmatprep.subr.bf16.mxu0 %v2043
    %2107 = vmatpush1.bf16.msra.mxu0 %v2042
    %2108 = vmatprep.subr.bf16.mxu0 %v2045
    %2109 = vmatpush1.bf16.msra.mxu0 %v2044
    %2110 = vmatprep.subr.bf16.mxu0 %v2047
    %2111 = vmatpush1.bf16.msra.mxu0 %v2046
    %2112 = vmatprep.subr.bf16.mxu0 %v2049
    %2113 = vmatpush1.bf16.msra.mxu0 %v2048
    %2114 = vmatprep.subr.bf16.mxu0 %v2051
    %2115 = vmatpush1.bf16.msra.mxu0 %v2050
    %2116 = vmatprep.subr.bf16.mxu0 %v2053
    %2117 = vmatpush1.bf16.msra.mxu0 %v2052
    %2118 = vmatprep.subr.bf16.mxu0 %v2055
    %2119 = vmatpush1.bf16.msra.mxu0 %v2054
    %2120 = vmatprep.subr.bf16.mxu0 %v2057
    %2121 = vmatpush1.bf16.msra.mxu0 %v2056
    %2122 = vmatprep.subr.bf16.mxu0 %v2059
    %2123 = vmatpush1.bf16.msra.mxu0 %v2058
    %2124 = vmatprep.mubr.bf16.mxu0 %v1896
    %2125 = vmatmul.mubr.bf16.gmra.mrb[0].mxu0 %v1895
    %v2126 = vpop.f32.mrb[0].mxu0
    %v2127 = vadd.f32 0.0, %v2126
    %v2128 = vpop.f32.mrb[0].mxu0
    %v2129 = vadd.f32 0.0, %v2128
    %v2130 = vpop.f32.mrb[0].mxu0
    %v2131 = vadd.f32 0.0, %v2130
    %v2132 = vpop.f32.mrb[0].mxu0
    %v2133 = vadd.f32 0.0, %v2132
    %2134 = vmatprep.mubr.bf16.mxu0 %v1898
    %2135 = vmatmul.mubr.bf16.gmra.mrb[0].mxu0 %v1897
    %v2136 = vpop.f32.mrb[0].mxu0
    %v2137 = vadd.f32 0.0, %v2136
    %v2138 = vpop.f32.mrb[0].mxu0
    %v2139 = vadd.f32 0.0, %v2138
    %v2140 = vpop.f32.mrb[0].mxu0
    %v2141 = vadd.f32 0.0, %v2140
    %v2142 = vpop.f32.mrb[0].mxu0
    %v2143 = vadd.f32 0.0, %v2142
    %2144 = vdwg.mxu0
    %v2177 = vunpack.c.l.b16 %v1789
    %v2178 = vunpack.c.h.b16 %v1789
    %v2179 = vunpack.c.l.b16 %v1790
    %v2180 = vunpack.c.h.b16 %v1790
    %v2181 = vunpack.c.l.b16 %v1791
    %v2182 = vunpack.c.h.b16 %v1791
    %v2183 = vunpack.c.l.b16 %v1792
    %v2184 = vunpack.c.h.b16 %v1792
    %v2185 = vunpack.c.l.b16 %v1793
    %v2186 = vunpack.c.h.b16 %v1793
    %v2187 = vunpack.c.l.b16 %v1794
    %v2188 = vunpack.c.h.b16 %v1794
    %v2189 = vunpack.c.l.b16 %v1795
    %v2190 = vunpack.c.h.b16 %v1795
    %v2191 = vunpack.c.l.b16 %v1796
    %v2192 = vunpack.c.h.b16 %v1796
    %v2193 = vunpack.c.l.b16 %v1797
    %v2194 = vunpack.c.h.b16 %v1797
    %v2195 = vunpack.c.l.b16 %v1798
    %v2196 = vunpack.c.h.b16 %v1798
    %v2197 = vunpack.c.l.b16 %v1799
    %v2198 = vunpack.c.h.b16 %v1799
    %v2199 = vunpack.c.l.b16 %v1800
    %v2200 = vunpack.c.h.b16 %v1800
    %v2201 = vunpack.c.l.b16 %v1801
    %v2202 = vunpack.c.h.b16 %v1801
    %v2203 = vunpack.c.l.b16 %v1802
    %v2204 = vunpack.c.h.b16 %v1802
    %v2205 = vunpack.c.l.b16 %v1803
    %v2206 = vunpack.c.h.b16 %v1803
    %v2207 = vunpack.c.l.b16 %v1804
    %v2208 = vunpack.c.h.b16 %v1804
    %v2209 = vunpack.c.l.b16 %v1805
    %v2210 = vunpack.c.h.b16 %v1805
    %v2211 = vunpack.c.l.b16 %v1806
    %v2212 = vunpack.c.h.b16 %v1806
    %v2213 = vunpack.c.l.b16 %v1807
    %v2214 = vunpack.c.h.b16 %v1807
    %v2215 = vunpack.c.l.b16 %v1808
    %v2216 = vunpack.c.h.b16 %v1808
    %v2217 = vunpack.c.l.b16 %v1809
    %v2218 = vunpack.c.h.b16 %v1809
    %v2219 = vunpack.c.l.b16 %v1810
    %v2220 = vunpack.c.h.b16 %v1810
    %v2221 = vunpack.c.l.b16 %v1811
    %v2222 = vunpack.c.h.b16 %v1811
    %v2223 = vunpack.c.l.b16 %v1812
    %v2224 = vunpack.c.h.b16 %v1812
    %v2225 = vunpack.c.l.b16 %v1813
    %v2226 = vunpack.c.h.b16 %v1813
    %v2227 = vunpack.c.l.b16 %v1814
    %v2228 = vunpack.c.h.b16 %v1814
    %v2229 = vunpack.c.l.b16 %v1815
    %v2230 = vunpack.c.h.b16 %v1815
    %v2231 = vunpack.c.l.b16 %v1816
    %v2232 = vunpack.c.h.b16 %v1816
    %v2233 = vunpack.c.l.b16 %v1817
    %v2234 = vunpack.c.h.b16 %v1817
    %v2235 = vunpack.c.l.b16 %v1818
    %v2236 = vunpack.c.h.b16 %v1818
    %v2237 = vunpack.c.l.b16 %v1819
    %v2238 = vunpack.c.h.b16 %v1819
    %v2239 = vunpack.c.l.b16 %v1820
    %v2240 = vunpack.c.h.b16 %v1820
    %v2241 = vpack.c.b16 %v2179, %v2177
    %v2242 = vpack.c.b16 %v2180, %v2178
    %v2243 = vpack.c.b16 %v2183, %v2181
    %v2244 = vpack.c.b16 %v2184, %v2182
    %v2245 = vpack.c.b16 %v2187, %v2185
    %v2246 = vpack.c.b16 %v2188, %v2186
    %v2247 = vpack.c.b16 %v2191, %v2189
    %v2248 = vpack.c.b16 %v2192, %v2190
    %v2249 = vpack.c.b16 %v2195, %v2193
    %v2250 = vpack.c.b16 %v2196, %v2194
    %v2251 = vpack.c.b16 %v2199, %v2197
    %v2252 = vpack.c.b16 %v2200, %v2198
    %v2253 = vpack.c.b16 %v2203, %v2201
    %v2254 = vpack.c.b16 %v2204, %v2202
    %v2255 = vpack.c.b16 %v2207, %v2205
    %v2256 = vpack.c.b16 %v2208, %v2206
    %v2257 = vpack.c.b16 %v2211, %v2209
    %v2258 = vpack.c.b16 %v2212, %v2210
    %v2259 = vpack.c.b16 %v2215, %v2213
    %v2260 = vpack.c.b16 %v2216, %v2214
    %v2261 = vpack.c.b16 %v2219, %v2217
    %v2262 = vpack.c.b16 %v2220, %v2218
    %v2263 = vpack.c.b16 %v2223, %v2221
    %v2264 = vpack.c.b16 %v2224, %v2222
    %v2265 = vpack.c.b16 %v2227, %v2225
    %v2266 = vpack.c.b16 %v2228, %v2226
    %v2267 = vpack.c.b16 %v2231, %v2229
    %v2268 = vpack.c.b16 %v2232, %v2230
    %v2269 = vpack.c.b16 %v2235, %v2233
    %v2270 = vpack.c.b16 %v2236, %v2234
    %v2271 = vpack.c.b16 %v2239, %v2237
    %v2272 = vpack.c.b16 %v2240, %v2238
    %2305 = vmatprep.subr.bf16.mxu0 %v2242
    %2306 = vmatpush1.bf16.msra.mxu0 %v2241
    %2307 = vmatprep.subr.bf16.mxu0 %v2244
    %2308 = vmatpush1.bf16.msra.mxu0 %v2243
    %2309 = vmatprep.subr.bf16.mxu0 %v2246
    %2310 = vmatpush1.bf16.msra.mxu0 %v2245
    %2311 = vmatprep.subr.bf16.mxu0 %v2248
    %2312 = vmatpush1.bf16.msra.mxu0 %v2247
    %2313 = vmatprep.subr.bf16.mxu0 %v2250
    %2314 = vmatpush1.bf16.msra.mxu0 %v2249
    %2315 = vmatprep.subr.bf16.mxu0 %v2252
    %2316 = vmatpush1.bf16.msra.mxu0 %v2251
    %2317 = vmatprep.subr.bf16.mxu0 %v2254
    %2318 = vmatpush1.bf16.msra.mxu0 %v2253
    %2319 = vmatprep.subr.bf16.mxu0 %v2256
    %2320 = vmatpush1.bf16.msra.mxu0 %v2255
    %2321 = vmatprep.subr.bf16.mxu0 %v2258
    %2322 = vmatpush1.bf16.msra.mxu0 %v2257
    %2323 = vmatprep.subr.bf16.mxu0 %v2260
    %2324 = vmatpush1.bf16.msra.mxu0 %v2259
    %2325 = vmatprep.subr.bf16.mxu0 %v2262
    %2326 = vmatpush1.bf16.msra.mxu0 %v2261
    %2327 = vmatprep.subr.bf16.mxu0 %v2264
    %2328 = vmatpush1.bf16.msra.mxu0 %v2263
    %2329 = vmatprep.subr.bf16.mxu0 %v2266
    %2330 = vmatpush1.bf16.msra.mxu0 %v2265
    %2331 = vmatprep.subr.bf16.mxu0 %v2268
    %2332 = vmatpush1.bf16.msra.mxu0 %v2267
    %2333 = vmatprep.subr.bf16.mxu0 %v2270
    %2334 = vmatpush1.bf16.msra.mxu0 %v2269
    %2335 = vmatprep.subr.bf16.mxu0 %v2272
    %2336 = vmatpush1.bf16.msra.mxu0 %v2271
    %2337 = vmatprep.mubr.bf16.mxu0 %v1786
    %2338 = vmatmul.mubr.bf16.gmra.mrb[0].mxu0 %v1785
    %v2339 = vpop.f32.mrb[0].mxu0
    %v2340 = vadd.f32 %v2127, %v2339
    %v2341 = vpop.f32.mrb[0].mxu0
    %v2342 = vadd.f32 %v2129, %v2341
    %v2343 = vpop.f32.mrb[0].mxu0
    %v2344 = vadd.f32 %v2131, %v2343
    %v2345 = vpop.f32.mrb[0].mxu0
    %v2346 = vadd.f32 %v2133, %v2345
    %2347 = vmatprep.mubr.bf16.mxu0 %v1788
    %2348 = vmatmul.mubr.bf16.gmra.mrb[0].mxu0 %v1787
    %v2349 = vpop.f32.mrb[0].mxu0
    %v2350 = vadd.f32 %v2137, %v2349
    %v2351 = vpop.f32.mrb[0].mxu0
    %v2352 = vadd.f32 %v2139, %v2351
    %v2353 = vpop.f32.mrb[0].mxu0
    %v2354 = vadd.f32 %v2141, %v2353
    %v2355 = vpop.f32.mrb[0].mxu0
    %v2356 = vadd.f32 %v2143, %v2355
    %2357 = vdwg.mxu0
    %s2358 = scalar_lea.vmem %s9, 32
    %v2359 = vld [vmem:[%s2358] sm:$0xf]
    %v2360 = vld [vmem:[%s2358 + $0x4] sm:$0xf]
    %v2361 = vld [vmem:[%s2358 + $0x8] sm:$0xf]
    %v2362 = vld [vmem:[%s2358 + $0xc] sm:$0xf]
    %v2367 = vunpack.c.l.b16 %v2359
    %v2368 = vunpack.c.l.b16 %v2360
    %v2369 = vunpack.c.l.b16 %v2361
    %v2370 = vunpack.c.l.b16 %v2362
    %v2371 = vpack.c.b16 %v2368, %v2367
    %v2372 = vpack.c.b16 %v2370, %v2369
    %v2374 = vsel %vm645, %v2371, 0
    %v2377 = vsel %vm645, %v2372, 0
    %2379 = vmatprep.subr.bf16.mxu0 %v1705
    %2380 = vmatpush1.bf16.msra.mxu0 %v1704
    %2381 = vmatprep.subr.bf16.mxu0 %v1707
    %2382 = vmatpush1.bf16.msra.mxu0 %v1706
    %2383 = vmatprep.subr.bf16.mxu0 %v1709
    %2384 = vmatpush1.bf16.msra.mxu0 %v1708
    %2385 = vmatprep.subr.bf16.mxu0 %v1711
    %2386 = vmatpush1.bf16.msra.mxu0 %v1710
    %2387 = vmatprep.subr.bf16.mxu0 0
    %2388 = vmatpush1.bf16.msra.mxu0 0
    %2389 = vmatprep.subr.bf16.mxu0 0
    %2390 = vmatpush1.bf16.msra.mxu0 0
    %2391 = vmatprep.subr.bf16.mxu0 0
    %2392 = vmatpush1.bf16.msra.mxu0 0
    %2393 = vmatprep.subr.bf16.mxu0 0
    %2394 = vmatpush1.bf16.msra.mxu0 0
    %2395 = vmatprep.subr.bf16.mxu0 0
    %2396 = vmatpush1.bf16.msra.mxu0 0
    %2397 = vmatprep.subr.bf16.mxu0 0
    %2398 = vmatpush1.bf16.msra.mxu0 0
    %2399 = vmatprep.subr.bf16.mxu0 0
    %2400 = vmatpush1.bf16.msra.mxu0 0
    %2401 = vmatprep.subr.bf16.mxu0 0
    %2402 = vmatpush1.bf16.msra.mxu0 0
    %2403 = vmatprep.subr.bf16.mxu0 0
    %2404 = vmatpush1.bf16.msra.mxu0 0
    %2405 = vmatprep.subr.bf16.mxu0 0
    %2406 = vmatpush1.bf16.msra.mxu0 0
    %2407 = vmatprep.subr.bf16.mxu0 0
    %2408 = vmatpush1.bf16.msra.mxu0 0
    %2409 = vmatprep.subr.bf16.mxu0 0
    %2410 = vmatpush1.bf16.msra.mxu0 0
    %2411 = vmatprep.mubr.bf16.mxu0 0
    %2412 = vmatmul.mubr.bf16.gmra.mrb[0].mxu0 %v2374
    %v2413 = vpop.f32.mrb[0].mxu0
    %v2414 = vadd.f32 0.0, %v2413
    %v2415 = vpop.f32.mrb[0].mxu0
    %v2416 = vadd.f32 0.0, %v2415
    %v2417 = vpop.f32.mrb[0].mxu0
    %v2418 = vadd.f32 0.0, %v2417
    %v2419 = vpop.f32.mrb[0].mxu0
    %v2420 = vadd.f32 0.0, %v2419
    %2421 = vmatprep.mubr.bf16.mxu0 0
    %2422 = vmatmul.mubr.bf16.gmra.mrb[0].mxu0 %v2377
    %v2423 = vpop.f32.mrb[0].mxu0
    %v2424 = vadd.f32 0.0, %v2423
    %v2425 = vpop.f32.mrb[0].mxu0
    %v2426 = vadd.f32 0.0, %v2425
    %v2427 = vpop.f32.mrb[0].mxu0
    %v2428 = vadd.f32 0.0, %v2427
    %v2429 = vpop.f32.mrb[0].mxu0
    %v2430 = vadd.f32 0.0, %v2429
    %2431 = vdwg.mxu0
    %v2432 = vpack.c.bf16 %v2418, %v2414
    %v2433 = vpack.c.bf16 %v2420, %v2416
    %v2434 = vpack.c.bf16 %v2428, %v2424
    %v2435 = vpack.c.bf16 %v2430, %v2426
    %s2436 = scalar_lea.vmem %s7, 512
    %v2437 = vld [vmem:[%s2436] sm:$0xff]
    %v2438 = vld [vmem:[%s2436 + $0x8] sm:$0xff]
    %v2439 = vld [vmem:[%s2436 + $0x10] sm:$0xff]
    %v2440 = vld [vmem:[%s2436 + $0x18] sm:$0xff]
    %v2441 = vld [vmem:[%s2436 + $0x20] sm:$0xff]
    %v2442 = vld [vmem:[%s2436 + $0x28] sm:$0xff]
    %v2443 = vld [vmem:[%s2436 + $0x30] sm:$0xff]
    %v2444 = vld [vmem:[%s2436 + $0x38] sm:$0xff]
    %v2445 = vld [vmem:[%s2436 + $0x40] sm:$0xff]
    %v2446 = vld [vmem:[%s2436 + $0x48] sm:$0xff]
    %v2447 = vld [vmem:[%s2436 + $0x50] sm:$0xff]
    %v2448 = vld [vmem:[%s2436 + $0x58] sm:$0xff]
    %v2449 = vld [vmem:[%s2436 + $0x60] sm:$0xff]
    %v2450 = vld [vmem:[%s2436 + $0x68] sm:$0xff]
    %v2451 = vld [vmem:[%s2436 + $0x70] sm:$0xff]
    %v2452 = vld [vmem:[%s2436 + $0x78] sm:$0xff]
    %v2453 = vld [vmem:[%s2436 + $0x80] sm:$0xff]
    %v2454 = vld [vmem:[%s2436 + $0x88] sm:$0xff]
    %v2455 = vld [vmem:[%s2436 + $0x90] sm:$0xff]
    %v2456 = vld [vmem:[%s2436 + $0x98] sm:$0xff]
    %v2457 = vld [vmem:[%s2436 + $0xa0] sm:$0xff]
    %v2458 = vld [vmem:[%s2436 + $0xa8] sm:$0xff]
    %v2459 = vld [vmem:[%s2436 + $0xb0] sm:$0xff]
    %v2460 = vld [vmem:[%s2436 + $0xb8] sm:$0xff]
    %v2461 = vld [vmem:[%s2436 + $0xc0] sm:$0xff]
    %v2462 = vld [vmem:[%s2436 + $0xc8] sm:$0xff]
    %v2463 = vld [vmem:[%s2436 + $0xd0] sm:$0xff]
    %v2464 = vld [vmem:[%s2436 + $0xd8] sm:$0xff]
    %v2465 = vld [vmem:[%s2436 + $0xe0] sm:$0xff]
    %v2466 = vld [vmem:[%s2436 + $0xe8] sm:$0xff]
    %v2467 = vld [vmem:[%s2436 + $0xf0] sm:$0xff]
    %v2468 = vld [vmem:[%s2436 + $0xf8] sm:$0xff]
    %v2501 = vunpack.c.l.b16 %v2437
    %v2502 = vunpack.c.h.b16 %v2437
    %v2503 = vunpack.c.l.b16 %v2438
    %v2504 = vunpack.c.h.b16 %v2438
    %v2505 = vunpack.c.l.b16 %v2439
    %v2506 = vunpack.c.h.b16 %v2439
    %v2507 = vunpack.c.l.b16 %v2440
    %v2508 = vunpack.c.h.b16 %v2440
    %v2509 = vunpack.c.l.b16 %v2441
    %v2510 = vunpack.c.h.b16 %v2441
    %v2511 = vunpack.c.l.b16 %v2442
    %v2512 = vunpack.c.h.b16 %v2442
    %v2513 = vunpack.c.l.b16 %v2443
    %v2514 = vunpack.c.h.b16 %v2443
    %v2515 = vunpack.c.l.b16 %v2444
    %v2516 = vunpack.c.h.b16 %v2444
    %v2517 = vunpack.c.l.b16 %v2445
    %v2518 = vunpack.c.h.b16 %v2445
    %v2519 = vunpack.c.l.b16 %v2446
    %v2520 = vunpack.c.h.b16 %v2446
    %v2521 = vunpack.c.l.b16 %v2447
    %v2522 = vunpack.c.h.b16 %v2447
    %v2523 = vunpack.c.l.b16 %v2448
    %v2524 = vunpack.c.h.b16 %v2448
    %v2525 = vunpack.c.l.b16 %v2449
    %v2526 = vunpack.c.h.b16 %v2449
    %v2527 = vunpack.c.l.b16 %v2450
    %v2528 = vunpack.c.h.b16 %v2450
    %v2529 = vunpack.c.l.b16 %v2451
    %v2530 = vunpack.c.h.b16 %v2451
    %v2531 = vunpack.c.l.b16 %v2452
    %v2532 = vunpack.c.h.b16 %v2452
    %v2533 = vunpack.c.l.b16 %v2453
    %v2534 = vunpack.c.h.b16 %v2453
    %v2535 = vunpack.c.l.b16 %v2454
    %v2536 = vunpack.c.h.b16 %v2454
    %v2537 = vunpack.c.l.b16 %v2455
    %v2538 = vunpack.c.h.b16 %v2455
    %v2539 = vunpack.c.l.b16 %v2456
    %v2540 = vunpack.c.h.b16 %v2456
    %v2541 = vunpack.c.l.b16 %v2457
    %v2542 = vunpack.c.h.b16 %v2457
    %v2543 = vunpack.c.l.b16 %v2458
    %v2544 = vunpack.c.h.b16 %v2458
    %v2545 = vunpack.c.l.b16 %v2459
    %v2546 = vunpack.c.h.b16 %v2459
    %v2547 = vunpack.c.l.b16 %v2460
    %v2548 = vunpack.c.h.b16 %v2460
    %v2549 = vunpack.c.l.b16 %v2461
    %v2550 = vunpack.c.h.b16 %v2461
    %v2551 = vunpack.c.l.b16 %v2462
    %v2552 = vunpack.c.h.b16 %v2462
    %v2553 = vunpack.c.l.b16 %v2463
    %v2554 = vunpack.c.h.b16 %v2463
    %v2555 = vunpack.c.l.b16 %v2464
    %v2556 = vunpack.c.h.b16 %v2464
    %v2557 = vunpack.c.l.b16 %v2465
    %v2558 = vunpack.c.h.b16 %v2465
    %v2559 = vunpack.c.l.b16 %v2466
    %v2560 = vunpack.c.h.b16 %v2466
    %v2561 = vunpack.c.l.b16 %v2467
    %v2562 = vunpack.c.h.b16 %v2467
    %v2563 = vunpack.c.l.b16 %v2468
    %v2564 = vunpack.c.h.b16 %v2468
    %v2565 = vpack.c.b16 %v2503, %v2501
    %v2566 = vpack.c.b16 %v2504, %v2502
    %v2567 = vpack.c.b16 %v2507, %v2505
    %v2568 = vpack.c.b16 %v2508, %v2506
    %v2569 = vpack.c.b16 %v2511, %v2509
    %v2570 = vpack.c.b16 %v2512, %v2510
    %v2571 = vpack.c.b16 %v2515, %v2513
    %v2572 = vpack.c.b16 %v2516, %v2514
    %v2573 = vpack.c.b16 %v2519, %v2517
    %v2574 = vpack.c.b16 %v2520, %v2518
    %v2575 = vpack.c.b16 %v2523, %v2521
    %v2576 = vpack.c.b16 %v2524, %v2522
    %v2577 = vpack.c.b16 %v2527, %v2525
    %v2578 = vpack.c.b16 %v2528, %v2526
    %v2579 = vpack.c.b16 %v2531, %v2529
    %v2580 = vpack.c.b16 %v2532, %v2530
    %v2581 = vpack.c.b16 %v2535, %v2533
    %v2582 = vpack.c.b16 %v2536, %v2534
    %v2583 = vpack.c.b16 %v2539, %v2537
    %v2584 = vpack.c.b16 %v2540, %v2538
    %v2585 = vpack.c.b16 %v2543, %v2541
    %v2586 = vpack.c.b16 %v2544, %v2542
    %v2587 = vpack.c.b16 %v2547, %v2545
    %v2588 = vpack.c.b16 %v2548, %v2546
    %v2589 = vpack.c.b16 %v2551, %v2549
    %v2590 = vpack.c.b16 %v2552, %v2550
    %v2591 = vpack.c.b16 %v2555, %v2553
    %v2592 = vpack.c.b16 %v2556, %v2554
    %v2593 = vpack.c.b16 %v2559, %v2557
    %v2594 = vpack.c.b16 %v2560, %v2558
    %v2595 = vpack.c.b16 %v2563, %v2561
    %v2596 = vpack.c.b16 %v2564, %v2562
    %2629 = vmatprep.subr.bf16.mxu0 %v2566
    %2630 = vmatpush1.bf16.msra.mxu0 %v2565
    %2631 = vmatprep.subr.bf16.mxu0 %v2568
    %2632 = vmatpush1.bf16.msra.mxu0 %v2567
    %2633 = vmatprep.subr.bf16.mxu0 %v2570
    %2634 = vmatpush1.bf16.msra.mxu0 %v2569
    %2635 = vmatprep.subr.bf16.mxu0 %v2572
    %2636 = vmatpush1.bf16.msra.mxu0 %v2571
    %2637 = vmatprep.subr.bf16.mxu0 %v2574
    %2638 = vmatpush1.bf16.msra.mxu0 %v2573
    %2639 = vmatprep.subr.bf16.mxu0 %v2576
    %2640 = vmatpush1.bf16.msra.mxu0 %v2575
    %2641 = vmatprep.subr.bf16.mxu0 %v2578
    %2642 = vmatpush1.bf16.msra.mxu0 %v2577
    %2643 = vmatprep.subr.bf16.mxu0 %v2580
    %2644 = vmatpush1.bf16.msra.mxu0 %v2579
    %2645 = vmatprep.subr.bf16.mxu0 %v2582
    %2646 = vmatpush1.bf16.msra.mxu0 %v2581
    %2647 = vmatprep.subr.bf16.mxu0 %v2584
    %2648 = vmatpush1.bf16.msra.mxu0 %v2583
    %2649 = vmatprep.subr.bf16.mxu0 %v2586
    %2650 = vmatpush1.bf16.msra.mxu0 %v2585
    %2651 = vmatprep.subr.bf16.mxu0 %v2588
    %2652 = vmatpush1.bf16.msra.mxu0 %v2587
    %2653 = vmatprep.subr.bf16.mxu0 %v2590
    %2654 = vmatpush1.bf16.msra.mxu0 %v2589
    %2655 = vmatprep.subr.bf16.mxu0 %v2592
    %2656 = vmatpush1.bf16.msra.mxu0 %v2591
    %2657 = vmatprep.subr.bf16.mxu0 %v2594
    %2658 = vmatpush1.bf16.msra.mxu0 %v2593
    %2659 = vmatprep.subr.bf16.mxu0 %v2596
    %2660 = vmatpush1.bf16.msra.mxu0 %v2595
    %2661 = vmatprep.mubr.bf16.mxu0 %v2433
    %2662 = vmatmul.mubr.bf16.gmra.mrb[0].mxu0 %v2432
    %v2663 = vpop.f32.mrb[0].mxu0
    %v2664 = vadd.f32 0.0, %v2663
    %v2665 = vpop.f32.mrb[0].mxu0
    %v2666 = vadd.f32 0.0, %v2665
    %v2667 = vpop.f32.mrb[0].mxu0
    %v2668 = vadd.f32 0.0, %v2667
    %v2669 = vpop.f32.mrb[0].mxu0
    %v2670 = vadd.f32 0.0, %v2669
    %2671 = vmatprep.mubr.bf16.mxu0 %v2435
    %2672 = vmatmul.mubr.bf16.gmra.mrb[0].mxu0 %v2434
    %v2673 = vpop.f32.mrb[0].mxu0
    %v2674 = vadd.f32 0.0, %v2673
    %v2675 = vpop.f32.mrb[0].mxu0
    %v2676 = vadd.f32 0.0, %v2675
    %v2677 = vpop.f32.mrb[0].mxu0
    %v2678 = vadd.f32 0.0, %v2677
    %v2679 = vpop.f32.mrb[0].mxu0
    %v2680 = vadd.f32 0.0, %v2679
    %2681 = vdwg.mxu0
    %v2682 = vadd.f32 %v2340, %v2664
    %v2683 = vadd.f32 %v2342, %v2666
    %v2684 = vadd.f32 %v2344, %v2668
    %v2685 = vadd.f32 %v2346, %v2670
    %v2686 = vadd.f32 %v2350, %v2674
    %v2687 = vadd.f32 %v2352, %v2676
    %v2688 = vadd.f32 %v2354, %v2678
    %v2689 = vadd.f32 %v2356, %v2680
    %s2690 = scalar_lea.vmem %s9, 48
    %v2691 = vld [vmem:[%s2690] sm:$0xf]
    %v2692 = vld [vmem:[%s2690 + $0x4] sm:$0xf]
    %v2693 = vld [vmem:[%s2690 + $0x8] sm:$0xf]
    %v2694 = vld [vmem:[%s2690 + $0xc] sm:$0xf]
    %v2699 = vunpack.c.l.b16 %v2691
    %v2700 = vunpack.c.l.b16 %v2692
    %v2701 = vunpack.c.l.b16 %v2693
    %v2702 = vunpack.c.l.b16 %v2694
    %v2703 = vpack.c.b16 %v2700, %v2699
    %v2704 = vpack.c.b16 %v2702, %v2701
    %v2706 = vsel %vm645, %v2703, 0
    %v2709 = vsel %vm645, %v2704, 0
    %2711 = vmatprep.subr.bf16.mxu0 %v1705
    %2712 = vmatpush1.bf16.msra.mxu0 %v1704
    %2713 = vmatprep.subr.bf16.mxu0 %v1707
    %2714 = vmatpush1.bf16.msra.mxu0 %v1706
    %2715 = vmatprep.subr.bf16.mxu0 %v1709
    %2716 = vmatpush1.bf16.msra.mxu0 %v1708
    %2717 = vmatprep.subr.bf16.mxu0 %v1711
    %2718 = vmatpush1.bf16.msra.mxu0 %v1710
    %2719 = vmatprep.subr.bf16.mxu0 0
    %2720 = vmatpush1.bf16.msra.mxu0 0
    %2721 = vmatprep.subr.bf16.mxu0 0
    %2722 = vmatpush1.bf16.msra.mxu0 0
    %2723 = vmatprep.subr.bf16.mxu0 0
    %2724 = vmatpush1.bf16.msra.mxu0 0
    %2725 = vmatprep.subr.bf16.mxu0 0
    %2726 = vmatpush1.bf16.msra.mxu0 0
    %2727 = vmatprep.subr.bf16.mxu0 0
    %2728 = vmatpush1.bf16.msra.mxu0 0
    %2729 = vmatprep.subr.bf16.mxu0 0
    %2730 = vmatpush1.bf16.msra.mxu0 0
    %2731 = vmatprep.subr.bf16.mxu0 0
    %2732 = vmatpush1.bf16.msra.mxu0 0
    %2733 = vmatprep.subr.bf16.mxu0 0
    %2734 = vmatpush1.bf16.msra.mxu0 0
    %2735 = vmatprep.subr.bf16.mxu0 0
    %2736 = vmatpush1.bf16.msra.mxu0 0
    %2737 = vmatprep.subr.bf16.mxu0 0
    %2738 = vmatpush1.bf16.msra.mxu0 0
    %2739 = vmatprep.subr.bf16.mxu0 0
    %2740 = vmatpush1.bf16.msra.mxu0 0
    %2741 = vmatprep.subr.bf16.mxu0 0
    %2742 = vmatpush1.bf16.msra.mxu0 0
    %2743 = vmatprep.mubr.bf16.mxu0 0
    %2744 = vmatmul.mubr.bf16.gmra.mrb[0].mxu0 %v2706
    %v2745 = vpop.f32.mrb[0].mxu0
    %v2746 = vadd.f32 0.0, %v2745
    %v2747 = vpop.f32.mrb[0].mxu0
    %v2748 = vadd.f32 0.0, %v2747
    %v2749 = vpop.f32.mrb[0].mxu0
    %v2750 = vadd.f32 0.0, %v2749
    %v2751 = vpop.f32.mrb[0].mxu0
    %v2752 = vadd.f32 0.0, %v2751
    %2753 = vmatprep.mubr.bf16.mxu0 0
    %2754 = vmatmul.mubr.bf16.gmra.mrb[0].mxu0 %v2709
    %v2755 = vpop.f32.mrb[0].mxu0
    %v2756 = vadd.f32 0.0, %v2755
    %v2757 = vpop.f32.mrb[0].mxu0
    %v2758 = vadd.f32 0.0, %v2757
    %v2759 = vpop.f32.mrb[0].mxu0
    %v2760 = vadd.f32 0.0, %v2759
    %v2761 = vpop.f32.mrb[0].mxu0
    %v2762 = vadd.f32 0.0, %v2761
    %2763 = vdwg.mxu0
    %v2764 = vpack.c.bf16 %v2750, %v2746
    %v2765 = vpack.c.bf16 %v2752, %v2748
    %v2766 = vpack.c.bf16 %v2760, %v2756
    %v2767 = vpack.c.bf16 %v2762, %v2758
    %s2768 = scalar_lea.vmem %s7, 768
    %v2769 = vld [vmem:[%s2768] sm:$0xff]
    %v2770 = vld [vmem:[%s2768 + $0x8] sm:$0xff]
    %v2771 = vld [vmem:[%s2768 + $0x10] sm:$0xff]
    %v2772 = vld [vmem:[%s2768 + $0x18] sm:$0xff]
    %v2773 = vld [vmem:[%s2768 + $0x20] sm:$0xff]
    %v2774 = vld [vmem:[%s2768 + $0x28] sm:$0xff]
    %v2775 = vld [vmem:[%s2768 + $0x30] sm:$0xff]
    %v2776 = vld [vmem:[%s2768 + $0x38] sm:$0xff]
    %v2777 = vld [vmem:[%s2768 + $0x40] sm:$0xff]
    %v2778 = vld [vmem:[%s2768 + $0x48] sm:$0xff]
    %v2779 = vld [vmem:[%s2768 + $0x50] sm:$0xff]
    %v2780 = vld [vmem:[%s2768 + $0x58] sm:$0xff]
    %v2781 = vld [vmem:[%s2768 + $0x60] sm:$0xff]
    %v2782 = vld [vmem:[%s2768 + $0x68] sm:$0xff]
    %v2783 = vld [vmem:[%s2768 + $0x70] sm:$0xff]
    %v2784 = vld [vmem:[%s2768 + $0x78] sm:$0xff]
    %v2785 = vld [vmem:[%s2768 + $0x80] sm:$0xff]
    %v2786 = vld [vmem:[%s2768 + $0x88] sm:$0xff]
    %v2787 = vld [vmem:[%s2768 + $0x90] sm:$0xff]
    %v2788 = vld [vmem:[%s2768 + $0x98] sm:$0xff]
    %v2789 = vld [vmem:[%s2768 + $0xa0] sm:$0xff]
    %v2790 = vld [vmem:[%s2768 + $0xa8] sm:$0xff]
    %v2791 = vld [vmem:[%s2768 + $0xb0] sm:$0xff]
    %v2792 = vld [vmem:[%s2768 + $0xb8] sm:$0xff]
    %v2793 = vld [vmem:[%s2768 + $0xc0] sm:$0xff]
    %v2794 = vld [vmem:[%s2768 + $0xc8] sm:$0xff]
    %v2795 = vld [vmem:[%s2768 + $0xd0] sm:$0xff]
    %v2796 = vld [vmem:[%s2768 + $0xd8] sm:$0xff]
    %v2797 = vld [vmem:[%s2768 + $0xe0] sm:$0xff]
    %v2798 = vld [vmem:[%s2768 + $0xe8] sm:$0xff]
    %v2799 = vld [vmem:[%s2768 + $0xf0] sm:$0xff]
    %v2800 = vld [vmem:[%s2768 + $0xf8] sm:$0xff]
    %v2833 = vunpack.c.l.b16 %v2769
    %v2834 = vunpack.c.h.b16 %v2769
    %v2835 = vunpack.c.l.b16 %v2770
    %v2836 = vunpack.c.h.b16 %v2770
    %v2837 = vunpack.c.l.b16 %v2771
    %v2838 = vunpack.c.h.b16 %v2771
    %v2839 = vunpack.c.l.b16 %v2772
    %v2840 = vunpack.c.h.b16 %v2772
    %v2841 = vunpack.c.l.b16 %v2773
    %v2842 = vunpack.c.h.b16 %v2773
    %v2843 = vunpack.c.l.b16 %v2774
    %v2844 = vunpack.c.h.b16 %v2774
    %v2845 = vunpack.c.l.b16 %v2775
    %v2846 = vunpack.c.h.b16 %v2775
    %v2847 = vunpack.c.l.b16 %v2776
    %v2848 = vunpack.c.h.b16 %v2776
    %v2849 = vunpack.c.l.b16 %v2777
    %v2850 = vunpack.c.h.b16 %v2777
    %v2851 = vunpack.c.l.b16 %v2778
    %v2852 = vunpack.c.h.b16 %v2778
    %v2853 = vunpack.c.l.b16 %v2779
    %v2854 = vunpack.c.h.b16 %v2779
    %v2855 = vunpack.c.l.b16 %v2780
    %v2856 = vunpack.c.h.b16 %v2780
    %v2857 = vunpack.c.l.b16 %v2781
    %v2858 = vunpack.c.h.b16 %v2781
    %v2859 = vunpack.c.l.b16 %v2782
    %v2860 = vunpack.c.h.b16 %v2782
    %v2861 = vunpack.c.l.b16 %v2783
    %v2862 = vunpack.c.h.b16 %v2783
    %v2863 = vunpack.c.l.b16 %v2784
    %v2864 = vunpack.c.h.b16 %v2784
    %v2865 = vunpack.c.l.b16 %v2785
    %v2866 = vunpack.c.h.b16 %v2785
    %v2867 = vunpack.c.l.b16 %v2786
    %v2868 = vunpack.c.h.b16 %v2786
    %v2869 = vunpack.c.l.b16 %v2787
    %v2870 = vunpack.c.h.b16 %v2787
    %v2871 = vunpack.c.l.b16 %v2788
    %v2872 = vunpack.c.h.b16 %v2788
    %v2873 = vunpack.c.l.b16 %v2789
    %v2874 = vunpack.c.h.b16 %v2789
    %v2875 = vunpack.c.l.b16 %v2790
    %v2876 = vunpack.c.h.b16 %v2790
    %v2877 = vunpack.c.l.b16 %v2791
    %v2878 = vunpack.c.h.b16 %v2791
    %v2879 = vunpack.c.l.b16 %v2792
    %v2880 = vunpack.c.h.b16 %v2792
    %v2881 = vunpack.c.l.b16 %v2793
    %v2882 = vunpack.c.h.b16 %v2793
    %v2883 = vunpack.c.l.b16 %v2794
    %v2884 = vunpack.c.h.b16 %v2794
    %v2885 = vunpack.c.l.b16 %v2795
    %v2886 = vunpack.c.h.b16 %v2795
    %v2887 = vunpack.c.l.b16 %v2796
    %v2888 = vunpack.c.h.b16 %v2796
    %v2889 = vunpack.c.l.b16 %v2797
    %v2890 = vunpack.c.h.b16 %v2797
    %v2891 = vunpack.c.l.b16 %v2798
    %v2892 = vunpack.c.h.b16 %v2798
    %v2893 = vunpack.c.l.b16 %v2799
    %v2894 = vunpack.c.h.b16 %v2799
    %v2895 = vunpack.c.l.b16 %v2800
    %v2896 = vunpack.c.h.b16 %v2800
    %v2897 = vpack.c.b16 %v2835, %v2833
    %v2898 = vpack.c.b16 %v2836, %v2834
    %v2899 = vpack.c.b16 %v2839, %v2837
    %v2900 = vpack.c.b16 %v2840, %v2838
    %v2901 = vpack.c.b16 %v2843, %v2841
    %v2902 = vpack.c.b16 %v2844, %v2842
    %v2903 = vpack.c.b16 %v2847, %v2845
    %v2904 = vpack.c.b16 %v2848, %v2846
    %v2905 = vpack.c.b16 %v2851, %v2849
    %v2906 = vpack.c.b16 %v2852, %v2850
    %v2907 = vpack.c.b16 %v2855, %v2853
    %v2908 = vpack.c.b16 %v2856, %v2854
    %v2909 = vpack.c.b16 %v2859, %v2857
    %v2910 = vpack.c.b16 %v2860, %v2858
    %v2911 = vpack.c.b16 %v2863, %v2861
    %v2912 = vpack.c.b16 %v2864, %v2862
    %v2913 = vpack.c.b16 %v2867, %v2865
    %v2914 = vpack.c.b16 %v2868, %v2866
    %v2915 = vpack.c.b16 %v2871, %v2869
    %v2916 = vpack.c.b16 %v2872, %v2870
    %v2917 = vpack.c.b16 %v2875, %v2873
    %v2918 = vpack.c.b16 %v2876, %v2874
    %v2919 = vpack.c.b16 %v2879, %v2877
    %v2920 = vpack.c.b16 %v2880, %v2878
    %v2921 = vpack.c.b16 %v2883, %v2881
    %v2922 = vpack.c.b16 %v2884, %v2882
    %v2923 = vpack.c.b16 %v2887, %v2885
    %v2924 = vpack.c.b16 %v2888, %v2886
    %v2925 = vpack.c.b16 %v2891, %v2889
    %v2926 = vpack.c.b16 %v2892, %v2890
    %v2927 = vpack.c.b16 %v2895, %v2893
    %v2928 = vpack.c.b16 %v2896, %v2894
    %2961 = vmatprep.subr.bf16.mxu0 %v2898
    %2962 = vmatpush1.bf16.msra.mxu0 %v2897
    %2963 = vmatprep.subr.bf16.mxu0 %v2900
    %2964 = vmatpush1.bf16.msra.mxu0 %v2899
    %2965 = vmatprep.subr.bf16.mxu0 %v2902
    %2966 = vmatpush1.bf16.msra.mxu0 %v2901
    %2967 = vmatprep.subr.bf16.mxu0 %v2904
    %2968 = vmatpush1.bf16.msra.mxu0 %v2903
    %2969 = vmatprep.subr.bf16.mxu0 %v2906
    %2970 = vmatpush1.bf16.msra.mxu0 %v2905
    %2971 = vmatprep.subr.bf16.mxu0 %v2908
    %2972 = vmatpush1.bf16.msra.mxu0 %v2907
    %2973 = vmatprep.subr.bf16.mxu0 %v2910
    %2974 = vmatpush1.bf16.msra.mxu0 %v2909
    %2975 = vmatprep.subr.bf16.mxu0 %v2912
    %2976 = vmatpush1.bf16.msra.mxu0 %v2911
    %2977 = vmatprep.subr.bf16.mxu0 %v2914
    %2978 = vmatpush1.bf16.msra.mxu0 %v2913
    %2979 = vmatprep.subr.bf16.mxu0 %v2916
    %2980 = vmatpush1.bf16.msra.mxu0 %v2915
    %2981 = vmatprep.subr.bf16.mxu0 %v2918
    %2982 = vmatpush1.bf16.msra.mxu0 %v2917
    %2983 = vmatprep.subr.bf16.mxu0 %v2920
    %2984 = vmatpush1.bf16.msra.mxu0 %v2919
    %2985 = vmatprep.subr.bf16.mxu0 %v2922
    %2986 = vmatpush1.bf16.msra.mxu0 %v2921
    %2987 = vmatprep.subr.bf16.mxu0 %v2924
    %2988 = vmatpush1.bf16.msra.mxu0 %v2923
    %2989 = vmatprep.subr.bf16.mxu0 %v2926
    %2990 = vmatpush1.bf16.msra.mxu0 %v2925
    %2991 = vmatprep.subr.bf16.mxu0 %v2928
    %2992 = vmatpush1.bf16.msra.mxu0 %v2927
    %2993 = vmatprep.mubr.bf16.mxu0 %v2765
    %2994 = vmatmul.mubr.bf16.gmra.mrb[0].mxu0 %v2764
    %v2995 = vpop.f32.mrb[0].mxu0
    %v2996 = vadd.f32 0.0, %v2995
    %v2997 = vpop.f32.mrb[0].mxu0
    %v2998 = vadd.f32 0.0, %v2997
    %v2999 = vpop.f32.mrb[0].mxu0
    %v3000 = vadd.f32 0.0, %v2999
    %v3001 = vpop.f32.mrb[0].mxu0
    %v3002 = vadd.f32 0.0, %v3001
    %3003 = vmatprep.mubr.bf16.mxu0 %v2767
    %3004 = vmatmul.mubr.bf16.gmra.mrb[0].mxu0 %v2766
    %v3005 = vpop.f32.mrb[0].mxu0
    %v3006 = vadd.f32 0.0, %v3005
    %v3007 = vpop.f32.mrb[0].mxu0
    %v3008 = vadd.f32 0.0, %v3007
    %v3009 = vpop.f32.mrb[0].mxu0
    %v3010 = vadd.f32 0.0, %v3009
    %v3011 = vpop.f32.mrb[0].mxu0
    %v3012 = vadd.f32 0.0, %v3011
    %3013 = vdwg.mxu0
    %v3014 = vadd.f32 %v2682, %v2996
    %v3015 = vadd.f32 %v2683, %v2998
    %v3016 = vadd.f32 %v2684, %v3000
    %v3017 = vadd.f32 %v2685, %v3002
    %v3018 = vadd.f32 %v2686, %v3006
    %v3019 = vadd.f32 %v2687, %v3008
    %v3020 = vadd.f32 %v2688, %v3010
    %v3021 = vadd.f32 %v2689, %v3012
    %v3022 = vadd.f32 %v3014, %v3016
    %v3023 = vadd.f32 %v3022, %v3018
    %v3024 = vadd.f32 %v3023, %v3020
    %v3025 = vrot.slane %v3024, 4
    %v3026 = vadd.f32 %v3024, %v3025
    %v3027 = vrot.slane %v3026, 2
    %v3028 = vadd.f32 %v3026, %v3027
    %v3029 = vrot.slane %v3028, 1
    %v3030 = vadd.f32 %v3028, %v3029
    %v3031 = vadd.f32 %v3015, %v3017
    %v3032 = vadd.f32 %v3031, %v3019
    %v3033 = vadd.f32 %v3032, %v3021
    %v3034 = vrot.slane %v3033, 4
    %v3035 = vadd.f32 %v3033, %v3034
    %v3036 = vrot.slane %v3035, 2
    %v3037 = vadd.f32 %v3035, %v3036
    %v3038 = vrot.slane %v3037, 1
    %v3039 = vadd.f32 %v3037, %v3038
    %v3040 = vmul.f32 %v3014, %v3014
    %v3041 = vmul.f32 %v3015, %v3015
    %v3042 = vmul.f32 %v3016, %v3016
    %v3043 = vmul.f32 %v3017, %v3017
    %v3044 = vmul.f32 %v3018, %v3018
    %v3045 = vmul.f32 %v3019, %v3019
    %v3046 = vmul.f32 %v3020, %v3020
    %v3047 = vmul.f32 %v3021, %v3021
    %v3048 = vadd.f32 %v3040, %v3042
    %v3049 = vadd.f32 %v3048, %v3044
    %v3050 = vadd.f32 %v3049, %v3046
    %v3051 = vrot.slane %v3050, 4
    %v3052 = vadd.f32 %v3050, %v3051
    %v3053 = vrot.slane %v3052, 2
    %v3054 = vadd.f32 %v3052, %v3053
    %v3055 = vrot.slane %v3054, 1
    %v3056 = vadd.f32 %v3054, %v3055
    %v3057 = vadd.f32 %v3041, %v3043
    %v3058 = vadd.f32 %v3057, %v3045
    %v3059 = vadd.f32 %v3058, %v3047
    %v3060 = vrot.slane %v3059, 4
    %v3061 = vadd.f32 %v3059, %v3060
    %v3062 = vrot.slane %v3061, 2
    %v3063 = vadd.f32 %v3061, %v3062
    %v3064 = vrot.slane %v3063, 1
    %v3065 = vadd.f32 %v3063, %v3064
    %v3066 = vld [vmem:[%s13] sm:$0xff]
    %v3067 = vld [vmem:[%s13 + $0x8] sm:$0xff]
    %v3068 = vld [vmem:[%s13 + $0x10] sm:$0xff]
    %v3069 = vld [vmem:[%s13 + $0x18] sm:$0xff]
    %v3070 = vld [vmem:[%s13 + $0x20] sm:$0xff]
    %v3071 = vld [vmem:[%s13 + $0x28] sm:$0xff]
    %v3072 = vld [vmem:[%s13 + $0x30] sm:$0xff]
    %v3073 = vld [vmem:[%s13 + $0x38] sm:$0xff]
    %v3074 = vld [vmem:[%s13 + $0x40] sm:$0xff]
    %v3075 = vld [vmem:[%s13 + $0x48] sm:$0xff]
    %v3076 = vld [vmem:[%s13 + $0x50] sm:$0xff]
    %v3077 = vld [vmem:[%s13 + $0x58] sm:$0xff]
    %v3078 = vld [vmem:[%s13 + $0x60] sm:$0xff]
    %v3079 = vld [vmem:[%s13 + $0x68] sm:$0xff]
    %v3080 = vld [vmem:[%s13 + $0x70] sm:$0xff]
    %v3081 = vld [vmem:[%s13 + $0x78] sm:$0xff]
    %v3082 = vld [vmem:[%s13 + $0x80] sm:$0xff]
    %v3083 = vld [vmem:[%s13 + $0x88] sm:$0xff]
    %v3084 = vld [vmem:[%s13 + $0x90] sm:$0xff]
    %v3085 = vld [vmem:[%s13 + $0x98] sm:$0xff]
    %v3086 = vld [vmem:[%s13 + $0xa0] sm:$0xff]
    %v3087 = vld [vmem:[%s13 + $0xa8] sm:$0xff]
    %v3088 = vld [vmem:[%s13 + $0xb0] sm:$0xff]
    %v3089 = vld [vmem:[%s13 + $0xb8] sm:$0xff]
    %v3090 = vld [vmem:[%s13 + $0xc0] sm:$0xff]
    %v3091 = vld [vmem:[%s13 + $0xc8] sm:$0xff]
    %v3092 = vld [vmem:[%s13 + $0xd0] sm:$0xff]
    %v3093 = vld [vmem:[%s13 + $0xd8] sm:$0xff]
    %v3094 = vld [vmem:[%s13 + $0xe0] sm:$0xff]
    %v3095 = vld [vmem:[%s13 + $0xe8] sm:$0xff]
    %v3096 = vld [vmem:[%s13 + $0xf0] sm:$0xff]
    %v3097 = vld [vmem:[%s13 + $0xf8] sm:$0xff]
    %3098 = vmatprep.subr.mxu0 0.0
    %3099 = vmatpush1.msra.mxu0 %v3066
    %3100 = vmatprep.subr.mxu0 0.0
    %3101 = vmatpush1.msra.mxu0 %v3067
    %3102 = vmatprep.subr.mxu0 0.0
    %3103 = vmatpush1.msra.mxu0 %v3068
    %3104 = vmatprep.subr.mxu0 0.0
    %3105 = vmatpush1.msra.mxu0 %v3069
    %3106 = vmatprep.subr.mxu0 0.0
    %3107 = vmatpush1.msra.mxu0 %v3070
    %3108 = vmatprep.subr.mxu0 0.0
    %3109 = vmatpush1.msra.mxu0 %v3071
    %3110 = vmatprep.subr.mxu0 0.0
    %3111 = vmatpush1.msra.mxu0 %v3072
    %3112 = vmatprep.subr.mxu0 0.0
    %3113 = vmatpush1.msra.mxu0 %v3073
    %3114 = vmatprep.subr.mxu0 0.0
    %3115 = vmatpush1.msra.mxu0 %v3074
    %3116 = vmatprep.subr.mxu0 0.0
    %3117 = vmatpush1.msra.mxu0 %v3075
    %3118 = vmatprep.subr.mxu0 0.0
    %3119 = vmatpush1.msra.mxu0 %v3076
    %3120 = vmatprep.subr.mxu0 0.0
    %3121 = vmatpush1.msra.mxu0 %v3077
    %3122 = vmatprep.subr.mxu0 0.0
    %3123 = vmatpush1.msra.mxu0 %v3078
    %3124 = vmatprep.subr.mxu0 0.0
    %3125 = vmatpush1.msra.mxu0 %v3079
    %3126 = vmatprep.subr.mxu0 0.0
    %3127 = vmatpush1.msra.mxu0 %v3080
    %3128 = vmatprep.subr.mxu0 0.0
    %3129 = vmatpush1.msra.mxu0 %v3081
    %3130 = vmatprep.subr.mxu0 0.0
    %3131 = vmatpush1.msra.mxu0 %v3082
    %3132 = vmatprep.subr.mxu0 0.0
    %3133 = vmatpush1.msra.mxu0 %v3083
    %3134 = vmatprep.subr.mxu0 0.0
    %3135 = vmatpush1.msra.mxu0 %v3084
    %3136 = vmatprep.subr.mxu0 0.0
    %3137 = vmatpush1.msra.mxu0 %v3085
    %3138 = vmatprep.subr.mxu0 0.0
    %3139 = vmatpush1.msra.mxu0 %v3086
    %3140 = vmatprep.subr.mxu0 0.0
    %3141 = vmatpush1.msra.mxu0 %v3087
    %3142 = vmatprep.subr.mxu0 0.0
    %3143 = vmatpush1.msra.mxu0 %v3088
    %3144 = vmatprep.subr.mxu0 0.0
    %3145 = vmatpush1.msra.mxu0 %v3089
    %3146 = vmatprep.subr.mxu0 0.0
    %3147 = vmatpush1.msra.mxu0 %v3090
    %3148 = vmatprep.subr.mxu0 0.0
    %3149 = vmatpush1.msra.mxu0 %v3091
    %3150 = vmatprep.subr.mxu0 0.0
    %3151 = vmatpush1.msra.mxu0 %v3092
    %3152 = vmatprep.subr.mxu0 0.0
    %3153 = vmatpush1.msra.mxu0 %v3093
    %3154 = vmatprep.subr.mxu0 0.0
    %3155 = vmatpush1.msra.mxu0 %v3094
    %3156 = vmatprep.subr.mxu0 0.0
    %3157 = vmatpush1.msra.mxu0 %v3095
    %3158 = vmatprep.subr.mxu0 0.0
    %3159 = vmatpush1.msra.mxu0 %v3096
    %3160 = vmatprep.subr.mxu0 0.0
    %3161 = vmatpush1.msra.mxu0 %v3097
    %3162 = vmatprep.mubr.f32.mxu0 %v3039
    %3163 = vmatmul.mubr.f32.gmra.mrb[0].mxu0 %v3030
    %v3164 = vpop.f32.mrb[0].mxu0
    %v3165 = vadd.f32 0.0, %v3164
    %v3166 = vpop.f32.mrb[0].mxu0
    %3167 = vdwg.mxu0
    %3168 = vmatprep.subr.mxu0 0.0
    %3169 = vmatpush1.msra.mxu0 %v3066
    %3170 = vmatprep.subr.mxu0 0.0
    %3171 = vmatpush1.msra.mxu0 %v3067
    %3172 = vmatprep.subr.mxu0 0.0
    %3173 = vmatpush1.msra.mxu0 %v3068
    %3174 = vmatprep.subr.mxu0 0.0
    %3175 = vmatpush1.msra.mxu0 %v3069
    %3176 = vmatprep.subr.mxu0 0.0
    %3177 = vmatpush1.msra.mxu0 %v3070
    %3178 = vmatprep.subr.mxu0 0.0
    %3179 = vmatpush1.msra.mxu0 %v3071
    %3180 = vmatprep.subr.mxu0 0.0
    %3181 = vmatpush1.msra.mxu0 %v3072
    %3182 = vmatprep.subr.mxu0 0.0
    %3183 = vmatpush1.msra.mxu0 %v3073
    %3184 = vmatprep.subr.mxu0 0.0
    %3185 = vmatpush1.msra.mxu0 %v3074
    %3186 = vmatprep.subr.mxu0 0.0
    %3187 = vmatpush1.msra.mxu0 %v3075
    %3188 = vmatprep.subr.mxu0 0.0
    %3189 = vmatpush1.msra.mxu0 %v3076
    %3190 = vmatprep.subr.mxu0 0.0
    %3191 = vmatpush1.msra.mxu0 %v3077
    %3192 = vmatprep.subr.mxu0 0.0
    %3193 = vmatpush1.msra.mxu0 %v3078
    %3194 = vmatprep.subr.mxu0 0.0
    %3195 = vmatpush1.msra.mxu0 %v3079
    %3196 = vmatprep.subr.mxu0 0.0
    %3197 = vmatpush1.msra.mxu0 %v3080
    %3198 = vmatprep.subr.mxu0 0.0
    %3199 = vmatpush1.msra.mxu0 %v3081
    %3200 = vmatprep.subr.mxu0 0.0
    %3201 = vmatpush1.msra.mxu0 %v3082
    %3202 = vmatprep.subr.mxu0 0.0
    %3203 = vmatpush1.msra.mxu0 %v3083
    %3204 = vmatprep.subr.mxu0 0.0
    %3205 = vmatpush1.msra.mxu0 %v3084
    %3206 = vmatprep.subr.mxu0 0.0
    %3207 = vmatpush1.msra.mxu0 %v3085
    %3208 = vmatprep.subr.mxu0 0.0
    %3209 = vmatpush1.msra.mxu0 %v3086
    %3210 = vmatprep.subr.mxu0 0.0
    %3211 = vmatpush1.msra.mxu0 %v3087
    %3212 = vmatprep.subr.mxu0 0.0
    %3213 = vmatpush1.msra.mxu0 %v3088
    %3214 = vmatprep.subr.mxu0 0.0
    %3215 = vmatpush1.msra.mxu0 %v3089
    %3216 = vmatprep.subr.mxu0 0.0
    %3217 = vmatpush1.msra.mxu0 %v3090
    %3218 = vmatprep.subr.mxu0 0.0
    %3219 = vmatpush1.msra.mxu0 %v3091
    %3220 = vmatprep.subr.mxu0 0.0
    %3221 = vmatpush1.msra.mxu0 %v3092
    %3222 = vmatprep.subr.mxu0 0.0
    %3223 = vmatpush1.msra.mxu0 %v3093
    %3224 = vmatprep.subr.mxu0 0.0
    %3225 = vmatpush1.msra.mxu0 %v3094
    %3226 = vmatprep.subr.mxu0 0.0
    %3227 = vmatpush1.msra.mxu0 %v3095
    %3228 = vmatprep.subr.mxu0 0.0
    %3229 = vmatpush1.msra.mxu0 %v3096
    %3230 = vmatprep.subr.mxu0 0.0
    %3231 = vmatpush1.msra.mxu0 %v3097
    %3232 = vmatprep.mubr.f32.mxu0 %v3065
    %3233 = vmatmul.mubr.f32.gmra.mrb[0].mxu0 %v3056
    %v3234 = vpop.f32.mrb[0].mxu0
    %v3235 = vadd.f32 0.0, %v3234
    %v3236 = vpop.f32.mrb[0].mxu0
    %3237 = vdwg.mxu0
    %v3238 = vrcp.pop 512.0
    %v3239 = vmul.f32 %v3165, %v3238
    %v3240 = vmul.f32 %v3235, %v3238
    %v3241 = vmul.f32 %v3239, %v3239
    %v3242 = vsub.f32 %v3240, %v3241
    %v3243 = vld [vmem:[%s15] sm:$0x1]
    %v3244 = vadd.f32 %v3242, 1e-05
    %v3245 = vrsqrt.pop %v3244
    %v3246 = vmul.f32 %v3243, %v3245
    %v3247 = vld [vmem:[%s17] sm:$0x1]
    %v3248 = vmul.f32 %v3239, %v3246
    %v3249 = vsub.f32 %v3247, %v3248
    %v3250 = vld [vmem:[%s11] sm:$0xff]
    %v3251 = vld [vmem:[%s11 + $0x8] sm:$0xff]
    %v3252 = vld [vmem:[%s11 + $0x10] sm:$0xff]
    %v3253 = vld [vmem:[%s11 + $0x18] sm:$0xff]
    %vm3254 = vcmask 130048
    %v3256 = vsel %vm3254, %v3246, 0
    %3258 = vmatprep.subr.mxu0 %v3251
    %3259 = vmatpush1.msra.mxu0 %v3250
    %3260 = vmatprep.subr.mxu0 %v3253
    %3261 = vmatpush1.msra.mxu0 %v3252
    %3262 = vmatprep.subr.mxu0 0.0
    %3263 = vmatpush1.msra.mxu0 0.0
    %3264 = vmatprep.subr.mxu0 0.0
    %3265 = vmatpush1.msra.mxu0 0.0
    %3266 = vmatprep.subr.mxu0 0.0
    %3267 = vmatpush1.msra.mxu0 0.0
    %3268 = vmatprep.subr.mxu0 0.0
    %3269 = vmatpush1.msra.mxu0 0.0
    %3270 = vmatprep.subr.mxu0 0.0
    %3271 = vmatpush1.msra.mxu0 0.0
    %3272 = vmatprep.subr.mxu0 0.0
    %3273 = vmatpush1.msra.mxu0 0.0
    %3274 = vmatprep.subr.mxu0 0.0
    %3275 = vmatpush1.msra.mxu0 0.0
    %3276 = vmatprep.subr.mxu0 0.0
    %3277 = vmatpush1.msra.mxu0 0.0
    %3278 = vmatprep.subr.mxu0 0.0
    %3279 = vmatpush1.msra.mxu0 0.0
    %3280 = vmatprep.subr.mxu0 0.0
    %3281 = vmatpush1.msra.mxu0 0.0
    %3282 = vmatprep.subr.mxu0 0.0
    %3283 = vmatpush1.msra.mxu0 0.0
    %3284 = vmatprep.subr.mxu0 0.0
    %3285 = vmatpush1.msra.mxu0 0.0
    %3286 = vmatprep.subr.mxu0 0.0
    %3287 = vmatpush1.msra.mxu0 0.0
    %3288 = vmatprep.subr.mxu0 0.0
    %3289 = vmatpush1.msra.mxu0 0.0
    %3290 = vmatprep.subr.mxu0 0.0
    %3291 = vmatpush1.msra.mxu0 0.0
    %3292 = vmatprep.subr.mxu0 0.0
    %3293 = vmatpush1.msra.mxu0 0.0
    %3294 = vmatprep.subr.mxu0 0.0
    %3295 = vmatpush1.msra.mxu0 0.0
    %3296 = vmatprep.subr.mxu0 0.0
    %3297 = vmatpush1.msra.mxu0 0.0
    %3298 = vmatprep.subr.mxu0 0.0
    %3299 = vmatpush1.msra.mxu0 0.0
    %3300 = vmatprep.subr.mxu0 0.0
    %3301 = vmatpush1.msra.mxu0 0.0
    %3302 = vmatprep.subr.mxu0 0.0
    %3303 = vmatpush1.msra.mxu0 0.0
    %3304 = vmatprep.subr.mxu0 0.0
    %3305 = vmatpush1.msra.mxu0 0.0
    %3306 = vmatprep.subr.mxu0 0.0
    %3307 = vmatpush1.msra.mxu0 0.0
    %3308 = vmatprep.subr.mxu0 0.0
    %3309 = vmatpush1.msra.mxu0 0.0
    %3310 = vmatprep.subr.mxu0 0.0
    %3311 = vmatpush1.msra.mxu0 0.0
    %3312 = vmatprep.subr.mxu0 0.0
    %3313 = vmatpush1.msra.mxu0 0.0
    %3314 = vmatprep.subr.mxu0 0.0
    %3315 = vmatpush1.msra.mxu0 0.0
    %3316 = vmatprep.subr.mxu0 0.0
    %3317 = vmatpush1.msra.mxu0 0.0
    %3318 = vmatprep.subr.mxu0 0.0
    %3319 = vmatpush1.msra.mxu0 0.0
    %3320 = vmatprep.subr.mxu0 0.0
    %3321 = vmatpush1.msra.mxu0 0.0
    %3322 = vmatprep.mubr.f32.mxu0 0.0
    %3323 = vmatmul.mubr.f32.gmra.mrb[0].mxu0 %v3256
    %v3324 = vpop.f32.mrb[0].mxu0
    %v3325 = vadd.f32 0.0, %v3324
    %v3326 = vpop.f32.mrb[0].mxu0
    %v3327 = vadd.f32 0.0, %v3326
    %3328 = vdwg.mxu0
    %v3330 = vsel %vm3254, %v3249, 0
    %3332 = vmatprep.subr.mxu0 %v3251
    %3333 = vmatpush1.msra.mxu0 %v3250
    %3334 = vmatprep.subr.mxu0 %v3253
    %3335 = vmatpush1.msra.mxu0 %v3252
    %3336 = vmatprep.subr.mxu0 0.0
    %3337 = vmatpush1.msra.mxu0 0.0
    %3338 = vmatprep.subr.mxu0 0.0
    %3339 = vmatpush1.msra.mxu0 0.0
    %3340 = vmatprep.subr.mxu0 0.0
    %3341 = vmatpush1.msra.mxu0 0.0
    %3342 = vmatprep.subr.mxu0 0.0
    %3343 = vmatpush1.msra.mxu0 0.0
    %3344 = vmatprep.subr.mxu0 0.0
    %3345 = vmatpush1.msra.mxu0 0.0
    %3346 = vmatprep.subr.mxu0 0.0
    %3347 = vmatpush1.msra.mxu0 0.0
    %3348 = vmatprep.subr.mxu0 0.0
    %3349 = vmatpush1.msra.mxu0 0.0
    %3350 = vmatprep.subr.mxu0 0.0
    %3351 = vmatpush1.msra.mxu0 0.0
    %3352 = vmatprep.subr.mxu0 0.0
    %3353 = vmatpush1.msra.mxu0 0.0
    %3354 = vmatprep.subr.mxu0 0.0
    %3355 = vmatpush1.msra.mxu0 0.0
    %3356 = vmatprep.subr.mxu0 0.0
    %3357 = vmatpush1.msra.mxu0 0.0
    %3358 = vmatprep.subr.mxu0 0.0
    %3359 = vmatpush1.msra.mxu0 0.0
    %3360 = vmatprep.subr.mxu0 0.0
    %3361 = vmatpush1.msra.mxu0 0.0
    %3362 = vmatprep.subr.mxu0 0.0
    %3363 = vmatpush1.msra.mxu0 0.0
    %3364 = vmatprep.subr.mxu0 0.0
    %3365 = vmatpush1.msra.mxu0 0.0
    %3366 = vmatprep.subr.mxu0 0.0
    %3367 = vmatpush1.msra.mxu0 0.0
    %3368 = vmatprep.subr.mxu0 0.0
    %3369 = vmatpush1.msra.mxu0 0.0
    %3370 = vmatprep.subr.mxu0 0.0
    %3371 = vmatpush1.msra.mxu0 0.0
    %3372 = vmatprep.subr.mxu0 0.0
    %3373 = vmatpush1.msra.mxu0 0.0
    %3374 = vmatprep.subr.mxu0 0.0
    %3375 = vmatpush1.msra.mxu0 0.0
    %3376 = vmatprep.subr.mxu0 0.0
    %3377 = vmatpush1.msra.mxu0 0.0
    %3378 = vmatprep.subr.mxu0 0.0
    %3379 = vmatpush1.msra.mxu0 0.0
    %3380 = vmatprep.subr.mxu0 0.0
    %3381 = vmatpush1.msra.mxu0 0.0
    %3382 = vmatprep.subr.mxu0 0.0
    %3383 = vmatpush1.msra.mxu0 0.0
    %3384 = vmatprep.subr.mxu0 0.0
    %3385 = vmatpush1.msra.mxu0 0.0
    %3386 = vmatprep.subr.mxu0 0.0
    %3387 = vmatpush1.msra.mxu0 0.0
    %3388 = vmatprep.subr.mxu0 0.0
    %3389 = vmatpush1.msra.mxu0 0.0
    %3390 = vmatprep.subr.mxu0 0.0
    %3391 = vmatpush1.msra.mxu0 0.0
    %3392 = vmatprep.subr.mxu0 0.0
    %3393 = vmatpush1.msra.mxu0 0.0
    %3394 = vmatprep.subr.mxu0 0.0
    %3395 = vmatpush1.msra.mxu0 0.0
    %3396 = vmatprep.mubr.f32.mxu0 0.0
    %3397 = vmatmul.mubr.f32.gmra.mrb[0].mxu0 %v3330
    %v3398 = vpop.f32.mrb[0].mxu0
    %v3399 = vadd.f32 0.0, %v3398
    %v3400 = vpop.f32.mrb[0].mxu0
    %v3401 = vadd.f32 0.0, %v3400
    %3402 = vdwg.mxu0
    %v3403 = vlaneseq
    %v3404 = vshrl.u32 %v3403, 7
    %v3405 = vsub.s32 0, %v3404
    %v3406 = vrot.slane %v3325, %v3405
    %v3407 = vlaneseq
    %v3408 = vshrl.u32 %v3407, 7
    %v3409 = vsub.s32 0, %v3408
    %v3410 = vrot.slane %v3327, %v3409
    %v3411 = vmul.f32 %v3014, %v3406
    %v3412 = vmul.f32 %v3015, %v3410
    %v3413 = vmul.f32 %v3016, %v3406
    %v3414 = vmul.f32 %v3017, %v3410
    %v3415 = vmul.f32 %v3018, %v3406
    %v3416 = vmul.f32 %v3019, %v3410
    %v3417 = vmul.f32 %v3020, %v3406
    %v3418 = vmul.f32 %v3021, %v3410
    %v3419 = vlaneseq
    %v3420 = vshrl.u32 %v3419, 7
    %v3421 = vsub.s32 0, %v3420
    %v3422 = vrot.slane %v3399, %v3421
    %v3423 = vlaneseq
    %v3424 = vshrl.u32 %v3423, 7
    %v3425 = vsub.s32 0, %v3424
    %v3426 = vrot.slane %v3401, %v3425
    %v3427 = vadd.f32 %v3411, %v3422
    %v3428 = vadd.f32 %v3412, %v3426
    %v3429 = vadd.f32 %v3413, %v3422
    %v3430 = vadd.f32 %v3414, %v3426
    %v3431 = vadd.f32 %v3415, %v3422
    %v3432 = vadd.f32 %v3416, %v3426
    %v3433 = vadd.f32 %v3417, %v3422
    %v3434 = vadd.f32 %v3418, %v3426
    %vm3435 = vcmp.ge.f32.partialorder %v3427, 0.0
    %vm3436 = vcmp.ge.f32.partialorder %v3428, 0.0
    %vm3437 = vcmp.ge.f32.partialorder %v3429, 0.0
    %vm3438 = vcmp.ge.f32.partialorder %v3430, 0.0
    %vm3439 = vcmp.ge.f32.partialorder %v3431, 0.0
    %vm3440 = vcmp.ge.f32.partialorder %v3432, 0.0
    %vm3441 = vcmp.ge.f32.partialorder %v3433, 0.0
    %vm3442 = vcmp.ge.f32.partialorder %v3434, 0.0
    %v3443 = vmul.f32 %v3427, 0.2
    %v3444 = vmul.f32 %v3428, 0.2
    %v3445 = vmul.f32 %v3429, 0.2
    %v3446 = vmul.f32 %v3430, 0.2
    %v3447 = vmul.f32 %v3431, 0.2
    %v3448 = vmul.f32 %v3432, 0.2
    %v3449 = vmul.f32 %v3433, 0.2
    %v3450 = vmul.f32 %v3434, 0.2
    %v3451 = vsel %vm3435, %v3427, %v3443
    %v3452 = vsel %vm3436, %v3428, %v3444
    %v3453 = vsel %vm3437, %v3429, %v3445
    %v3454 = vsel %vm3438, %v3430, %v3446
    %v3455 = vsel %vm3439, %v3431, %v3447
    %v3456 = vsel %vm3440, %v3432, %v3448
    %v3457 = vsel %vm3441, %v3433, %v3449
    %v3458 = vsel %vm3442, %v3434, %v3450
    %v3459 = vpack.c.bf16 %v3453, %v3451
    %v3460 = vpack.c.bf16 %v3454, %v3452
    %v3461 = vpack.c.bf16 %v3457, %v3455
    %v3462 = vpack.c.bf16 %v3458, %v3456
    %v3463 = vld [vmem:[%s21] sm:$0xf]
    %v3464 = vld [vmem:[%s21 + $0x4] sm:$0xf]
    %v3467 = vunpack.c.l.b16 %v3463
    %v3468 = vunpack.c.l.b16 %v3464
    %v3469 = vpack.c.b16 %v3468, %v3467
    %vm3470 = vcmask 261120
    %v3472 = vsel %vm3470, %v3469, 0
    %3474 = vmatprep.subr.bf16.mxu0 %v3460
    %3475 = vmatpush1.bf16.msra.mxu0 %v3459
    %3476 = vmatprep.subr.bf16.mxu0 %v3462
    %3477 = vmatpush1.bf16.msra.mxu0 %v3461
    %3478 = vmatprep.subr.bf16.mxu0 0
    %3479 = vmatpush1.bf16.msra.mxu0 0
    %3480 = vmatprep.subr.bf16.mxu0 0
    %3481 = vmatpush1.bf16.msra.mxu0 0
    %3482 = vmatprep.subr.bf16.mxu0 0
    %3483 = vmatpush1.bf16.msra.mxu0 0
    %3484 = vmatprep.subr.bf16.mxu0 0
    %3485 = vmatpush1.bf16.msra.mxu0 0
    %3486 = vmatprep.subr.bf16.mxu0 0
    %3487 = vmatpush1.bf16.msra.mxu0 0
    %3488 = vmatprep.subr.bf16.mxu0 0
    %3489 = vmatpush1.bf16.msra.mxu0 0
    %3490 = vmatprep.subr.bf16.mxu0 0
    %3491 = vmatpush1.bf16.msra.mxu0 0
    %3492 = vmatprep.subr.bf16.mxu0 0
    %3493 = vmatpush1.bf16.msra.mxu0 0
    %3494 = vmatprep.subr.bf16.mxu0 0
    %3495 = vmatpush1.bf16.msra.mxu0 0
    %3496 = vmatprep.subr.bf16.mxu0 0
    %3497 = vmatpush1.bf16.msra.mxu0 0
    %3498 = vmatprep.subr.bf16.mxu0 0
    %3499 = vmatpush1.bf16.msra.mxu0 0
    %3500 = vmatprep.subr.bf16.mxu0 0
    %3501 = vmatpush1.bf16.msra.mxu0 0
    %3502 = vmatprep.subr.bf16.mxu0 0
    %3503 = vmatpush1.bf16.msra.mxu0 0
    %3504 = vmatprep.subr.bf16.mxu0 0
    %3505 = vmatpush1.bf16.msra.mxu0 0
    %3506 = vmatprep.mubr.bf16.mxu0 0
    %3507 = vmatmul.mubr.bf16.gmra.mrb[0].mxu0 %v3472
    %v3508 = vpop.f32.mrb[0].mxu0
    %v3509 = vadd.f32 0.0, %v3508
    %v3510 = vpop.f32.mrb[0].mxu0
    %v3511 = vadd.f32 0.0, %v3510
    %v3512 = vpop.f32.mrb[0].mxu0
    %v3513 = vadd.f32 0.0, %v3512
    %v3514 = vpop.f32.mrb[0].mxu0
    %v3515 = vadd.f32 0.0, %v3514
    %3516 = vdwg.mxu0
    %v3517 = vpack.c.bf16 %v3513, %v3509
    %v3518 = vpack.c.bf16 %v3515, %v3511
    %v3519 = vld [vmem:[%s19] sm:$0xff]
    %v3520 = vld [vmem:[%s19 + $0x8] sm:$0xff]
    %v3521 = vld [vmem:[%s19 + $0x10] sm:$0xff]
    %v3522 = vld [vmem:[%s19 + $0x18] sm:$0xff]
    %v3523 = vld [vmem:[%s19 + $0x20] sm:$0xff]
    %v3524 = vld [vmem:[%s19 + $0x28] sm:$0xff]
    %v3525 = vld [vmem:[%s19 + $0x30] sm:$0xff]
    %v3526 = vld [vmem:[%s19 + $0x38] sm:$0xff]
    %v3527 = vld [vmem:[%s19 + $0x40] sm:$0xff]
    %v3528 = vld [vmem:[%s19 + $0x48] sm:$0xff]
    %v3529 = vld [vmem:[%s19 + $0x50] sm:$0xff]
    %v3530 = vld [vmem:[%s19 + $0x58] sm:$0xff]
    %v3531 = vld [vmem:[%s19 + $0x60] sm:$0xff]
    %v3532 = vld [vmem:[%s19 + $0x68] sm:$0xff]
    %v3533 = vld [vmem:[%s19 + $0x70] sm:$0xff]
    %v3534 = vld [vmem:[%s19 + $0x78] sm:$0xff]
    %v3535 = vld [vmem:[%s19 + $0x80] sm:$0xff]
    %v3536 = vld [vmem:[%s19 + $0x88] sm:$0xff]
    %v3537 = vld [vmem:[%s19 + $0x90] sm:$0xff]
    %v3538 = vld [vmem:[%s19 + $0x98] sm:$0xff]
    %v3539 = vld [vmem:[%s19 + $0xa0] sm:$0xff]
    %v3540 = vld [vmem:[%s19 + $0xa8] sm:$0xff]
    %v3541 = vld [vmem:[%s19 + $0xb0] sm:$0xff]
    %v3542 = vld [vmem:[%s19 + $0xb8] sm:$0xff]
    %v3543 = vld [vmem:[%s19 + $0xc0] sm:$0xff]
    %v3544 = vld [vmem:[%s19 + $0xc8] sm:$0xff]
    %v3545 = vld [vmem:[%s19 + $0xd0] sm:$0xff]
    %v3546 = vld [vmem:[%s19 + $0xd8] sm:$0xff]
    %v3547 = vld [vmem:[%s19 + $0xe0] sm:$0xff]
    %v3548 = vld [vmem:[%s19 + $0xe8] sm:$0xff]
    %v3549 = vld [vmem:[%s19 + $0xf0] sm:$0xff]
    %v3550 = vld [vmem:[%s19 + $0xf8] sm:$0xff]
    %s3551 = scalar_lea.vmem %s21, 8
    %v3552 = vld [vmem:[%s3551] sm:$0xf]
    %v3553 = vld [vmem:[%s3551 + $0x4] sm:$0xf]
    %v3556 = vunpack.c.l.b16 %v3552
    %v3557 = vunpack.c.l.b16 %v3553
    %v3558 = vpack.c.b16 %v3557, %v3556
    %v3560 = vsel %vm3470, %v3558, 0
    %3562 = vmatprep.subr.bf16.mxu0 %v3460
    %3563 = vmatpush1.bf16.msra.mxu0 %v3459
    %3564 = vmatprep.subr.bf16.mxu0 %v3462
    %3565 = vmatpush1.bf16.msra.mxu0 %v3461
    %3566 = vmatprep.subr.bf16.mxu0 0
    %3567 = vmatpush1.bf16.msra.mxu0 0
    %3568 = vmatprep.subr.bf16.mxu0 0
    %3569 = vmatpush1.bf16.msra.mxu0 0
    %3570 = vmatprep.subr.bf16.mxu0 0
    %3571 = vmatpush1.bf16.msra.mxu0 0
    %3572 = vmatprep.subr.bf16.mxu0 0
    %3573 = vmatpush1.bf16.msra.mxu0 0
    %3574 = vmatprep.subr.bf16.mxu0 0
    %3575 = vmatpush1.bf16.msra.mxu0 0
    %3576 = vmatprep.subr.bf16.mxu0 0
    %3577 = vmatpush1.bf16.msra.mxu0 0
    %3578 = vmatprep.subr.bf16.mxu0 0
    %3579 = vmatpush1.bf16.msra.mxu0 0
    %3580 = vmatprep.subr.bf16.mxu0 0
    %3581 = vmatpush1.bf16.msra.mxu0 0
    %3582 = vmatprep.subr.bf16.mxu0 0
    %3583 = vmatpush1.bf16.msra.mxu0 0
    %3584 = vmatprep.subr.bf16.mxu0 0
    %3585 = vmatpush1.bf16.msra.mxu0 0
    %3586 = vmatprep.subr.bf16.mxu0 0
    %3587 = vmatpush1.bf16.msra.mxu0 0
    %3588 = vmatprep.subr.bf16.mxu0 0
    %3589 = vmatpush1.bf16.msra.mxu0 0
    %3590 = vmatprep.subr.bf16.mxu0 0
    %3591 = vmatpush1.bf16.msra.mxu0 0
    %3592 = vmatprep.subr.bf16.mxu0 0
    %3593 = vmatpush1.bf16.msra.mxu0 0
    %3594 = vmatprep.mubr.bf16.mxu0 0
    %3595 = vmatmul.mubr.bf16.gmra.mrb[0].mxu0 %v3560
    %v3596 = vpop.f32.mrb[0].mxu0
    %v3597 = vadd.f32 0.0, %v3596
    %v3598 = vpop.f32.mrb[0].mxu0
    %v3599 = vadd.f32 0.0, %v3598
    %v3600 = vpop.f32.mrb[0].mxu0
    %v3601 = vadd.f32 0.0, %v3600
    %v3602 = vpop.f32.mrb[0].mxu0
    %v3603 = vadd.f32 0.0, %v3602
    %3604 = vdwg.mxu0
    %v3605 = vpack.c.bf16 %v3601, %v3597
    %v3606 = vpack.c.bf16 %v3603, %v3599
    %s3607 = scalar_lea.vmem %s19, 256
    %v3608 = vld [vmem:[%s3607] sm:$0xff]
    %v3609 = vld [vmem:[%s3607 + $0x8] sm:$0xff]
    %v3610 = vld [vmem:[%s3607 + $0x10] sm:$0xff]
    %v3611 = vld [vmem:[%s3607 + $0x18] sm:$0xff]
    %v3612 = vld [vmem:[%s3607 + $0x20] sm:$0xff]
    %v3613 = vld [vmem:[%s3607 + $0x28] sm:$0xff]
    %v3614 = vld [vmem:[%s3607 + $0x30] sm:$0xff]
    %v3615 = vld [vmem:[%s3607 + $0x38] sm:$0xff]
    %v3616 = vld [vmem:[%s3607 + $0x40] sm:$0xff]
    %v3617 = vld [vmem:[%s3607 + $0x48] sm:$0xff]
    %v3618 = vld [vmem:[%s3607 + $0x50] sm:$0xff]
    %v3619 = vld [vmem:[%s3607 + $0x58] sm:$0xff]
    %v3620 = vld [vmem:[%s3607 + $0x60] sm:$0xff]
    %v3621 = vld [vmem:[%s3607 + $0x68] sm:$0xff]
    %v3622 = vld [vmem:[%s3607 + $0x70] sm:$0xff]
    %v3623 = vld [vmem:[%s3607 + $0x78] sm:$0xff]
    %v3624 = vld [vmem:[%s3607 + $0x80] sm:$0xff]
    %v3625 = vld [vmem:[%s3607 + $0x88] sm:$0xff]
    %v3626 = vld [vmem:[%s3607 + $0x90] sm:$0xff]
    %v3627 = vld [vmem:[%s3607 + $0x98] sm:$0xff]
    %v3628 = vld [vmem:[%s3607 + $0xa0] sm:$0xff]
    %v3629 = vld [vmem:[%s3607 + $0xa8] sm:$0xff]
    %v3630 = vld [vmem:[%s3607 + $0xb0] sm:$0xff]
    %v3631 = vld [vmem:[%s3607 + $0xb8] sm:$0xff]
    %v3632 = vld [vmem:[%s3607 + $0xc0] sm:$0xff]
    %v3633 = vld [vmem:[%s3607 + $0xc8] sm:$0xff]
    %v3634 = vld [vmem:[%s3607 + $0xd0] sm:$0xff]
    %v3635 = vld [vmem:[%s3607 + $0xd8] sm:$0xff]
    %v3636 = vld [vmem:[%s3607 + $0xe0] sm:$0xff]
    %v3637 = vld [vmem:[%s3607 + $0xe8] sm:$0xff]
    %v3638 = vld [vmem:[%s3607 + $0xf0] sm:$0xff]
    %v3639 = vld [vmem:[%s3607 + $0xf8] sm:$0xff]
    %v3672 = vunpack.c.l.b16 %v3608
    %v3673 = vunpack.c.h.b16 %v3608
    %v3674 = vunpack.c.l.b16 %v3609
    %v3675 = vunpack.c.h.b16 %v3609
    %v3676 = vunpack.c.l.b16 %v3610
    %v3677 = vunpack.c.h.b16 %v3610
    %v3678 = vunpack.c.l.b16 %v3611
    %v3679 = vunpack.c.h.b16 %v3611
    %v3680 = vunpack.c.l.b16 %v3612
    %v3681 = vunpack.c.h.b16 %v3612
    %v3682 = vunpack.c.l.b16 %v3613
    %v3683 = vunpack.c.h.b16 %v3613
    %v3684 = vunpack.c.l.b16 %v3614
    %v3685 = vunpack.c.h.b16 %v3614
    %v3686 = vunpack.c.l.b16 %v3615
    %v3687 = vunpack.c.h.b16 %v3615
    %v3688 = vunpack.c.l.b16 %v3616
    %v3689 = vunpack.c.h.b16 %v3616
    %v3690 = vunpack.c.l.b16 %v3617
    %v3691 = vunpack.c.h.b16 %v3617
    %v3692 = vunpack.c.l.b16 %v3618
    %v3693 = vunpack.c.h.b16 %v3618
    %v3694 = vunpack.c.l.b16 %v3619
    %v3695 = vunpack.c.h.b16 %v3619
    %v3696 = vunpack.c.l.b16 %v3620
    %v3697 = vunpack.c.h.b16 %v3620
    %v3698 = vunpack.c.l.b16 %v3621
    %v3699 = vunpack.c.h.b16 %v3621
    %v3700 = vunpack.c.l.b16 %v3622
    %v3701 = vunpack.c.h.b16 %v3622
    %v3702 = vunpack.c.l.b16 %v3623
    %v3703 = vunpack.c.h.b16 %v3623
    %v3704 = vunpack.c.l.b16 %v3624
    %v3705 = vunpack.c.h.b16 %v3624
    %v3706 = vunpack.c.l.b16 %v3625
    %v3707 = vunpack.c.h.b16 %v3625
    %v3708 = vunpack.c.l.b16 %v3626
    %v3709 = vunpack.c.h.b16 %v3626
    %v3710 = vunpack.c.l.b16 %v3627
    %v3711 = vunpack.c.h.b16 %v3627
    %v3712 = vunpack.c.l.b16 %v3628
    %v3713 = vunpack.c.h.b16 %v3628
    %v3714 = vunpack.c.l.b16 %v3629
    %v3715 = vunpack.c.h.b16 %v3629
    %v3716 = vunpack.c.l.b16 %v3630
    %v3717 = vunpack.c.h.b16 %v3630
    %v3718 = vunpack.c.l.b16 %v3631
    %v3719 = vunpack.c.h.b16 %v3631
    %v3720 = vunpack.c.l.b16 %v3632
    %v3721 = vunpack.c.h.b16 %v3632
    %v3722 = vunpack.c.l.b16 %v3633
    %v3723 = vunpack.c.h.b16 %v3633
    %v3724 = vunpack.c.l.b16 %v3634
    %v3725 = vunpack.c.h.b16 %v3634
    %v3726 = vunpack.c.l.b16 %v3635
    %v3727 = vunpack.c.h.b16 %v3635
    %v3728 = vunpack.c.l.b16 %v3636
    %v3729 = vunpack.c.h.b16 %v3636
    %v3730 = vunpack.c.l.b16 %v3637
    %v3731 = vunpack.c.h.b16 %v3637
    %v3732 = vunpack.c.l.b16 %v3638
    %v3733 = vunpack.c.h.b16 %v3638
    %v3734 = vunpack.c.l.b16 %v3639
    %v3735 = vunpack.c.h.b16 %v3639
    %v3736 = vpack.c.b16 %v3674, %v3672
    %v3737 = vpack.c.b16 %v3675, %v3673
    %v3738 = vpack.c.b16 %v3678, %v3676
    %v3739 = vpack.c.b16 %v3679, %v3677
    %v3740 = vpack.c.b16 %v3682, %v3680
    %v3741 = vpack.c.b16 %v3683, %v3681
    %v3742 = vpack.c.b16 %v3686, %v3684
    %v3743 = vpack.c.b16 %v3687, %v3685
    %v3744 = vpack.c.b16 %v3690, %v3688
    %v3745 = vpack.c.b16 %v3691, %v3689
    %v3746 = vpack.c.b16 %v3694, %v3692
    %v3747 = vpack.c.b16 %v3695, %v3693
    %v3748 = vpack.c.b16 %v3698, %v3696
    %v3749 = vpack.c.b16 %v3699, %v3697
    %v3750 = vpack.c.b16 %v3702, %v3700
    %v3751 = vpack.c.b16 %v3703, %v3701
    %v3752 = vpack.c.b16 %v3706, %v3704
    %v3753 = vpack.c.b16 %v3707, %v3705
    %v3754 = vpack.c.b16 %v3710, %v3708
    %v3755 = vpack.c.b16 %v3711, %v3709
    %v3756 = vpack.c.b16 %v3714, %v3712
    %v3757 = vpack.c.b16 %v3715, %v3713
    %v3758 = vpack.c.b16 %v3718, %v3716
    %v3759 = vpack.c.b16 %v3719, %v3717
    %v3760 = vpack.c.b16 %v3722, %v3720
    %v3761 = vpack.c.b16 %v3723, %v3721
    %v3762 = vpack.c.b16 %v3726, %v3724
    %v3763 = vpack.c.b16 %v3727, %v3725
    %v3764 = vpack.c.b16 %v3730, %v3728
    %v3765 = vpack.c.b16 %v3731, %v3729
    %v3766 = vpack.c.b16 %v3734, %v3732
    %v3767 = vpack.c.b16 %v3735, %v3733
    %3800 = vmatprep.subr.bf16.mxu0 %v3737
    %3801 = vmatpush1.bf16.msra.mxu0 %v3736
    %3802 = vmatprep.subr.bf16.mxu0 %v3739
    %3803 = vmatpush1.bf16.msra.mxu0 %v3738
    %3804 = vmatprep.subr.bf16.mxu0 %v3741
    %3805 = vmatpush1.bf16.msra.mxu0 %v3740
    %3806 = vmatprep.subr.bf16.mxu0 %v3743
    %3807 = vmatpush1.bf16.msra.mxu0 %v3742
    %3808 = vmatprep.subr.bf16.mxu0 %v3745
    %3809 = vmatpush1.bf16.msra.mxu0 %v3744
    %3810 = vmatprep.subr.bf16.mxu0 %v3747
    %3811 = vmatpush1.bf16.msra.mxu0 %v3746
    %3812 = vmatprep.subr.bf16.mxu0 %v3749
    %3813 = vmatpush1.bf16.msra.mxu0 %v3748
    %3814 = vmatprep.subr.bf16.mxu0 %v3751
    %3815 = vmatpush1.bf16.msra.mxu0 %v3750
    %3816 = vmatprep.subr.bf16.mxu0 %v3753
    %3817 = vmatpush1.bf16.msra.mxu0 %v3752
    %3818 = vmatprep.subr.bf16.mxu0 %v3755
    %3819 = vmatpush1.bf16.msra.mxu0 %v3754
    %3820 = vmatprep.subr.bf16.mxu0 %v3757
    %3821 = vmatpush1.bf16.msra.mxu0 %v3756
    %3822 = vmatprep.subr.bf16.mxu0 %v3759
    %3823 = vmatpush1.bf16.msra.mxu0 %v3758
    %3824 = vmatprep.subr.bf16.mxu0 %v3761
    %3825 = vmatpush1.bf16.msra.mxu0 %v3760
    %3826 = vmatprep.subr.bf16.mxu0 %v3763
    %3827 = vmatpush1.bf16.msra.mxu0 %v3762
    %3828 = vmatprep.subr.bf16.mxu0 %v3765
    %3829 = vmatpush1.bf16.msra.mxu0 %v3764
    %3830 = vmatprep.subr.bf16.mxu0 %v3767
    %3831 = vmatpush1.bf16.msra.mxu0 %v3766
    %3832 = vmatprep.mubr.bf16.mxu0 %v3606
    %3833 = vmatmul.mubr.bf16.gmra.mrb[0].mxu0 %v3605
    %v3834 = vpop.f32.mrb[0].mxu0
    %v3835 = vadd.f32 0.0, %v3834
    %v3836 = vpop.f32.mrb[0].mxu0
    %v3837 = vadd.f32 0.0, %v3836
    %v3838 = vpop.f32.mrb[0].mxu0
    %v3839 = vadd.f32 0.0, %v3838
    %v3840 = vpop.f32.mrb[0].mxu0
    %v3841 = vadd.f32 0.0, %v3840
    %3842 = vdwg.mxu0
    %v3875 = vunpack.c.l.b16 %v3519
    %v3876 = vunpack.c.h.b16 %v3519
    %v3877 = vunpack.c.l.b16 %v3520
    %v3878 = vunpack.c.h.b16 %v3520
    %v3879 = vunpack.c.l.b16 %v3521
    %v3880 = vunpack.c.h.b16 %v3521
    %v3881 = vunpack.c.l.b16 %v3522
    %v3882 = vunpack.c.h.b16 %v3522
    %v3883 = vunpack.c.l.b16 %v3523
    %v3884 = vunpack.c.h.b16 %v3523
    %v3885 = vunpack.c.l.b16 %v3524
    %v3886 = vunpack.c.h.b16 %v3524
    %v3887 = vunpack.c.l.b16 %v3525
    %v3888 = vunpack.c.h.b16 %v3525
    %v3889 = vunpack.c.l.b16 %v3526
    %v3890 = vunpack.c.h.b16 %v3526
    %v3891 = vunpack.c.l.b16 %v3527
    %v3892 = vunpack.c.h.b16 %v3527
    %v3893 = vunpack.c.l.b16 %v3528
    %v3894 = vunpack.c.h.b16 %v3528
    %v3895 = vunpack.c.l.b16 %v3529
    %v3896 = vunpack.c.h.b16 %v3529
    %v3897 = vunpack.c.l.b16 %v3530
    %v3898 = vunpack.c.h.b16 %v3530
    %v3899 = vunpack.c.l.b16 %v3531
    %v3900 = vunpack.c.h.b16 %v3531
    %v3901 = vunpack.c.l.b16 %v3532
    %v3902 = vunpack.c.h.b16 %v3532
    %v3903 = vunpack.c.l.b16 %v3533
    %v3904 = vunpack.c.h.b16 %v3533
    %v3905 = vunpack.c.l.b16 %v3534
    %v3906 = vunpack.c.h.b16 %v3534
    %v3907 = vunpack.c.l.b16 %v3535
    %v3908 = vunpack.c.h.b16 %v3535
    %v3909 = vunpack.c.l.b16 %v3536
    %v3910 = vunpack.c.h.b16 %v3536
    %v3911 = vunpack.c.l.b16 %v3537
    %v3912 = vunpack.c.h.b16 %v3537
    %v3913 = vunpack.c.l.b16 %v3538
    %v3914 = vunpack.c.h.b16 %v3538
    %v3915 = vunpack.c.l.b16 %v3539
    %v3916 = vunpack.c.h.b16 %v3539
    %v3917 = vunpack.c.l.b16 %v3540
    %v3918 = vunpack.c.h.b16 %v3540
    %v3919 = vunpack.c.l.b16 %v3541
    %v3920 = vunpack.c.h.b16 %v3541
    %v3921 = vunpack.c.l.b16 %v3542
    %v3922 = vunpack.c.h.b16 %v3542
    %v3923 = vunpack.c.l.b16 %v3543
    %v3924 = vunpack.c.h.b16 %v3543
    %v3925 = vunpack.c.l.b16 %v3544
    %v3926 = vunpack.c.h.b16 %v3544
    %v3927 = vunpack.c.l.b16 %v3545
    %v3928 = vunpack.c.h.b16 %v3545
    %v3929 = vunpack.c.l.b16 %v3546
    %v3930 = vunpack.c.h.b16 %v3546
    %v3931 = vunpack.c.l.b16 %v3547
    %v3932 = vunpack.c.h.b16 %v3547
    %v3933 = vunpack.c.l.b16 %v3548
    %v3934 = vunpack.c.h.b16 %v3548
    %v3935 = vunpack.c.l.b16 %v3549
    %v3936 = vunpack.c.h.b16 %v3549
    %v3937 = vunpack.c.l.b16 %v3550
    %v3938 = vunpack.c.h.b16 %v3550
    %v3939 = vpack.c.b16 %v3877, %v3875
    %v3940 = vpack.c.b16 %v3878, %v3876
    %v3941 = vpack.c.b16 %v3881, %v3879
    %v3942 = vpack.c.b16 %v3882, %v3880
    %v3943 = vpack.c.b16 %v3885, %v3883
    %v3944 = vpack.c.b16 %v3886, %v3884
    %v3945 = vpack.c.b16 %v3889, %v3887
    %v3946 = vpack.c.b16 %v3890, %v3888
    %v3947 = vpack.c.b16 %v3893, %v3891
    %v3948 = vpack.c.b16 %v3894, %v3892
    %v3949 = vpack.c.b16 %v3897, %v3895
    %v3950 = vpack.c.b16 %v3898, %v3896
    %v3951 = vpack.c.b16 %v3901, %v3899
    %v3952 = vpack.c.b16 %v3902, %v3900
    %v3953 = vpack.c.b16 %v3905, %v3903
    %v3954 = vpack.c.b16 %v3906, %v3904
    %v3955 = vpack.c.b16 %v3909, %v3907
    %v3956 = vpack.c.b16 %v3910, %v3908
    %v3957 = vpack.c.b16 %v3913, %v3911
    %v3958 = vpack.c.b16 %v3914, %v3912
    %v3959 = vpack.c.b16 %v3917, %v3915
    %v3960 = vpack.c.b16 %v3918, %v3916
    %v3961 = vpack.c.b16 %v3921, %v3919
    %v3962 = vpack.c.b16 %v3922, %v3920
    %v3963 = vpack.c.b16 %v3925, %v3923
    %v3964 = vpack.c.b16 %v3926, %v3924
    %v3965 = vpack.c.b16 %v3929, %v3927
    %v3966 = vpack.c.b16 %v3930, %v3928
    %v3967 = vpack.c.b16 %v3933, %v3931
    %v3968 = vpack.c.b16 %v3934, %v3932
    %v3969 = vpack.c.b16 %v3937, %v3935
    %v3970 = vpack.c.b16 %v3938, %v3936
    %4003 = vmatprep.subr.bf16.mxu0 %v3940
    %4004 = vmatpush1.bf16.msra.mxu0 %v3939
    %4005 = vmatprep.subr.bf16.mxu0 %v3942
    %4006 = vmatpush1.bf16.msra.mxu0 %v3941
    %4007 = vmatprep.subr.bf16.mxu0 %v3944
    %4008 = vmatpush1.bf16.msra.mxu0 %v3943
    %4009 = vmatprep.subr.bf16.mxu0 %v3946
    %4010 = vmatpush1.bf16.msra.mxu0 %v3945
    %4011 = vmatprep.subr.bf16.mxu0 %v3948
    %4012 = vmatpush1.bf16.msra.mxu0 %v3947
    %4013 = vmatprep.subr.bf16.mxu0 %v3950
    %4014 = vmatpush1.bf16.msra.mxu0 %v3949
    %4015 = vmatprep.subr.bf16.mxu0 %v3952
    %4016 = vmatpush1.bf16.msra.mxu0 %v3951
    %4017 = vmatprep.subr.bf16.mxu0 %v3954
    %4018 = vmatpush1.bf16.msra.mxu0 %v3953
    %4019 = vmatprep.subr.bf16.mxu0 %v3956
    %4020 = vmatpush1.bf16.msra.mxu0 %v3955
    %4021 = vmatprep.subr.bf16.mxu0 %v3958
    %4022 = vmatpush1.bf16.msra.mxu0 %v3957
    %4023 = vmatprep.subr.bf16.mxu0 %v3960
    %4024 = vmatpush1.bf16.msra.mxu0 %v3959
    %4025 = vmatprep.subr.bf16.mxu0 %v3962
    %4026 = vmatpush1.bf16.msra.mxu0 %v3961
    %4027 = vmatprep.subr.bf16.mxu0 %v3964
    %4028 = vmatpush1.bf16.msra.mxu0 %v3963
    %4029 = vmatprep.subr.bf16.mxu0 %v3966
    %4030 = vmatpush1.bf16.msra.mxu0 %v3965
    %4031 = vmatprep.subr.bf16.mxu0 %v3968
    %4032 = vmatpush1.bf16.msra.mxu0 %v3967
    %4033 = vmatprep.subr.bf16.mxu0 %v3970
    %4034 = vmatpush1.bf16.msra.mxu0 %v3969
    %4035 = vmatprep.mubr.bf16.mxu0 %v3518
    %4036 = vmatmul.mubr.bf16.gmra.mrb[0].mxu0 %v3517
    %v4037 = vpop.f32.mrb[0].mxu0
    %v4038 = vadd.f32 %v3835, %v4037
    %v4039 = vpop.f32.mrb[0].mxu0
    %v4040 = vadd.f32 %v3837, %v4039
    %v4041 = vpop.f32.mrb[0].mxu0
    %v4042 = vadd.f32 %v3839, %v4041
    %v4043 = vpop.f32.mrb[0].mxu0
    %v4044 = vadd.f32 %v3841, %v4043
    %4045 = vdwg.mxu0
    %s4046 = scalar_lea.vmem %s21, 16
    %v4047 = vld [vmem:[%s4046] sm:$0xf]
    %v4048 = vld [vmem:[%s4046 + $0x4] sm:$0xf]
    %v4051 = vunpack.c.l.b16 %v4047
    %v4052 = vunpack.c.l.b16 %v4048
    %v4053 = vpack.c.b16 %v4052, %v4051
    %v4055 = vsel %vm3470, %v4053, 0
    %4057 = vmatprep.subr.bf16.mxu0 %v3460
    %4058 = vmatpush1.bf16.msra.mxu0 %v3459
    %4059 = vmatprep.subr.bf16.mxu0 %v3462
    %4060 = vmatpush1.bf16.msra.mxu0 %v3461
    %4061 = vmatprep.subr.bf16.mxu0 0
    %4062 = vmatpush1.bf16.msra.mxu0 0
    %4063 = vmatprep.subr.bf16.mxu0 0
    %4064 = vmatpush1.bf16.msra.mxu0 0
    %4065 = vmatprep.subr.bf16.mxu0 0
    %4066 = vmatpush1.bf16.msra.mxu0 0
    %4067 = vmatprep.subr.bf16.mxu0 0
    %4068 = vmatpush1.bf16.msra.mxu0 0
    %4069 = vmatprep.subr.bf16.mxu0 0
    %4070 = vmatpush1.bf16.msra.mxu0 0
    %4071 = vmatprep.subr.bf16.mxu0 0
    %4072 = vmatpush1.bf16.msra.mxu0 0
    %4073 = vmatprep.subr.bf16.mxu0 0
    %4074 = vmatpush1.bf16.msra.mxu0 0
    %4075 = vmatprep.subr.bf16.mxu0 0
    %4076 = vmatpush1.bf16.msra.mxu0 0
    %4077 = vmatprep.subr.bf16.mxu0 0
    %4078 = vmatpush1.bf16.msra.mxu0 0
    %4079 = vmatprep.subr.bf16.mxu0 0
    %4080 = vmatpush1.bf16.msra.mxu0 0
    %4081 = vmatprep.subr.bf16.mxu0 0
    %4082 = vmatpush1.bf16.msra.mxu0 0
    %4083 = vmatprep.subr.bf16.mxu0 0
    %4084 = vmatpush1.bf16.msra.mxu0 0
    %4085 = vmatprep.subr.bf16.mxu0 0
    %4086 = vmatpush1.bf16.msra.mxu0 0
    %4087 = vmatprep.subr.bf16.mxu0 0
    %4088 = vmatpush1.bf16.msra.mxu0 0
    %4089 = vmatprep.mubr.bf16.mxu0 0
    %4090 = vmatmul.mubr.bf16.gmra.mrb[0].mxu0 %v4055
    %v4091 = vpop.f32.mrb[0].mxu0
    %v4092 = vadd.f32 0.0, %v4091
    %v4093 = vpop.f32.mrb[0].mxu0
    %v4094 = vadd.f32 0.0, %v4093
    %v4095 = vpop.f32.mrb[0].mxu0
    %v4096 = vadd.f32 0.0, %v4095
    %v4097 = vpop.f32.mrb[0].mxu0
    %v4098 = vadd.f32 0.0, %v4097
    %4099 = vdwg.mxu0
    %v4100 = vpack.c.bf16 %v4096, %v4092
    %v4101 = vpack.c.bf16 %v4098, %v4094
    %s4102 = scalar_lea.vmem %s19, 512
    %v4103 = vld [vmem:[%s4102] sm:$0xff]
    %v4104 = vld [vmem:[%s4102 + $0x8] sm:$0xff]
    %v4105 = vld [vmem:[%s4102 + $0x10] sm:$0xff]
    %v4106 = vld [vmem:[%s4102 + $0x18] sm:$0xff]
    %v4107 = vld [vmem:[%s4102 + $0x20] sm:$0xff]
    %v4108 = vld [vmem:[%s4102 + $0x28] sm:$0xff]
    %v4109 = vld [vmem:[%s4102 + $0x30] sm:$0xff]
    %v4110 = vld [vmem:[%s4102 + $0x38] sm:$0xff]
    %v4111 = vld [vmem:[%s4102 + $0x40] sm:$0xff]
    %v4112 = vld [vmem:[%s4102 + $0x48] sm:$0xff]
    %v4113 = vld [vmem:[%s4102 + $0x50] sm:$0xff]
    %v4114 = vld [vmem:[%s4102 + $0x58] sm:$0xff]
    %v4115 = vld [vmem:[%s4102 + $0x60] sm:$0xff]
    %v4116 = vld [vmem:[%s4102 + $0x68] sm:$0xff]
    %v4117 = vld [vmem:[%s4102 + $0x70] sm:$0xff]
    %v4118 = vld [vmem:[%s4102 + $0x78] sm:$0xff]
    %v4119 = vld [vmem:[%s4102 + $0x80] sm:$0xff]
    %v4120 = vld [vmem:[%s4102 + $0x88] sm:$0xff]
    %v4121 = vld [vmem:[%s4102 + $0x90] sm:$0xff]
    %v4122 = vld [vmem:[%s4102 + $0x98] sm:$0xff]
    %v4123 = vld [vmem:[%s4102 + $0xa0] sm:$0xff]
    %v4124 = vld [vmem:[%s4102 + $0xa8] sm:$0xff]
    %v4125 = vld [vmem:[%s4102 + $0xb0] sm:$0xff]
    %v4126 = vld [vmem:[%s4102 + $0xb8] sm:$0xff]
    %v4127 = vld [vmem:[%s4102 + $0xc0] sm:$0xff]
    %v4128 = vld [vmem:[%s4102 + $0xc8] sm:$0xff]
    %v4129 = vld [vmem:[%s4102 + $0xd0] sm:$0xff]
    %v4130 = vld [vmem:[%s4102 + $0xd8] sm:$0xff]
    %v4131 = vld [vmem:[%s4102 + $0xe0] sm:$0xff]
    %v4132 = vld [vmem:[%s4102 + $0xe8] sm:$0xff]
    %v4133 = vld [vmem:[%s4102 + $0xf0] sm:$0xff]
    %v4134 = vld [vmem:[%s4102 + $0xf8] sm:$0xff]
    %v4167 = vunpack.c.l.b16 %v4103
    %v4168 = vunpack.c.h.b16 %v4103
    %v4169 = vunpack.c.l.b16 %v4104
    %v4170 = vunpack.c.h.b16 %v4104
    %v4171 = vunpack.c.l.b16 %v4105
    %v4172 = vunpack.c.h.b16 %v4105
    %v4173 = vunpack.c.l.b16 %v4106
    %v4174 = vunpack.c.h.b16 %v4106
    %v4175 = vunpack.c.l.b16 %v4107
    %v4176 = vunpack.c.h.b16 %v4107
    %v4177 = vunpack.c.l.b16 %v4108
    %v4178 = vunpack.c.h.b16 %v4108
    %v4179 = vunpack.c.l.b16 %v4109
    %v4180 = vunpack.c.h.b16 %v4109
    %v4181 = vunpack.c.l.b16 %v4110
    %v4182 = vunpack.c.h.b16 %v4110
    %v4183 = vunpack.c.l.b16 %v4111
    %v4184 = vunpack.c.h.b16 %v4111
    %v4185 = vunpack.c.l.b16 %v4112
    %v4186 = vunpack.c.h.b16 %v4112
    %v4187 = vunpack.c.l.b16 %v4113
    %v4188 = vunpack.c.h.b16 %v4113
    %v4189 = vunpack.c.l.b16 %v4114
    %v4190 = vunpack.c.h.b16 %v4114
    %v4191 = vunpack.c.l.b16 %v4115
    %v4192 = vunpack.c.h.b16 %v4115
    %v4193 = vunpack.c.l.b16 %v4116
    %v4194 = vunpack.c.h.b16 %v4116
    %v4195 = vunpack.c.l.b16 %v4117
    %v4196 = vunpack.c.h.b16 %v4117
    %v4197 = vunpack.c.l.b16 %v4118
    %v4198 = vunpack.c.h.b16 %v4118
    %v4199 = vunpack.c.l.b16 %v4119
    %v4200 = vunpack.c.h.b16 %v4119
    %v4201 = vunpack.c.l.b16 %v4120
    %v4202 = vunpack.c.h.b16 %v4120
    %v4203 = vunpack.c.l.b16 %v4121
    %v4204 = vunpack.c.h.b16 %v4121
    %v4205 = vunpack.c.l.b16 %v4122
    %v4206 = vunpack.c.h.b16 %v4122
    %v4207 = vunpack.c.l.b16 %v4123
    %v4208 = vunpack.c.h.b16 %v4123
    %v4209 = vunpack.c.l.b16 %v4124
    %v4210 = vunpack.c.h.b16 %v4124
    %v4211 = vunpack.c.l.b16 %v4125
    %v4212 = vunpack.c.h.b16 %v4125
    %v4213 = vunpack.c.l.b16 %v4126
    %v4214 = vunpack.c.h.b16 %v4126
    %v4215 = vunpack.c.l.b16 %v4127
    %v4216 = vunpack.c.h.b16 %v4127
    %v4217 = vunpack.c.l.b16 %v4128
    %v4218 = vunpack.c.h.b16 %v4128
    %v4219 = vunpack.c.l.b16 %v4129
    %v4220 = vunpack.c.h.b16 %v4129
    %v4221 = vunpack.c.l.b16 %v4130
    %v4222 = vunpack.c.h.b16 %v4130
    %v4223 = vunpack.c.l.b16 %v4131
    %v4224 = vunpack.c.h.b16 %v4131
    %v4225 = vunpack.c.l.b16 %v4132
    %v4226 = vunpack.c.h.b16 %v4132
    %v4227 = vunpack.c.l.b16 %v4133
    %v4228 = vunpack.c.h.b16 %v4133
    %v4229 = vunpack.c.l.b16 %v4134
    %v4230 = vunpack.c.h.b16 %v4134
    %v4231 = vpack.c.b16 %v4169, %v4167
    %v4232 = vpack.c.b16 %v4170, %v4168
    %v4233 = vpack.c.b16 %v4173, %v4171
    %v4234 = vpack.c.b16 %v4174, %v4172
    %v4235 = vpack.c.b16 %v4177, %v4175
    %v4236 = vpack.c.b16 %v4178, %v4176
    %v4237 = vpack.c.b16 %v4181, %v4179
    %v4238 = vpack.c.b16 %v4182, %v4180
    %v4239 = vpack.c.b16 %v4185, %v4183
    %v4240 = vpack.c.b16 %v4186, %v4184
    %v4241 = vpack.c.b16 %v4189, %v4187
    %v4242 = vpack.c.b16 %v4190, %v4188
    %v4243 = vpack.c.b16 %v4193, %v4191
    %v4244 = vpack.c.b16 %v4194, %v4192
    %v4245 = vpack.c.b16 %v4197, %v4195
    %v4246 = vpack.c.b16 %v4198, %v4196
    %v4247 = vpack.c.b16 %v4201, %v4199
    %v4248 = vpack.c.b16 %v4202, %v4200
    %v4249 = vpack.c.b16 %v4205, %v4203
    %v4250 = vpack.c.b16 %v4206, %v4204
    %v4251 = vpack.c.b16 %v4209, %v4207
    %v4252 = vpack.c.b16 %v4210, %v4208
    %v4253 = vpack.c.b16 %v4213, %v4211
    %v4254 = vpack.c.b16 %v4214, %v4212
    %v4255 = vpack.c.b16 %v4217, %v4215
    %v4256 = vpack.c.b16 %v4218, %v4216
    %v4257 = vpack.c.b16 %v4221, %v4219
    %v4258 = vpack.c.b16 %v4222, %v4220
    %v4259 = vpack.c.b16 %v4225, %v4223
    %v4260 = vpack.c.b16 %v4226, %v4224
    %v4261 = vpack.c.b16 %v4229, %v4227
    %v4262 = vpack.c.b16 %v4230, %v4228
    %4295 = vmatprep.subr.bf16.mxu0 %v4232
    %4296 = vmatpush1.bf16.msra.mxu0 %v4231
    %4297 = vmatprep.subr.bf16.mxu0 %v4234
    %4298 = vmatpush1.bf16.msra.mxu0 %v4233
    %4299 = vmatprep.subr.bf16.mxu0 %v4236
    %4300 = vmatpush1.bf16.msra.mxu0 %v4235
    %4301 = vmatprep.subr.bf16.mxu0 %v4238
    %4302 = vmatpush1.bf16.msra.mxu0 %v4237
    %4303 = vmatprep.subr.bf16.mxu0 %v4240
    %4304 = vmatpush1.bf16.msra.mxu0 %v4239
    %4305 = vmatprep.subr.bf16.mxu0 %v4242
    %4306 = vmatpush1.bf16.msra.mxu0 %v4241
    %4307 = vmatprep.subr.bf16.mxu0 %v4244
    %4308 = vmatpush1.bf16.msra.mxu0 %v4243
    %4309 = vmatprep.subr.bf16.mxu0 %v4246
    %4310 = vmatpush1.bf16.msra.mxu0 %v4245
    %4311 = vmatprep.subr.bf16.mxu0 %v4248
    %4312 = vmatpush1.bf16.msra.mxu0 %v4247
    %4313 = vmatprep.subr.bf16.mxu0 %v4250
    %4314 = vmatpush1.bf16.msra.mxu0 %v4249
    %4315 = vmatprep.subr.bf16.mxu0 %v4252
    %4316 = vmatpush1.bf16.msra.mxu0 %v4251
    %4317 = vmatprep.subr.bf16.mxu0 %v4254
    %4318 = vmatpush1.bf16.msra.mxu0 %v4253
    %4319 = vmatprep.subr.bf16.mxu0 %v4256
    %4320 = vmatpush1.bf16.msra.mxu0 %v4255
    %4321 = vmatprep.subr.bf16.mxu0 %v4258
    %4322 = vmatpush1.bf16.msra.mxu0 %v4257
    %4323 = vmatprep.subr.bf16.mxu0 %v4260
    %4324 = vmatpush1.bf16.msra.mxu0 %v4259
    %4325 = vmatprep.subr.bf16.mxu0 %v4262
    %4326 = vmatpush1.bf16.msra.mxu0 %v4261
    %4327 = vmatprep.mubr.bf16.mxu0 %v4101
    %4328 = vmatmul.mubr.bf16.gmra.mrb[0].mxu0 %v4100
    %v4329 = vpop.f32.mrb[0].mxu0
    %v4330 = vadd.f32 0.0, %v4329
    %v4331 = vpop.f32.mrb[0].mxu0
    %v4332 = vadd.f32 0.0, %v4331
    %v4333 = vpop.f32.mrb[0].mxu0
    %v4334 = vadd.f32 0.0, %v4333
    %v4335 = vpop.f32.mrb[0].mxu0
    %v4336 = vadd.f32 0.0, %v4335
    %4337 = vdwg.mxu0
    %v4338 = vadd.f32 %v4038, %v4330
    %v4339 = vadd.f32 %v4040, %v4332
    %v4340 = vadd.f32 %v4042, %v4334
    %v4341 = vadd.f32 %v4044, %v4336
    %s4342 = scalar_lea.vmem %s21, 24
    %v4343 = vld [vmem:[%s4342] sm:$0xf]
    %v4344 = vld [vmem:[%s4342 + $0x4] sm:$0xf]
    %v4347 = vunpack.c.l.b16 %v4343
    %v4348 = vunpack.c.l.b16 %v4344
    %v4349 = vpack.c.b16 %v4348, %v4347
    %v4351 = vsel %vm3470, %v4349, 0
    %4353 = vmatprep.subr.bf16.mxu0 %v3460
    %4354 = vmatpush1.bf16.msra.mxu0 %v3459
    %4355 = vmatprep.subr.bf16.mxu0 %v3462
    %4356 = vmatpush1.bf16.msra.mxu0 %v3461
    %4357 = vmatprep.subr.bf16.mxu0 0
    %4358 = vmatpush1.bf16.msra.mxu0 0
    %4359 = vmatprep.subr.bf16.mxu0 0
    %4360 = vmatpush1.bf16.msra.mxu0 0
    %4361 = vmatprep.subr.bf16.mxu0 0
    %4362 = vmatpush1.bf16.msra.mxu0 0
    %4363 = vmatprep.subr.bf16.mxu0 0
    %4364 = vmatpush1.bf16.msra.mxu0 0
    %4365 = vmatprep.subr.bf16.mxu0 0
    %4366 = vmatpush1.bf16.msra.mxu0 0
    %4367 = vmatprep.subr.bf16.mxu0 0
    %4368 = vmatpush1.bf16.msra.mxu0 0
    %4369 = vmatprep.subr.bf16.mxu0 0
    %4370 = vmatpush1.bf16.msra.mxu0 0
    %4371 = vmatprep.subr.bf16.mxu0 0
    %4372 = vmatpush1.bf16.msra.mxu0 0
    %4373 = vmatprep.subr.bf16.mxu0 0
    %4374 = vmatpush1.bf16.msra.mxu0 0
    %4375 = vmatprep.subr.bf16.mxu0 0
    %4376 = vmatpush1.bf16.msra.mxu0 0
    %4377 = vmatprep.subr.bf16.mxu0 0
    %4378 = vmatpush1.bf16.msra.mxu0 0
    %4379 = vmatprep.subr.bf16.mxu0 0
    %4380 = vmatpush1.bf16.msra.mxu0 0
    %4381 = vmatprep.subr.bf16.mxu0 0
    %4382 = vmatpush1.bf16.msra.mxu0 0
    %4383 = vmatprep.subr.bf16.mxu0 0
    %4384 = vmatpush1.bf16.msra.mxu0 0
    %4385 = vmatprep.mubr.bf16.mxu0 0
    %4386 = vmatmul.mubr.bf16.gmra.mrb[0].mxu0 %v4351
    %v4387 = vpop.f32.mrb[0].mxu0
    %v4388 = vadd.f32 0.0, %v4387
    %v4389 = vpop.f32.mrb[0].mxu0
    %v4390 = vadd.f32 0.0, %v4389
    %v4391 = vpop.f32.mrb[0].mxu0
    %v4392 = vadd.f32 0.0, %v4391
    %v4393 = vpop.f32.mrb[0].mxu0
    %v4394 = vadd.f32 0.0, %v4393
    %4395 = vdwg.mxu0
    %v4396 = vpack.c.bf16 %v4392, %v4388
    %v4397 = vpack.c.bf16 %v4394, %v4390
    %s4398 = scalar_lea.vmem %s19, 768
    %v4399 = vld [vmem:[%s4398] sm:$0xff]
    %v4400 = vld [vmem:[%s4398 + $0x8] sm:$0xff]
    %v4401 = vld [vmem:[%s4398 + $0x10] sm:$0xff]
    %v4402 = vld [vmem:[%s4398 + $0x18] sm:$0xff]
    %v4403 = vld [vmem:[%s4398 + $0x20] sm:$0xff]
    %v4404 = vld [vmem:[%s4398 + $0x28] sm:$0xff]
    %v4405 = vld [vmem:[%s4398 + $0x30] sm:$0xff]
    %v4406 = vld [vmem:[%s4398 + $0x38] sm:$0xff]
    %v4407 = vld [vmem:[%s4398 + $0x40] sm:$0xff]
    %v4408 = vld [vmem:[%s4398 + $0x48] sm:$0xff]
    %v4409 = vld [vmem:[%s4398 + $0x50] sm:$0xff]
    %v4410 = vld [vmem:[%s4398 + $0x58] sm:$0xff]
    %v4411 = vld [vmem:[%s4398 + $0x60] sm:$0xff]
    %v4412 = vld [vmem:[%s4398 + $0x68] sm:$0xff]
    %v4413 = vld [vmem:[%s4398 + $0x70] sm:$0xff]
    %v4414 = vld [vmem:[%s4398 + $0x78] sm:$0xff]
    %v4415 = vld [vmem:[%s4398 + $0x80] sm:$0xff]
    %v4416 = vld [vmem:[%s4398 + $0x88] sm:$0xff]
    %v4417 = vld [vmem:[%s4398 + $0x90] sm:$0xff]
    %v4418 = vld [vmem:[%s4398 + $0x98] sm:$0xff]
    %v4419 = vld [vmem:[%s4398 + $0xa0] sm:$0xff]
    %v4420 = vld [vmem:[%s4398 + $0xa8] sm:$0xff]
    %v4421 = vld [vmem:[%s4398 + $0xb0] sm:$0xff]
    %v4422 = vld [vmem:[%s4398 + $0xb8] sm:$0xff]
    %v4423 = vld [vmem:[%s4398 + $0xc0] sm:$0xff]
    %v4424 = vld [vmem:[%s4398 + $0xc8] sm:$0xff]
    %v4425 = vld [vmem:[%s4398 + $0xd0] sm:$0xff]
    %v4426 = vld [vmem:[%s4398 + $0xd8] sm:$0xff]
    %v4427 = vld [vmem:[%s4398 + $0xe0] sm:$0xff]
    %v4428 = vld [vmem:[%s4398 + $0xe8] sm:$0xff]
    %v4429 = vld [vmem:[%s4398 + $0xf0] sm:$0xff]
    %v4430 = vld [vmem:[%s4398 + $0xf8] sm:$0xff]
    %v4463 = vunpack.c.l.b16 %v4399
    %v4464 = vunpack.c.h.b16 %v4399
    %v4465 = vunpack.c.l.b16 %v4400
    %v4466 = vunpack.c.h.b16 %v4400
    %v4467 = vunpack.c.l.b16 %v4401
    %v4468 = vunpack.c.h.b16 %v4401
    %v4469 = vunpack.c.l.b16 %v4402
    %v4470 = vunpack.c.h.b16 %v4402
    %v4471 = vunpack.c.l.b16 %v4403
    %v4472 = vunpack.c.h.b16 %v4403
    %v4473 = vunpack.c.l.b16 %v4404
    %v4474 = vunpack.c.h.b16 %v4404
    %v4475 = vunpack.c.l.b16 %v4405
    %v4476 = vunpack.c.h.b16 %v4405
    %v4477 = vunpack.c.l.b16 %v4406
    %v4478 = vunpack.c.h.b16 %v4406
    %v4479 = vunpack.c.l.b16 %v4407
    %v4480 = vunpack.c.h.b16 %v4407
    %v4481 = vunpack.c.l.b16 %v4408
    %v4482 = vunpack.c.h.b16 %v4408
    %v4483 = vunpack.c.l.b16 %v4409
    %v4484 = vunpack.c.h.b16 %v4409
    %v4485 = vunpack.c.l.b16 %v4410
    %v4486 = vunpack.c.h.b16 %v4410
    %v4487 = vunpack.c.l.b16 %v4411
    %v4488 = vunpack.c.h.b16 %v4411
    %v4489 = vunpack.c.l.b16 %v4412
    %v4490 = vunpack.c.h.b16 %v4412
    %v4491 = vunpack.c.l.b16 %v4413
    %v4492 = vunpack.c.h.b16 %v4413
    %v4493 = vunpack.c.l.b16 %v4414
    %v4494 = vunpack.c.h.b16 %v4414
    %v4495 = vunpack.c.l.b16 %v4415
    %v4496 = vunpack.c.h.b16 %v4415
    %v4497 = vunpack.c.l.b16 %v4416
    %v4498 = vunpack.c.h.b16 %v4416
    %v4499 = vunpack.c.l.b16 %v4417
    %v4500 = vunpack.c.h.b16 %v4417
    %v4501 = vunpack.c.l.b16 %v4418
    %v4502 = vunpack.c.h.b16 %v4418
    %v4503 = vunpack.c.l.b16 %v4419
    %v4504 = vunpack.c.h.b16 %v4419
    %v4505 = vunpack.c.l.b16 %v4420
    %v4506 = vunpack.c.h.b16 %v4420
    %v4507 = vunpack.c.l.b16 %v4421
    %v4508 = vunpack.c.h.b16 %v4421
    %v4509 = vunpack.c.l.b16 %v4422
    %v4510 = vunpack.c.h.b16 %v4422
    %v4511 = vunpack.c.l.b16 %v4423
    %v4512 = vunpack.c.h.b16 %v4423
    %v4513 = vunpack.c.l.b16 %v4424
    %v4514 = vunpack.c.h.b16 %v4424
    %v4515 = vunpack.c.l.b16 %v4425
    %v4516 = vunpack.c.h.b16 %v4425
    %v4517 = vunpack.c.l.b16 %v4426
    %v4518 = vunpack.c.h.b16 %v4426
    %v4519 = vunpack.c.l.b16 %v4427
    %v4520 = vunpack.c.h.b16 %v4427
    %v4521 = vunpack.c.l.b16 %v4428
    %v4522 = vunpack.c.h.b16 %v4428
    %v4523 = vunpack.c.l.b16 %v4429
    %v4524 = vunpack.c.h.b16 %v4429
    %v4525 = vunpack.c.l.b16 %v4430
    %v4526 = vunpack.c.h.b16 %v4430
    %v4527 = vpack.c.b16 %v4465, %v4463
    %v4528 = vpack.c.b16 %v4466, %v4464
    %v4529 = vpack.c.b16 %v4469, %v4467
    %v4530 = vpack.c.b16 %v4470, %v4468
    %v4531 = vpack.c.b16 %v4473, %v4471
    %v4532 = vpack.c.b16 %v4474, %v4472
    %v4533 = vpack.c.b16 %v4477, %v4475
    %v4534 = vpack.c.b16 %v4478, %v4476
    %v4535 = vpack.c.b16 %v4481, %v4479
    %v4536 = vpack.c.b16 %v4482, %v4480
    %v4537 = vpack.c.b16 %v4485, %v4483
    %v4538 = vpack.c.b16 %v4486, %v4484
    %v4539 = vpack.c.b16 %v4489, %v4487
    %v4540 = vpack.c.b16 %v4490, %v4488
    %v4541 = vpack.c.b16 %v4493, %v4491
    %v4542 = vpack.c.b16 %v4494, %v4492
    %v4543 = vpack.c.b16 %v4497, %v4495
    %v4544 = vpack.c.b16 %v4498, %v4496
    %v4545 = vpack.c.b16 %v4501, %v4499
    %v4546 = vpack.c.b16 %v4502, %v4500
    %v4547 = vpack.c.b16 %v4505, %v4503
    %v4548 = vpack.c.b16 %v4506, %v4504
    %v4549 = vpack.c.b16 %v4509, %v4507
    %v4550 = vpack.c.b16 %v4510, %v4508
    %v4551 = vpack.c.b16 %v4513, %v4511
    %v4552 = vpack.c.b16 %v4514, %v4512
    %v4553 = vpack.c.b16 %v4517, %v4515
    %v4554 = vpack.c.b16 %v4518, %v4516
    %v4555 = vpack.c.b16 %v4521, %v4519
    %v4556 = vpack.c.b16 %v4522, %v4520
    %v4557 = vpack.c.b16 %v4525, %v4523
    %v4558 = vpack.c.b16 %v4526, %v4524
    %4591 = vmatprep.subr.bf16.mxu0 %v4528
    %4592 = vmatpush1.bf16.msra.mxu0 %v4527
    %4593 = vmatprep.subr.bf16.mxu0 %v4530
    %4594 = vmatpush1.bf16.msra.mxu0 %v4529
    %4595 = vmatprep.subr.bf16.mxu0 %v4532
    %4596 = vmatpush1.bf16.msra.mxu0 %v4531
    %4597 = vmatprep.subr.bf16.mxu0 %v4534
    %4598 = vmatpush1.bf16.msra.mxu0 %v4533
    %4599 = vmatprep.subr.bf16.mxu0 %v4536
    %4600 = vmatpush1.bf16.msra.mxu0 %v4535
    %4601 = vmatprep.subr.bf16.mxu0 %v4538
    %4602 = vmatpush1.bf16.msra.mxu0 %v4537
    %4603 = vmatprep.subr.bf16.mxu0 %v4540
    %4604 = vmatpush1.bf16.msra.mxu0 %v4539
    %4605 = vmatprep.subr.bf16.mxu0 %v4542
    %4606 = vmatpush1.bf16.msra.mxu0 %v4541
    %4607 = vmatprep.subr.bf16.mxu0 %v4544
    %4608 = vmatpush1.bf16.msra.mxu0 %v4543
    %4609 = vmatprep.subr.bf16.mxu0 %v4546
    %4610 = vmatpush1.bf16.msra.mxu0 %v4545
    %4611 = vmatprep.subr.bf16.mxu0 %v4548
    %4612 = vmatpush1.bf16.msra.mxu0 %v4547
    %4613 = vmatprep.subr.bf16.mxu0 %v4550
    %4614 = vmatpush1.bf16.msra.mxu0 %v4549
    %4615 = vmatprep.subr.bf16.mxu0 %v4552
    %4616 = vmatpush1.bf16.msra.mxu0 %v4551
    %4617 = vmatprep.subr.bf16.mxu0 %v4554
    %4618 = vmatpush1.bf16.msra.mxu0 %v4553
    %4619 = vmatprep.subr.bf16.mxu0 %v4556
    %4620 = vmatpush1.bf16.msra.mxu0 %v4555
    %4621 = vmatprep.subr.bf16.mxu0 %v4558
    %4622 = vmatpush1.bf16.msra.mxu0 %v4557
    %4623 = vmatprep.mubr.bf16.mxu0 %v4397
    %4624 = vmatmul.mubr.bf16.gmra.mrb[0].mxu0 %v4396
    %v4625 = vpop.f32.mrb[0].mxu0
    %v4626 = vadd.f32 0.0, %v4625
    %v4627 = vpop.f32.mrb[0].mxu0
    %v4628 = vadd.f32 0.0, %v4627
    %v4629 = vpop.f32.mrb[0].mxu0
    %v4630 = vadd.f32 0.0, %v4629
    %v4631 = vpop.f32.mrb[0].mxu0
    %v4632 = vadd.f32 0.0, %v4631
    %4633 = vdwg.mxu0
    %v4634 = vadd.f32 %v4338, %v4626
    %v4635 = vadd.f32 %v4339, %v4628
    %v4636 = vadd.f32 %v4340, %v4630
    %v4637 = vadd.f32 %v4341, %v4632
    %v4638 = vadd.f32 %v4634, %v4636
    %v4639 = vrot.slane %v4638, 4
    %v4640 = vadd.f32 %v4638, %v4639
    %v4641 = vrot.slane %v4640, 2
    %v4642 = vadd.f32 %v4640, %v4641
    %v4643 = vrot.slane %v4642, 1
    %v4644 = vadd.f32 %v4642, %v4643
    %v4645 = vadd.f32 %v4635, %v4637
    %v4646 = vrot.slane %v4645, 4
    %v4647 = vadd.f32 %v4645, %v4646
    %v4648 = vrot.slane %v4647, 2
    %v4649 = vadd.f32 %v4647, %v4648
    %v4650 = vrot.slane %v4649, 1
    %v4651 = vadd.f32 %v4649, %v4650
    %v4652 = vmul.f32 %v4634, %v4634
    %v4653 = vmul.f32 %v4635, %v4635
    %v4654 = vmul.f32 %v4636, %v4636
    %v4655 = vmul.f32 %v4637, %v4637
    %v4656 = vadd.f32 %v4652, %v4654
    %v4657 = vrot.slane %v4656, 4
    %v4658 = vadd.f32 %v4656, %v4657
    %v4659 = vrot.slane %v4658, 2
    %v4660 = vadd.f32 %v4658, %v4659
    %v4661 = vrot.slane %v4660, 1
    %v4662 = vadd.f32 %v4660, %v4661
    %v4663 = vadd.f32 %v4653, %v4655
    %v4664 = vrot.slane %v4663, 4
    %v4665 = vadd.f32 %v4663, %v4664
    %v4666 = vrot.slane %v4665, 2
    %v4667 = vadd.f32 %v4665, %v4666
    %v4668 = vrot.slane %v4667, 1
    %v4669 = vadd.f32 %v4667, %v4668
    %v4670 = vld [vmem:[%s25] sm:$0xff]
    %v4671 = vld [vmem:[%s25 + $0x8] sm:$0xff]
    %v4672 = vld [vmem:[%s25 + $0x10] sm:$0xff]
    %v4673 = vld [vmem:[%s25 + $0x18] sm:$0xff]
    %v4674 = vld [vmem:[%s25 + $0x20] sm:$0xff]
    %v4675 = vld [vmem:[%s25 + $0x28] sm:$0xff]
    %v4676 = vld [vmem:[%s25 + $0x30] sm:$0xff]
    %v4677 = vld [vmem:[%s25 + $0x38] sm:$0xff]
    %v4678 = vld [vmem:[%s25 + $0x40] sm:$0xff]
    %v4679 = vld [vmem:[%s25 + $0x48] sm:$0xff]
    %v4680 = vld [vmem:[%s25 + $0x50] sm:$0xff]
    %v4681 = vld [vmem:[%s25 + $0x58] sm:$0xff]
    %v4682 = vld [vmem:[%s25 + $0x60] sm:$0xff]
    %v4683 = vld [vmem:[%s25 + $0x68] sm:$0xff]
    %v4684 = vld [vmem:[%s25 + $0x70] sm:$0xff]
    %v4685 = vld [vmem:[%s25 + $0x78] sm:$0xff]
    %v4686 = vld [vmem:[%s25 + $0x80] sm:$0xff]
    %v4687 = vld [vmem:[%s25 + $0x88] sm:$0xff]
    %v4688 = vld [vmem:[%s25 + $0x90] sm:$0xff]
    %v4689 = vld [vmem:[%s25 + $0x98] sm:$0xff]
    %v4690 = vld [vmem:[%s25 + $0xa0] sm:$0xff]
    %v4691 = vld [vmem:[%s25 + $0xa8] sm:$0xff]
    %v4692 = vld [vmem:[%s25 + $0xb0] sm:$0xff]
    %v4693 = vld [vmem:[%s25 + $0xb8] sm:$0xff]
    %v4694 = vld [vmem:[%s25 + $0xc0] sm:$0xff]
    %v4695 = vld [vmem:[%s25 + $0xc8] sm:$0xff]
    %v4696 = vld [vmem:[%s25 + $0xd0] sm:$0xff]
    %v4697 = vld [vmem:[%s25 + $0xd8] sm:$0xff]
    %v4698 = vld [vmem:[%s25 + $0xe0] sm:$0xff]
    %v4699 = vld [vmem:[%s25 + $0xe8] sm:$0xff]
    %v4700 = vld [vmem:[%s25 + $0xf0] sm:$0xff]
    %v4701 = vld [vmem:[%s25 + $0xf8] sm:$0xff]
    %4702 = vmatprep.subr.mxu0 0.0
    %4703 = vmatpush1.msra.mxu0 %v4670
    %4704 = vmatprep.subr.mxu0 0.0
    %4705 = vmatpush1.msra.mxu0 %v4671
    %4706 = vmatprep.subr.mxu0 0.0
    %4707 = vmatpush1.msra.mxu0 %v4672
    %4708 = vmatprep.subr.mxu0 0.0
    %4709 = vmatpush1.msra.mxu0 %v4673
    %4710 = vmatprep.subr.mxu0 0.0
    %4711 = vmatpush1.msra.mxu0 %v4674
    %4712 = vmatprep.subr.mxu0 0.0
    %4713 = vmatpush1.msra.mxu0 %v4675
    %4714 = vmatprep.subr.mxu0 0.0
    %4715 = vmatpush1.msra.mxu0 %v4676
    %4716 = vmatprep.subr.mxu0 0.0
    %4717 = vmatpush1.msra.mxu0 %v4677
    %4718 = vmatprep.subr.mxu0 0.0
    %4719 = vmatpush1.msra.mxu0 %v4678
    %4720 = vmatprep.subr.mxu0 0.0
    %4721 = vmatpush1.msra.mxu0 %v4679
    %4722 = vmatprep.subr.mxu0 0.0
    %4723 = vmatpush1.msra.mxu0 %v4680
    %4724 = vmatprep.subr.mxu0 0.0
    %4725 = vmatpush1.msra.mxu0 %v4681
    %4726 = vmatprep.subr.mxu0 0.0
    %4727 = vmatpush1.msra.mxu0 %v4682
    %4728 = vmatprep.subr.mxu0 0.0
    %4729 = vmatpush1.msra.mxu0 %v4683
    %4730 = vmatprep.subr.mxu0 0.0
    %4731 = vmatpush1.msra.mxu0 %v4684
    %4732 = vmatprep.subr.mxu0 0.0
    %4733 = vmatpush1.msra.mxu0 %v4685
    %4734 = vmatprep.subr.mxu0 0.0
    %4735 = vmatpush1.msra.mxu0 %v4686
    %4736 = vmatprep.subr.mxu0 0.0
    %4737 = vmatpush1.msra.mxu0 %v4687
    %4738 = vmatprep.subr.mxu0 0.0
    %4739 = vmatpush1.msra.mxu0 %v4688
    %4740 = vmatprep.subr.mxu0 0.0
    %4741 = vmatpush1.msra.mxu0 %v4689
    %4742 = vmatprep.subr.mxu0 0.0
    %4743 = vmatpush1.msra.mxu0 %v4690
    %4744 = vmatprep.subr.mxu0 0.0
    %4745 = vmatpush1.msra.mxu0 %v4691
    %4746 = vmatprep.subr.mxu0 0.0
    %4747 = vmatpush1.msra.mxu0 %v4692
    %4748 = vmatprep.subr.mxu0 0.0
    %4749 = vmatpush1.msra.mxu0 %v4693
    %4750 = vmatprep.subr.mxu0 0.0
    %4751 = vmatpush1.msra.mxu0 %v4694
    %4752 = vmatprep.subr.mxu0 0.0
    %4753 = vmatpush1.msra.mxu0 %v4695
    %4754 = vmatprep.subr.mxu0 0.0
    %4755 = vmatpush1.msra.mxu0 %v4696
    %4756 = vmatprep.subr.mxu0 0.0
    %4757 = vmatpush1.msra.mxu0 %v4697
    %4758 = vmatprep.subr.mxu0 0.0
    %4759 = vmatpush1.msra.mxu0 %v4698
    %4760 = vmatprep.subr.mxu0 0.0
    %4761 = vmatpush1.msra.mxu0 %v4699
    %4762 = vmatprep.subr.mxu0 0.0
    %4763 = vmatpush1.msra.mxu0 %v4700
    %4764 = vmatprep.subr.mxu0 0.0
    %4765 = vmatpush1.msra.mxu0 %v4701
    %4766 = vmatprep.mubr.f32.mxu0 %v4651
    %4767 = vmatmul.mubr.f32.gmra.mrb[0].mxu0 %v4644
    %v4768 = vpop.f32.mrb[0].mxu0
    %v4769 = vadd.f32 0.0, %v4768
    %v4770 = vpop.f32.mrb[0].mxu0
    %4771 = vdwg.mxu0
    %4772 = vmatprep.subr.mxu0 0.0
    %4773 = vmatpush1.msra.mxu0 %v4670
    %4774 = vmatprep.subr.mxu0 0.0
    %4775 = vmatpush1.msra.mxu0 %v4671
    %4776 = vmatprep.subr.mxu0 0.0
    %4777 = vmatpush1.msra.mxu0 %v4672
    %4778 = vmatprep.subr.mxu0 0.0
    %4779 = vmatpush1.msra.mxu0 %v4673
    %4780 = vmatprep.subr.mxu0 0.0
    %4781 = vmatpush1.msra.mxu0 %v4674
    %4782 = vmatprep.subr.mxu0 0.0
    %4783 = vmatpush1.msra.mxu0 %v4675
    %4784 = vmatprep.subr.mxu0 0.0
    %4785 = vmatpush1.msra.mxu0 %v4676
    %4786 = vmatprep.subr.mxu0 0.0
    %4787 = vmatpush1.msra.mxu0 %v4677
    %4788 = vmatprep.subr.mxu0 0.0
    %4789 = vmatpush1.msra.mxu0 %v4678
    %4790 = vmatprep.subr.mxu0 0.0
    %4791 = vmatpush1.msra.mxu0 %v4679
    %4792 = vmatprep.subr.mxu0 0.0
    %4793 = vmatpush1.msra.mxu0 %v4680
    %4794 = vmatprep.subr.mxu0 0.0
    %4795 = vmatpush1.msra.mxu0 %v4681
    %4796 = vmatprep.subr.mxu0 0.0
    %4797 = vmatpush1.msra.mxu0 %v4682
    %4798 = vmatprep.subr.mxu0 0.0
    %4799 = vmatpush1.msra.mxu0 %v4683
    %4800 = vmatprep.subr.mxu0 0.0
    %4801 = vmatpush1.msra.mxu0 %v4684
    %4802 = vmatprep.subr.mxu0 0.0
    %4803 = vmatpush1.msra.mxu0 %v4685
    %4804 = vmatprep.subr.mxu0 0.0
    %4805 = vmatpush1.msra.mxu0 %v4686
    %4806 = vmatprep.subr.mxu0 0.0
    %4807 = vmatpush1.msra.mxu0 %v4687
    %4808 = vmatprep.subr.mxu0 0.0
    %4809 = vmatpush1.msra.mxu0 %v4688
    %4810 = vmatprep.subr.mxu0 0.0
    %4811 = vmatpush1.msra.mxu0 %v4689
    %4812 = vmatprep.subr.mxu0 0.0
    %4813 = vmatpush1.msra.mxu0 %v4690
    %4814 = vmatprep.subr.mxu0 0.0
    %4815 = vmatpush1.msra.mxu0 %v4691
    %4816 = vmatprep.subr.mxu0 0.0
    %4817 = vmatpush1.msra.mxu0 %v4692
    %4818 = vmatprep.subr.mxu0 0.0
    %4819 = vmatpush1.msra.mxu0 %v4693
    %4820 = vmatprep.subr.mxu0 0.0
    %4821 = vmatpush1.msra.mxu0 %v4694
    %4822 = vmatprep.subr.mxu0 0.0
    %4823 = vmatpush1.msra.mxu0 %v4695
    %4824 = vmatprep.subr.mxu0 0.0
    %4825 = vmatpush1.msra.mxu0 %v4696
    %4826 = vmatprep.subr.mxu0 0.0
    %4827 = vmatpush1.msra.mxu0 %v4697
    %4828 = vmatprep.subr.mxu0 0.0
    %4829 = vmatpush1.msra.mxu0 %v4698
    %4830 = vmatprep.subr.mxu0 0.0
    %4831 = vmatpush1.msra.mxu0 %v4699
    %4832 = vmatprep.subr.mxu0 0.0
    %4833 = vmatpush1.msra.mxu0 %v4700
    %4834 = vmatprep.subr.mxu0 0.0
    %4835 = vmatpush1.msra.mxu0 %v4701
    %4836 = vmatprep.mubr.f32.mxu0 %v4669
    %4837 = vmatmul.mubr.f32.gmra.mrb[0].mxu0 %v4662
    %v4838 = vpop.f32.mrb[0].mxu0
    %v4839 = vadd.f32 0.0, %v4838
    %v4840 = vpop.f32.mrb[0].mxu0
    %4841 = vdwg.mxu0
    %v4842 = vrcp.pop 128.0
    %v4843 = vmul.f32 %v4769, %v4842
    %v4844 = vmul.f32 %v4839, %v4842
    %v4845 = vmul.f32 %v4843, %v4843
    %v4846 = vsub.f32 %v4844, %v4845
    %v4847 = vld [vmem:[%s27] sm:$0x1]
    %v4848 = vadd.f32 %v4846, 1e-05
    %v4849 = vrsqrt.pop %v4848
    %v4850 = vmul.f32 %v4847, %v4849
    %v4851 = vld [vmem:[%s29] sm:$0x1]
    %v4852 = vmul.f32 %v4843, %v4850
    %v4853 = vsub.f32 %v4851, %v4852
    %v4854 = vld [vmem:[%s23] sm:$0xff]
    %v4855 = vld [vmem:[%s23 + $0x8] sm:$0xff]
    %v4856 = vld [vmem:[%s23 + $0x10] sm:$0xff]
    %v4857 = vld [vmem:[%s23 + $0x18] sm:$0xff]
    %v4858 = vld [vmem:[%s23 + $0x20] sm:$0xff]
    %v4859 = vld [vmem:[%s23 + $0x28] sm:$0xff]
    %v4860 = vld [vmem:[%s23 + $0x30] sm:$0xff]
    %v4861 = vld [vmem:[%s23 + $0x38] sm:$0xff]
    %v4863 = vsel %vm3470, %v4850, 0
    %4865 = vmatprep.subr.mxu0 %v4855
    %4866 = vmatpush1.msra.mxu0 %v4854
    %4867 = vmatprep.subr.mxu0 %v4857
    %4868 = vmatpush1.msra.mxu0 %v4856
    %4869 = vmatprep.subr.mxu0 %v4859
    %4870 = vmatpush1.msra.mxu0 %v4858
    %4871 = vmatprep.subr.mxu0 %v4861
    %4872 = vmatpush1.msra.mxu0 %v4860
    %4873 = vmatprep.subr.mxu0 0.0
    %4874 = vmatpush1.msra.mxu0 0.0
    %4875 = vmatprep.subr.mxu0 0.0
    %4876 = vmatpush1.msra.mxu0 0.0
    %4877 = vmatprep.subr.mxu0 0.0
    %4878 = vmatpush1.msra.mxu0 0.0
    %4879 = vmatprep.subr.mxu0 0.0
    %4880 = vmatpush1.msra.mxu0 0.0
    %4881 = vmatprep.subr.mxu0 0.0
    %4882 = vmatpush1.msra.mxu0 0.0
    %4883 = vmatprep.subr.mxu0 0.0
    %4884 = vmatpush1.msra.mxu0 0.0
    %4885 = vmatprep.subr.mxu0 0.0
    %4886 = vmatpush1.msra.mxu0 0.0
    %4887 = vmatprep.subr.mxu0 0.0
    %4888 = vmatpush1.msra.mxu0 0.0
    %4889 = vmatprep.subr.mxu0 0.0
    %4890 = vmatpush1.msra.mxu0 0.0
    %4891 = vmatprep.subr.mxu0 0.0
    %4892 = vmatpush1.msra.mxu0 0.0
    %4893 = vmatprep.subr.mxu0 0.0
    %4894 = vmatpush1.msra.mxu0 0.0
    %4895 = vmatprep.subr.mxu0 0.0
    %4896 = vmatpush1.msra.mxu0 0.0
    %4897 = vmatprep.subr.mxu0 0.0
    %4898 = vmatpush1.msra.mxu0 0.0
    %4899 = vmatprep.subr.mxu0 0.0
    %4900 = vmatpush1.msra.mxu0 0.0
    %4901 = vmatprep.subr.mxu0 0.0
    %4902 = vmatpush1.msra.mxu0 0.0
    %4903 = vmatprep.subr.mxu0 0.0
    %4904 = vmatpush1.msra.mxu0 0.0
    %4905 = vmatprep.subr.mxu0 0.0
    %4906 = vmatpush1.msra.mxu0 0.0
    %4907 = vmatprep.subr.mxu0 0.0
    %4908 = vmatpush1.msra.mxu0 0.0
    %4909 = vmatprep.subr.mxu0 0.0
    %4910 = vmatpush1.msra.mxu0 0.0
    %4911 = vmatprep.subr.mxu0 0.0
    %4912 = vmatpush1.msra.mxu0 0.0
    %4913 = vmatprep.subr.mxu0 0.0
    %4914 = vmatpush1.msra.mxu0 0.0
    %4915 = vmatprep.subr.mxu0 0.0
    %4916 = vmatpush1.msra.mxu0 0.0
    %4917 = vmatprep.subr.mxu0 0.0
    %4918 = vmatpush1.msra.mxu0 0.0
    %4919 = vmatprep.subr.mxu0 0.0
    %4920 = vmatpush1.msra.mxu0 0.0
    %4921 = vmatprep.subr.mxu0 0.0
    %4922 = vmatpush1.msra.mxu0 0.0
    %4923 = vmatprep.subr.mxu0 0.0
    %4924 = vmatpush1.msra.mxu0 0.0
    %4925 = vmatprep.subr.mxu0 0.0
    %4926 = vmatpush1.msra.mxu0 0.0
    %4927 = vmatprep.subr.mxu0 0.0
    %4928 = vmatpush1.msra.mxu0 0.0
    %4929 = vmatprep.mubr.f32.mxu0 0.0
    %4930 = vmatmul.mubr.f32.gmra.mrb[0].mxu0 %v4863
    %v4931 = vpop.f32.mrb[0].mxu0
    %v4932 = vadd.f32 0.0, %v4931
    %v4933 = vpop.f32.mrb[0].mxu0
    %v4934 = vadd.f32 0.0, %v4933
    %4935 = vdwg.mxu0
    %v4937 = vsel %vm3470, %v4853, 0
    %4939 = vmatprep.subr.mxu0 %v4855
    %4940 = vmatpush1.msra.mxu0 %v4854
    %4941 = vmatprep.subr.mxu0 %v4857
    %4942 = vmatpush1.msra.mxu0 %v4856
    %4943 = vmatprep.subr.mxu0 %v4859
    %4944 = vmatpush1.msra.mxu0 %v4858
    %4945 = vmatprep.subr.mxu0 %v4861
    %4946 = vmatpush1.msra.mxu0 %v4860
    %4947 = vmatprep.subr.mxu0 0.0
    %4948 = vmatpush1.msra.mxu0 0.0
    %4949 = vmatprep.subr.mxu0 0.0
    %4950 = vmatpush1.msra.mxu0 0.0
    %4951 = vmatprep.subr.mxu0 0.0
    %4952 = vmatpush1.msra.mxu0 0.0
    %4953 = vmatprep.subr.mxu0 0.0
    %4954 = vmatpush1.msra.mxu0 0.0
    %4955 = vmatprep.subr.mxu0 0.0
    %4956 = vmatpush1.msra.mxu0 0.0
    %4957 = vmatprep.subr.mxu0 0.0
    %4958 = vmatpush1.msra.mxu0 0.0
    %4959 = vmatprep.subr.mxu0 0.0
    %4960 = vmatpush1.msra.mxu0 0.0
    %4961 = vmatprep.subr.mxu0 0.0
    %4962 = vmatpush1.msra.mxu0 0.0
    %4963 = vmatprep.subr.mxu0 0.0
    %4964 = vmatpush1.msra.mxu0 0.0
    %4965 = vmatprep.subr.mxu0 0.0
    %4966 = vmatpush1.msra.mxu0 0.0
    %4967 = vmatprep.subr.mxu0 0.0
    %4968 = vmatpush1.msra.mxu0 0.0
    %4969 = vmatprep.subr.mxu0 0.0
    %4970 = vmatpush1.msra.mxu0 0.0
    %4971 = vmatprep.subr.mxu0 0.0
    %4972 = vmatpush1.msra.mxu0 0.0
    %4973 = vmatprep.subr.mxu0 0.0
    %4974 = vmatpush1.msra.mxu0 0.0
    %4975 = vmatprep.subr.mxu0 0.0
    %4976 = vmatpush1.msra.mxu0 0.0
    %4977 = vmatprep.subr.mxu0 0.0
    %4978 = vmatpush1.msra.mxu0 0.0
    %4979 = vmatprep.subr.mxu0 0.0
    %4980 = vmatpush1.msra.mxu0 0.0
    %4981 = vmatprep.subr.mxu0 0.0
    %4982 = vmatpush1.msra.mxu0 0.0
    %4983 = vmatprep.subr.mxu0 0.0
    %4984 = vmatpush1.msra.mxu0 0.0
    %4985 = vmatprep.subr.mxu0 0.0
    %4986 = vmatpush1.msra.mxu0 0.0
    %4987 = vmatprep.subr.mxu0 0.0
    %4988 = vmatpush1.msra.mxu0 0.0
    %4989 = vmatprep.subr.mxu0 0.0
    %4990 = vmatpush1.msra.mxu0 0.0
    %4991 = vmatprep.subr.mxu0 0.0
    %4992 = vmatpush1.msra.mxu0 0.0
    %4993 = vmatprep.subr.mxu0 0.0
    %4994 = vmatpush1.msra.mxu0 0.0
    %4995 = vmatprep.subr.mxu0 0.0
    %4996 = vmatpush1.msra.mxu0 0.0
    %4997 = vmatprep.subr.mxu0 0.0
    %4998 = vmatpush1.msra.mxu0 0.0
    %4999 = vmatprep.subr.mxu0 0.0
    %5000 = vmatpush1.msra.mxu0 0.0
    %5001 = vmatprep.subr.mxu0 0.0
    %5002 = vmatpush1.msra.mxu0 0.0
    %5003 = vmatprep.mubr.f32.mxu0 0.0
    %5004 = vmatmul.mubr.f32.gmra.mrb[0].mxu0 %v4937
    %v5005 = vpop.f32.mrb[0].mxu0
    %v5006 = vadd.f32 0.0, %v5005
    %v5007 = vpop.f32.mrb[0].mxu0
    %v5008 = vadd.f32 0.0, %v5007
    %5009 = vdwg.mxu0
    %v5010 = vlaneseq
    %v5011 = vshrl.u32 %v5010, 7
    %v5012 = vsub.s32 0, %v5011
    %v5013 = vrot.slane %v4932, %v5012
    %v5014 = vlaneseq
    %v5015 = vshrl.u32 %v5014, 7
    %v5016 = vsub.s32 0, %v5015
    %v5017 = vrot.slane %v4934, %v5016
    %v5018 = vmul.f32 %v4634, %v5013
    %v5019 = vmul.f32 %v4635, %v5017
    %v5020 = vmul.f32 %v4636, %v5013
    %v5021 = vmul.f32 %v4637, %v5017
    %v5022 = vlaneseq
    %v5023 = vshrl.u32 %v5022, 7
    %v5024 = vsub.s32 0, %v5023
    %v5025 = vrot.slane %v5006, %v5024
    %v5026 = vlaneseq
    %v5027 = vshrl.u32 %v5026, 7
    %v5028 = vsub.s32 0, %v5027
    %v5029 = vrot.slane %v5008, %v5028
    %v5030 = vadd.f32 %v5018, %v5025
    %v5031 = vadd.f32 %v5019, %v5029
    %v5032 = vadd.f32 %v5020, %v5025
    %v5033 = vadd.f32 %v5021, %v5029
    %vm5034 = vcmp.ge.f32.partialorder %v5030, 0.0
    %vm5035 = vcmp.ge.f32.partialorder %v5031, 0.0
    %vm5036 = vcmp.ge.f32.partialorder %v5032, 0.0
    %vm5037 = vcmp.ge.f32.partialorder %v5033, 0.0
    %v5038 = vmul.f32 %v5030, 0.2
    %v5039 = vmul.f32 %v5031, 0.2
    %v5040 = vmul.f32 %v5032, 0.2
    %v5041 = vmul.f32 %v5033, 0.2
    %v5042 = vsel %vm5034, %v5030, %v5038
    %v5043 = vsel %vm5035, %v5031, %v5039
    %v5044 = vsel %vm5036, %v5032, %v5040
    %v5045 = vsel %vm5037, %v5033, %v5041
    %v5046 = vpack.c.bf16 %v5044, %v5042
    %v5047 = vpack.c.bf16 %v5045, %v5043
    %v5048 = vld [vmem:[%s33] sm:$0xf]
    %v5050 = vsel %vm3254, %v5048, 0
    %5052 = vmatprep.subr.bf16.mxu0 %v5047
    %5053 = vmatpush1.bf16.msra.mxu0 %v5046
    %5054 = vmatprep.subr.bf16.mxu0 0
    %5055 = vmatpush1.bf16.msra.mxu0 0
    %5056 = vmatprep.subr.bf16.mxu0 0
    %5057 = vmatpush1.bf16.msra.mxu0 0
    %5058 = vmatprep.subr.bf16.mxu0 0
    %5059 = vmatpush1.bf16.msra.mxu0 0
    %5060 = vmatprep.subr.bf16.mxu0 0
    %5061 = vmatpush1.bf16.msra.mxu0 0
    %5062 = vmatprep.subr.bf16.mxu0 0
    %5063 = vmatpush1.bf16.msra.mxu0 0
    %5064 = vmatprep.subr.bf16.mxu0 0
    %5065 = vmatpush1.bf16.msra.mxu0 0
    %5066 = vmatprep.subr.bf16.mxu0 0
    %5067 = vmatpush1.bf16.msra.mxu0 0
    %5068 = vmatprep.subr.bf16.mxu0 0
    %5069 = vmatpush1.bf16.msra.mxu0 0
    %5070 = vmatprep.subr.bf16.mxu0 0
    %5071 = vmatpush1.bf16.msra.mxu0 0
    %5072 = vmatprep.subr.bf16.mxu0 0
    %5073 = vmatpush1.bf16.msra.mxu0 0
    %5074 = vmatprep.subr.bf16.mxu0 0
    %5075 = vmatpush1.bf16.msra.mxu0 0
    %5076 = vmatprep.subr.bf16.mxu0 0
    %5077 = vmatpush1.bf16.msra.mxu0 0
    %5078 = vmatprep.subr.bf16.mxu0 0
    %5079 = vmatpush1.bf16.msra.mxu0 0
    %5080 = vmatprep.subr.bf16.mxu0 0
    %5081 = vmatpush1.bf16.msra.mxu0 0
    %5082 = vmatprep.subr.bf16.mxu0 0
    %5083 = vmatpush1.bf16.msra.mxu0 0
    %5084 = vmatprep.mubr.bf16.mxu0 0
    %5085 = vmatmul.mubr.bf16.gmra.mrb[0].mxu0 %v5050
    %v5086 = vpop.f32.mrb[0].mxu0
    %v5087 = vadd.f32 0.0, %v5086
    %v5088 = vpop.f32.mrb[0].mxu0
    %v5089 = vadd.f32 0.0, %v5088
    %v5090 = vpop.f32.mrb[0].mxu0
    %v5091 = vpop.f32.mrb[0].mxu0
    %5092 = vdwg.mxu0
    %v5093 = vpack.c.bf16 %v5087, %v5087
    %v5094 = vpack.c.bf16 %v5089, %v5089
    %v5095 = vld [vmem:[%s31] sm:$0xff]
    %v5096 = vld [vmem:[%s31 + $0x8] sm:$0xff]
    %v5097 = vld [vmem:[%s31 + $0x10] sm:$0xff]
    %v5098 = vld [vmem:[%s31 + $0x18] sm:$0xff]
    %v5099 = vld [vmem:[%s31 + $0x20] sm:$0xff]
    %v5100 = vld [vmem:[%s31 + $0x28] sm:$0xff]
    %v5101 = vld [vmem:[%s31 + $0x30] sm:$0xff]
    %v5102 = vld [vmem:[%s31 + $0x38] sm:$0xff]
    %v5103 = vld [vmem:[%s31 + $0x40] sm:$0xff]
    %v5104 = vld [vmem:[%s31 + $0x48] sm:$0xff]
    %v5105 = vld [vmem:[%s31 + $0x50] sm:$0xff]
    %v5106 = vld [vmem:[%s31 + $0x58] sm:$0xff]
    %v5107 = vld [vmem:[%s31 + $0x60] sm:$0xff]
    %v5108 = vld [vmem:[%s31 + $0x68] sm:$0xff]
    %v5109 = vld [vmem:[%s31 + $0x70] sm:$0xff]
    %v5110 = vld [vmem:[%s31 + $0x78] sm:$0xff]
    %v5111 = vld [vmem:[%s31 + $0x80] sm:$0xff]
    %v5112 = vld [vmem:[%s31 + $0x88] sm:$0xff]
    %v5113 = vld [vmem:[%s31 + $0x90] sm:$0xff]
    %v5114 = vld [vmem:[%s31 + $0x98] sm:$0xff]
    %v5115 = vld [vmem:[%s31 + $0xa0] sm:$0xff]
    %v5116 = vld [vmem:[%s31 + $0xa8] sm:$0xff]
    %v5117 = vld [vmem:[%s31 + $0xb0] sm:$0xff]
    %v5118 = vld [vmem:[%s31 + $0xb8] sm:$0xff]
    %v5119 = vld [vmem:[%s31 + $0xc0] sm:$0xff]
    %v5120 = vld [vmem:[%s31 + $0xc8] sm:$0xff]
    %v5121 = vld [vmem:[%s31 + $0xd0] sm:$0xff]
    %v5122 = vld [vmem:[%s31 + $0xd8] sm:$0xff]
    %v5123 = vld [vmem:[%s31 + $0xe0] sm:$0xff]
    %v5124 = vld [vmem:[%s31 + $0xe8] sm:$0xff]
    %v5125 = vld [vmem:[%s31 + $0xf0] sm:$0xff]
    %v5126 = vld [vmem:[%s31 + $0xf8] sm:$0xff]
    %s5127 = scalar_lea.vmem %s33, 4
    %v5128 = vld [vmem:[%s5127] sm:$0xf]
    %v5130 = vsel %vm3254, %v5128, 0
    %5132 = vmatprep.subr.bf16.mxu0 %v5047
    %5133 = vmatpush1.bf16.msra.mxu0 %v5046
    %5134 = vmatprep.subr.bf16.mxu0 0
    %5135 = vmatpush1.bf16.msra.mxu0 0
    %5136 = vmatprep.subr.bf16.mxu0 0
    %5137 = vmatpush1.bf16.msra.mxu0 0
    %5138 = vmatprep.subr.bf16.mxu0 0
    %5139 = vmatpush1.bf16.msra.mxu0 0
    %5140 = vmatprep.subr.bf16.mxu0 0
    %5141 = vmatpush1.bf16.msra.mxu0 0
    %5142 = vmatprep.subr.bf16.mxu0 0
    %5143 = vmatpush1.bf16.msra.mxu0 0
    %5144 = vmatprep.subr.bf16.mxu0 0
    %5145 = vmatpush1.bf16.msra.mxu0 0
    %5146 = vmatprep.subr.bf16.mxu0 0
    %5147 = vmatpush1.bf16.msra.mxu0 0
    %5148 = vmatprep.subr.bf16.mxu0 0
    %5149 = vmatpush1.bf16.msra.mxu0 0
    %5150 = vmatprep.subr.bf16.mxu0 0
    %5151 = vmatpush1.bf16.msra.mxu0 0
    %5152 = vmatprep.subr.bf16.mxu0 0
    %5153 = vmatpush1.bf16.msra.mxu0 0
    %5154 = vmatprep.subr.bf16.mxu0 0
    %5155 = vmatpush1.bf16.msra.mxu0 0
    %5156 = vmatprep.subr.bf16.mxu0 0
    %5157 = vmatpush1.bf16.msra.mxu0 0
    %5158 = vmatprep.subr.bf16.mxu0 0
    %5159 = vmatpush1.bf16.msra.mxu0 0
    %5160 = vmatprep.subr.bf16.mxu0 0
    %5161 = vmatpush1.bf16.msra.mxu0 0
    %5162 = vmatprep.subr.bf16.mxu0 0
    %5163 = vmatpush1.bf16.msra.mxu0 0
    %5164 = vmatprep.mubr.bf16.mxu0 0
    %5165 = vmatmul.mubr.bf16.gmra.mrb[0].mxu0 %v5130
    %v5166 = vpop.f32.mrb[0].mxu0
    %v5167 = vadd.f32 0.0, %v5166
    %v5168 = vpop.f32.mrb[0].mxu0
    %v5169 = vadd.f32 0.0, %v5168
    %v5170 = vpop.f32.mrb[0].mxu0
    %v5171 = vpop.f32.mrb[0].mxu0
    %5172 = vdwg.mxu0
    %v5173 = vpack.c.bf16 %v5167, %v5167
    %v5174 = vpack.c.bf16 %v5169, %v5169
    %s5175 = scalar_lea.vmem %s31, 256
    %v5176 = vld [vmem:[%s5175] sm:$0xff]
    %v5177 = vld [vmem:[%s5175 + $0x8] sm:$0xff]
    %v5178 = vld [vmem:[%s5175 + $0x10] sm:$0xff]
    %v5179 = vld [vmem:[%s5175 + $0x18] sm:$0xff]
    %v5180 = vld [vmem:[%s5175 + $0x20] sm:$0xff]
    %v5181 = vld [vmem:[%s5175 + $0x28] sm:$0xff]
    %v5182 = vld [vmem:[%s5175 + $0x30] sm:$0xff]
    %v5183 = vld [vmem:[%s5175 + $0x38] sm:$0xff]
    %v5184 = vld [vmem:[%s5175 + $0x40] sm:$0xff]
    %v5185 = vld [vmem:[%s5175 + $0x48] sm:$0xff]
    %v5186 = vld [vmem:[%s5175 + $0x50] sm:$0xff]
    %v5187 = vld [vmem:[%s5175 + $0x58] sm:$0xff]
    %v5188 = vld [vmem:[%s5175 + $0x60] sm:$0xff]
    %v5189 = vld [vmem:[%s5175 + $0x68] sm:$0xff]
    %v5190 = vld [vmem:[%s5175 + $0x70] sm:$0xff]
    %v5191 = vld [vmem:[%s5175 + $0x78] sm:$0xff]
    %v5192 = vld [vmem:[%s5175 + $0x80] sm:$0xff]
    %v5193 = vld [vmem:[%s5175 + $0x88] sm:$0xff]
    %v5194 = vld [vmem:[%s5175 + $0x90] sm:$0xff]
    %v5195 = vld [vmem:[%s5175 + $0x98] sm:$0xff]
    %v5196 = vld [vmem:[%s5175 + $0xa0] sm:$0xff]
    %v5197 = vld [vmem:[%s5175 + $0xa8] sm:$0xff]
    %v5198 = vld [vmem:[%s5175 + $0xb0] sm:$0xff]
    %v5199 = vld [vmem:[%s5175 + $0xb8] sm:$0xff]
    %v5200 = vld [vmem:[%s5175 + $0xc0] sm:$0xff]
    %v5201 = vld [vmem:[%s5175 + $0xc8] sm:$0xff]
    %v5202 = vld [vmem:[%s5175 + $0xd0] sm:$0xff]
    %v5203 = vld [vmem:[%s5175 + $0xd8] sm:$0xff]
    %v5204 = vld [vmem:[%s5175 + $0xe0] sm:$0xff]
    %v5205 = vld [vmem:[%s5175 + $0xe8] sm:$0xff]
    %v5206 = vld [vmem:[%s5175 + $0xf0] sm:$0xff]
    %v5207 = vld [vmem:[%s5175 + $0xf8] sm:$0xff]
    %v5240 = vunpack.c.l.b16 %v5176
    %v5241 = vunpack.c.h.b16 %v5176
    %v5242 = vunpack.c.l.b16 %v5177
    %v5243 = vunpack.c.h.b16 %v5177
    %v5244 = vunpack.c.l.b16 %v5178
    %v5245 = vunpack.c.h.b16 %v5178
    %v5246 = vunpack.c.l.b16 %v5179
    %v5247 = vunpack.c.h.b16 %v5179
    %v5248 = vunpack.c.l.b16 %v5180
    %v5249 = vunpack.c.h.b16 %v5180
    %v5250 = vunpack.c.l.b16 %v5181
    %v5251 = vunpack.c.h.b16 %v5181
    %v5252 = vunpack.c.l.b16 %v5182
    %v5253 = vunpack.c.h.b16 %v5182
    %v5254 = vunpack.c.l.b16 %v5183
    %v5255 = vunpack.c.h.b16 %v5183
    %v5256 = vunpack.c.l.b16 %v5184
    %v5257 = vunpack.c.h.b16 %v5184
    %v5258 = vunpack.c.l.b16 %v5185
    %v5259 = vunpack.c.h.b16 %v5185
    %v5260 = vunpack.c.l.b16 %v5186
    %v5261 = vunpack.c.h.b16 %v5186
    %v5262 = vunpack.c.l.b16 %v5187
    %v5263 = vunpack.c.h.b16 %v5187
    %v5264 = vunpack.c.l.b16 %v5188
    %v5265 = vunpack.c.h.b16 %v5188
    %v5266 = vunpack.c.l.b16 %v5189
    %v5267 = vunpack.c.h.b16 %v5189
    %v5268 = vunpack.c.l.b16 %v5190
    %v5269 = vunpack.c.h.b16 %v5190
    %v5270 = vunpack.c.l.b16 %v5191
    %v5271 = vunpack.c.h.b16 %v5191
    %v5272 = vunpack.c.l.b16 %v5192
    %v5273 = vunpack.c.h.b16 %v5192
    %v5274 = vunpack.c.l.b16 %v5193
    %v5275 = vunpack.c.h.b16 %v5193
    %v5276 = vunpack.c.l.b16 %v5194
    %v5277 = vunpack.c.h.b16 %v5194
    %v5278 = vunpack.c.l.b16 %v5195
    %v5279 = vunpack.c.h.b16 %v5195
    %v5280 = vunpack.c.l.b16 %v5196
    %v5281 = vunpack.c.h.b16 %v5196
    %v5282 = vunpack.c.l.b16 %v5197
    %v5283 = vunpack.c.h.b16 %v5197
    %v5284 = vunpack.c.l.b16 %v5198
    %v5285 = vunpack.c.h.b16 %v5198
    %v5286 = vunpack.c.l.b16 %v5199
    %v5287 = vunpack.c.h.b16 %v5199
    %v5288 = vunpack.c.l.b16 %v5200
    %v5289 = vunpack.c.h.b16 %v5200
    %v5290 = vunpack.c.l.b16 %v5201
    %v5291 = vunpack.c.h.b16 %v5201
    %v5292 = vunpack.c.l.b16 %v5202
    %v5293 = vunpack.c.h.b16 %v5202
    %v5294 = vunpack.c.l.b16 %v5203
    %v5295 = vunpack.c.h.b16 %v5203
    %v5296 = vunpack.c.l.b16 %v5204
    %v5297 = vunpack.c.h.b16 %v5204
    %v5298 = vunpack.c.l.b16 %v5205
    %v5299 = vunpack.c.h.b16 %v5205
    %v5300 = vunpack.c.l.b16 %v5206
    %v5301 = vunpack.c.h.b16 %v5206
    %v5302 = vunpack.c.l.b16 %v5207
    %v5303 = vunpack.c.h.b16 %v5207
    %v5304 = vpack.c.b16 %v5242, %v5240
    %v5305 = vpack.c.b16 %v5243, %v5241
    %v5306 = vpack.c.b16 %v5246, %v5244
    %v5307 = vpack.c.b16 %v5247, %v5245
    %v5308 = vpack.c.b16 %v5250, %v5248
    %v5309 = vpack.c.b16 %v5251, %v5249
    %v5310 = vpack.c.b16 %v5254, %v5252
    %v5311 = vpack.c.b16 %v5255, %v5253
    %v5312 = vpack.c.b16 %v5258, %v5256
    %v5313 = vpack.c.b16 %v5259, %v5257
    %v5314 = vpack.c.b16 %v5262, %v5260
    %v5315 = vpack.c.b16 %v5263, %v5261
    %v5316 = vpack.c.b16 %v5266, %v5264
    %v5317 = vpack.c.b16 %v5267, %v5265
    %v5318 = vpack.c.b16 %v5270, %v5268
    %v5319 = vpack.c.b16 %v5271, %v5269
    %v5320 = vpack.c.b16 %v5274, %v5272
    %v5321 = vpack.c.b16 %v5275, %v5273
    %v5322 = vpack.c.b16 %v5278, %v5276
    %v5323 = vpack.c.b16 %v5279, %v5277
    %v5324 = vpack.c.b16 %v5282, %v5280
    %v5325 = vpack.c.b16 %v5283, %v5281
    %v5326 = vpack.c.b16 %v5286, %v5284
    %v5327 = vpack.c.b16 %v5287, %v5285
    %v5328 = vpack.c.b16 %v5290, %v5288
    %v5329 = vpack.c.b16 %v5291, %v5289
    %v5330 = vpack.c.b16 %v5294, %v5292
    %v5331 = vpack.c.b16 %v5295, %v5293
    %v5332 = vpack.c.b16 %v5298, %v5296
    %v5333 = vpack.c.b16 %v5299, %v5297
    %v5334 = vpack.c.b16 %v5302, %v5300
    %v5335 = vpack.c.b16 %v5303, %v5301
    %5368 = vmatprep.subr.bf16.mxu0 %v5305
    %5369 = vmatpush1.bf16.msra.mxu0 %v5304
    %5370 = vmatprep.subr.bf16.mxu0 %v5307
    %5371 = vmatpush1.bf16.msra.mxu0 %v5306
    %5372 = vmatprep.subr.bf16.mxu0 %v5309
    %5373 = vmatpush1.bf16.msra.mxu0 %v5308
    %5374 = vmatprep.subr.bf16.mxu0 %v5311
    %5375 = vmatpush1.bf16.msra.mxu0 %v5310
    %5376 = vmatprep.subr.bf16.mxu0 %v5313
    %5377 = vmatpush1.bf16.msra.mxu0 %v5312
    %5378 = vmatprep.subr.bf16.mxu0 %v5315
    %5379 = vmatpush1.bf16.msra.mxu0 %v5314
    %5380 = vmatprep.subr.bf16.mxu0 %v5317
    %5381 = vmatpush1.bf16.msra.mxu0 %v5316
    %5382 = vmatprep.subr.bf16.mxu0 %v5319
    %5383 = vmatpush1.bf16.msra.mxu0 %v5318
    %5384 = vmatprep.subr.bf16.mxu0 %v5321
    %5385 = vmatpush1.bf16.msra.mxu0 %v5320
    %5386 = vmatprep.subr.bf16.mxu0 %v5323
    %5387 = vmatpush1.bf16.msra.mxu0 %v5322
    %5388 = vmatprep.subr.bf16.mxu0 %v5325
    %5389 = vmatpush1.bf16.msra.mxu0 %v5324
    %5390 = vmatprep.subr.bf16.mxu0 %v5327
    %5391 = vmatpush1.bf16.msra.mxu0 %v5326
    %5392 = vmatprep.subr.bf16.mxu0 %v5329
    %5393 = vmatpush1.bf16.msra.mxu0 %v5328
    %5394 = vmatprep.subr.bf16.mxu0 %v5331
    %5395 = vmatpush1.bf16.msra.mxu0 %v5330
    %5396 = vmatprep.subr.bf16.mxu0 %v5333
    %5397 = vmatpush1.bf16.msra.mxu0 %v5332
    %5398 = vmatprep.subr.bf16.mxu0 %v5335
    %5399 = vmatpush1.bf16.msra.mxu0 %v5334
    %5400 = vmatprep.mubr.bf16.mxu0 %v5174
    %5401 = vmatmul.mubr.bf16.gmra.mrb[0].mxu0 %v5173
    %v5402 = vpop.f32.mrb[0].mxu0
    %v5403 = vadd.f32 0.0, %v5402
    %v5404 = vpop.f32.mrb[0].mxu0
    %v5405 = vadd.f32 0.0, %v5404
    %v5406 = vpop.f32.mrb[0].mxu0
    %v5407 = vpop.f32.mrb[0].mxu0
    %5408 = vdwg.mxu0
    %v5441 = vunpack.c.l.b16 %v5095
    %v5442 = vunpack.c.h.b16 %v5095
    %v5443 = vunpack.c.l.b16 %v5096
    %v5444 = vunpack.c.h.b16 %v5096
    %v5445 = vunpack.c.l.b16 %v5097
    %v5446 = vunpack.c.h.b16 %v5097
    %v5447 = vunpack.c.l.b16 %v5098
    %v5448 = vunpack.c.h.b16 %v5098
    %v5449 = vunpack.c.l.b16 %v5099
    %v5450 = vunpack.c.h.b16 %v5099
    %v5451 = vunpack.c.l.b16 %v5100
    %v5452 = vunpack.c.h.b16 %v5100
    %v5453 = vunpack.c.l.b16 %v5101
    %v5454 = vunpack.c.h.b16 %v5101
    %v5455 = vunpack.c.l.b16 %v5102
    %v5456 = vunpack.c.h.b16 %v5102
    %v5457 = vunpack.c.l.b16 %v5103
    %v5458 = vunpack.c.h.b16 %v5103
    %v5459 = vunpack.c.l.b16 %v5104
    %v5460 = vunpack.c.h.b16 %v5104
    %v5461 = vunpack.c.l.b16 %v5105
    %v5462 = vunpack.c.h.b16 %v5105
    %v5463 = vunpack.c.l.b16 %v5106
    %v5464 = vunpack.c.h.b16 %v5106
    %v5465 = vunpack.c.l.b16 %v5107
    %v5466 = vunpack.c.h.b16 %v5107
    %v5467 = vunpack.c.l.b16 %v5108
    %v5468 = vunpack.c.h.b16 %v5108
    %v5469 = vunpack.c.l.b16 %v5109
    %v5470 = vunpack.c.h.b16 %v5109
    %v5471 = vunpack.c.l.b16 %v5110
    %v5472 = vunpack.c.h.b16 %v5110
    %v5473 = vunpack.c.l.b16 %v5111
    %v5474 = vunpack.c.h.b16 %v5111
    %v5475 = vunpack.c.l.b16 %v5112
    %v5476 = vunpack.c.h.b16 %v5112
    %v5477 = vunpack.c.l.b16 %v5113
    %v5478 = vunpack.c.h.b16 %v5113
    %v5479 = vunpack.c.l.b16 %v5114
    %v5480 = vunpack.c.h.b16 %v5114
    %v5481 = vunpack.c.l.b16 %v5115
    %v5482 = vunpack.c.h.b16 %v5115
    %v5483 = vunpack.c.l.b16 %v5116
    %v5484 = vunpack.c.h.b16 %v5116
    %v5485 = vunpack.c.l.b16 %v5117
    %v5486 = vunpack.c.h.b16 %v5117
    %v5487 = vunpack.c.l.b16 %v5118
    %v5488 = vunpack.c.h.b16 %v5118
    %v5489 = vunpack.c.l.b16 %v5119
    %v5490 = vunpack.c.h.b16 %v5119
    %v5491 = vunpack.c.l.b16 %v5120
    %v5492 = vunpack.c.h.b16 %v5120
    %v5493 = vunpack.c.l.b16 %v5121
    %v5494 = vunpack.c.h.b16 %v5121
    %v5495 = vunpack.c.l.b16 %v5122
    %v5496 = vunpack.c.h.b16 %v5122
    %v5497 = vunpack.c.l.b16 %v5123
    %v5498 = vunpack.c.h.b16 %v5123
    %v5499 = vunpack.c.l.b16 %v5124
    %v5500 = vunpack.c.h.b16 %v5124
    %v5501 = vunpack.c.l.b16 %v5125
    %v5502 = vunpack.c.h.b16 %v5125
    %v5503 = vunpack.c.l.b16 %v5126
    %v5504 = vunpack.c.h.b16 %v5126
    %v5505 = vpack.c.b16 %v5443, %v5441
    %v5506 = vpack.c.b16 %v5444, %v5442
    %v5507 = vpack.c.b16 %v5447, %v5445
    %v5508 = vpack.c.b16 %v5448, %v5446
    %v5509 = vpack.c.b16 %v5451, %v5449
    %v5510 = vpack.c.b16 %v5452, %v5450
    %v5511 = vpack.c.b16 %v5455, %v5453
    %v5512 = vpack.c.b16 %v5456, %v5454
    %v5513 = vpack.c.b16 %v5459, %v5457
    %v5514 = vpack.c.b16 %v5460, %v5458
    %v5515 = vpack.c.b16 %v5463, %v5461
    %v5516 = vpack.c.b16 %v5464, %v5462
    %v5517 = vpack.c.b16 %v5467, %v5465
    %v5518 = vpack.c.b16 %v5468, %v5466
    %v5519 = vpack.c.b16 %v5471, %v5469
    %v5520 = vpack.c.b16 %v5472, %v5470
    %v5521 = vpack.c.b16 %v5475, %v5473
    %v5522 = vpack.c.b16 %v5476, %v5474
    %v5523 = vpack.c.b16 %v5479, %v5477
    %v5524 = vpack.c.b16 %v5480, %v5478
    %v5525 = vpack.c.b16 %v5483, %v5481
    %v5526 = vpack.c.b16 %v5484, %v5482
    %v5527 = vpack.c.b16 %v5487, %v5485
    %v5528 = vpack.c.b16 %v5488, %v5486
    %v5529 = vpack.c.b16 %v5491, %v5489
    %v5530 = vpack.c.b16 %v5492, %v5490
    %v5531 = vpack.c.b16 %v5495, %v5493
    %v5532 = vpack.c.b16 %v5496, %v5494
    %v5533 = vpack.c.b16 %v5499, %v5497
    %v5534 = vpack.c.b16 %v5500, %v5498
    %v5535 = vpack.c.b16 %v5503, %v5501
    %v5536 = vpack.c.b16 %v5504, %v5502
    %5569 = vmatprep.subr.bf16.mxu0 %v5506
    %5570 = vmatpush1.bf16.msra.mxu0 %v5505
    %5571 = vmatprep.subr.bf16.mxu0 %v5508
    %5572 = vmatpush1.bf16.msra.mxu0 %v5507
    %5573 = vmatprep.subr.bf16.mxu0 %v5510
    %5574 = vmatpush1.bf16.msra.mxu0 %v5509
    %5575 = vmatprep.subr.bf16.mxu0 %v5512
    %5576 = vmatpush1.bf16.msra.mxu0 %v5511
    %5577 = vmatprep.subr.bf16.mxu0 %v5514
    %5578 = vmatpush1.bf16.msra.mxu0 %v5513
    %5579 = vmatprep.subr.bf16.mxu0 %v5516
    %5580 = vmatpush1.bf16.msra.mxu0 %v5515
    %5581 = vmatprep.subr.bf16.mxu0 %v5518
    %5582 = vmatpush1.bf16.msra.mxu0 %v5517
    %5583 = vmatprep.subr.bf16.mxu0 %v5520
    %5584 = vmatpush1.bf16.msra.mxu0 %v5519
    %5585 = vmatprep.subr.bf16.mxu0 %v5522
    %5586 = vmatpush1.bf16.msra.mxu0 %v5521
    %5587 = vmatprep.subr.bf16.mxu0 %v5524
    %5588 = vmatpush1.bf16.msra.mxu0 %v5523
    %5589 = vmatprep.subr.bf16.mxu0 %v5526
    %5590 = vmatpush1.bf16.msra.mxu0 %v5525
    %5591 = vmatprep.subr.bf16.mxu0 %v5528
    %5592 = vmatpush1.bf16.msra.mxu0 %v5527
    %5593 = vmatprep.subr.bf16.mxu0 %v5530
    %5594 = vmatpush1.bf16.msra.mxu0 %v5529
    %5595 = vmatprep.subr.bf16.mxu0 %v5532
    %5596 = vmatpush1.bf16.msra.mxu0 %v5531
    %5597 = vmatprep.subr.bf16.mxu0 %v5534
    %5598 = vmatpush1.bf16.msra.mxu0 %v5533
    %5599 = vmatprep.subr.bf16.mxu0 %v5536
    %5600 = vmatpush1.bf16.msra.mxu0 %v5535
    %5601 = vmatprep.mubr.bf16.mxu0 %v5094
    %5602 = vmatmul.mubr.bf16.gmra.mrb[0].mxu0 %v5093
    %v5603 = vpop.f32.mrb[0].mxu0
    %v5604 = vadd.f32 %v5403, %v5603
    %v5605 = vpop.f32.mrb[0].mxu0
    %v5606 = vadd.f32 %v5405, %v5605
    %v5607 = vpop.f32.mrb[0].mxu0
    %v5608 = vpop.f32.mrb[0].mxu0
    %5609 = vdwg.mxu0
    %s5610 = scalar_lea.vmem %s33, 8
    %v5611 = vld [vmem:[%s5610] sm:$0xf]
    %v5613 = vsel %vm3254, %v5611, 0
    %5615 = vmatprep.subr.bf16.mxu0 %v5047
    %5616 = vmatpush1.bf16.msra.mxu0 %v5046
    %5617 = vmatprep.subr.bf16.mxu0 0
    %5618 = vmatpush1.bf16.msra.mxu0 0
    %5619 = vmatprep.subr.bf16.mxu0 0
    %5620 = vmatpush1.bf16.msra.mxu0 0
    %5621 = vmatprep.subr.bf16.mxu0 0
    %5622 = vmatpush1.bf16.msra.mxu0 0
    %5623 = vmatprep.subr.bf16.mxu0 0
    %5624 = vmatpush1.bf16.msra.mxu0 0
    %5625 = vmatprep.subr.bf16.mxu0 0
    %5626 = vmatpush1.bf16.msra.mxu0 0
    %5627 = vmatprep.subr.bf16.mxu0 0
    %5628 = vmatpush1.bf16.msra.mxu0 0
    %5629 = vmatprep.subr.bf16.mxu0 0
    %5630 = vmatpush1.bf16.msra.mxu0 0
    %5631 = vmatprep.subr.bf16.mxu0 0
    %5632 = vmatpush1.bf16.msra.mxu0 0
    %5633 = vmatprep.subr.bf16.mxu0 0
    %5634 = vmatpush1.bf16.msra.mxu0 0
    %5635 = vmatprep.subr.bf16.mxu0 0
    %5636 = vmatpush1.bf16.msra.mxu0 0
    %5637 = vmatprep.subr.bf16.mxu0 0
    %5638 = vmatpush1.bf16.msra.mxu0 0
    %5639 = vmatprep.subr.bf16.mxu0 0
    %5640 = vmatpush1.bf16.msra.mxu0 0
    %5641 = vmatprep.subr.bf16.mxu0 0
    %5642 = vmatpush1.bf16.msra.mxu0 0
    %5643 = vmatprep.subr.bf16.mxu0 0
    %5644 = vmatpush1.bf16.msra.mxu0 0
    %5645 = vmatprep.subr.bf16.mxu0 0
    %5646 = vmatpush1.bf16.msra.mxu0 0
    %5647 = vmatprep.mubr.bf16.mxu0 0
    %5648 = vmatmul.mubr.bf16.gmra.mrb[0].mxu0 %v5613
    %v5649 = vpop.f32.mrb[0].mxu0
    %v5650 = vadd.f32 0.0, %v5649
    %v5651 = vpop.f32.mrb[0].mxu0
    %v5652 = vadd.f32 0.0, %v5651
    %v5653 = vpop.f32.mrb[0].mxu0
    %v5654 = vpop.f32.mrb[0].mxu0
    %5655 = vdwg.mxu0
    %v5656 = vpack.c.bf16 %v5650, %v5650
    %v5657 = vpack.c.bf16 %v5652, %v5652
    %s5658 = scalar_lea.vmem %s31, 512
    %v5659 = vld [vmem:[%s5658] sm:$0xff]
    %v5660 = vld [vmem:[%s5658 + $0x8] sm:$0xff]
    %v5661 = vld [vmem:[%s5658 + $0x10] sm:$0xff]
    %v5662 = vld [vmem:[%s5658 + $0x18] sm:$0xff]
    %v5663 = vld [vmem:[%s5658 + $0x20] sm:$0xff]
    %v5664 = vld [vmem:[%s5658 + $0x28] sm:$0xff]
    %v5665 = vld [vmem:[%s5658 + $0x30] sm:$0xff]
    %v5666 = vld [vmem:[%s5658 + $0x38] sm:$0xff]
    %v5667 = vld [vmem:[%s5658 + $0x40] sm:$0xff]
    %v5668 = vld [vmem:[%s5658 + $0x48] sm:$0xff]
    %v5669 = vld [vmem:[%s5658 + $0x50] sm:$0xff]
    %v5670 = vld [vmem:[%s5658 + $0x58] sm:$0xff]
    %v5671 = vld [vmem:[%s5658 + $0x60] sm:$0xff]
    %v5672 = vld [vmem:[%s5658 + $0x68] sm:$0xff]
    %v5673 = vld [vmem:[%s5658 + $0x70] sm:$0xff]
    %v5674 = vld [vmem:[%s5658 + $0x78] sm:$0xff]
    %v5675 = vld [vmem:[%s5658 + $0x80] sm:$0xff]
    %v5676 = vld [vmem:[%s5658 + $0x88] sm:$0xff]
    %v5677 = vld [vmem:[%s5658 + $0x90] sm:$0xff]
    %v5678 = vld [vmem:[%s5658 + $0x98] sm:$0xff]
    %v5679 = vld [vmem:[%s5658 + $0xa0] sm:$0xff]
    %v5680 = vld [vmem:[%s5658 + $0xa8] sm:$0xff]
    %v5681 = vld [vmem:[%s5658 + $0xb0] sm:$0xff]
    %v5682 = vld [vmem:[%s5658 + $0xb8] sm:$0xff]
    %v5683 = vld [vmem:[%s5658 + $0xc0] sm:$0xff]
    %v5684 = vld [vmem:[%s5658 + $0xc8] sm:$0xff]
    %v5685 = vld [vmem:[%s5658 + $0xd0] sm:$0xff]
    %v5686 = vld [vmem:[%s5658 + $0xd8] sm:$0xff]
    %v5687 = vld [vmem:[%s5658 + $0xe0] sm:$0xff]
    %v5688 = vld [vmem:[%s5658 + $0xe8] sm:$0xff]
    %v5689 = vld [vmem:[%s5658 + $0xf0] sm:$0xff]
    %v5690 = vld [vmem:[%s5658 + $0xf8] sm:$0xff]
    %v5723 = vunpack.c.l.b16 %v5659
    %v5724 = vunpack.c.h.b16 %v5659
    %v5725 = vunpack.c.l.b16 %v5660
    %v5726 = vunpack.c.h.b16 %v5660
    %v5727 = vunpack.c.l.b16 %v5661
    %v5728 = vunpack.c.h.b16 %v5661
    %v5729 = vunpack.c.l.b16 %v5662
    %v5730 = vunpack.c.h.b16 %v5662
    %v5731 = vunpack.c.l.b16 %v5663
    %v5732 = vunpack.c.h.b16 %v5663
    %v5733 = vunpack.c.l.b16 %v5664
    %v5734 = vunpack.c.h.b16 %v5664
    %v5735 = vunpack.c.l.b16 %v5665
    %v5736 = vunpack.c.h.b16 %v5665
    %v5737 = vunpack.c.l.b16 %v5666
    %v5738 = vunpack.c.h.b16 %v5666
    %v5739 = vunpack.c.l.b16 %v5667
    %v5740 = vunpack.c.h.b16 %v5667
    %v5741 = vunpack.c.l.b16 %v5668
    %v5742 = vunpack.c.h.b16 %v5668
    %v5743 = vunpack.c.l.b16 %v5669
    %v5744 = vunpack.c.h.b16 %v5669
    %v5745 = vunpack.c.l.b16 %v5670
    %v5746 = vunpack.c.h.b16 %v5670
    %v5747 = vunpack.c.l.b16 %v5671
    %v5748 = vunpack.c.h.b16 %v5671
    %v5749 = vunpack.c.l.b16 %v5672
    %v5750 = vunpack.c.h.b16 %v5672
    %v5751 = vunpack.c.l.b16 %v5673
    %v5752 = vunpack.c.h.b16 %v5673
    %v5753 = vunpack.c.l.b16 %v5674
    %v5754 = vunpack.c.h.b16 %v5674
    %v5755 = vunpack.c.l.b16 %v5675
    %v5756 = vunpack.c.h.b16 %v5675
    %v5757 = vunpack.c.l.b16 %v5676
    %v5758 = vunpack.c.h.b16 %v5676
    %v5759 = vunpack.c.l.b16 %v5677
    %v5760 = vunpack.c.h.b16 %v5677
    %v5761 = vunpack.c.l.b16 %v5678
    %v5762 = vunpack.c.h.b16 %v5678
    %v5763 = vunpack.c.l.b16 %v5679
    %v5764 = vunpack.c.h.b16 %v5679
    %v5765 = vunpack.c.l.b16 %v5680
    %v5766 = vunpack.c.h.b16 %v5680
    %v5767 = vunpack.c.l.b16 %v5681
    %v5768 = vunpack.c.h.b16 %v5681
    %v5769 = vunpack.c.l.b16 %v5682
    %v5770 = vunpack.c.h.b16 %v5682
    %v5771 = vunpack.c.l.b16 %v5683
    %v5772 = vunpack.c.h.b16 %v5683
    %v5773 = vunpack.c.l.b16 %v5684
    %v5774 = vunpack.c.h.b16 %v5684
    %v5775 = vunpack.c.l.b16 %v5685
    %v5776 = vunpack.c.h.b16 %v5685
    %v5777 = vunpack.c.l.b16 %v5686
    %v5778 = vunpack.c.h.b16 %v5686
    %v5779 = vunpack.c.l.b16 %v5687
    %v5780 = vunpack.c.h.b16 %v5687
    %v5781 = vunpack.c.l.b16 %v5688
    %v5782 = vunpack.c.h.b16 %v5688
    %v5783 = vunpack.c.l.b16 %v5689
    %v5784 = vunpack.c.h.b16 %v5689
    %v5785 = vunpack.c.l.b16 %v5690
    %v5786 = vunpack.c.h.b16 %v5690
    %v5787 = vpack.c.b16 %v5725, %v5723
    %v5788 = vpack.c.b16 %v5726, %v5724
    %v5789 = vpack.c.b16 %v5729, %v5727
    %v5790 = vpack.c.b16 %v5730, %v5728
    %v5791 = vpack.c.b16 %v5733, %v5731
    %v5792 = vpack.c.b16 %v5734, %v5732
    %v5793 = vpack.c.b16 %v5737, %v5735
    %v5794 = vpack.c.b16 %v5738, %v5736
    %v5795 = vpack.c.b16 %v5741, %v5739
    %v5796 = vpack.c.b16 %v5742, %v5740
    %v5797 = vpack.c.b16 %v5745, %v5743
    %v5798 = vpack.c.b16 %v5746, %v5744
    %v5799 = vpack.c.b16 %v5749, %v5747
    %v5800 = vpack.c.b16 %v5750, %v5748
    %v5801 = vpack.c.b16 %v5753, %v5751
    %v5802 = vpack.c.b16 %v5754, %v5752
    %v5803 = vpack.c.b16 %v5757, %v5755
    %v5804 = vpack.c.b16 %v5758, %v5756
    %v5805 = vpack.c.b16 %v5761, %v5759
    %v5806 = vpack.c.b16 %v5762, %v5760
    %v5807 = vpack.c.b16 %v5765, %v5763
    %v5808 = vpack.c.b16 %v5766, %v5764
    %v5809 = vpack.c.b16 %v5769, %v5767
    %v5810 = vpack.c.b16 %v5770, %v5768
    %v5811 = vpack.c.b16 %v5773, %v5771
    %v5812 = vpack.c.b16 %v5774, %v5772
    %v5813 = vpack.c.b16 %v5777, %v5775
    %v5814 = vpack.c.b16 %v5778, %v5776
    %v5815 = vpack.c.b16 %v5781, %v5779
    %v5816 = vpack.c.b16 %v5782, %v5780
    %v5817 = vpack.c.b16 %v5785, %v5783
    %v5818 = vpack.c.b16 %v5786, %v5784
    %5851 = vmatprep.subr.bf16.mxu0 %v5788
    %5852 = vmatpush1.bf16.msra.mxu0 %v5787
    %5853 = vmatprep.subr.bf16.mxu0 %v5790
    %5854 = vmatpush1.bf16.msra.mxu0 %v5789
    %5855 = vmatprep.subr.bf16.mxu0 %v5792
    %5856 = vmatpush1.bf16.msra.mxu0 %v5791
    %5857 = vmatprep.subr.bf16.mxu0 %v5794
    %5858 = vmatpush1.bf16.msra.mxu0 %v5793
    %5859 = vmatprep.subr.bf16.mxu0 %v5796
    %5860 = vmatpush1.bf16.msra.mxu0 %v5795
    %5861 = vmatprep.subr.bf16.mxu0 %v5798
    %5862 = vmatpush1.bf16.msra.mxu0 %v5797
    %5863 = vmatprep.subr.bf16.mxu0 %v5800
    %5864 = vmatpush1.bf16.msra.mxu0 %v5799
    %5865 = vmatprep.subr.bf16.mxu0 %v5802
    %5866 = vmatpush1.bf16.msra.mxu0 %v5801
    %5867 = vmatprep.subr.bf16.mxu0 %v5804
    %5868 = vmatpush1.bf16.msra.mxu0 %v5803
    %5869 = vmatprep.subr.bf16.mxu0 %v5806
    %5870 = vmatpush1.bf16.msra.mxu0 %v5805
    %5871 = vmatprep.subr.bf16.mxu0 %v5808
    %5872 = vmatpush1.bf16.msra.mxu0 %v5807
    %5873 = vmatprep.subr.bf16.mxu0 %v5810
    %5874 = vmatpush1.bf16.msra.mxu0 %v5809
    %5875 = vmatprep.subr.bf16.mxu0 %v5812
    %5876 = vmatpush1.bf16.msra.mxu0 %v5811
    %5877 = vmatprep.subr.bf16.mxu0 %v5814
    %5878 = vmatpush1.bf16.msra.mxu0 %v5813
    %5879 = vmatprep.subr.bf16.mxu0 %v5816
    %5880 = vmatpush1.bf16.msra.mxu0 %v5815
    %5881 = vmatprep.subr.bf16.mxu0 %v5818
    %5882 = vmatpush1.bf16.msra.mxu0 %v5817
    %5883 = vmatprep.mubr.bf16.mxu0 %v5657
    %5884 = vmatmul.mubr.bf16.gmra.mrb[0].mxu0 %v5656
    %v5885 = vpop.f32.mrb[0].mxu0
    %v5886 = vadd.f32 0.0, %v5885
    %v5887 = vpop.f32.mrb[0].mxu0
    %v5888 = vadd.f32 0.0, %v5887
    %v5889 = vpop.f32.mrb[0].mxu0
    %v5890 = vpop.f32.mrb[0].mxu0
    %5891 = vdwg.mxu0
    %v5892 = vadd.f32 %v5604, %v5886
    %v5893 = vadd.f32 %v5606, %v5888
    %s5894 = scalar_lea.vmem %s33, 12
    %v5895 = vld [vmem:[%s5894] sm:$0xf]
    %v5897 = vsel %vm3254, %v5895, 0
    %5899 = vmatprep.subr.bf16.mxu0 %v5047
    %5900 = vmatpush1.bf16.msra.mxu0 %v5046
    %5901 = vmatprep.subr.bf16.mxu0 0
    %5902 = vmatpush1.bf16.msra.mxu0 0
    %5903 = vmatprep.subr.bf16.mxu0 0
    %5904 = vmatpush1.bf16.msra.mxu0 0
    %5905 = vmatprep.subr.bf16.mxu0 0
    %5906 = vmatpush1.bf16.msra.mxu0 0
    %5907 = vmatprep.subr.bf16.mxu0 0
    %5908 = vmatpush1.bf16.msra.mxu0 0
    %5909 = vmatprep.subr.bf16.mxu0 0
    %5910 = vmatpush1.bf16.msra.mxu0 0
    %5911 = vmatprep.subr.bf16.mxu0 0
    %5912 = vmatpush1.bf16.msra.mxu0 0
    %5913 = vmatprep.subr.bf16.mxu0 0
    %5914 = vmatpush1.bf16.msra.mxu0 0
    %5915 = vmatprep.subr.bf16.mxu0 0
    %5916 = vmatpush1.bf16.msra.mxu0 0
    %5917 = vmatprep.subr.bf16.mxu0 0
    %5918 = vmatpush1.bf16.msra.mxu0 0
    %5919 = vmatprep.subr.bf16.mxu0 0
    %5920 = vmatpush1.bf16.msra.mxu0 0
    %5921 = vmatprep.subr.bf16.mxu0 0
    %5922 = vmatpush1.bf16.msra.mxu0 0
    %5923 = vmatprep.subr.bf16.mxu0 0
    %5924 = vmatpush1.bf16.msra.mxu0 0
    %5925 = vmatprep.subr.bf16.mxu0 0
    %5926 = vmatpush1.bf16.msra.mxu0 0
    %5927 = vmatprep.subr.bf16.mxu0 0
    %5928 = vmatpush1.bf16.msra.mxu0 0
    %5929 = vmatprep.subr.bf16.mxu0 0
    %5930 = vmatpush1.bf16.msra.mxu0 0
    %5931 = vmatprep.mubr.bf16.mxu0 0
    %5932 = vmatmul.mubr.bf16.gmra.mrb[0].mxu0 %v5897
    %v5933 = vpop.f32.mrb[0].mxu0
    %v5934 = vadd.f32 0.0, %v5933
    %v5935 = vpop.f32.mrb[0].mxu0
    %v5936 = vadd.f32 0.0, %v5935
    %v5937 = vpop.f32.mrb[0].mxu0
    %v5938 = vpop.f32.mrb[0].mxu0
    %5939 = vdwg.mxu0
    %v5940 = vpack.c.bf16 %v5934, %v5934
    %v5941 = vpack.c.bf16 %v5936, %v5936
    %s5942 = scalar_lea.vmem %s31, 768
    %v5943 = vld [vmem:[%s5942] sm:$0xff]
    %v5944 = vld [vmem:[%s5942 + $0x8] sm:$0xff]
    %v5945 = vld [vmem:[%s5942 + $0x10] sm:$0xff]
    %v5946 = vld [vmem:[%s5942 + $0x18] sm:$0xff]
    %v5947 = vld [vmem:[%s5942 + $0x20] sm:$0xff]
    %v5948 = vld [vmem:[%s5942 + $0x28] sm:$0xff]
    %v5949 = vld [vmem:[%s5942 + $0x30] sm:$0xff]
    %v5950 = vld [vmem:[%s5942 + $0x38] sm:$0xff]
    %v5951 = vld [vmem:[%s5942 + $0x40] sm:$0xff]
    %v5952 = vld [vmem:[%s5942 + $0x48] sm:$0xff]
    %v5953 = vld [vmem:[%s5942 + $0x50] sm:$0xff]
    %v5954 = vld [vmem:[%s5942 + $0x58] sm:$0xff]
    %v5955 = vld [vmem:[%s5942 + $0x60] sm:$0xff]
    %v5956 = vld [vmem:[%s5942 + $0x68] sm:$0xff]
    %v5957 = vld [vmem:[%s5942 + $0x70] sm:$0xff]
    %v5958 = vld [vmem:[%s5942 + $0x78] sm:$0xff]
    %v5959 = vld [vmem:[%s5942 + $0x80] sm:$0xff]
    %v5960 = vld [vmem:[%s5942 + $0x88] sm:$0xff]
    %v5961 = vld [vmem:[%s5942 + $0x90] sm:$0xff]
    %v5962 = vld [vmem:[%s5942 + $0x98] sm:$0xff]
    %v5963 = vld [vmem:[%s5942 + $0xa0] sm:$0xff]
    %v5964 = vld [vmem:[%s5942 + $0xa8] sm:$0xff]
    %v5965 = vld [vmem:[%s5942 + $0xb0] sm:$0xff]
    %v5966 = vld [vmem:[%s5942 + $0xb8] sm:$0xff]
    %v5967 = vld [vmem:[%s5942 + $0xc0] sm:$0xff]
    %v5968 = vld [vmem:[%s5942 + $0xc8] sm:$0xff]
    %v5969 = vld [vmem:[%s5942 + $0xd0] sm:$0xff]
    %v5970 = vld [vmem:[%s5942 + $0xd8] sm:$0xff]
    %v5971 = vld [vmem:[%s5942 + $0xe0] sm:$0xff]
    %v5972 = vld [vmem:[%s5942 + $0xe8] sm:$0xff]
    %v5973 = vld [vmem:[%s5942 + $0xf0] sm:$0xff]
    %v5974 = vld [vmem:[%s5942 + $0xf8] sm:$0xff]
    %v6007 = vunpack.c.l.b16 %v5943
    %v6008 = vunpack.c.h.b16 %v5943
    %v6009 = vunpack.c.l.b16 %v5944
    %v6010 = vunpack.c.h.b16 %v5944
    %v6011 = vunpack.c.l.b16 %v5945
    %v6012 = vunpack.c.h.b16 %v5945
    %v6013 = vunpack.c.l.b16 %v5946
    %v6014 = vunpack.c.h.b16 %v5946
    %v6015 = vunpack.c.l.b16 %v5947
    %v6016 = vunpack.c.h.b16 %v5947
    %v6017 = vunpack.c.l.b16 %v5948
    %v6018 = vunpack.c.h.b16 %v5948
    %v6019 = vunpack.c.l.b16 %v5949
    %v6020 = vunpack.c.h.b16 %v5949
    %v6021 = vunpack.c.l.b16 %v5950
    %v6022 = vunpack.c.h.b16 %v5950
    %v6023 = vunpack.c.l.b16 %v5951
    %v6024 = vunpack.c.h.b16 %v5951
    %v6025 = vunpack.c.l.b16 %v5952
    %v6026 = vunpack.c.h.b16 %v5952
    %v6027 = vunpack.c.l.b16 %v5953
    %v6028 = vunpack.c.h.b16 %v5953
    %v6029 = vunpack.c.l.b16 %v5954
    %v6030 = vunpack.c.h.b16 %v5954
    %v6031 = vunpack.c.l.b16 %v5955
    %v6032 = vunpack.c.h.b16 %v5955
    %v6033 = vunpack.c.l.b16 %v5956
    %v6034 = vunpack.c.h.b16 %v5956
    %v6035 = vunpack.c.l.b16 %v5957
    %v6036 = vunpack.c.h.b16 %v5957
    %v6037 = vunpack.c.l.b16 %v5958
    %v6038 = vunpack.c.h.b16 %v5958
    %v6039 = vunpack.c.l.b16 %v5959
    %v6040 = vunpack.c.h.b16 %v5959
    %v6041 = vunpack.c.l.b16 %v5960
    %v6042 = vunpack.c.h.b16 %v5960
    %v6043 = vunpack.c.l.b16 %v5961
    %v6044 = vunpack.c.h.b16 %v5961
    %v6045 = vunpack.c.l.b16 %v5962
    %v6046 = vunpack.c.h.b16 %v5962
    %v6047 = vunpack.c.l.b16 %v5963
    %v6048 = vunpack.c.h.b16 %v5963
    %v6049 = vunpack.c.l.b16 %v5964
    %v6050 = vunpack.c.h.b16 %v5964
    %v6051 = vunpack.c.l.b16 %v5965
    %v6052 = vunpack.c.h.b16 %v5965
    %v6053 = vunpack.c.l.b16 %v5966
    %v6054 = vunpack.c.h.b16 %v5966
    %v6055 = vunpack.c.l.b16 %v5967
    %v6056 = vunpack.c.h.b16 %v5967
    %v6057 = vunpack.c.l.b16 %v5968
    %v6058 = vunpack.c.h.b16 %v5968
    %v6059 = vunpack.c.l.b16 %v5969
    %v6060 = vunpack.c.h.b16 %v5969
    %v6061 = vunpack.c.l.b16 %v5970
    %v6062 = vunpack.c.h.b16 %v5970
    %v6063 = vunpack.c.l.b16 %v5971
    %v6064 = vunpack.c.h.b16 %v5971
    %v6065 = vunpack.c.l.b16 %v5972
    %v6066 = vunpack.c.h.b16 %v5972
    %v6067 = vunpack.c.l.b16 %v5973
    %v6068 = vunpack.c.h.b16 %v5973
    %v6069 = vunpack.c.l.b16 %v5974
    %v6070 = vunpack.c.h.b16 %v5974
    %v6071 = vpack.c.b16 %v6009, %v6007
    %v6072 = vpack.c.b16 %v6010, %v6008
    %v6073 = vpack.c.b16 %v6013, %v6011
    %v6074 = vpack.c.b16 %v6014, %v6012
    %v6075 = vpack.c.b16 %v6017, %v6015
    %v6076 = vpack.c.b16 %v6018, %v6016
    %v6077 = vpack.c.b16 %v6021, %v6019
    %v6078 = vpack.c.b16 %v6022, %v6020
    %v6079 = vpack.c.b16 %v6025, %v6023
    %v6080 = vpack.c.b16 %v6026, %v6024
    %v6081 = vpack.c.b16 %v6029, %v6027
    %v6082 = vpack.c.b16 %v6030, %v6028
    %v6083 = vpack.c.b16 %v6033, %v6031
    %v6084 = vpack.c.b16 %v6034, %v6032
    %v6085 = vpack.c.b16 %v6037, %v6035
    %v6086 = vpack.c.b16 %v6038, %v6036
    %v6087 = vpack.c.b16 %v6041, %v6039
    %v6088 = vpack.c.b16 %v6042, %v6040
    %v6089 = vpack.c.b16 %v6045, %v6043
    %v6090 = vpack.c.b16 %v6046, %v6044
    %v6091 = vpack.c.b16 %v6049, %v6047
    %v6092 = vpack.c.b16 %v6050, %v6048
    %v6093 = vpack.c.b16 %v6053, %v6051
    %v6094 = vpack.c.b16 %v6054, %v6052
    %v6095 = vpack.c.b16 %v6057, %v6055
    %v6096 = vpack.c.b16 %v6058, %v6056
    %v6097 = vpack.c.b16 %v6061, %v6059
    %v6098 = vpack.c.b16 %v6062, %v6060
    %v6099 = vpack.c.b16 %v6065, %v6063
    %v6100 = vpack.c.b16 %v6066, %v6064
    %v6101 = vpack.c.b16 %v6069, %v6067
    %v6102 = vpack.c.b16 %v6070, %v6068
    %6135 = vmatprep.subr.bf16.mxu0 %v6072
    %6136 = vmatpush1.bf16.msra.mxu0 %v6071
    %6137 = vmatprep.subr.bf16.mxu0 %v6074
    %6138 = vmatpush1.bf16.msra.mxu0 %v6073
    %6139 = vmatprep.subr.bf16.mxu0 %v6076
    %6140 = vmatpush1.bf16.msra.mxu0 %v6075
    %6141 = vmatprep.subr.bf16.mxu0 %v6078
    %6142 = vmatpush1.bf16.msra.mxu0 %v6077
    %6143 = vmatprep.subr.bf16.mxu0 %v6080
    %6144 = vmatpush1.bf16.msra.mxu0 %v6079
    %6145 = vmatprep.subr.bf16.mxu0 %v6082
    %6146 = vmatpush1.bf16.msra.mxu0 %v6081
    %6147 = vmatprep.subr.bf16.mxu0 %v6084
    %6148 = vmatpush1.bf16.msra.mxu0 %v6083
    %6149 = vmatprep.subr.bf16.mxu0 %v6086
    %6150 = vmatpush1.bf16.msra.mxu0 %v6085
    %6151 = vmatprep.subr.bf16.mxu0 %v6088
    %6152 = vmatpush1.bf16.msra.mxu0 %v6087
    %6153 = vmatprep.subr.bf16.mxu0 %v6090
    %6154 = vmatpush1.bf16.msra.mxu0 %v6089
    %6155 = vmatprep.subr.bf16.mxu0 %v6092
    %6156 = vmatpush1.bf16.msra.mxu0 %v6091
    %6157 = vmatprep.subr.bf16.mxu0 %v6094
    %6158 = vmatpush1.bf16.msra.mxu0 %v6093
    %6159 = vmatprep.subr.bf16.mxu0 %v6096
    %6160 = vmatpush1.bf16.msra.mxu0 %v6095
    %6161 = vmatprep.subr.bf16.mxu0 %v6098
    %6162 = vmatpush1.bf16.msra.mxu0 %v6097
    %6163 = vmatprep.subr.bf16.mxu0 %v6100
    %6164 = vmatpush1.bf16.msra.mxu0 %v6099
    %6165 = vmatprep.subr.bf16.mxu0 %v6102
    %6166 = vmatpush1.bf16.msra.mxu0 %v6101
    %6167 = vmatprep.mubr.bf16.mxu0 %v5941
    %6168 = vmatmul.mubr.bf16.gmra.mrb[0].mxu0 %v5940
    %v6169 = vpop.f32.mrb[0].mxu0
    %v6170 = vadd.f32 0.0, %v6169
    %v6171 = vpop.f32.mrb[0].mxu0
    %v6172 = vadd.f32 0.0, %v6171
    %v6173 = vpop.f32.mrb[0].mxu0
    %v6174 = vpop.f32.mrb[0].mxu0
    %6175 = vdwg.mxu0
    %v6176 = vadd.f32 %v5892, %v6170
    %v6177 = vadd.f32 %v5893, %v6172
    %v6178 = vrot.slane %v6176, 4
    %v6179 = vadd.f32 %v6176, %v6178
    %v6180 = vrot.slane %v6179, 2
    %v6181 = vadd.f32 %v6179, %v6180
    %v6182 = vrot.slane %v6181, 1
    %v6183 = vadd.f32 %v6181, %v6182
    %v6184 = vrot.slane %v6177, 4
    %v6185 = vadd.f32 %v6177, %v6184
    %v6186 = vrot.slane %v6185, 2
    %v6187 = vadd.f32 %v6185, %v6186
    %v6188 = vrot.slane %v6187, 1
    %v6189 = vadd.f32 %v6187, %v6188
    %v6190 = vmul.f32 %v6176, %v6176
    %v6191 = vmul.f32 %v6177, %v6177
    %v6192 = vrot.slane %v6190, 4
    %v6193 = vadd.f32 %v6190, %v6192
    %v6194 = vrot.slane %v6193, 2
    %v6195 = vadd.f32 %v6193, %v6194
    %v6196 = vrot.slane %v6195, 1
    %v6197 = vadd.f32 %v6195, %v6196
    %v6198 = vrot.slane %v6191, 4
    %v6199 = vadd.f32 %v6191, %v6198
    %v6200 = vrot.slane %v6199, 2
    %v6201 = vadd.f32 %v6199, %v6200
    %v6202 = vrot.slane %v6201, 1
    %v6203 = vadd.f32 %v6201, %v6202
    %v6204 = vld [vmem:[%s37] sm:$0xff]
    %v6205 = vld [vmem:[%s37 + $0x8] sm:$0xff]
    %v6206 = vld [vmem:[%s37 + $0x10] sm:$0xff]
    %v6207 = vld [vmem:[%s37 + $0x18] sm:$0xff]
    %v6208 = vld [vmem:[%s37 + $0x20] sm:$0xff]
    %v6209 = vld [vmem:[%s37 + $0x28] sm:$0xff]
    %v6210 = vld [vmem:[%s37 + $0x30] sm:$0xff]
    %v6211 = vld [vmem:[%s37 + $0x38] sm:$0xff]
    %v6212 = vld [vmem:[%s37 + $0x40] sm:$0xff]
    %v6213 = vld [vmem:[%s37 + $0x48] sm:$0xff]
    %v6214 = vld [vmem:[%s37 + $0x50] sm:$0xff]
    %v6215 = vld [vmem:[%s37 + $0x58] sm:$0xff]
    %v6216 = vld [vmem:[%s37 + $0x60] sm:$0xff]
    %v6217 = vld [vmem:[%s37 + $0x68] sm:$0xff]
    %v6218 = vld [vmem:[%s37 + $0x70] sm:$0xff]
    %v6219 = vld [vmem:[%s37 + $0x78] sm:$0xff]
    %v6220 = vld [vmem:[%s37 + $0x80] sm:$0xff]
    %v6221 = vld [vmem:[%s37 + $0x88] sm:$0xff]
    %v6222 = vld [vmem:[%s37 + $0x90] sm:$0xff]
    %v6223 = vld [vmem:[%s37 + $0x98] sm:$0xff]
    %v6224 = vld [vmem:[%s37 + $0xa0] sm:$0xff]
    %v6225 = vld [vmem:[%s37 + $0xa8] sm:$0xff]
    %v6226 = vld [vmem:[%s37 + $0xb0] sm:$0xff]
    %v6227 = vld [vmem:[%s37 + $0xb8] sm:$0xff]
    %v6228 = vld [vmem:[%s37 + $0xc0] sm:$0xff]
    %v6229 = vld [vmem:[%s37 + $0xc8] sm:$0xff]
    %v6230 = vld [vmem:[%s37 + $0xd0] sm:$0xff]
    %v6231 = vld [vmem:[%s37 + $0xd8] sm:$0xff]
    %v6232 = vld [vmem:[%s37 + $0xe0] sm:$0xff]
    %v6233 = vld [vmem:[%s37 + $0xe8] sm:$0xff]
    %v6234 = vld [vmem:[%s37 + $0xf0] sm:$0xff]
    %v6235 = vld [vmem:[%s37 + $0xf8] sm:$0xff]
    %6236 = vmatprep.subr.mxu0 0.0
    %6237 = vmatpush1.msra.mxu0 %v6204
    %6238 = vmatprep.subr.mxu0 0.0
    %6239 = vmatpush1.msra.mxu0 %v6205
    %6240 = vmatprep.subr.mxu0 0.0
    %6241 = vmatpush1.msra.mxu0 %v6206
    %6242 = vmatprep.subr.mxu0 0.0
    %6243 = vmatpush1.msra.mxu0 %v6207
    %6244 = vmatprep.subr.mxu0 0.0
    %6245 = vmatpush1.msra.mxu0 %v6208
    %6246 = vmatprep.subr.mxu0 0.0
    %6247 = vmatpush1.msra.mxu0 %v6209
    %6248 = vmatprep.subr.mxu0 0.0
    %6249 = vmatpush1.msra.mxu0 %v6210
    %6250 = vmatprep.subr.mxu0 0.0
    %6251 = vmatpush1.msra.mxu0 %v6211
    %6252 = vmatprep.subr.mxu0 0.0
    %6253 = vmatpush1.msra.mxu0 %v6212
    %6254 = vmatprep.subr.mxu0 0.0
    %6255 = vmatpush1.msra.mxu0 %v6213
    %6256 = vmatprep.subr.mxu0 0.0
    %6257 = vmatpush1.msra.mxu0 %v6214
    %6258 = vmatprep.subr.mxu0 0.0
    %6259 = vmatpush1.msra.mxu0 %v6215
    %6260 = vmatprep.subr.mxu0 0.0
    %6261 = vmatpush1.msra.mxu0 %v6216
    %6262 = vmatprep.subr.mxu0 0.0
    %6263 = vmatpush1.msra.mxu0 %v6217
    %6264 = vmatprep.subr.mxu0 0.0
    %6265 = vmatpush1.msra.mxu0 %v6218
    %6266 = vmatprep.subr.mxu0 0.0
    %6267 = vmatpush1.msra.mxu0 %v6219
    %6268 = vmatprep.subr.mxu0 0.0
    %6269 = vmatpush1.msra.mxu0 %v6220
    %6270 = vmatprep.subr.mxu0 0.0
    %6271 = vmatpush1.msra.mxu0 %v6221
    %6272 = vmatprep.subr.mxu0 0.0
    %6273 = vmatpush1.msra.mxu0 %v6222
    %6274 = vmatprep.subr.mxu0 0.0
    %6275 = vmatpush1.msra.mxu0 %v6223
    %6276 = vmatprep.subr.mxu0 0.0
    %6277 = vmatpush1.msra.mxu0 %v6224
    %6278 = vmatprep.subr.mxu0 0.0
    %6279 = vmatpush1.msra.mxu0 %v6225
    %6280 = vmatprep.subr.mxu0 0.0
    %6281 = vmatpush1.msra.mxu0 %v6226
    %6282 = vmatprep.subr.mxu0 0.0
    %6283 = vmatpush1.msra.mxu0 %v6227
    %6284 = vmatprep.subr.mxu0 0.0
    %6285 = vmatpush1.msra.mxu0 %v6228
    %6286 = vmatprep.subr.mxu0 0.0
    %6287 = vmatpush1.msra.mxu0 %v6229
    %6288 = vmatprep.subr.mxu0 0.0
    %6289 = vmatpush1.msra.mxu0 %v6230
    %6290 = vmatprep.subr.mxu0 0.0
    %6291 = vmatpush1.msra.mxu0 %v6231
    %6292 = vmatprep.subr.mxu0 0.0
    %6293 = vmatpush1.msra.mxu0 %v6232
    %6294 = vmatprep.subr.mxu0 0.0
    %6295 = vmatpush1.msra.mxu0 %v6233
    %6296 = vmatprep.subr.mxu0 0.0
    %6297 = vmatpush1.msra.mxu0 %v6234
    %6298 = vmatprep.subr.mxu0 0.0
    %6299 = vmatpush1.msra.mxu0 %v6235
    %6300 = vmatprep.mubr.f32.mxu0 %v6189
    %6301 = vmatmul.mubr.f32.gmra.mrb[0].mxu0 %v6183
    %v6302 = vpop.f32.mrb[0].mxu0
    %v6303 = vadd.f32 0.0, %v6302
    %v6304 = vpop.f32.mrb[0].mxu0
    %6305 = vdwg.mxu0
    %6306 = vmatprep.subr.mxu0 0.0
    %6307 = vmatpush1.msra.mxu0 %v6204
    %6308 = vmatprep.subr.mxu0 0.0
    %6309 = vmatpush1.msra.mxu0 %v6205
    %6310 = vmatprep.subr.mxu0 0.0
    %6311 = vmatpush1.msra.mxu0 %v6206
    %6312 = vmatprep.subr.mxu0 0.0
    %6313 = vmatpush1.msra.mxu0 %v6207
    %6314 = vmatprep.subr.mxu0 0.0
    %6315 = vmatpush1.msra.mxu0 %v6208
    %6316 = vmatprep.subr.mxu0 0.0
    %6317 = vmatpush1.msra.mxu0 %v6209
    %6318 = vmatprep.subr.mxu0 0.0
    %6319 = vmatpush1.msra.mxu0 %v6210
    %6320 = vmatprep.subr.mxu0 0.0
    %6321 = vmatpush1.msra.mxu0 %v6211
    %6322 = vmatprep.subr.mxu0 0.0
    %6323 = vmatpush1.msra.mxu0 %v6212
    %6324 = vmatprep.subr.mxu0 0.0
    %6325 = vmatpush1.msra.mxu0 %v6213
    %6326 = vmatprep.subr.mxu0 0.0
    %6327 = vmatpush1.msra.mxu0 %v6214
    %6328 = vmatprep.subr.mxu0 0.0
    %6329 = vmatpush1.msra.mxu0 %v6215
    %6330 = vmatprep.subr.mxu0 0.0
    %6331 = vmatpush1.msra.mxu0 %v6216
    %6332 = vmatprep.subr.mxu0 0.0
    %6333 = vmatpush1.msra.mxu0 %v6217
    %6334 = vmatprep.subr.mxu0 0.0
    %6335 = vmatpush1.msra.mxu0 %v6218
    %6336 = vmatprep.subr.mxu0 0.0
    %6337 = vmatpush1.msra.mxu0 %v6219
    %6338 = vmatprep.subr.mxu0 0.0
    %6339 = vmatpush1.msra.mxu0 %v6220
    %6340 = vmatprep.subr.mxu0 0.0
    %6341 = vmatpush1.msra.mxu0 %v6221
    %6342 = vmatprep.subr.mxu0 0.0
    %6343 = vmatpush1.msra.mxu0 %v6222
    %6344 = vmatprep.subr.mxu0 0.0
    %6345 = vmatpush1.msra.mxu0 %v6223
    %6346 = vmatprep.subr.mxu0 0.0
    %6347 = vmatpush1.msra.mxu0 %v6224
    %6348 = vmatprep.subr.mxu0 0.0
    %6349 = vmatpush1.msra.mxu0 %v6225
    %6350 = vmatprep.subr.mxu0 0.0
    %6351 = vmatpush1.msra.mxu0 %v6226
    %6352 = vmatprep.subr.mxu0 0.0
    %6353 = vmatpush1.msra.mxu0 %v6227
    %6354 = vmatprep.subr.mxu0 0.0
    %6355 = vmatpush1.msra.mxu0 %v6228
    %6356 = vmatprep.subr.mxu0 0.0
    %6357 = vmatpush1.msra.mxu0 %v6229
    %6358 = vmatprep.subr.mxu0 0.0
    %6359 = vmatpush1.msra.mxu0 %v6230
    %6360 = vmatprep.subr.mxu0 0.0
    %6361 = vmatpush1.msra.mxu0 %v6231
    %6362 = vmatprep.subr.mxu0 0.0
    %6363 = vmatpush1.msra.mxu0 %v6232
    %6364 = vmatprep.subr.mxu0 0.0
    %6365 = vmatpush1.msra.mxu0 %v6233
    %6366 = vmatprep.subr.mxu0 0.0
    %6367 = vmatpush1.msra.mxu0 %v6234
    %6368 = vmatprep.subr.mxu0 0.0
    %6369 = vmatpush1.msra.mxu0 %v6235
    %6370 = vmatprep.mubr.f32.mxu0 %v6203
    %6371 = vmatmul.mubr.f32.gmra.mrb[0].mxu0 %v6197
    %v6372 = vpop.f32.mrb[0].mxu0
    %v6373 = vadd.f32 0.0, %v6372
    %v6374 = vpop.f32.mrb[0].mxu0
    %6375 = vdwg.mxu0
    %v6376 = vrcp.pop 32.0
    %v6377 = vmul.f32 %v6303, %v6376
    %v6378 = vmul.f32 %v6373, %v6376
    %v6379 = vmul.f32 %v6377, %v6377
    %v6380 = vsub.f32 %v6378, %v6379
    %v6381 = vld [vmem:[%s39] sm:$0x1]
    %v6382 = vadd.f32 %v6380, 1e-05
    %v6383 = vrsqrt.pop %v6382
    %v6384 = vmul.f32 %v6381, %v6383
    %v6385 = vld [vmem:[%s41] sm:$0x1]
    %v6386 = vmul.f32 %v6377, %v6384
    %v6387 = vsub.f32 %v6385, %v6386
    %v6388 = vld [vmem:[%s35] sm:$0xff]
    %v6389 = vld [vmem:[%s35 + $0x8] sm:$0xff]
    %v6390 = vld [vmem:[%s35 + $0x10] sm:$0xff]
    %v6391 = vld [vmem:[%s35 + $0x18] sm:$0xff]
    %v6392 = vld [vmem:[%s35 + $0x20] sm:$0xff]
    %v6393 = vld [vmem:[%s35 + $0x28] sm:$0xff]
    %v6394 = vld [vmem:[%s35 + $0x30] sm:$0xff]
    %v6395 = vld [vmem:[%s35 + $0x38] sm:$0xff]
    %v6396 = vld [vmem:[%s35 + $0x40] sm:$0xff]
    %v6397 = vld [vmem:[%s35 + $0x48] sm:$0xff]
    %v6398 = vld [vmem:[%s35 + $0x50] sm:$0xff]
    %v6399 = vld [vmem:[%s35 + $0x58] sm:$0xff]
    %v6400 = vld [vmem:[%s35 + $0x60] sm:$0xff]
    %v6401 = vld [vmem:[%s35 + $0x68] sm:$0xff]
    %v6402 = vld [vmem:[%s35 + $0x70] sm:$0xff]
    %v6403 = vld [vmem:[%s35 + $0x78] sm:$0xff]
    %v6405 = vsel %vm645, %v6384, 0
    %6407 = vmatprep.subr.mxu0 %v6389
    %6408 = vmatpush1.msra.mxu0 %v6388
    %6409 = vmatprep.subr.mxu0 %v6391
    %6410 = vmatpush1.msra.mxu0 %v6390
    %6411 = vmatprep.subr.mxu0 %v6393
    %6412 = vmatpush1.msra.mxu0 %v6392
    %6413 = vmatprep.subr.mxu0 %v6395
    %6414 = vmatpush1.msra.mxu0 %v6394
    %6415 = vmatprep.subr.mxu0 %v6397
    %6416 = vmatpush1.msra.mxu0 %v6396
    %6417 = vmatprep.subr.mxu0 %v6399
    %6418 = vmatpush1.msra.mxu0 %v6398
    %6419 = vmatprep.subr.mxu0 %v6401
    %6420 = vmatpush1.msra.mxu0 %v6400
    %6421 = vmatprep.subr.mxu0 %v6403
    %6422 = vmatpush1.msra.mxu0 %v6402
    %6423 = vmatprep.subr.mxu0 0.0
    %6424 = vmatpush1.msra.mxu0 0.0
    %6425 = vmatprep.subr.mxu0 0.0
    %6426 = vmatpush1.msra.mxu0 0.0
    %6427 = vmatprep.subr.mxu0 0.0
    %6428 = vmatpush1.msra.mxu0 0.0
    %6429 = vmatprep.subr.mxu0 0.0
    %6430 = vmatpush1.msra.mxu0 0.0
    %6431 = vmatprep.subr.mxu0 0.0
    %6432 = vmatpush1.msra.mxu0 0.0
    %6433 = vmatprep.subr.mxu0 0.0
    %6434 = vmatpush1.msra.mxu0 0.0
    %6435 = vmatprep.subr.mxu0 0.0
    %6436 = vmatpush1.msra.mxu0 0.0
    %6437 = vmatprep.subr.mxu0 0.0
    %6438 = vmatpush1.msra.mxu0 0.0
    %6439 = vmatprep.subr.mxu0 0.0
    %6440 = vmatpush1.msra.mxu0 0.0
    %6441 = vmatprep.subr.mxu0 0.0
    %6442 = vmatpush1.msra.mxu0 0.0
    %6443 = vmatprep.subr.mxu0 0.0
    %6444 = vmatpush1.msra.mxu0 0.0
    %6445 = vmatprep.subr.mxu0 0.0
    %6446 = vmatpush1.msra.mxu0 0.0
    %6447 = vmatprep.subr.mxu0 0.0
    %6448 = vmatpush1.msra.mxu0 0.0
    %6449 = vmatprep.subr.mxu0 0.0
    %6450 = vmatpush1.msra.mxu0 0.0
    %6451 = vmatprep.subr.mxu0 0.0
    %6452 = vmatpush1.msra.mxu0 0.0
    %6453 = vmatprep.subr.mxu0 0.0
    %6454 = vmatpush1.msra.mxu0 0.0
    %6455 = vmatprep.subr.mxu0 0.0
    %6456 = vmatpush1.msra.mxu0 0.0
    %6457 = vmatprep.subr.mxu0 0.0
    %6458 = vmatpush1.msra.mxu0 0.0
    %6459 = vmatprep.subr.mxu0 0.0
    %6460 = vmatpush1.msra.mxu0 0.0
    %6461 = vmatprep.subr.mxu0 0.0
    %6462 = vmatpush1.msra.mxu0 0.0
    %6463 = vmatprep.subr.mxu0 0.0
    %6464 = vmatpush1.msra.mxu0 0.0
    %6465 = vmatprep.subr.mxu0 0.0
    %6466 = vmatpush1.msra.mxu0 0.0
    %6467 = vmatprep.subr.mxu0 0.0
    %6468 = vmatpush1.msra.mxu0 0.0
    %6469 = vmatprep.subr.mxu0 0.0
    %6470 = vmatpush1.msra.mxu0 0.0
    %6471 = vmatprep.mubr.f32.mxu0 0.0
    %6472 = vmatmul.mubr.f32.gmra.mrb[0].mxu0 %v6405
    %v6473 = vpop.f32.mrb[0].mxu0
    %v6474 = vadd.f32 0.0, %v6473
    %v6475 = vpop.f32.mrb[0].mxu0
    %v6476 = vadd.f32 0.0, %v6475
    %6477 = vdwg.mxu0
    %v6479 = vsel %vm645, %v6387, 0
    %6481 = vmatprep.subr.mxu0 %v6389
    %6482 = vmatpush1.msra.mxu0 %v6388
    %6483 = vmatprep.subr.mxu0 %v6391
    %6484 = vmatpush1.msra.mxu0 %v6390
    %6485 = vmatprep.subr.mxu0 %v6393
    %6486 = vmatpush1.msra.mxu0 %v6392
    %6487 = vmatprep.subr.mxu0 %v6395
    %6488 = vmatpush1.msra.mxu0 %v6394
    %6489 = vmatprep.subr.mxu0 %v6397
    %6490 = vmatpush1.msra.mxu0 %v6396
    %6491 = vmatprep.subr.mxu0 %v6399
    %6492 = vmatpush1.msra.mxu0 %v6398
    %6493 = vmatprep.subr.mxu0 %v6401
    %6494 = vmatpush1.msra.mxu0 %v6400
    %6495 = vmatprep.subr.mxu0 %v6403
    %6496 = vmatpush1.msra.mxu0 %v6402
    %6497 = vmatprep.subr.mxu0 0.0
    %6498 = vmatpush1.msra.mxu0 0.0
    %6499 = vmatprep.subr.mxu0 0.0
    %6500 = vmatpush1.msra.mxu0 0.0
    %6501 = vmatprep.subr.mxu0 0.0
    %6502 = vmatpush1.msra.mxu0 0.0
    %6503 = vmatprep.subr.mxu0 0.0
    %6504 = vmatpush1.msra.mxu0 0.0
    %6505 = vmatprep.subr.mxu0 0.0
    %6506 = vmatpush1.msra.mxu0 0.0
    %6507 = vmatprep.subr.mxu0 0.0
    %6508 = vmatpush1.msra.mxu0 0.0
    %6509 = vmatprep.subr.mxu0 0.0
    %6510 = vmatpush1.msra.mxu0 0.0
    %6511 = vmatprep.subr.mxu0 0.0
    %6512 = vmatpush1.msra.mxu0 0.0
    %6513 = vmatprep.subr.mxu0 0.0
    %6514 = vmatpush1.msra.mxu0 0.0
    %6515 = vmatprep.subr.mxu0 0.0
    %6516 = vmatpush1.msra.mxu0 0.0
    %6517 = vmatprep.subr.mxu0 0.0
    %6518 = vmatpush1.msra.mxu0 0.0
    %6519 = vmatprep.subr.mxu0 0.0
    %6520 = vmatpush1.msra.mxu0 0.0
    %6521 = vmatprep.subr.mxu0 0.0
    %6522 = vmatpush1.msra.mxu0 0.0
    %6523 = vmatprep.subr.mxu0 0.0
    %6524 = vmatpush1.msra.mxu0 0.0
    %6525 = vmatprep.subr.mxu0 0.0
    %6526 = vmatpush1.msra.mxu0 0.0
    %6527 = vmatprep.subr.mxu0 0.0
    %6528 = vmatpush1.msra.mxu0 0.0
    %6529 = vmatprep.subr.mxu0 0.0
    %6530 = vmatpush1.msra.mxu0 0.0
    %6531 = vmatprep.subr.mxu0 0.0
    %6532 = vmatpush1.msra.mxu0 0.0
    %6533 = vmatprep.subr.mxu0 0.0
    %6534 = vmatpush1.msra.mxu0 0.0
    %6535 = vmatprep.subr.mxu0 0.0
    %6536 = vmatpush1.msra.mxu0 0.0
    %6537 = vmatprep.subr.mxu0 0.0
    %6538 = vmatpush1.msra.mxu0 0.0
    %6539 = vmatprep.subr.mxu0 0.0
    %6540 = vmatpush1.msra.mxu0 0.0
    %6541 = vmatprep.subr.mxu0 0.0
    %6542 = vmatpush1.msra.mxu0 0.0
    %6543 = vmatprep.subr.mxu0 0.0
    %6544 = vmatpush1.msra.mxu0 0.0
    %6545 = vmatprep.mubr.f32.mxu0 0.0
    %6546 = vmatmul.mubr.f32.gmra.mrb[0].mxu0 %v6479
    %v6547 = vpop.f32.mrb[0].mxu0
    %v6548 = vadd.f32 0.0, %v6547
    %v6549 = vpop.f32.mrb[0].mxu0
    %v6550 = vadd.f32 0.0, %v6549
    %6551 = vdwg.mxu0
    %v6552 = vlaneseq
    %v6553 = vshrl.u32 %v6552, 7
    %v6554 = vsub.s32 0, %v6553
    %v6555 = vrot.slane %v6474, %v6554
    %v6556 = vlaneseq
    %v6557 = vshrl.u32 %v6556, 7
    %v6558 = vsub.s32 0, %v6557
    %v6559 = vrot.slane %v6476, %v6558
    %v6560 = vmul.f32 %v6176, %v6555
    %v6561 = vmul.f32 %v6177, %v6559
    %v6562 = vlaneseq
    %v6563 = vshrl.u32 %v6562, 7
    %v6564 = vsub.s32 0, %v6563
    %v6565 = vrot.slane %v6548, %v6564
    %v6566 = vlaneseq
    %v6567 = vshrl.u32 %v6566, 7
    %v6568 = vsub.s32 0, %v6567
    %v6569 = vrot.slane %v6550, %v6568
    %v6570 = vadd.f32 %v6560, %v6565
    %v6571 = vadd.f32 %v6561, %v6569
    %vm6572 = vcmp.ge.f32.partialorder %v6570, 0.0
    %vm6573 = vcmp.ge.f32.partialorder %v6571, 0.0
    %v6574 = vmul.f32 %v6570, 0.2
    %v6575 = vmul.f32 %v6571, 0.2
    %v6576 = vsel %vm6572, %v6570, %v6574
    %v6577 = vsel %vm6573, %v6571, %v6575
    %v6578 = vpack.c.bf16 %v6576, %v6576
    %v6579 = vpack.c.bf16 %v6577, %v6577
    %v6580 = vld [vmem:[%s43] sm:$0x1]
    %vm6581 = vcmask 64512
    %v6583 = vsel %vm6581, %v6580, 0
    %vm6585 = vcmask 1043456
    %v6587 = vsel %vm6585, %v6578, 0
    %v6590 = vsel %vm6585, %v6579, 0
    %6592 = vmatprep.subr.bf16.mxu0 %v6590
    %6593 = vmatpush1.bf16.msra.mxu0 %v6587
    %6594 = vmatprep.subr.bf16.mxu0 0
    %6595 = vmatpush1.bf16.msra.mxu0 0
    %6596 = vmatprep.subr.bf16.mxu0 0
    %6597 = vmatpush1.bf16.msra.mxu0 0
    %6598 = vmatprep.subr.bf16.mxu0 0
    %6599 = vmatpush1.bf16.msra.mxu0 0
    %6600 = vmatprep.subr.bf16.mxu0 0
    %6601 = vmatpush1.bf16.msra.mxu0 0
    %6602 = vmatprep.subr.bf16.mxu0 0
    %6603 = vmatpush1.bf16.msra.mxu0 0
    %6604 = vmatprep.subr.bf16.mxu0 0
    %6605 = vmatpush1.bf16.msra.mxu0 0
    %6606 = vmatprep.subr.bf16.mxu0 0
    %6607 = vmatpush1.bf16.msra.mxu0 0
    %6608 = vmatprep.subr.bf16.mxu0 0
    %6609 = vmatpush1.bf16.msra.mxu0 0
    %6610 = vmatprep.subr.bf16.mxu0 0
    %6611 = vmatpush1.bf16.msra.mxu0 0
    %6612 = vmatprep.subr.bf16.mxu0 0
    %6613 = vmatpush1.bf16.msra.mxu0 0
    %6614 = vmatprep.subr.bf16.mxu0 0
    %6615 = vmatpush1.bf16.msra.mxu0 0
    %6616 = vmatprep.subr.bf16.mxu0 0
    %6617 = vmatpush1.bf16.msra.mxu0 0
    %6618 = vmatprep.subr.bf16.mxu0 0
    %6619 = vmatpush1.bf16.msra.mxu0 0
    %6620 = vmatprep.subr.bf16.mxu0 0
    %6621 = vmatpush1.bf16.msra.mxu0 0
    %6622 = vmatprep.subr.bf16.mxu0 0
    %6623 = vmatpush1.bf16.msra.mxu0 0
    %6624 = vmatprep.mubr.bf16.mxu0 0
    %6625 = vmatmul.mubr.bf16.gmra.mrb[0].mxu0 %v6583
    %v6626 = vpop.f32.mrb[0].mxu0
    %v6627 = vadd.f32 0.0, %v6626
    %v6628 = vpop.f32.mrb[0].mxu0
    %v6629 = vadd.f32 0.0, %v6628
    %v6630 = vpop.f32.mrb[0].mxu0
    %v6631 = vpop.f32.mrb[0].mxu0
    %6632 = vdwg.mxu0
    %v6633 = vpack.c.bf16 %v6627, %v6627
    %v6634 = vpack.c.bf16 %v6629, %v6629
    %v6635 = vld [vmem:[%s45] sm:$0xf]
    %v6636 = vld [vmem:[%s45 + $0x4] sm:$0xf]
    %v6637 = vld [vmem:[%s45 + $0x8] sm:$0xf]
    %v6638 = vld [vmem:[%s45 + $0xc] sm:$0xf]
    %v6639 = vld [vmem:[%s45 + $0x10] sm:$0xf]
    %v6640 = vld [vmem:[%s45 + $0x14] sm:$0xf]
    %v6641 = vld [vmem:[%s45 + $0x18] sm:$0xf]
    %v6642 = vld [vmem:[%s45 + $0x1c] sm:$0xf]
    %v6643 = vld [vmem:[%s45 + $0x20] sm:$0xf]
    %v6644 = vld [vmem:[%s45 + $0x24] sm:$0xf]
    %v6645 = vld [vmem:[%s45 + $0x28] sm:$0xf]
    %v6646 = vld [vmem:[%s45 + $0x2c] sm:$0xf]
    %v6647 = vld [vmem:[%s45 + $0x30] sm:$0xf]
    %v6648 = vld [vmem:[%s45 + $0x34] sm:$0xf]
    %v6649 = vld [vmem:[%s45 + $0x38] sm:$0xf]
    %v6650 = vld [vmem:[%s45 + $0x3c] sm:$0xf]
    %v6651 = vld [vmem:[%s45 + $0x40] sm:$0xf]
    %v6652 = vld [vmem:[%s45 + $0x44] sm:$0xf]
    %v6653 = vld [vmem:[%s45 + $0x48] sm:$0xf]
    %v6654 = vld [vmem:[%s45 + $0x4c] sm:$0xf]
    %v6655 = vld [vmem:[%s45 + $0x50] sm:$0xf]
    %v6656 = vld [vmem:[%s45 + $0x54] sm:$0xf]
    %v6657 = vld [vmem:[%s45 + $0x58] sm:$0xf]
    %v6658 = vld [vmem:[%s45 + $0x5c] sm:$0xf]
    %v6659 = vld [vmem:[%s45 + $0x60] sm:$0xf]
    %v6660 = vld [vmem:[%s45 + $0x64] sm:$0xf]
    %v6661 = vld [vmem:[%s45 + $0x68] sm:$0xf]
    %v6662 = vld [vmem:[%s45 + $0x6c] sm:$0xf]
    %v6663 = vld [vmem:[%s45 + $0x70] sm:$0xf]
    %v6664 = vld [vmem:[%s45 + $0x74] sm:$0xf]
    %v6665 = vld [vmem:[%s45 + $0x78] sm:$0xf]
    %v6666 = vld [vmem:[%s45 + $0x7c] sm:$0xf]
    %s6667 = scalar_lea.vmem %s43, 1
    %v6668 = vld [vmem:[%s6667] sm:$0x1]
    %v6670 = vsel %vm6581, %v6668, 0
    %6672 = vmatprep.subr.bf16.mxu0 %v6590
    %6673 = vmatpush1.bf16.msra.mxu0 %v6587
    %6674 = vmatprep.subr.bf16.mxu0 0
    %6675 = vmatpush1.bf16.msra.mxu0 0
    %6676 = vmatprep.subr.bf16.mxu0 0
    %6677 = vmatpush1.bf16.msra.mxu0 0
    %6678 = vmatprep.subr.bf16.mxu0 0
    %6679 = vmatpush1.bf16.msra.mxu0 0
    %6680 = vmatprep.subr.bf16.mxu0 0
    %6681 = vmatpush1.bf16.msra.mxu0 0
    %6682 = vmatprep.subr.bf16.mxu0 0
    %6683 = vmatpush1.bf16.msra.mxu0 0
    %6684 = vmatprep.subr.bf16.mxu0 0
    %6685 = vmatpush1.bf16.msra.mxu0 0
    %6686 = vmatprep.subr.bf16.mxu0 0
    %6687 = vmatpush1.bf16.msra.mxu0 0
    %6688 = vmatprep.subr.bf16.mxu0 0
    %6689 = vmatpush1.bf16.msra.mxu0 0
    %6690 = vmatprep.subr.bf16.mxu0 0
    %6691 = vmatpush1.bf16.msra.mxu0 0
    %6692 = vmatprep.subr.bf16.mxu0 0
    %6693 = vmatpush1.bf16.msra.mxu0 0
    %6694 = vmatprep.subr.bf16.mxu0 0
    %6695 = vmatpush1.bf16.msra.mxu0 0
    %6696 = vmatprep.subr.bf16.mxu0 0
    %6697 = vmatpush1.bf16.msra.mxu0 0
    %6698 = vmatprep.subr.bf16.mxu0 0
    %6699 = vmatpush1.bf16.msra.mxu0 0
    %6700 = vmatprep.subr.bf16.mxu0 0
    %6701 = vmatpush1.bf16.msra.mxu0 0
    %6702 = vmatprep.subr.bf16.mxu0 0
    %6703 = vmatpush1.bf16.msra.mxu0 0
    %6704 = vmatprep.mubr.bf16.mxu0 0
    %6705 = vmatmul.mubr.bf16.gmra.mrb[0].mxu0 %v6670
    %v6706 = vpop.f32.mrb[0].mxu0
    %v6707 = vadd.f32 0.0, %v6706
    %v6708 = vpop.f32.mrb[0].mxu0
    %v6709 = vadd.f32 0.0, %v6708
    %v6710 = vpop.f32.mrb[0].mxu0
    %v6711 = vpop.f32.mrb[0].mxu0
    %6712 = vdwg.mxu0
    %v6713 = vpack.c.bf16 %v6707, %v6707
    %v6714 = vpack.c.bf16 %v6709, %v6709
    %s6715 = scalar_lea.vmem %s45, 128
    %v6716 = vld [vmem:[%s6715] sm:$0xf]
    %v6717 = vld [vmem:[%s6715 + $0x4] sm:$0xf]
    %v6718 = vld [vmem:[%s6715 + $0x8] sm:$0xf]
    %v6719 = vld [vmem:[%s6715 + $0xc] sm:$0xf]
    %v6720 = vld [vmem:[%s6715 + $0x10] sm:$0xf]
    %v6721 = vld [vmem:[%s6715 + $0x14] sm:$0xf]
    %v6722 = vld [vmem:[%s6715 + $0x18] sm:$0xf]
    %v6723 = vld [vmem:[%s6715 + $0x1c] sm:$0xf]
    %v6724 = vld [vmem:[%s6715 + $0x20] sm:$0xf]
    %v6725 = vld [vmem:[%s6715 + $0x24] sm:$0xf]
    %v6726 = vld [vmem:[%s6715 + $0x28] sm:$0xf]
    %v6727 = vld [vmem:[%s6715 + $0x2c] sm:$0xf]
    %v6728 = vld [vmem:[%s6715 + $0x30] sm:$0xf]
    %v6729 = vld [vmem:[%s6715 + $0x34] sm:$0xf]
    %v6730 = vld [vmem:[%s6715 + $0x38] sm:$0xf]
    %v6731 = vld [vmem:[%s6715 + $0x3c] sm:$0xf]
    %v6732 = vld [vmem:[%s6715 + $0x40] sm:$0xf]
    %v6733 = vld [vmem:[%s6715 + $0x44] sm:$0xf]
    %v6734 = vld [vmem:[%s6715 + $0x48] sm:$0xf]
    %v6735 = vld [vmem:[%s6715 + $0x4c] sm:$0xf]
    %v6736 = vld [vmem:[%s6715 + $0x50] sm:$0xf]
    %v6737 = vld [vmem:[%s6715 + $0x54] sm:$0xf]
    %v6738 = vld [vmem:[%s6715 + $0x58] sm:$0xf]
    %v6739 = vld [vmem:[%s6715 + $0x5c] sm:$0xf]
    %v6740 = vld [vmem:[%s6715 + $0x60] sm:$0xf]
    %v6741 = vld [vmem:[%s6715 + $0x64] sm:$0xf]
    %v6742 = vld [vmem:[%s6715 + $0x68] sm:$0xf]
    %v6743 = vld [vmem:[%s6715 + $0x6c] sm:$0xf]
    %v6744 = vld [vmem:[%s6715 + $0x70] sm:$0xf]
    %v6745 = vld [vmem:[%s6715 + $0x74] sm:$0xf]
    %v6746 = vld [vmem:[%s6715 + $0x78] sm:$0xf]
    %v6747 = vld [vmem:[%s6715 + $0x7c] sm:$0xf]
    %v6780 = vunpack.c.l.b16 %v6716
    %v6781 = vunpack.c.l.b16 %v6717
    %v6782 = vunpack.c.l.b16 %v6718
    %v6783 = vunpack.c.l.b16 %v6719
    %v6784 = vunpack.c.l.b16 %v6720
    %v6785 = vunpack.c.l.b16 %v6721
    %v6786 = vunpack.c.l.b16 %v6722
    %v6787 = vunpack.c.l.b16 %v6723
    %v6788 = vunpack.c.l.b16 %v6724
    %v6789 = vunpack.c.l.b16 %v6725
    %v6790 = vunpack.c.l.b16 %v6726
    %v6791 = vunpack.c.l.b16 %v6727
    %v6792 = vunpack.c.l.b16 %v6728
    %v6793 = vunpack.c.l.b16 %v6729
    %v6794 = vunpack.c.l.b16 %v6730
    %v6795 = vunpack.c.l.b16 %v6731
    %v6796 = vunpack.c.l.b16 %v6732
    %v6797 = vunpack.c.l.b16 %v6733
    %v6798 = vunpack.c.l.b16 %v6734
    %v6799 = vunpack.c.l.b16 %v6735
    %v6800 = vunpack.c.l.b16 %v6736
    %v6801 = vunpack.c.l.b16 %v6737
    %v6802 = vunpack.c.l.b16 %v6738
    %v6803 = vunpack.c.l.b16 %v6739
    %v6804 = vunpack.c.l.b16 %v6740
    %v6805 = vunpack.c.l.b16 %v6741
    %v6806 = vunpack.c.l.b16 %v6742
    %v6807 = vunpack.c.l.b16 %v6743
    %v6808 = vunpack.c.l.b16 %v6744
    %v6809 = vunpack.c.l.b16 %v6745
    %v6810 = vunpack.c.l.b16 %v6746
    %v6811 = vunpack.c.l.b16 %v6747
    %v6812 = vpack.c.b16 %v6781, %v6780
    %v6813 = vpack.c.b16 %v6783, %v6782
    %v6814 = vpack.c.b16 %v6785, %v6784
    %v6815 = vpack.c.b16 %v6787, %v6786
    %v6816 = vpack.c.b16 %v6789, %v6788
    %v6817 = vpack.c.b16 %v6791, %v6790
    %v6818 = vpack.c.b16 %v6793, %v6792
    %v6819 = vpack.c.b16 %v6795, %v6794
    %v6820 = vpack.c.b16 %v6797, %v6796
    %v6821 = vpack.c.b16 %v6799, %v6798
    %v6822 = vpack.c.b16 %v6801, %v6800
    %v6823 = vpack.c.b16 %v6803, %v6802
    %v6824 = vpack.c.b16 %v6805, %v6804
    %v6825 = vpack.c.b16 %v6807, %v6806
    %v6826 = vpack.c.b16 %v6809, %v6808
    %v6827 = vpack.c.b16 %v6811, %v6810
    %6844 = vmatprep.subr.bf16.mxu0 0
    %6845 = vmatpush1.bf16.msra.mxu0 %v6812
    %6846 = vmatprep.subr.bf16.mxu0 0
    %6847 = vmatpush1.bf16.msra.mxu0 %v6813
    %6848 = vmatprep.subr.bf16.mxu0 0
    %6849 = vmatpush1.bf16.msra.mxu0 %v6814
    %6850 = vmatprep.subr.bf16.mxu0 0
    %6851 = vmatpush1.bf16.msra.mxu0 %v6815
    %6852 = vmatprep.subr.bf16.mxu0 0
    %6853 = vmatpush1.bf16.msra.mxu0 %v6816
    %6854 = vmatprep.subr.bf16.mxu0 0
    %6855 = vmatpush1.bf16.msra.mxu0 %v6817
    %6856 = vmatprep.subr.bf16.mxu0 0
    %6857 = vmatpush1.bf16.msra.mxu0 %v6818
    %6858 = vmatprep.subr.bf16.mxu0 0
    %6859 = vmatpush1.bf16.msra.mxu0 %v6819
    %6860 = vmatprep.subr.bf16.mxu0 0
    %6861 = vmatpush1.bf16.msra.mxu0 %v6820
    %6862 = vmatprep.subr.bf16.mxu0 0
    %6863 = vmatpush1.bf16.msra.mxu0 %v6821
    %6864 = vmatprep.subr.bf16.mxu0 0
    %6865 = vmatpush1.bf16.msra.mxu0 %v6822
    %6866 = vmatprep.subr.bf16.mxu0 0
    %6867 = vmatpush1.bf16.msra.mxu0 %v6823
    %6868 = vmatprep.subr.bf16.mxu0 0
    %6869 = vmatpush1.bf16.msra.mxu0 %v6824
    %6870 = vmatprep.subr.bf16.mxu0 0
    %6871 = vmatpush1.bf16.msra.mxu0 %v6825
    %6872 = vmatprep.subr.bf16.mxu0 0
    %6873 = vmatpush1.bf16.msra.mxu0 %v6826
    %6874 = vmatprep.subr.bf16.mxu0 0
    %6875 = vmatpush1.bf16.msra.mxu0 %v6827
    %6876 = vmatprep.mubr.bf16.mxu0 %v6714
    %6877 = vmatmul.mubr.bf16.gmra.mrb[0].mxu0 %v6713
    %v6878 = vpop.f32.mrb[0].mxu0
    %v6879 = vadd.f32 0.0, %v6878
    %v6880 = vpop.f32.mrb[0].mxu0
    %v6881 = vpop.f32.mrb[0].mxu0
    %v6882 = vpop.f32.mrb[0].mxu0
    %6883 = vdwg.mxu0
    %v6916 = vunpack.c.l.b16 %v6635
    %v6917 = vunpack.c.l.b16 %v6636
    %v6918 = vunpack.c.l.b16 %v6637
    %v6919 = vunpack.c.l.b16 %v6638
    %v6920 = vunpack.c.l.b16 %v6639
    %v6921 = vunpack.c.l.b16 %v6640
    %v6922 = vunpack.c.l.b16 %v6641
    %v6923 = vunpack.c.l.b16 %v6642
    %v6924 = vunpack.c.l.b16 %v6643
    %v6925 = vunpack.c.l.b16 %v6644
    %v6926 = vunpack.c.l.b16 %v6645
    %v6927 = vunpack.c.l.b16 %v6646
    %v6928 = vunpack.c.l.b16 %v6647
    %v6929 = vunpack.c.l.b16 %v6648
    %v6930 = vunpack.c.l.b16 %v6649
    %v6931 = vunpack.c.l.b16 %v6650
    %v6932 = vunpack.c.l.b16 %v6651
    %v6933 = vunpack.c.l.b16 %v6652
    %v6934 = vunpack.c.l.b16 %v6653
    %v6935 = vunpack.c.l.b16 %v6654
    %v6936 = vunpack.c.l.b16 %v6655
    %v6937 = vunpack.c.l.b16 %v6656
    %v6938 = vunpack.c.l.b16 %v6657
    %v6939 = vunpack.c.l.b16 %v6658
    %v6940 = vunpack.c.l.b16 %v6659
    %v6941 = vunpack.c.l.b16 %v6660
    %v6942 = vunpack.c.l.b16 %v6661
    %v6943 = vunpack.c.l.b16 %v6662
    %v6944 = vunpack.c.l.b16 %v6663
    %v6945 = vunpack.c.l.b16 %v6664
    %v6946 = vunpack.c.l.b16 %v6665
    %v6947 = vunpack.c.l.b16 %v6666
    %v6948 = vpack.c.b16 %v6917, %v6916
    %v6949 = vpack.c.b16 %v6919, %v6918
    %v6950 = vpack.c.b16 %v6921, %v6920
    %v6951 = vpack.c.b16 %v6923, %v6922
    %v6952 = vpack.c.b16 %v6925, %v6924
    %v6953 = vpack.c.b16 %v6927, %v6926
    %v6954 = vpack.c.b16 %v6929, %v6928
    %v6955 = vpack.c.b16 %v6931, %v6930
    %v6956 = vpack.c.b16 %v6933, %v6932
    %v6957 = vpack.c.b16 %v6935, %v6934
    %v6958 = vpack.c.b16 %v6937, %v6936
    %v6959 = vpack.c.b16 %v6939, %v6938
    %v6960 = vpack.c.b16 %v6941, %v6940
    %v6961 = vpack.c.b16 %v6943, %v6942
    %v6962 = vpack.c.b16 %v6945, %v6944
    %v6963 = vpack.c.b16 %v6947, %v6946
    %6980 = vmatprep.subr.bf16.mxu0 0
    %6981 = vmatpush1.bf16.msra.mxu0 %v6948
    %6982 = vmatprep.subr.bf16.mxu0 0
    %6983 = vmatpush1.bf16.msra.mxu0 %v6949
    %6984 = vmatprep.subr.bf16.mxu0 0
    %6985 = vmatpush1.bf16.msra.mxu0 %v6950
    %6986 = vmatprep.subr.bf16.mxu0 0
    %6987 = vmatpush1.bf16.msra.mxu0 %v6951
    %6988 = vmatprep.subr.bf16.mxu0 0
    %6989 = vmatpush1.bf16.msra.mxu0 %v6952
    %6990 = vmatprep.subr.bf16.mxu0 0
    %6991 = vmatpush1.bf16.msra.mxu0 %v6953
    %6992 = vmatprep.subr.bf16.mxu0 0
    %6993 = vmatpush1.bf16.msra.mxu0 %v6954
    %6994 = vmatprep.subr.bf16.mxu0 0
    %6995 = vmatpush1.bf16.msra.mxu0 %v6955
    %6996 = vmatprep.subr.bf16.mxu0 0
    %6997 = vmatpush1.bf16.msra.mxu0 %v6956
    %6998 = vmatprep.subr.bf16.mxu0 0
    %6999 = vmatpush1.bf16.msra.mxu0 %v6957
    %7000 = vmatprep.subr.bf16.mxu0 0
    %7001 = vmatpush1.bf16.msra.mxu0 %v6958
    %7002 = vmatprep.subr.bf16.mxu0 0
    %7003 = vmatpush1.bf16.msra.mxu0 %v6959
    %7004 = vmatprep.subr.bf16.mxu0 0
    %7005 = vmatpush1.bf16.msra.mxu0 %v6960
    %7006 = vmatprep.subr.bf16.mxu0 0
    %7007 = vmatpush1.bf16.msra.mxu0 %v6961
    %7008 = vmatprep.subr.bf16.mxu0 0
    %7009 = vmatpush1.bf16.msra.mxu0 %v6962
    %7010 = vmatprep.subr.bf16.mxu0 0
    %7011 = vmatpush1.bf16.msra.mxu0 %v6963
    %7012 = vmatprep.mubr.bf16.mxu0 %v6634
    %7013 = vmatmul.mubr.bf16.gmra.mrb[0].mxu0 %v6633
    %v7014 = vpop.f32.mrb[0].mxu0
    %v7015 = vadd.f32 %v6879, %v7014
    %v7016 = vpop.f32.mrb[0].mxu0
    %v7017 = vpop.f32.mrb[0].mxu0
    %v7018 = vpop.f32.mrb[0].mxu0
    %7019 = vdwg.mxu0
    %s7020 = scalar_lea.vmem %s43, 2
    %v7021 = vld [vmem:[%s7020] sm:$0x1]
    %v7023 = vsel %vm6581, %v7021, 0
    %7025 = vmatprep.subr.bf16.mxu0 %v6590
    %7026 = vmatpush1.bf16.msra.mxu0 %v6587
    %7027 = vmatprep.subr.bf16.mxu0 0
    %7028 = vmatpush1.bf16.msra.mxu0 0
    %7029 = vmatprep.subr.bf16.mxu0 0
    %7030 = vmatpush1.bf16.msra.mxu0 0
    %7031 = vmatprep.subr.bf16.mxu0 0
    %7032 = vmatpush1.bf16.msra.mxu0 0
    %7033 = vmatprep.subr.bf16.mxu0 0
    %7034 = vmatpush1.bf16.msra.mxu0 0
    %7035 = vmatprep.subr.bf16.mxu0 0
    %7036 = vmatpush1.bf16.msra.mxu0 0
    %7037 = vmatprep.subr.bf16.mxu0 0
    %7038 = vmatpush1.bf16.msra.mxu0 0
    %7039 = vmatprep.subr.bf16.mxu0 0
    %7040 = vmatpush1.bf16.msra.mxu0 0
    %7041 = vmatprep.subr.bf16.mxu0 0
    %7042 = vmatpush1.bf16.msra.mxu0 0
    %7043 = vmatprep.subr.bf16.mxu0 0
    %7044 = vmatpush1.bf16.msra.mxu0 0
    %7045 = vmatprep.subr.bf16.mxu0 0
    %7046 = vmatpush1.bf16.msra.mxu0 0
    %7047 = vmatprep.subr.bf16.mxu0 0
    %7048 = vmatpush1.bf16.msra.mxu0 0
    %7049 = vmatprep.subr.bf16.mxu0 0
    %7050 = vmatpush1.bf16.msra.mxu0 0
    %7051 = vmatprep.subr.bf16.mxu0 0
    %7052 = vmatpush1.bf16.msra.mxu0 0
    %7053 = vmatprep.subr.bf16.mxu0 0
    %7054 = vmatpush1.bf16.msra.mxu0 0
    %7055 = vmatprep.subr.bf16.mxu0 0
    %7056 = vmatpush1.bf16.msra.mxu0 0
    %7057 = vmatprep.mubr.bf16.mxu0 0
    %7058 = vmatmul.mubr.bf16.gmra.mrb[0].mxu0 %v7023
    %v7059 = vpop.f32.mrb[0].mxu0
    %v7060 = vadd.f32 0.0, %v7059
    %v7061 = vpop.f32.mrb[0].mxu0
    %v7062 = vadd.f32 0.0, %v7061
    %v7063 = vpop.f32.mrb[0].mxu0
    %v7064 = vpop.f32.mrb[0].mxu0
    %7065 = vdwg.mxu0
    %v7066 = vpack.c.bf16 %v7060, %v7060
    %v7067 = vpack.c.bf16 %v7062, %v7062
    %s7068 = scalar_lea.vmem %s45, 256
    %v7069 = vld [vmem:[%s7068] sm:$0xf]
    %v7070 = vld [vmem:[%s7068 + $0x4] sm:$0xf]
    %v7071 = vld [vmem:[%s7068 + $0x8] sm:$0xf]
    %v7072 = vld [vmem:[%s7068 + $0xc] sm:$0xf]
    %v7073 = vld [vmem:[%s7068 + $0x10] sm:$0xf]
    %v7074 = vld [vmem:[%s7068 + $0x14] sm:$0xf]
    %v7075 = vld [vmem:[%s7068 + $0x18] sm:$0xf]
    %v7076 = vld [vmem:[%s7068 + $0x1c] sm:$0xf]
    %v7077 = vld [vmem:[%s7068 + $0x20] sm:$0xf]
    %v7078 = vld [vmem:[%s7068 + $0x24] sm:$0xf]
    %v7079 = vld [vmem:[%s7068 + $0x28] sm:$0xf]
    %v7080 = vld [vmem:[%s7068 + $0x2c] sm:$0xf]
    %v7081 = vld [vmem:[%s7068 + $0x30] sm:$0xf]
    %v7082 = vld [vmem:[%s7068 + $0x34] sm:$0xf]
    %v7083 = vld [vmem:[%s7068 + $0x38] sm:$0xf]
    %v7084 = vld [vmem:[%s7068 + $0x3c] sm:$0xf]
    %v7085 = vld [vmem:[%s7068 + $0x40] sm:$0xf]
    %v7086 = vld [vmem:[%s7068 + $0x44] sm:$0xf]
    %v7087 = vld [vmem:[%s7068 + $0x48] sm:$0xf]
    %v7088 = vld [vmem:[%s7068 + $0x4c] sm:$0xf]
    %v7089 = vld [vmem:[%s7068 + $0x50] sm:$0xf]
    %v7090 = vld [vmem:[%s7068 + $0x54] sm:$0xf]
    %v7091 = vld [vmem:[%s7068 + $0x58] sm:$0xf]
    %v7092 = vld [vmem:[%s7068 + $0x5c] sm:$0xf]
    %v7093 = vld [vmem:[%s7068 + $0x60] sm:$0xf]
    %v7094 = vld [vmem:[%s7068 + $0x64] sm:$0xf]
    %v7095 = vld [vmem:[%s7068 + $0x68] sm:$0xf]
    %v7096 = vld [vmem:[%s7068 + $0x6c] sm:$0xf]
    %v7097 = vld [vmem:[%s7068 + $0x70] sm:$0xf]
    %v7098 = vld [vmem:[%s7068 + $0x74] sm:$0xf]
    %v7099 = vld [vmem:[%s7068 + $0x78] sm:$0xf]
    %v7100 = vld [vmem:[%s7068 + $0x7c] sm:$0xf]
    %v7133 = vunpack.c.l.b16 %v7069
    %v7134 = vunpack.c.l.b16 %v7070
    %v7135 = vunpack.c.l.b16 %v7071
    %v7136 = vunpack.c.l.b16 %v7072
    %v7137 = vunpack.c.l.b16 %v7073
    %v7138 = vunpack.c.l.b16 %v7074
    %v7139 = vunpack.c.l.b16 %v7075
    %v7140 = vunpack.c.l.b16 %v7076
    %v7141 = vunpack.c.l.b16 %v7077
    %v7142 = vunpack.c.l.b16 %v7078
    %v7143 = vunpack.c.l.b16 %v7079
    %v7144 = vunpack.c.l.b16 %v7080
    %v7145 = vunpack.c.l.b16 %v7081
    %v7146 = vunpack.c.l.b16 %v7082
    %v7147 = vunpack.c.l.b16 %v7083
    %v7148 = vunpack.c.l.b16 %v7084
    %v7149 = vunpack.c.l.b16 %v7085
    %v7150 = vunpack.c.l.b16 %v7086
    %v7151 = vunpack.c.l.b16 %v7087
    %v7152 = vunpack.c.l.b16 %v7088
    %v7153 = vunpack.c.l.b16 %v7089
    %v7154 = vunpack.c.l.b16 %v7090
    %v7155 = vunpack.c.l.b16 %v7091
    %v7156 = vunpack.c.l.b16 %v7092
    %v7157 = vunpack.c.l.b16 %v7093
    %v7158 = vunpack.c.l.b16 %v7094
    %v7159 = vunpack.c.l.b16 %v7095
    %v7160 = vunpack.c.l.b16 %v7096
    %v7161 = vunpack.c.l.b16 %v7097
    %v7162 = vunpack.c.l.b16 %v7098
    %v7163 = vunpack.c.l.b16 %v7099
    %v7164 = vunpack.c.l.b16 %v7100
    %v7165 = vpack.c.b16 %v7134, %v7133
    %v7166 = vpack.c.b16 %v7136, %v7135
    %v7167 = vpack.c.b16 %v7138, %v7137
    %v7168 = vpack.c.b16 %v7140, %v7139
    %v7169 = vpack.c.b16 %v7142, %v7141
    %v7170 = vpack.c.b16 %v7144, %v7143
    %v7171 = vpack.c.b16 %v7146, %v7145
    %v7172 = vpack.c.b16 %v7148, %v7147
    %v7173 = vpack.c.b16 %v7150, %v7149
    %v7174 = vpack.c.b16 %v7152, %v7151
    %v7175 = vpack.c.b16 %v7154, %v7153
    %v7176 = vpack.c.b16 %v7156, %v7155
    %v7177 = vpack.c.b16 %v7158, %v7157
    %v7178 = vpack.c.b16 %v7160, %v7159
    %v7179 = vpack.c.b16 %v7162, %v7161
    %v7180 = vpack.c.b16 %v7164, %v7163
    %7197 = vmatprep.subr.bf16.mxu0 0
    %7198 = vmatpush1.bf16.msra.mxu0 %v7165
    %7199 = vmatprep.subr.bf16.mxu0 0
    %7200 = vmatpush1.bf16.msra.mxu0 %v7166
    %7201 = vmatprep.subr.bf16.mxu0 0
    %7202 = vmatpush1.bf16.msra.mxu0 %v7167
    %7203 = vmatprep.subr.bf16.mxu0 0
    %7204 = vmatpush1.bf16.msra.mxu0 %v7168
    %7205 = vmatprep.subr.bf16.mxu0 0
    %7206 = vmatpush1.bf16.msra.mxu0 %v7169
    %7207 = vmatprep.subr.bf16.mxu0 0
    %7208 = vmatpush1.bf16.msra.mxu0 %v7170
    %7209 = vmatprep.subr.bf16.mxu0 0
    %7210 = vmatpush1.bf16.msra.mxu0 %v7171
    %7211 = vmatprep.subr.bf16.mxu0 0
    %7212 = vmatpush1.bf16.msra.mxu0 %v7172
    %7213 = vmatprep.subr.bf16.mxu0 0
    %7214 = vmatpush1.bf16.msra.mxu0 %v7173
    %7215 = vmatprep.subr.bf16.mxu0 0
    %7216 = vmatpush1.bf16.msra.mxu0 %v7174
    %7217 = vmatprep.subr.bf16.mxu0 0
    %7218 = vmatpush1.bf16.msra.mxu0 %v7175
    %7219 = vmatprep.subr.bf16.mxu0 0
    %7220 = vmatpush1.bf16.msra.mxu0 %v7176
    %7221 = vmatprep.subr.bf16.mxu0 0
    %7222 = vmatpush1.bf16.msra.mxu0 %v7177
    %7223 = vmatprep.subr.bf16.mxu0 0
    %7224 = vmatpush1.bf16.msra.mxu0 %v7178
    %7225 = vmatprep.subr.bf16.mxu0 0
    %7226 = vmatpush1.bf16.msra.mxu0 %v7179
    %7227 = vmatprep.subr.bf16.mxu0 0
    %7228 = vmatpush1.bf16.msra.mxu0 %v7180
    %7229 = vmatprep.mubr.bf16.mxu0 %v7067
    %7230 = vmatmul.mubr.bf16.gmra.mrb[0].mxu0 %v7066
    %v7231 = vpop.f32.mrb[0].mxu0
    %v7232 = vadd.f32 0.0, %v7231
    %v7233 = vpop.f32.mrb[0].mxu0
    %v7234 = vpop.f32.mrb[0].mxu0
    %v7235 = vpop.f32.mrb[0].mxu0
    %7236 = vdwg.mxu0
    %v7237 = vadd.f32 %v7015, %v7232
    %s7238 = scalar_lea.vmem %s43, 3
    %v7239 = vld [vmem:[%s7238] sm:$0x1]
    %v7241 = vsel %vm6581, %v7239, 0
    %7243 = vmatprep.subr.bf16.mxu0 %v6590
    %7244 = vmatpush1.bf16.msra.mxu0 %v6587
    %7245 = vmatprep.subr.bf16.mxu0 0
    %7246 = vmatpush1.bf16.msra.mxu0 0
    %7247 = vmatprep.subr.bf16.mxu0 0
    %7248 = vmatpush1.bf16.msra.mxu0 0
    %7249 = vmatprep.subr.bf16.mxu0 0
    %7250 = vmatpush1.bf16.msra.mxu0 0
    %7251 = vmatprep.subr.bf16.mxu0 0
    %7252 = vmatpush1.bf16.msra.mxu0 0
    %7253 = vmatprep.subr.bf16.mxu0 0
    %7254 = vmatpush1.bf16.msra.mxu0 0
    %7255 = vmatprep.subr.bf16.mxu0 0
    %7256 = vmatpush1.bf16.msra.mxu0 0
    %7257 = vmatprep.subr.bf16.mxu0 0
    %7258 = vmatpush1.bf16.msra.mxu0 0
    %7259 = vmatprep.subr.bf16.mxu0 0
    %7260 = vmatpush1.bf16.msra.mxu0 0
    %7261 = vmatprep.subr.bf16.mxu0 0
    %7262 = vmatpush1.bf16.msra.mxu0 0
    %7263 = vmatprep.subr.bf16.mxu0 0
    %7264 = vmatpush1.bf16.msra.mxu0 0
    %7265 = vmatprep.subr.bf16.mxu0 0
    %7266 = vmatpush1.bf16.msra.mxu0 0
    %7267 = vmatprep.subr.bf16.mxu0 0
    %7268 = vmatpush1.bf16.msra.mxu0 0
    %7269 = vmatprep.subr.bf16.mxu0 0
    %7270 = vmatpush1.bf16.msra.mxu0 0
    %7271 = vmatprep.subr.bf16.mxu0 0
    %7272 = vmatpush1.bf16.msra.mxu0 0
    %7273 = vmatprep.subr.bf16.mxu0 0
    %7274 = vmatpush1.bf16.msra.mxu0 0
    %7275 = vmatprep.mubr.bf16.mxu0 0
    %7276 = vmatmul.mubr.bf16.gmra.mrb[0].mxu0 %v7241
    %v7277 = vpop.f32.mrb[0].mxu0
    %v7278 = vadd.f32 0.0, %v7277
    %v7279 = vpop.f32.mrb[0].mxu0
    %v7280 = vadd.f32 0.0, %v7279
    %v7281 = vpop.f32.mrb[0].mxu0
    %v7282 = vpop.f32.mrb[0].mxu0
    %7283 = vdwg.mxu0
    %v7284 = vpack.c.bf16 %v7278, %v7278
    %v7285 = vpack.c.bf16 %v7280, %v7280
    %s7286 = scalar_lea.vmem %s45, 384
    %v7287 = vld [vmem:[%s7286] sm:$0xf]
    %v7288 = vld [vmem:[%s7286 + $0x4] sm:$0xf]
    %v7289 = vld [vmem:[%s7286 + $0x8] sm:$0xf]
    %v7290 = vld [vmem:[%s7286 + $0xc] sm:$0xf]
    %v7291 = vld [vmem:[%s7286 + $0x10] sm:$0xf]
    %v7292 = vld [vmem:[%s7286 + $0x14] sm:$0xf]
    %v7293 = vld [vmem:[%s7286 + $0x18] sm:$0xf]
    %v7294 = vld [vmem:[%s7286 + $0x1c] sm:$0xf]
    %v7295 = vld [vmem:[%s7286 + $0x20] sm:$0xf]
    %v7296 = vld [vmem:[%s7286 + $0x24] sm:$0xf]
    %v7297 = vld [vmem:[%s7286 + $0x28] sm:$0xf]
    %v7298 = vld [vmem:[%s7286 + $0x2c] sm:$0xf]
    %v7299 = vld [vmem:[%s7286 + $0x30] sm:$0xf]
    %v7300 = vld [vmem:[%s7286 + $0x34] sm:$0xf]
    %v7301 = vld [vmem:[%s7286 + $0x38] sm:$0xf]
    %v7302 = vld [vmem:[%s7286 + $0x3c] sm:$0xf]
    %v7303 = vld [vmem:[%s7286 + $0x40] sm:$0xf]
    %v7304 = vld [vmem:[%s7286 + $0x44] sm:$0xf]
    %v7305 = vld [vmem:[%s7286 + $0x48] sm:$0xf]
    %v7306 = vld [vmem:[%s7286 + $0x4c] sm:$0xf]
    %v7307 = vld [vmem:[%s7286 + $0x50] sm:$0xf]
    %v7308 = vld [vmem:[%s7286 + $0x54] sm:$0xf]
    %v7309 = vld [vmem:[%s7286 + $0x58] sm:$0xf]
    %v7310 = vld [vmem:[%s7286 + $0x5c] sm:$0xf]
    %v7311 = vld [vmem:[%s7286 + $0x60] sm:$0xf]
    %v7312 = vld [vmem:[%s7286 + $0x64] sm:$0xf]
    %v7313 = vld [vmem:[%s7286 + $0x68] sm:$0xf]
    %v7314 = vld [vmem:[%s7286 + $0x6c] sm:$0xf]
    %v7315 = vld [vmem:[%s7286 + $0x70] sm:$0xf]
    %v7316 = vld [vmem:[%s7286 + $0x74] sm:$0xf]
    %v7317 = vld [vmem:[%s7286 + $0x78] sm:$0xf]
    %v7318 = vld [vmem:[%s7286 + $0x7c] sm:$0xf]
    %v7351 = vunpack.c.l.b16 %v7287
    %v7352 = vunpack.c.l.b16 %v7288
    %v7353 = vunpack.c.l.b16 %v7289
    %v7354 = vunpack.c.l.b16 %v7290
    %v7355 = vunpack.c.l.b16 %v7291
    %v7356 = vunpack.c.l.b16 %v7292
    %v7357 = vunpack.c.l.b16 %v7293
    %v7358 = vunpack.c.l.b16 %v7294
    %v7359 = vunpack.c.l.b16 %v7295
    %v7360 = vunpack.c.l.b16 %v7296
    %v7361 = vunpack.c.l.b16 %v7297
    %v7362 = vunpack.c.l.b16 %v7298
    %v7363 = vunpack.c.l.b16 %v7299
    %v7364 = vunpack.c.l.b16 %v7300
    %v7365 = vunpack.c.l.b16 %v7301
    %v7366 = vunpack.c.l.b16 %v7302
    %v7367 = vunpack.c.l.b16 %v7303
    %v7368 = vunpack.c.l.b16 %v7304
    %v7369 = vunpack.c.l.b16 %v7305
    %v7370 = vunpack.c.l.b16 %v7306
    %v7371 = vunpack.c.l.b16 %v7307
    %v7372 = vunpack.c.l.b16 %v7308
    %v7373 = vunpack.c.l.b16 %v7309
    %v7374 = vunpack.c.l.b16 %v7310
    %v7375 = vunpack.c.l.b16 %v7311
    %v7376 = vunpack.c.l.b16 %v7312
    %v7377 = vunpack.c.l.b16 %v7313
    %v7378 = vunpack.c.l.b16 %v7314
    %v7379 = vunpack.c.l.b16 %v7315
    %v7380 = vunpack.c.l.b16 %v7316
    %v7381 = vunpack.c.l.b16 %v7317
    %v7382 = vunpack.c.l.b16 %v7318
    %v7383 = vpack.c.b16 %v7352, %v7351
    %v7384 = vpack.c.b16 %v7354, %v7353
    %v7385 = vpack.c.b16 %v7356, %v7355
    %v7386 = vpack.c.b16 %v7358, %v7357
    %v7387 = vpack.c.b16 %v7360, %v7359
    %v7388 = vpack.c.b16 %v7362, %v7361
    %v7389 = vpack.c.b16 %v7364, %v7363
    %v7390 = vpack.c.b16 %v7366, %v7365
    %v7391 = vpack.c.b16 %v7368, %v7367
    %v7392 = vpack.c.b16 %v7370, %v7369
    %v7393 = vpack.c.b16 %v7372, %v7371
    %v7394 = vpack.c.b16 %v7374, %v7373
    %v7395 = vpack.c.b16 %v7376, %v7375
    %v7396 = vpack.c.b16 %v7378, %v7377
    %v7397 = vpack.c.b16 %v7380, %v7379
    %v7398 = vpack.c.b16 %v7382, %v7381
    %7415 = vmatprep.subr.bf16.mxu0 0
    %7416 = vmatpush1.bf16.msra.mxu0 %v7383
    %7417 = vmatprep.subr.bf16.mxu0 0
    %7418 = vmatpush1.bf16.msra.mxu0 %v7384
    %7419 = vmatprep.subr.bf16.mxu0 0
    %7420 = vmatpush1.bf16.msra.mxu0 %v7385
    %7421 = vmatprep.subr.bf16.mxu0 0
    %7422 = vmatpush1.bf16.msra.mxu0 %v7386
    %7423 = vmatprep.subr.bf16.mxu0 0
    %7424 = vmatpush1.bf16.msra.mxu0 %v7387
    %7425 = vmatprep.subr.bf16.mxu0 0
    %7426 = vmatpush1.bf16.msra.mxu0 %v7388
    %7427 = vmatprep.subr.bf16.mxu0 0
    %7428 = vmatpush1.bf16.msra.mxu0 %v7389
    %7429 = vmatprep.subr.bf16.mxu0 0
    %7430 = vmatpush1.bf16.msra.mxu0 %v7390
    %7431 = vmatprep.subr.bf16.mxu0 0
    %7432 = vmatpush1.bf16.msra.mxu0 %v7391
    %7433 = vmatprep.subr.bf16.mxu0 0
    %7434 = vmatpush1.bf16.msra.mxu0 %v7392
    %7435 = vmatprep.subr.bf16.mxu0 0
    %7436 = vmatpush1.bf16.msra.mxu0 %v7393
    %7437 = vmatprep.subr.bf16.mxu0 0
    %7438 = vmatpush1.bf16.msra.mxu0 %v7394
    %7439 = vmatprep.subr.bf16.mxu0 0
    %7440 = vmatpush1.bf16.msra.mxu0 %v7395
    %7441 = vmatprep.subr.bf16.mxu0 0
    %7442 = vmatpush1.bf16.msra.mxu0 %v7396
    %7443 = vmatprep.subr.bf16.mxu0 0
    %7444 = vmatpush1.bf16.msra.mxu0 %v7397
    %7445 = vmatprep.subr.bf16.mxu0 0
    %7446 = vmatpush1.bf16.msra.mxu0 %v7398
    %7447 = vmatprep.mubr.bf16.mxu0 %v7285
    %7448 = vmatmul.mubr.bf16.gmra.mrb[0].mxu0 %v7284
    %v7449 = vpop.f32.mrb[0].mxu0
    %v7450 = vadd.f32 0.0, %v7449
    %v7451 = vpop.f32.mrb[0].mxu0
    %v7452 = vpop.f32.mrb[0].mxu0
    %v7453 = vpop.f32.mrb[0].mxu0
    %7454 = vdwg.mxu0
    %v7455 = vadd.f32 %v7237, %v7450
    %v7456 = vld [vmem:[%s47] sm:$0x1]
    %v7458 = vlaneseq
    %v7459 = vshrl.u32 %v7458, 7
    %v7460 = vsub.s32 0, %v7459
    %v7461 = vrot.slane %v7456, %v7460
    %v7463 = vadd.f32 %v7455, %v7461
    %vm7464 = vcmask 123904
    %7465 = vst.msk [vmem:[#allocation2] sm:$0x3] %vm7464, %v7463
    %v7466 = vld [vmem:[%s61] sm:$0x3]
    %v7467 = vld [vmem:[%s63] sm:$0x3]
    %v7468 = vpack.c.bf16 %v7463, %v7463
    %v7469 = vld [vmem:[%s49] sm:$0xf]
    %v7470 = vld [vmem:[%s49 + $0x4] sm:$0xf]
    %v7471 = vpack.c.bf16 %v7466, %v7466
    %v7472 = vld [vmem:[%s51] sm:$0xf]
    %v7473 = vld [vmem:[%s51 + $0x4] sm:$0xf]
    %v7474 = vld [vmem:[%s51 + $0x8] sm:$0xf]
    %v7475 = vld [vmem:[%s51 + $0xc] sm:$0xf]
    %v7480 = vunpack.c.l.b16 %v7472
    %v7481 = vunpack.c.l.b16 %v7473
    %v7482 = vunpack.c.l.b16 %v7474
    %v7483 = vunpack.c.l.b16 %v7475
    %v7484 = vpack.c.b16 %v7481, %v7480
    %v7485 = vpack.c.b16 %v7483, %v7482
    %v7489 = vsel %vm3470, %v7471, 0
    %7491 = vmatprep.subr.bf16.mxu0 0
    %7492 = vmatpush1.bf16.msra.mxu0 %v7484
    %7493 = vmatprep.subr.bf16.mxu0 0
    %7494 = vmatpush1.bf16.msra.mxu0 %v7485
    %7495 = vmatprep.subr.bf16.mxu0 0
    %7496 = vmatpush1.bf16.msra.mxu0 0
    %7497 = vmatprep.subr.bf16.mxu0 0
    %7498 = vmatpush1.bf16.msra.mxu0 0
    %7499 = vmatprep.subr.bf16.mxu0 0
    %7500 = vmatpush1.bf16.msra.mxu0 0
    %7501 = vmatprep.subr.bf16.mxu0 0
    %7502 = vmatpush1.bf16.msra.mxu0 0
    %7503 = vmatprep.subr.bf16.mxu0 0
    %7504 = vmatpush1.bf16.msra.mxu0 0
    %7505 = vmatprep.subr.bf16.mxu0 0
    %7506 = vmatpush1.bf16.msra.mxu0 0
    %7507 = vmatprep.subr.bf16.mxu0 0
    %7508 = vmatpush1.bf16.msra.mxu0 0
    %7509 = vmatprep.subr.bf16.mxu0 0
    %7510 = vmatpush1.bf16.msra.mxu0 0
    %7511 = vmatprep.subr.bf16.mxu0 0
    %7512 = vmatpush1.bf16.msra.mxu0 0
    %7513 = vmatprep.subr.bf16.mxu0 0
    %7514 = vmatpush1.bf16.msra.mxu0 0
    %7515 = vmatprep.subr.bf16.mxu0 0
    %7516 = vmatpush1.bf16.msra.mxu0 0
    %7517 = vmatprep.subr.bf16.mxu0 0
    %7518 = vmatpush1.bf16.msra.mxu0 0
    %7519 = vmatprep.subr.bf16.mxu0 0
    %7520 = vmatpush1.bf16.msra.mxu0 0
    %7521 = vmatprep.subr.bf16.mxu0 0
    %7522 = vmatpush1.bf16.msra.mxu0 0
    %7523 = vmatprep.mubr.bf16.mxu0 0
    %7524 = vmatmul.mubr.bf16.gmra.mrb[0].mxu0 %v7489
    %v7525 = vpop.f32.mrb[0].mxu0
    %v7526 = vadd.f32 0.0, %v7525
    %v7527 = vpop.f32.mrb[0].mxu0
    %v7528 = vpop.f32.mrb[0].mxu0
    %v7529 = vpop.f32.mrb[0].mxu0
    %7530 = vdwg.mxu0
    %v7533 = vunpack.c.l.b16 %v7469
    %v7534 = vunpack.c.l.b16 %v7470
    %v7535 = vpack.c.b16 %v7534, %v7533
    %v7538 = vsel %vm3254, %v7468, 0
    %7540 = vmatprep.subr.bf16.mxu0 0
    %7541 = vmatpush1.bf16.msra.mxu0 %v7535
    %7542 = vmatprep.subr.bf16.mxu0 0
    %7543 = vmatpush1.bf16.msra.mxu0 0
    %7544 = vmatprep.subr.bf16.mxu0 0
    %7545 = vmatpush1.bf16.msra.mxu0 0
    %7546 = vmatprep.subr.bf16.mxu0 0
    %7547 = vmatpush1.bf16.msra.mxu0 0
    %7548 = vmatprep.subr.bf16.mxu0 0
    %7549 = vmatpush1.bf16.msra.mxu0 0
    %7550 = vmatprep.subr.bf16.mxu0 0
    %7551 = vmatpush1.bf16.msra.mxu0 0
    %7552 = vmatprep.subr.bf16.mxu0 0
    %7553 = vmatpush1.bf16.msra.mxu0 0
    %7554 = vmatprep.subr.bf16.mxu0 0
    %7555 = vmatpush1.bf16.msra.mxu0 0
    %7556 = vmatprep.subr.bf16.mxu0 0
    %7557 = vmatpush1.bf16.msra.mxu0 0
    %7558 = vmatprep.subr.bf16.mxu0 0
    %7559 = vmatpush1.bf16.msra.mxu0 0
    %7560 = vmatprep.subr.bf16.mxu0 0
    %7561 = vmatpush1.bf16.msra.mxu0 0
    %7562 = vmatprep.subr.bf16.mxu0 0
    %7563 = vmatpush1.bf16.msra.mxu0 0
    %7564 = vmatprep.subr.bf16.mxu0 0
    %7565 = vmatpush1.bf16.msra.mxu0 0
    %7566 = vmatprep.subr.bf16.mxu0 0
    %7567 = vmatpush1.bf16.msra.mxu0 0
    %7568 = vmatprep.subr.bf16.mxu0 0
    %7569 = vmatpush1.bf16.msra.mxu0 0
    %7570 = vmatprep.subr.bf16.mxu0 0
    %7571 = vmatpush1.bf16.msra.mxu0 0
    %7572 = vmatprep.mubr.bf16.mxu0 0
    %7573 = vmatmul.mubr.bf16.gmra.mrb[0].mxu0 %v7538
    %v7574 = vpop.f32.mrb[0].mxu0
    %v7575 = vadd.f32 %v7526, %v7574
    %v7576 = vpop.f32.mrb[0].mxu0
    %v7577 = vpop.f32.mrb[0].mxu0
    %v7578 = vpop.f32.mrb[0].mxu0
    %7579 = vdwg.mxu0
    %v7580 = vld [vmem:[%s53] sm:$0x1]
    %v7582 = vlaneseq
    %v7583 = vshrl.u32 %v7582, 7
    %v7584 = vsub.s32 0, %v7583
    %v7585 = vrot.slane %v7580, %v7584
    %v7587 = vadd.f32 %v7575, %v7585
    %v7588 = vxor.u32 %v7587, 2147483648
    %v7589 = vmul.f32 %v7588, 1.442695
    %v7590 = vpow.pop %v7589
    %v7591 = vadd.f32 %v7590, 1.0
    %v7592 = vrcp.pop %v7591
    %v7593 = vmul.f32 1.0, %v7592
    %v7594 = vtanh.pop %v7587
    %7596 = vrot.lane.b32.xlu0 %v7467, 32
    %v7597 = vpop.permute.xlu0 %7596
    %v7599 = vmul.f32 %v7593, %v7597
    %7601 = vrot.lane.b32.xlu0 %v7594, 32
    %v7602 = vpop.permute.xlu0 %7601
    %v7604 = vmul.f32 %v7593, %v7602
    %7606 = vrot.lane.b32.xlu0 %v7604, 32
    %v7607 = vpop.permute.xlu0 %7606
    %v7609 = vadd.f32 %v7599, %v7607
    %v7610 = vtanh.pop %v7609
    %7612 = vrot.lane.b32.xlu0 %v7610, 32
    %v7613 = vpop.permute.xlu0 %7612
    %v7615 = vmul.f32 %v7593, %v7613
    %7617 = vrot.lane.b32.xlu0 %v7615, 64
    %v7618 = vpop.permute.xlu0 %7617
    %vm7620 = vcmask 254976
    %7621 = vst.msk [vmem:[#allocation6] sm:$0x3] %vm7620, %v7618
    %7623 = vrot.lane.b32.xlu0 %v7609, 96
    %v7624 = vpop.permute.xlu0 %7623
    %7626 = vst.msk [vmem:[#allocation7] sm:$0x3] %vm7620, %v7624
    %s7627 = scalar_lea.vmem %s61, 2
    %v7628 = vld [vmem:[%s7627] sm:$0x3]
    %s7629 = scalar_lea.vmem %s63, 2
    %v7630 = vld [vmem:[%s7629] sm:$0x3]
    %v7631 = vpack.c.bf16 %v7615, %v7615
    %v7632 = vld [vmem:[%s55] sm:$0xf]
    %v7633 = vld [vmem:[%s55 + $0x4] sm:$0xf]
    %v7634 = vld [vmem:[%s55 + $0x8] sm:$0xf]
    %v7635 = vld [vmem:[%s55 + $0xc] sm:$0xf]
    %v7636 = vpack.c.bf16 %v7628, %v7628
    %v7637 = vld [vmem:[%s57] sm:$0xf]
    %v7638 = vld [vmem:[%s57 + $0x4] sm:$0xf]
    %v7639 = vld [vmem:[%s57 + $0x8] sm:$0xf]
    %v7640 = vld [vmem:[%s57 + $0xc] sm:$0xf]
    %v7645 = vunpack.c.l.b16 %v7637
    %v7646 = vunpack.c.l.b16 %v7638
    %v7647 = vunpack.c.l.b16 %v7639
    %v7648 = vunpack.c.l.b16 %v7640
    %v7649 = vpack.c.b16 %v7646, %v7645
    %v7650 = vpack.c.b16 %v7648, %v7647
    %v7654 = vsel %vm3470, %v7636, 0
    %7656 = vmatprep.subr.bf16.mxu0 0
    %7657 = vmatpush1.bf16.msra.mxu0 %v7649
    %7658 = vmatprep.subr.bf16.mxu0 0
    %7659 = vmatpush1.bf16.msra.mxu0 %v7650
    %7660 = vmatprep.subr.bf16.mxu0 0
    %7661 = vmatpush1.bf16.msra.mxu0 0
    %7662 = vmatprep.subr.bf16.mxu0 0
    %7663 = vmatpush1.bf16.msra.mxu0 0
    %7664 = vmatprep.subr.bf16.mxu0 0
    %7665 = vmatpush1.bf16.msra.mxu0 0
    %7666 = vmatprep.subr.bf16.mxu0 0
    %7667 = vmatpush1.bf16.msra.mxu0 0
    %7668 = vmatprep.subr.bf16.mxu0 0
    %7669 = vmatpush1.bf16.msra.mxu0 0
    %7670 = vmatprep.subr.bf16.mxu0 0
    %7671 = vmatpush1.bf16.msra.mxu0 0
    %7672 = vmatprep.subr.bf16.mxu0 0
    %7673 = vmatpush1.bf16.msra.mxu0 0
    %7674 = vmatprep.subr.bf16.mxu0 0
    %7675 = vmatpush1.bf16.msra.mxu0 0
    %7676 = vmatprep.subr.bf16.mxu0 0
    %7677 = vmatpush1.bf16.msra.mxu0 0
    %7678 = vmatprep.subr.bf16.mxu0 0
    %7679 = vmatpush1.bf16.msra.mxu0 0
    %7680 = vmatprep.subr.bf16.mxu0 0
    %7681 = vmatpush1.bf16.msra.mxu0 0
    %7682 = vmatprep.subr.bf16.mxu0 0
    %7683 = vmatpush1.bf16.msra.mxu0 0
    %7684 = vmatprep.subr.bf16.mxu0 0
    %7685 = vmatpush1.bf16.msra.mxu0 0
    %7686 = vmatprep.subr.bf16.mxu0 0
    %7687 = vmatpush1.bf16.msra.mxu0 0
    %7688 = vmatprep.mubr.bf16.mxu0 0
    %7689 = vmatmul.mubr.bf16.gmra.mrb[0].mxu0 %v7654
    %v7690 = vpop.f32.mrb[0].mxu0
    %v7691 = vadd.f32 0.0, %v7690
    %v7692 = vpop.f32.mrb[0].mxu0
    %v7693 = vpop.f32.mrb[0].mxu0
    %v7694 = vpop.f32.mrb[0].mxu0
    %7695 = vdwg.mxu0
    %7697 = vrot.lane.b32.xlu0 %v7631, 64
    %v7698 = vpop.permute.xlu0 %7697
    %v7703 = vunpack.c.l.b16 %v7632
    %v7704 = vunpack.c.l.b16 %v7633
    %v7705 = vunpack.c.l.b16 %v7634
    %v7706 = vunpack.c.l.b16 %v7635
    %v7707 = vpack.c.b16 %v7704, %v7703
    %v7708 = vpack.c.b16 %v7706, %v7705
    %v7712 = vsel %vm3470, %v7698, 0
    %7714 = vmatprep.subr.bf16.mxu0 0
    %7715 = vmatpush1.bf16.msra.mxu0 %v7707
    %7716 = vmatprep.subr.bf16.mxu0 0
    %7717 = vmatpush1.bf16.msra.mxu0 %v7708
    %7718 = vmatprep.subr.bf16.mxu0 0
    %7719 = vmatpush1.bf16.msra.mxu0 0
    %7720 = vmatprep.subr.bf16.mxu0 0
    %7721 = vmatpush1.bf16.msra.mxu0 0
    %7722 = vmatprep.subr.bf16.mxu0 0
    %7723 = vmatpush1.bf16.msra.mxu0 0
    %7724 = vmatprep.subr.bf16.mxu0 0
    %7725 = vmatpush1.bf16.msra.mxu0 0
    %7726 = vmatprep.subr.bf16.mxu0 0
    %7727 = vmatpush1.bf16.msra.mxu0 0
    %7728 = vmatprep.subr.bf16.mxu0 0
    %7729 = vmatpush1.bf16.msra.mxu0 0
    %7730 = vmatprep.subr.bf16.mxu0 0
    %7731 = vmatpush1.bf16.msra.mxu0 0
    %7732 = vmatprep.subr.bf16.mxu0 0
    %7733 = vmatpush1.bf16.msra.mxu0 0
    %7734 = vmatprep.subr.bf16.mxu0 0
    %7735 = vmatpush1.bf16.msra.mxu0 0
    %7736 = vmatprep.subr.bf16.mxu0 0
    %7737 = vmatpush1.bf16.msra.mxu0 0
    %7738 = vmatprep.subr.bf16.mxu0 0
    %7739 = vmatpush1.bf16.msra.mxu0 0
    %7740 = vmatprep.subr.bf16.mxu0 0
    %7741 = vmatpush1.bf16.msra.mxu0 0
    %7742 = vmatprep.subr.bf16.mxu0 0
    %7743 = vmatpush1.bf16.msra.mxu0 0
    %7744 = vmatprep.subr.bf16.mxu0 0
    %7745 = vmatpush1.bf16.msra.mxu0 0
    %7746 = vmatprep.mubr.bf16.mxu0 0
    %7747 = vmatmul.mubr.bf16.gmra.mrb[0].mxu0 %v7712
    %v7748 = vpop.f32.mrb[0].mxu0
    %v7749 = vadd.f32 %v7691, %v7748
    %v7750 = vpop.f32.mrb[0].mxu0
    %v7751 = vpop.f32.mrb[0].mxu0
    %v7752 = vpop.f32.mrb[0].mxu0
    %7753 = vdwg.mxu0
    %v7754 = vld [vmem:[%s59] sm:$0x1]
    %v7756 = vlaneseq
    %v7757 = vshrl.u32 %v7756, 7
    %v7758 = vsub.s32 0, %v7757
    %v7759 = vrot.slane %v7754, %v7758
    %v7761 = vadd.f32 %v7749, %v7759
    %v7762 = vxor.u32 %v7761, 2147483648
    %v7763 = vmul.f32 %v7762, 1.442695
    %v7764 = vpow.pop %v7763
    %v7765 = vadd.f32 %v7764, 1.0
    %v7766 = vrcp.pop %v7765
    %v7767 = vmul.f32 1.0, %v7766
    %v7768 = vtanh.pop %v7761
    %7770 = vrot.lane.b32.xlu0 %v7630, 32
    %v7771 = vpop.permute.xlu0 %7770
    %v7773 = vmul.f32 %v7767, %v7771
    %7775 = vrot.lane.b32.xlu0 %v7768, 32
    %v7776 = vpop.permute.xlu0 %7775
    %v7778 = vmul.f32 %v7767, %v7776
    %7780 = vrot.lane.b32.xlu0 %v7778, 32
    %v7781 = vpop.permute.xlu0 %7780
    %v7783 = vadd.f32 %v7773, %v7781
    %v7784 = vtanh.pop %v7783
    %7786 = vrot.lane.b32.xlu0 %v7784, 32
    %v7787 = vpop.permute.xlu0 %7786
    %v7789 = vmul.f32 %v7767, %v7787
    %7791 = vrot.lane.b32.xlu0 %v7789, 64
    %v7792 = vpop.permute.xlu0 %7791
    %s7794 = scalar_lea.vmem [#allocation6], 2
    %7795 = vst.msk [vmem:[%s7794] sm:$0x3] %vm7620, %v7792
    %7797 = vrot.lane.b32.xlu0 %v7783, 96
    %v7798 = vpop.permute.xlu0 %7797
    %s7800 = scalar_lea.vmem [#allocation7], 2
    %7801 = vst.msk [vmem:[%s7800] sm:$0x3] %vm7620, %v7798
    %vm7802 = vcmp.ge.f32.partialorder %v7789, 0.0
    %v7803 = vmul.f32 %v7789, 0.2
    %v7804 = vsel %vm7802, %v7789, %v7803
    %v7805 = vpack.c.bf16 %v7804, %v7804
    %v7806 = vld [vmem:[%s65] sm:$0xf]
    %v7807 = vld [vmem:[%s65 + $0x4] sm:$0xf]
    %v7808 = vld [vmem:[%s65 + $0x8] sm:$0xf]
    %v7809 = vld [vmem:[%s65 + $0xc] sm:$0xf]
    %v7810 = vld [vmem:[%s67] sm:$0x1]
    %v7812 = vlaneseq
    %v7813 = vshrl.u32 %v7812, 7
    %v7814 = vsub.s32 0, %v7813
    %v7815 = vrot.slane %v7810, %v7814
    %7818 = vrot.lane.b32.xlu0 %v7805, 64
    %v7819 = vpop.permute.xlu0 %7818
    %v7824 = vunpack.c.l.b16 %v7806
    %v7825 = vunpack.c.l.b16 %v7807
    %v7826 = vunpack.c.l.b16 %v7808
    %v7827 = vunpack.c.l.b16 %v7809
    %v7828 = vpack.c.b16 %v7825, %v7824
    %v7829 = vpack.c.b16 %v7827, %v7826
    %v7833 = vsel %vm3470, %v7819, 0
    %7835 = vmatprep.subr.bf16.mxu0 0
    %7836 = vmatpush1.bf16.msra.mxu0 %v7828
    %7837 = vmatprep.subr.bf16.mxu0 0
    %7838 = vmatpush1.bf16.msra.mxu0 %v7829
    %7839 = vmatprep.subr.bf16.mxu0 0
    %7840 = vmatpush1.bf16.msra.mxu0 0
    %7841 = vmatprep.subr.bf16.mxu0 0
    %7842 = vmatpush1.bf16.msra.mxu0 0
    %7843 = vmatprep.subr.bf16.mxu0 0
    %7844 = vmatpush1.bf16.msra.mxu0 0
    %7845 = vmatprep.subr.bf16.mxu0 0
    %7846 = vmatpush1.bf16.msra.mxu0 0
    %7847 = vmatprep.subr.bf16.mxu0 0
    %7848 = vmatpush1.bf16.msra.mxu0 0
    %7849 = vmatprep.subr.bf16.mxu0 0
    %7850 = vmatpush1.bf16.msra.mxu0 0
    %7851 = vmatprep.subr.bf16.mxu0 0
    %7852 = vmatpush1.bf16.msra.mxu0 0
    %7853 = vmatprep.subr.bf16.mxu0 0
    %7854 = vmatpush1.bf16.msra.mxu0 0
    %7855 = vmatprep.subr.bf16.mxu0 0
    %7856 = vmatpush1.bf16.msra.mxu0 0
    %7857 = vmatprep.subr.bf16.mxu0 0
    %7858 = vmatpush1.bf16.msra.mxu0 0
    %7859 = vmatprep.subr.bf16.mxu0 0
    %7860 = vmatpush1.bf16.msra.mxu0 0
    %7861 = vmatprep.subr.bf16.mxu0 0
    %7862 = vmatpush1.bf16.msra.mxu0 0
    %7863 = vmatprep.subr.bf16.mxu0 0
    %7864 = vmatpush1.bf16.msra.mxu0 0
    %7865 = vmatprep.subr.bf16.mxu0 0
    %7866 = vmatpush1.bf16.msra.mxu0 0
    %7867 = vmatprep.mubr.bf16.mxu0 0
    %7868 = vmatmul.mubr.bf16.gmra.mrb[0].mxu0 %v7833
    %v7869 = vpop.f32.mrb[0].mxu0
    %v7870 = vadd.f32 %v7815, %v7869
    %v7871 = vpop.f32.mrb[0].mxu0
    %v7872 = vpop.f32.mrb[0].mxu0
    %v7873 = vpop.f32.mrb[0].mxu0
    %7874 = vdwg.mxu0
    %7875 = vst.msk [vmem:[#allocation4] sm:$0x3] %vm7464, %v7870
    // Predicated region
    $region138: #{generator_actor_forward.1} parent=1 // pred_check
      _
    $region139: #{generator_actor_forward.1} parent=1 // pred_check_branch
      %7877 = sbr.rel (0) target = $region141
    $region140: #{generator_actor_forward.1} parent=1 // pred_region
      %s7879 = ssub.s32 32, 32
      %7880 = vsyncadd [#allocation3], %s7879
      %s7882 = sshll.u32 [#allocation2], 4
      %s7883 = int_to_ptr.vmem [resolvable:$true] %s7882
      %7885 = dma.vmem_to_hbm [thread:$0]  %s7883, 32, %s69, [#allocation3]
    $region141: #{generator_actor_forward.1} parent=1 // pred_fallthru
      _
    // Predicated region
    $region142: #{generator_actor_forward.1} parent=1 // pred_check
      _
    $region143: #{generator_actor_forward.1} parent=1 // pred_check_branch
      %7887 = sbr.rel (0) target = $region145
    $region144: #{generator_actor_forward.1} parent=1 // pred_region
      %s7889 = ssub.s32 32, 32
      %7890 = vsyncadd [#allocation5], %s7889
      %s7892 = sshll.u32 [#allocation4], 4
      %s7893 = int_to_ptr.vmem [resolvable:$true] %s7892
      %7895 = dma.vmem_to_hbm [thread:$0]  %s7893, 32, %s71, [#allocation5]
    $region145: #{generator_actor_forward.1} parent=1 // pred_fallthru
      _
    // Predicated region
    $region146: #{generator_actor_forward.1} parent=1 // pred_check
      _
    $region147: #{generator_actor_forward.1} parent=1 // pred_check_branch
      %7897 = sbr.rel (0) target = $region149
    $region148: #{generator_actor_forward.1} parent=1 // pred_region
      %s7899 = ssub.s32 64, 64
      %7900 = vsyncadd [#allocation5], %s7899
      %s7901 = sshll.u32 [#allocation6], 4
      %s7902 = int_to_ptr.vmem [resolvable:$true] %s7901
      %7907 = dma.vmem_to_hbm [thread:$0]  %s7902, 64, %s73, [#allocation5], 32, 32, 2
    $region149: #{generator_actor_forward.1} parent=1 // pred_fallthru
      _
    // Predicated region
    $region150: #{generator_actor_forward.1} parent=1 // pred_check
      _
    $region151: #{generator_actor_forward.1} parent=1 // pred_check_branch
      %7909 = sbr.rel (0) target = $region153
    $region152: #{generator_actor_forward.1} parent=1 // pred_region
      %s7911 = ssub.s32 64, 64
      %7912 = vsyncadd [#allocation8], %s7911
      %s7913 = sshll.u32 [#allocation7], 4
      %s7914 = int_to_ptr.vmem [resolvable:$true] %s7913
      %7919 = dma.vmem_to_hbm [thread:$0]  %s7914, 64, %s75, [#allocation8], 32, 32, 2
    $region153: #{generator_actor_forward.1} parent=1 // pred_fallthru
      _
    // Predicated region
    $region154: #{generator_actor_forward.1} parent=1 // pred_check
      _
    $region155: #{generator_actor_forward.1} parent=1 // pred_check_branch
      %7921 = sbr.rel (0) target = $region157
    $region156: #{generator_actor_forward.1} parent=1 // pred_region
      %7922 = dma.done [#allocation3], 32
    $region157: #{generator_actor_forward.1} parent=1 // pred_fallthru
      _
    // Predicated region
    $region158: #{generator_actor_forward.1} parent=1 // pred_check
      _
    $region159: #{generator_actor_forward.1} parent=1 // pred_check_branch
      %7924 = sbr.rel (0) target = $region161
    $region160: #{generator_actor_forward.1} parent=1 // pred_region
      %7925 = dma.done [#allocation5], 32
    $region161: #{generator_actor_forward.1} parent=1 // pred_fallthru
      _
    // Predicated region
    $region162: #{generator_actor_forward.1} parent=1 // pred_check
      _
    $region163: #{generator_actor_forward.1} parent=1 // pred_check_branch
      %7927 = sbr.rel (0) target = $region165
    $region164: #{generator_actor_forward.1} parent=1 // pred_region
      %7928 = dma.done [#allocation5], 64
    $region165: #{generator_actor_forward.1} parent=1 // pred_fallthru
      _
    // Predicated region
    $region166: #{generator_actor_forward.1} parent=1 // pred_check
      _
    $region167: #{generator_actor_forward.1} parent=1 // pred_check_branch
      %7930 = sbr.rel (0) target = $region169
    $region168: #{generator_actor_forward.1} parent=1 // pred_region
      %7931 = dma.done [#allocation8], 64
    $region169: #{generator_actor_forward.1} parent=1 // pred_fallthru
      _
    %7932 = vsyncpa [#allocation3], 1
    %7933 = vsyncpa [#allocation5], 1
    %7934 = vsyncpa [#allocation8], 1

</llo_original>
